<compile_context>
chip_gen: v7x
topology: tpu7x:2x2x1
jax: 0.10.0
libtpu: 0.0.40
codegen_flags: <defaults>
</compile_context>

<pallas_src>
import functools

import jax
import jax.numpy as jnp
from jax import lax
from jax.experimental import pallas as pl
from jax.experimental.pallas import tpu as pltpu

EPS = 1e-5


def _vmem_spec():
    return pl.BlockSpec(memory_space=pltpu.MemorySpace.VMEM)


def _smem_spec():
    return pl.BlockSpec(memory_space=pltpu.MemorySpace.SMEM)


# ----------------------------------------------------------------------------
# Fused kernel
# ----------------------------------------------------------------------------
def _fused_forward_kernel(xpad_ref, p1_ref, p3_ref, out_ref):
    """Whole forward pass in one kernel invocation.

    xpad_ref : (N, 1, H+6, W+6) f32  input split 0, zero-padded by 3
    p1_ref   : (21,)  f32 SMEM       packed resnet_block_1 params (cout=1)
    p3_ref   : (63,)  f32 SMEM       packed resnet_block_3 params (cout=3)
    out_ref  : (N, 3, H, 3W) f32     final cat(dim=3) result, written directly
    """
    N = xpad_ref.shape[0]
    H = out_ref.shape[2]
    W = out_ref.shape[3] // 3
    count = float(N * H * W)          # BatchNorm population per channel

    def interior_mask(m, sh, sw):
        """1.0 on the H x W valid region of an (sh, sw) frame, else 0.0."""
        r = lax.broadcasted_iota(jnp.int32, (1, 1, sh, sw), 2)
        c = lax.broadcasted_iota(jnp.int32, (1, 1, sh, sw), 3)
        return ((r >= m) & (r < m + H) & (c >= m) & (c < m + W)
                ).astype(jnp.float32)

    def bn_relu(raw, mask, gamma, beta):
        """BatchNorm (batch stats, biased two-pass var) + ReLU over the valid
        region of a frame; masked-out positions stay exactly zero so the
        result doubles as the next stage's zero padding."""
        a = raw * mask
        mean = jnp.sum(a) / count
        cen = (a - mean) * mask
        var = jnp.sum(cen * cen) / count
        y = jnp.maximum(cen * (gamma * lax.rsqrt(var + EPS)) + beta, 0.0)
        return y * mask

    def acb(frame, oh, ow, mask, p_ref, cout):
        """Asymmetric-conv ResBlock evaluated on an (oh+2, ow+2) input frame.

        Returns `cout` values of shape (N, 1, oh, ow):
            relu(bn(conv3x3)) + relu(bn_0(conv1x3)) + relu(bn_1(conv3x1))
        Conv biases are omitted: batch-statistics BN right after each conv
        subtracts the per-channel mean, cancelling a constant bias exactly.
        """
        # 9 shifted stencil windows, hoisted: reused by the 3x3 / 1x3 / 3x1
        # branches and by every output channel.
        win = [[frame[:, :, di:di + oh, dj:dj + ow] for dj in range(3)]
               for di in range(3)]
        o13 = cout * 9
        o31 = o13 + cout * 3
        obn = o31 + cout * 3
        outs = []
        for co in range(cout):
            # 3x3 branch, padding (1, 1)
            a3 = win[0][0] * p_ref[co * 9]
            for t in range(1, 9):
                a3 = a3 + win[t // 3][t % 3] * p_ref[co * 9 + t]
            # 1x3 branch, padding (0, 1) -> fixed row offset 1 in frame coords
            a13 = win[1][0] * p_ref[o13 + co * 3]
            for kj in range(1, 3):
                a13 = a13 + win[1][kj] * p_ref[o13 + co * 3 + kj]
            # 3x1 branch, padding (1, 0) -> fixed col offset 1 in frame coords
            a31 = win[0][1] * p_ref[o31 + co * 3]
            for ki in range(1, 3):
                a31 = a31 + win[ki][1] * p_ref[o31 + co * 3 + ki]
            y = (bn_relu(a3, mask, p_ref[obn + co], p_ref[obn + cout + co])
                 + bn_relu(a13, mask, p_ref[obn + 2 * cout + co],
                           p_ref[obn + 3 * cout + co])
                 + bn_relu(a31, mask, p_ref[obn + 4 * cout + co],
                           p_ref[obn + 5 * cout + co]))
            outs.append(y)
        return outs

    m_stage1 = interior_mask(2, H + 4, W + 4)
    m_stage2 = interior_mask(1, H + 2, W + 2)

    xpad = xpad_ref[...]                                     # (N,1,H+6,W+6)

    # stage 1: resnet_block_1 on input split 0 only (splits 1/2 of the first
    # concat are never consumed downstream -> dead work removed).  Evaluated
    # on the (H+4, W+4) frame; its zero border is stage-2's conv padding.
    r1 = acb(xpad, H + 4, W + 4, m_stage1, p1_ref, 1)[0]

    # stage 2: resnet_block_3 on channel 0 of the concat, on the (H+2, W+2)
    # frame; its zero border is stage-3's conv padding.
    y0, y1, y2 = acb(r1, H + 2, W + 2, m_stage2, p3_ref, 3)

    # stage 3: block2 on channels 0/2, resnet_block_3 (same weights) on
    # channel 1, all on the final (H, W) domain.
    # TODO(synk): the reference also computes block2(u1), block0(u0) and
    # resnet_block_3(u2) whose results are immediately overwritten (dead code,
    # and block0 is channel-inconsistent); skipped.
    b0 = bn_relu(y0, m_stage2, 1.0, 0.0)[:, :, 1:H + 1, 1:W + 1]
    b2 = bn_relu(y2, m_stage2, 1.0, 0.0)[:, :, 1:H + 1, 1:W + 1]
    z0, z1, z2 = acb(y1, H, W, 1.0, p3_ref, 3)

    # Direct (N, 3, H, 3W) cat(dim=3) layout; no wrapper transpose/reshape.
    # TODO(synk): the original cat(dim=3) mixes inconsistent channel counts
    # (1 vs 3); the 1-channel block2 branches are broadcast to 3 channels so
    # the concat is well-defined (same interpretation as previous versions).
    out_ref[:, :, :, 0:W] = jnp.broadcast_to(b0, (N, 3, H, W))
    out_ref[:, 0:1, :, W:2 * W] = z0
    out_ref[:, 1:2, :, W:2 * W] = z1
    out_ref[:, 2:3, :, W:2 * W] = z2
    out_ref[:, :, :, 2 * W:3 * W] = jnp.broadcast_to(b2, (N, 3, H, W))


# ----------------------------------------------------------------------------
# Parameters and wrapper
# ----------------------------------------------------------------------------
def init_params(key):
    # Conv biases are omitted on purpose: with batch-statistics BatchNorm
    # immediately after every conv, a per-channel constant bias is exactly
    # cancelled by the mean subtraction (dead compute).
    def block(ks, cout):
        return {
            "w3": 0.1 * jax.random.normal(ks[0], (cout, 1, 3, 3), jnp.float32),
            "w13": 0.1 * jax.random.normal(ks[1], (cout, 1, 1, 3), jnp.float32),
            "w31": 0.1 * jax.random.normal(ks[2], (cout, 1, 3, 1), jnp.float32),
            "g0": jnp.ones((cout,), jnp.float32),
            "be0": jnp.zeros((cout,), jnp.float32),
            "g1": jnp.ones((cout,), jnp.float32),
            "be1": jnp.zeros((cout,), jnp.float32),
            "g2": jnp.ones((cout,), jnp.float32),
            "be2": jnp.zeros((cout,), jnp.float32),
        }

    keys = jax.random.split(key, 6)
    return {"rb1": block(keys[:3], 1),    # resnet_block_1 : 1 -> 1 channels
            "rb3": block(keys[3:], 3)}    # resnet_block_3 : 1 -> 3 channels


def _pack_block(p):
    """Flatten one ResBlock's params into a single SMEM-friendly f32 vector.

    Layout: [w3 (cout*9) | w13 (cout*3) | w31 (cout*3) |
             g0 | be0 | g1 | be1 | g2 | be2]           (each cout long)
    """
    return jnp.concatenate([
        p["w3"].reshape(-1), p["w13"].reshape(-1), p["w31"].reshape(-1),
        p["g0"], p["be0"], p["g1"], p["be1"], p["g2"], p["be2"],
    ]).astype(jnp.float32)


def model_forward(x, params):
    N, C, H, W = x.shape                          # C == 3
    # torch.split(input, [1, 1, 1], dim=1) -- returned as part of the output.
    s = (x[:, 0:1], x[:, 1:2], x[:, 2:3])

    # Only input split 0 feeds the conv pipeline; pad it by 3 once so every
    # later stage's 1-px zero halo is realized in-register (telescoped frames).
    xpad = jnp.pad(x[:, 0:1], ((0, 0), (0, 0), (3, 3), (3, 3)))

    out0 = pl.pallas_call(
        _fused_forward_kernel,
        out_shape=jax.ShapeDtypeStruct((N, 3, H, 3 * W), jnp.float32),
        in_specs=[_vmem_spec(), _smem_spec(), _smem_spec()],
        out_specs=_vmem_spec(),
    )(xpad, _pack_block(params["rb1"]), _pack_block(params["rb3"]))
    return out0, s


# ----------------------------------------------------------------------------
# Pure-JAX reference (XLA convs) for correctness cross-check
# ----------------------------------------------------------------------------
def _acb_ref(x, p):
    def bn_relu(v, g, b):
        mean = v.mean(axis=(0, 2, 3), keepdims=True)
        cen = v - mean
        var = (cen * cen).mean(axis=(0, 2, 3), keepdims=True)
        g = g.reshape(1, -1, 1, 1)
        b = b.reshape(1, -1, 1, 1)
        return jnp.maximum(cen * (g * lax.rsqrt(var + EPS)) + b, 0.0)

    def conv(w, ph, pw):
        return lax.conv_general_dilated(
            x, w, window_strides=(1, 1), padding=((ph, ph), (pw, pw)),
            dimension_numbers=("NCHW", "OIHW", "NCHW"))

    return (bn_relu(conv(p["w3"], 1, 1), p["g0"], p["be0"])
            + bn_relu(conv(p["w13"], 0, 1), p["g1"], p["be1"])
            + bn_relu(conv(p["w31"], 1, 0), p["g2"], p["be2"]))


def _bn_relu_ref(v):
    mean = v.mean(axis=(0, 2, 3), keepdims=True)
    cen = v - mean
    var = (cen * cen).mean(axis=(0, 2, 3), keepdims=True)
    return jnp.maximum(cen * lax.rsqrt(var + EPS), 0.0)


def model_forward_ref(x, params):
    r1 = _acb_ref(x[:, 0:1], params["rb1"])
    y = _acb_ref(r1, params["rb3"])
    b0 = _bn_relu_ref(y[:, 0:1])
    b2 = _bn_relu_ref(y[:, 2:3])
    z = _acb_ref(y[:, 1:2], params["rb3"])
    out0 = jnp.concatenate([jnp.broadcast_to(b0, z.shape), z,
                            jnp.broadcast_to(b2, z.shape)], axis=3)
    return out0, (x[:, 0:1], x[:, 1:2], x[:, 2:3])


if __name__ == "__main__":
    key = jax.random.PRNGKey(0)
    kx, kp = jax.random.split(key)
    x = jax.random.normal(kx, (2, 3, 16, 16), jnp.float32)
    params = init_params(kp)

    fwd = jax.jit(functools.partial(model_forward, params=params))
    out0, splits = fwd(x)
    jax.block_until_ready(out0)
    for sarr in splits:
        jax.block_until_ready(sarr)

    assert out0.shape == (2, 3, 16, 48), out0.shape
    assert all(sarr.shape == (2, 1, 16, 16) for sarr in splits)
    assert bool(jnp.all(jnp.isfinite(out0)))

    # Cross-check the fused Pallas kernel against a pure-JAX/XLA reference.
    ref0, _ = model_forward_ref(x, params)
    assert bool(jnp.allclose(out0, ref0, rtol=1e-3, atol=1e-3)), float(
        jnp.max(jnp.abs(out0 - ref0)))

    print("KERNEL_OK")
</pallas_src>

<mosaic_0001>
module attributes {stable_mosaic.version = 11 : i64} {
  func.func @_fused_forward_kernel(%arg0: memref<2x1x22x22xf32, #tpu.memory_space<vmem>>, %arg1: memref<21xf32, #tpu.memory_space<smem>>, %arg2: memref<63xf32, #tpu.memory_space<smem>>, %arg3: memref<2x3x16x48xf32, #tpu.memory_space<vmem>>) attributes {dimension_semantics = [], scalar_prefetch = 0 : i64, scratch_operands = 0 : i64, tpu.core_type = #tpu.core_type<tc>} {
    %0 = tpu.iota {dimensions = array<i32: 2>} : vector<1x1x20x20xi32>
    %1 = tpu.iota {dimensions = array<i32: 3>} : vector<1x1x20x20xi32>
    %c2_i32 = arith.constant 2 : i32
    %2 = vector.broadcast %c2_i32 : i32 to vector<1x1x20x20xi32>
    %3 = arith.cmpi sge, %0, %2 : vector<1x1x20x20xi32>
    %c18_i32 = arith.constant 18 : i32
    %4 = vector.broadcast %c18_i32 : i32 to vector<1x1x20x20xi32>
    %5 = arith.cmpi slt, %0, %4 : vector<1x1x20x20xi32>
    %6 = arith.andi %3, %5 : vector<1x1x20x20xi1>
    %c2_i32_0 = arith.constant 2 : i32
    %7 = vector.broadcast %c2_i32_0 : i32 to vector<1x1x20x20xi32>
    %8 = arith.cmpi sge, %1, %7 : vector<1x1x20x20xi32>
    %9 = arith.andi %6, %8 : vector<1x1x20x20xi1>
    %c18_i32_1 = arith.constant 18 : i32
    %10 = vector.broadcast %c18_i32_1 : i32 to vector<1x1x20x20xi32>
    %11 = arith.cmpi slt, %1, %10 : vector<1x1x20x20xi32>
    %12 = arith.andi %9, %11 : vector<1x1x20x20xi1>
    %13 = arith.extui %12 : vector<1x1x20x20xi1> to vector<1x1x20x20xi32>
    %14 = arith.sitofp %13 : vector<1x1x20x20xi32> to vector<1x1x20x20xf32>
    %15 = tpu.iota {dimensions = array<i32: 2>} : vector<1x1x18x18xi32>
    %16 = tpu.iota {dimensions = array<i32: 3>} : vector<1x1x18x18xi32>
    %c1_i32 = arith.constant 1 : i32
    %17 = vector.broadcast %c1_i32 : i32 to vector<1x1x18x18xi32>
    %18 = arith.cmpi sge, %15, %17 : vector<1x1x18x18xi32>
    %c17_i32 = arith.constant 17 : i32
    %19 = vector.broadcast %c17_i32 : i32 to vector<1x1x18x18xi32>
    %20 = arith.cmpi slt, %15, %19 : vector<1x1x18x18xi32>
    %21 = arith.andi %18, %20 : vector<1x1x18x18xi1>
    %c1_i32_2 = arith.constant 1 : i32
    %22 = vector.broadcast %c1_i32_2 : i32 to vector<1x1x18x18xi32>
    %23 = arith.cmpi sge, %16, %22 : vector<1x1x18x18xi32>
    %24 = arith.andi %21, %23 : vector<1x1x18x18xi1>
    %c17_i32_3 = arith.constant 17 : i32
    %25 = vector.broadcast %c17_i32_3 : i32 to vector<1x1x18x18xi32>
    %26 = arith.cmpi slt, %16, %25 : vector<1x1x18x18xi32>
    %27 = arith.andi %24, %26 : vector<1x1x18x18xi1>
    %28 = arith.extui %27 : vector<1x1x18x18xi1> to vector<1x1x18x18xi32>
    %29 = arith.sitofp %28 : vector<1x1x18x18xi32> to vector<1x1x18x18xf32>
    %c0 = arith.constant 0 : index
    %c0_4 = arith.constant 0 : index
    %c0_5 = arith.constant 0 : index
    %c0_6 = arith.constant 0 : index
    %30 = vector.load %arg0[%c0, %c0_4, %c0_5, %c0_6] : memref<2x1x22x22xf32, #tpu.memory_space<vmem>>, vector<2x1x22x22xf32>
    %31 = vector.extract_strided_slice %30 {offsets = [0, 0, 0, 0], sizes = [2, 1, 20, 20], strides = [1, 1, 1, 1]} : vector<2x1x22x22xf32> to vector<2x1x20x20xf32>
    %32 = vector.extract_strided_slice %30 {offsets = [0, 0, 0, 1], sizes = [2, 1, 20, 20], strides = [1, 1, 1, 1]} : vector<2x1x22x22xf32> to vector<2x1x20x20xf32>
    %33 = vector.extract_strided_slice %30 {offsets = [0, 0, 0, 2], sizes = [2, 1, 20, 20], strides = [1, 1, 1, 1]} : vector<2x1x22x22xf32> to vector<2x1x20x20xf32>
    %34 = vector.extract_strided_slice %30 {offsets = [0, 0, 1, 0], sizes = [2, 1, 20, 20], strides = [1, 1, 1, 1]} : vector<2x1x22x22xf32> to vector<2x1x20x20xf32>
    %35 = vector.extract_strided_slice %30 {offsets = [0, 0, 1, 1], sizes = [2, 1, 20, 20], strides = [1, 1, 1, 1]} : vector<2x1x22x22xf32> to vector<2x1x20x20xf32>
    %36 = vector.extract_strided_slice %30 {offsets = [0, 0, 1, 2], sizes = [2, 1, 20, 20], strides = [1, 1, 1, 1]} : vector<2x1x22x22xf32> to vector<2x1x20x20xf32>
    %37 = vector.extract_strided_slice %30 {offsets = [0, 0, 2, 0], sizes = [2, 1, 20, 20], strides = [1, 1, 1, 1]} : vector<2x1x22x22xf32> to vector<2x1x20x20xf32>
    %38 = vector.extract_strided_slice %30 {offsets = [0, 0, 2, 1], sizes = [2, 1, 20, 20], strides = [1, 1, 1, 1]} : vector<2x1x22x22xf32> to vector<2x1x20x20xf32>
    %39 = vector.extract_strided_slice %30 {offsets = [0, 0, 2, 2], sizes = [2, 1, 20, 20], strides = [1, 1, 1, 1]} : vector<2x1x22x22xf32> to vector<2x1x20x20xf32>
    %c0_7 = arith.constant 0 : index
    %40 = memref.load %arg1[%c0_7] : memref<21xf32, #tpu.memory_space<smem>>
    %41 = vector.broadcast %40 : f32 to vector<2x1x20x20xf32>
    %42 = arith.mulf %31, %41 : vector<2x1x20x20xf32>
    %c1 = arith.constant 1 : index
    %43 = memref.load %arg1[%c1] : memref<21xf32, #tpu.memory_space<smem>>
    %44 = vector.broadcast %43 : f32 to vector<2x1x20x20xf32>
    %45 = arith.mulf %32, %44 : vector<2x1x20x20xf32>
    %46 = arith.addf %42, %45 : vector<2x1x20x20xf32>
    %c2 = arith.constant 2 : index
    %47 = memref.load %arg1[%c2] : memref<21xf32, #tpu.memory_space<smem>>
    %48 = vector.broadcast %47 : f32 to vector<2x1x20x20xf32>
    %49 = arith.mulf %33, %48 : vector<2x1x20x20xf32>
    %50 = arith.addf %46, %49 : vector<2x1x20x20xf32>
    %c3 = arith.constant 3 : index
    %51 = memref.load %arg1[%c3] : memref<21xf32, #tpu.memory_space<smem>>
    %52 = vector.broadcast %51 : f32 to vector<2x1x20x20xf32>
    %53 = arith.mulf %34, %52 : vector<2x1x20x20xf32>
    %54 = arith.addf %50, %53 : vector<2x1x20x20xf32>
    %c4 = arith.constant 4 : index
    %55 = memref.load %arg1[%c4] : memref<21xf32, #tpu.memory_space<smem>>
    %56 = vector.broadcast %55 : f32 to vector<2x1x20x20xf32>
    %57 = arith.mulf %35, %56 : vector<2x1x20x20xf32>
    %58 = arith.addf %54, %57 : vector<2x1x20x20xf32>
    %c5 = arith.constant 5 : index
    %59 = memref.load %arg1[%c5] : memref<21xf32, #tpu.memory_space<smem>>
    %60 = vector.broadcast %59 : f32 to vector<2x1x20x20xf32>
    %61 = arith.mulf %36, %60 : vector<2x1x20x20xf32>
    %62 = arith.addf %58, %61 : vector<2x1x20x20xf32>
    %c6 = arith.constant 6 : index
    %63 = memref.load %arg1[%c6] : memref<21xf32, #tpu.memory_space<smem>>
    %64 = vector.broadcast %63 : f32 to vector<2x1x20x20xf32>
    %65 = arith.mulf %37, %64 : vector<2x1x20x20xf32>
    %66 = arith.addf %62, %65 : vector<2x1x20x20xf32>
    %c7 = arith.constant 7 : index
    %67 = memref.load %arg1[%c7] : memref<21xf32, #tpu.memory_space<smem>>
    %68 = vector.broadcast %67 : f32 to vector<2x1x20x20xf32>
    %69 = arith.mulf %38, %68 : vector<2x1x20x20xf32>
    %70 = arith.addf %66, %69 : vector<2x1x20x20xf32>
    %c8 = arith.constant 8 : index
    %71 = memref.load %arg1[%c8] : memref<21xf32, #tpu.memory_space<smem>>
    %72 = vector.broadcast %71 : f32 to vector<2x1x20x20xf32>
    %73 = arith.mulf %39, %72 : vector<2x1x20x20xf32>
    %74 = arith.addf %70, %73 : vector<2x1x20x20xf32>
    %c9 = arith.constant 9 : index
    %75 = memref.load %arg1[%c9] : memref<21xf32, #tpu.memory_space<smem>>
    %76 = vector.broadcast %75 : f32 to vector<2x1x20x20xf32>
    %77 = arith.mulf %34, %76 : vector<2x1x20x20xf32>
    %c10 = arith.constant 10 : index
    %78 = memref.load %arg1[%c10] : memref<21xf32, #tpu.memory_space<smem>>
    %79 = vector.broadcast %78 : f32 to vector<2x1x20x20xf32>
    %80 = arith.mulf %35, %79 : vector<2x1x20x20xf32>
    %81 = arith.addf %77, %80 : vector<2x1x20x20xf32>
    %c11 = arith.constant 11 : index
    %82 = memref.load %arg1[%c11] : memref<21xf32, #tpu.memory_space<smem>>
    %83 = vector.broadcast %82 : f32 to vector<2x1x20x20xf32>
    %84 = arith.mulf %36, %83 : vector<2x1x20x20xf32>
    %85 = arith.addf %81, %84 : vector<2x1x20x20xf32>
    %c12 = arith.constant 12 : index
    %86 = memref.load %arg1[%c12] : memref<21xf32, #tpu.memory_space<smem>>
    %87 = vector.broadcast %86 : f32 to vector<2x1x20x20xf32>
    %88 = arith.mulf %32, %87 : vector<2x1x20x20xf32>
    %c13 = arith.constant 13 : index
    %89 = memref.load %arg1[%c13] : memref<21xf32, #tpu.memory_space<smem>>
    %90 = vector.broadcast %89 : f32 to vector<2x1x20x20xf32>
    %91 = arith.mulf %35, %90 : vector<2x1x20x20xf32>
    %92 = arith.addf %88, %91 : vector<2x1x20x20xf32>
    %c14 = arith.constant 14 : index
    %93 = memref.load %arg1[%c14] : memref<21xf32, #tpu.memory_space<smem>>
    %94 = vector.broadcast %93 : f32 to vector<2x1x20x20xf32>
    %95 = arith.mulf %38, %94 : vector<2x1x20x20xf32>
    %96 = arith.addf %92, %95 : vector<2x1x20x20xf32>
    %c15 = arith.constant 15 : index
    %97 = memref.load %arg1[%c15] : memref<21xf32, #tpu.memory_space<smem>>
    %c16 = arith.constant 16 : index
    %98 = memref.load %arg1[%c16] : memref<21xf32, #tpu.memory_space<smem>>
    %99 = vector.broadcast %14 : vector<1x1x20x20xf32> to vector<2x1x20x20xf32>
    %100 = arith.mulf %74, %99 : vector<2x1x20x20xf32>
    %101 = vector.shape_cast %100 : vector<2x1x20x20xf32> to vector<1x2x1x20x20xf32>
    %cst = arith.constant dense<0.000000e+00> : vector<1xf32>
    %102 = vector.multi_reduction <add>, %101, %cst [1, 2, 3, 4] : vector<1x2x1x20x20xf32> to vector<1xf32>
    %103 = vector.shape_cast %102 : vector<1xf32> to vector<1x1x1x1x1xf32>
    %104 = vector.extract %103[0, 0, 0, 0, 0] : f32 from vector<1x1x1x1x1xf32>
    %cst_8 = arith.constant 5.120000e+02 : f32
    %105 = arith.divf %104, %cst_8 : f32
    %106 = vector.broadcast %105 : f32 to vector<2x1x20x20xf32>
    %107 = arith.subf %100, %106 : vector<2x1x20x20xf32>
    %108 = vector.broadcast %14 : vector<1x1x20x20xf32> to vector<2x1x20x20xf32>
    %109 = arith.mulf %107, %108 : vector<2x1x20x20xf32>
    %110 = arith.mulf %109, %109 : vector<2x1x20x20xf32>
    %111 = vector.shape_cast %110 : vector<2x1x20x20xf32> to vector<1x2x1x20x20xf32>
    %cst_9 = arith.constant dense<0.000000e+00> : vector<1xf32>
    %112 = vector.multi_reduction <add>, %111, %cst_9 [1, 2, 3, 4] : vector<1x2x1x20x20xf32> to vector<1xf32>
    %113 = vector.shape_cast %112 : vector<1xf32> to vector<1x1x1x1x1xf32>
    %114 = vector.extract %113[0, 0, 0, 0, 0] : f32 from vector<1x1x1x1x1xf32>
    %cst_10 = arith.constant 5.120000e+02 : f32
    %115 = arith.divf %114, %cst_10 : f32
    %cst_11 = arith.constant 9.99999974E-6 : f32
    %116 = arith.addf %115, %cst_11 : f32
    %117 = math.rsqrt %116 : f32
    %118 = arith.mulf %97, %117 : f32
    %119 = vector.broadcast %118 : f32 to vector<2x1x20x20xf32>
    %120 = arith.mulf %109, %119 : vector<2x1x20x20xf32>
    %121 = vector.broadcast %98 : f32 to vector<2x1x20x20xf32>
    %122 = arith.addf %120, %121 : vector<2x1x20x20xf32>
    %cst_12 = arith.constant 0.000000e+00 : f32
    %123 = vector.broadcast %cst_12 : f32 to vector<2x1x20x20xf32>
    %124 = arith.maximumf %122, %123 : vector<2x1x20x20xf32>
    %125 = vector.broadcast %14 : vector<1x1x20x20xf32> to vector<2x1x20x20xf32>
    %126 = arith.mulf %124, %125 : vector<2x1x20x20xf32>
    %c17 = arith.constant 17 : index
    %127 = memref.load %arg1[%c17] : memref<21xf32, #tpu.memory_space<smem>>
    %c18 = arith.constant 18 : index
    %128 = memref.load %arg1[%c18] : memref<21xf32, #tpu.memory_space<smem>>
    %129 = vector.broadcast %14 : vector<1x1x20x20xf32> to vector<2x1x20x20xf32>
    %130 = arith.mulf %85, %129 : vector<2x1x20x20xf32>
    %131 = vector.shape_cast %130 : vector<2x1x20x20xf32> to vector<1x2x1x20x20xf32>
    %cst_13 = arith.constant dense<0.000000e+00> : vector<1xf32>
    %132 = vector.multi_reduction <add>, %131, %cst_13 [1, 2, 3, 4] : vector<1x2x1x20x20xf32> to vector<1xf32>
    %133 = vector.shape_cast %132 : vector<1xf32> to vector<1x1x1x1x1xf32>
    %134 = vector.extract %133[0, 0, 0, 0, 0] : f32 from vector<1x1x1x1x1xf32>
    %cst_14 = arith.constant 5.120000e+02 : f32
    %135 = arith.divf %134, %cst_14 : f32
    %136 = vector.broadcast %135 : f32 to vector<2x1x20x20xf32>
    %137 = arith.subf %130, %136 : vector<2x1x20x20xf32>
    %138 = vector.broadcast %14 : vector<1x1x20x20xf32> to vector<2x1x20x20xf32>
    %139 = arith.mulf %137, %138 : vector<2x1x20x20xf32>
    %140 = arith.mulf %139, %139 : vector<2x1x20x20xf32>
    %141 = vector.shape_cast %140 : vector<2x1x20x20xf32> to vector<1x2x1x20x20xf32>
    %cst_15 = arith.constant dense<0.000000e+00> : vector<1xf32>
    %142 = vector.multi_reduction <add>, %141, %cst_15 [1, 2, 3, 4] : vector<1x2x1x20x20xf32> to vector<1xf32>
    %143 = vector.shape_cast %142 : vector<1xf32> to vector<1x1x1x1x1xf32>
    %144 = vector.extract %143[0, 0, 0, 0, 0] : f32 from vector<1x1x1x1x1xf32>
    %cst_16 = arith.constant 5.120000e+02 : f32
    %145 = arith.divf %144, %cst_16 : f32
    %cst_17 = arith.constant 9.99999974E-6 : f32
    %146 = arith.addf %145, %cst_17 : f32
    %147 = math.rsqrt %146 : f32
    %148 = arith.mulf %127, %147 : f32
    %149 = vector.broadcast %148 : f32 to vector<2x1x20x20xf32>
    %150 = arith.mulf %139, %149 : vector<2x1x20x20xf32>
    %151 = vector.broadcast %128 : f32 to vector<2x1x20x20xf32>
    %152 = arith.addf %150, %151 : vector<2x1x20x20xf32>
    %cst_18 = arith.constant 0.000000e+00 : f32
    %153 = vector.broadcast %cst_18 : f32 to vector<2x1x20x20xf32>
    %154 = arith.maximumf %152, %153 : vector<2x1x20x20xf32>
    %155 = vector.broadcast %14 : vector<1x1x20x20xf32> to vector<2x1x20x20xf32>
    %156 = arith.mulf %154, %155 : vector<2x1x20x20xf32>
    %157 = arith.addf %126, %156 : vector<2x1x20x20xf32>
    %c19 = arith.constant 19 : index
    %158 = memref.load %arg1[%c19] : memref<21xf32, #tpu.memory_space<smem>>
    %c20 = arith.constant 20 : index
    %159 = memref.load %arg1[%c20] : memref<21xf32, #tpu.memory_space<smem>>
    %160 = vector.broadcast %14 : vector<1x1x20x20xf32> to vector<2x1x20x20xf32>
    %161 = arith.mulf %96, %160 : vector<2x1x20x20xf32>
    %162 = vector.shape_cast %161 : vector<2x1x20x20xf32> to vector<1x2x1x20x20xf32>
    %cst_19 = arith.constant dense<0.000000e+00> : vector<1xf32>
    %163 = vector.multi_reduction <add>, %162, %cst_19 [1, 2, 3, 4] : vector<1x2x1x20x20xf32> to vector<1xf32>
    %164 = vector.shape_cast %163 : vector<1xf32> to vector<1x1x1x1x1xf32>
    %165 = vector.extract %164[0, 0, 0, 0, 0] : f32 from vector<1x1x1x1x1xf32>
    %cst_20 = arith.constant 5.120000e+02 : f32
    %166 = arith.divf %165, %cst_20 : f32
    %167 = vector.broadcast %166 : f32 to vector<2x1x20x20xf32>
    %168 = arith.subf %161, %167 : vector<2x1x20x20xf32>
    %169 = vector.broadcast %14 : vector<1x1x20x20xf32> to vector<2x1x20x20xf32>
    %170 = arith.mulf %168, %169 : vector<2x1x20x20xf32>
    %171 = arith.mulf %170, %170 : vector<2x1x20x20xf32>
    %172 = vector.shape_cast %171 : vector<2x1x20x20xf32> to vector<1x2x1x20x20xf32>
    %cst_21 = arith.constant dense<0.000000e+00> : vector<1xf32>
    %173 = vector.multi_reduction <add>, %172, %cst_21 [1, 2, 3, 4] : vector<1x2x1x20x20xf32> to vector<1xf32>
    %174 = vector.shape_cast %173 : vector<1xf32> to vector<1x1x1x1x1xf32>
    %175 = vector.extract %174[0, 0, 0, 0, 0] : f32 from vector<1x1x1x1x1xf32>
    %cst_22 = arith.constant 5.120000e+02 : f32
    %176 = arith.divf %175, %cst_22 : f32
    %cst_23 = arith.constant 9.99999974E-6 : f32
    %177 = arith.addf %176, %cst_23 : f32
    %178 = math.rsqrt %177 : f32
    %179 = arith.mulf %158, %178 : f32
    %180 = vector.broadcast %179 : f32 to vector<2x1x20x20xf32>
    %181 = arith.mulf %170, %180 : vector<2x1x20x20xf32>
    %182 = vector.broadcast %159 : f32 to vector<2x1x20x20xf32>
    %183 = arith.addf %181, %182 : vector<2x1x20x20xf32>
    %cst_24 = arith.constant 0.000000e+00 : f32
    %184 = vector.broadcast %cst_24 : f32 to vector<2x1x20x20xf32>
    %185 = arith.maximumf %183, %184 : vector<2x1x20x20xf32>
    %186 = vector.broadcast %14 : vector<1x1x20x20xf32> to vector<2x1x20x20xf32>
    %187 = arith.mulf %185, %186 : vector<2x1x20x20xf32>
    %188 = arith.addf %157, %187 : vector<2x1x20x20xf32>
    %189 = vector.extract_strided_slice %188 {offsets = [0, 0, 0, 0], sizes = [2, 1, 18, 18], strides = [1, 1, 1, 1]} : vector<2x1x20x20xf32> to vector<2x1x18x18xf32>
    %190 = vector.extract_strided_slice %188 {offsets = [0, 0, 0, 1], sizes = [2, 1, 18, 18], strides = [1, 1, 1, 1]} : vector<2x1x20x20xf32> to vector<2x1x18x18xf32>
    %191 = vector.extract_strided_slice %188 {offsets = [0, 0, 0, 2], sizes = [2, 1, 18, 18], strides = [1, 1, 1, 1]} : vector<2x1x20x20xf32> to vector<2x1x18x18xf32>
    %192 = vector.extract_strided_slice %188 {offsets = [0, 0, 1, 0], sizes = [2, 1, 18, 18], strides = [1, 1, 1, 1]} : vector<2x1x20x20xf32> to vector<2x1x18x18xf32>
    %193 = vector.extract_strided_slice %188 {offsets = [0, 0, 1, 1], sizes = [2, 1, 18, 18], strides = [1, 1, 1, 1]} : vector<2x1x20x20xf32> to vector<2x1x18x18xf32>
    %194 = vector.extract_strided_slice %188 {offsets = [0, 0, 1, 2], sizes = [2, 1, 18, 18], strides = [1, 1, 1, 1]} : vector<2x1x20x20xf32> to vector<2x1x18x18xf32>
    %195 = vector.extract_strided_slice %188 {offsets = [0, 0, 2, 0], sizes = [2, 1, 18, 18], strides = [1, 1, 1, 1]} : vector<2x1x20x20xf32> to vector<2x1x18x18xf32>
    %196 = vector.extract_strided_slice %188 {offsets = [0, 0, 2, 1], sizes = [2, 1, 18, 18], strides = [1, 1, 1, 1]} : vector<2x1x20x20xf32> to vector<2x1x18x18xf32>
    %197 = vector.extract_strided_slice %188 {offsets = [0, 0, 2, 2], sizes = [2, 1, 18, 18], strides = [1, 1, 1, 1]} : vector<2x1x20x20xf32> to vector<2x1x18x18xf32>
    %c0_25 = arith.constant 0 : index
    %198 = memref.load %arg2[%c0_25] : memref<63xf32, #tpu.memory_space<smem>>
    %199 = vector.broadcast %198 : f32 to vector<2x1x18x18xf32>
    %200 = arith.mulf %189, %199 : vector<2x1x18x18xf32>
    %c1_26 = arith.constant 1 : index
    %201 = memref.load %arg2[%c1_26] : memref<63xf32, #tpu.memory_space<smem>>
    %202 = vector.broadcast %201 : f32 to vector<2x1x18x18xf32>
    %203 = arith.mulf %190, %202 : vector<2x1x18x18xf32>
    %204 = arith.addf %200, %203 : vector<2x1x18x18xf32>
    %c2_27 = arith.constant 2 : index
    %205 = memref.load %arg2[%c2_27] : memref<63xf32, #tpu.memory_space<smem>>
    %206 = vector.broadcast %205 : f32 to vector<2x1x18x18xf32>
    %207 = arith.mulf %191, %206 : vector<2x1x18x18xf32>
    %208 = arith.addf %204, %207 : vector<2x1x18x18xf32>
    %c3_28 = arith.constant 3 : index
    %209 = memref.load %arg2[%c3_28] : memref<63xf32, #tpu.memory_space<smem>>
    %210 = vector.broadcast %209 : f32 to vector<2x1x18x18xf32>
    %211 = arith.mulf %192, %210 : vector<2x1x18x18xf32>
    %212 = arith.addf %208, %211 : vector<2x1x18x18xf32>
    %c4_29 = arith.constant 4 : index
    %213 = memref.load %arg2[%c4_29] : memref<63xf32, #tpu.memory_space<smem>>
    %214 = vector.broadcast %213 : f32 to vector<2x1x18x18xf32>
    %215 = arith.mulf %193, %214 : vector<2x1x18x18xf32>
    %216 = arith.addf %212, %215 : vector<2x1x18x18xf32>
    %c5_30 = arith.constant 5 : index
    %217 = memref.load %arg2[%c5_30] : memref<63xf32, #tpu.memory_space<smem>>
    %218 = vector.broadcast %217 : f32 to vector<2x1x18x18xf32>
    %219 = arith.mulf %194, %218 : vector<2x1x18x18xf32>
    %220 = arith.addf %216, %219 : vector<2x1x18x18xf32>
    %c6_31 = arith.constant 6 : index
    %221 = memref.load %arg2[%c6_31] : memref<63xf32, #tpu.memory_space<smem>>
    %222 = vector.broadcast %221 : f32 to vector<2x1x18x18xf32>
    %223 = arith.mulf %195, %222 : vector<2x1x18x18xf32>
    %224 = arith.addf %220, %223 : vector<2x1x18x18xf32>
    %c7_32 = arith.constant 7 : index
    %225 = memref.load %arg2[%c7_32] : memref<63xf32, #tpu.memory_space<smem>>
    %226 = vector.broadcast %225 : f32 to vector<2x1x18x18xf32>
    %227 = arith.mulf %196, %226 : vector<2x1x18x18xf32>
    %228 = arith.addf %224, %227 : vector<2x1x18x18xf32>
    %c8_33 = arith.constant 8 : index
    %229 = memref.load %arg2[%c8_33] : memref<63xf32, #tpu.memory_space<smem>>
    %230 = vector.broadcast %229 : f32 to vector<2x1x18x18xf32>
    %231 = arith.mulf %197, %230 : vector<2x1x18x18xf32>
    %232 = arith.addf %228, %231 : vector<2x1x18x18xf32>
    %c27 = arith.constant 27 : index
    %233 = memref.load %arg2[%c27] : memref<63xf32, #tpu.memory_space<smem>>
    %234 = vector.broadcast %233 : f32 to vector<2x1x18x18xf32>
    %235 = arith.mulf %192, %234 : vector<2x1x18x18xf32>
    %c28 = arith.constant 28 : index
    %236 = memref.load %arg2[%c28] : memref<63xf32, #tpu.memory_space<smem>>
    %237 = vector.broadcast %236 : f32 to vector<2x1x18x18xf32>
    %238 = arith.mulf %193, %237 : vector<2x1x18x18xf32>
    %239 = arith.addf %235, %238 : vector<2x1x18x18xf32>
    %c29 = arith.constant 29 : index
    %240 = memref.load %arg2[%c29] : memref<63xf32, #tpu.memory_space<smem>>
    %241 = vector.broadcast %240 : f32 to vector<2x1x18x18xf32>
    %242 = arith.mulf %194, %241 : vector<2x1x18x18xf32>
    %243 = arith.addf %239, %242 : vector<2x1x18x18xf32>
    %c36 = arith.constant 36 : index
    %244 = memref.load %arg2[%c36] : memref<63xf32, #tpu.memory_space<smem>>
    %245 = vector.broadcast %244 : f32 to vector<2x1x18x18xf32>
    %246 = arith.mulf %190, %245 : vector<2x1x18x18xf32>
    %c37 = arith.constant 37 : index
    %247 = memref.load %arg2[%c37] : memref<63xf32, #tpu.memory_space<smem>>
    %248 = vector.broadcast %247 : f32 to vector<2x1x18x18xf32>
    %249 = arith.mulf %193, %248 : vector<2x1x18x18xf32>
    %250 = arith.addf %246, %249 : vector<2x1x18x18xf32>
    %c38 = arith.constant 38 : index
    %251 = memref.load %arg2[%c38] : memref<63xf32, #tpu.memory_space<smem>>
    %252 = vector.broadcast %251 : f32 to vector<2x1x18x18xf32>
    %253 = arith.mulf %196, %252 : vector<2x1x18x18xf32>
    %254 = arith.addf %250, %253 : vector<2x1x18x18xf32>
    %c45 = arith.constant 45 : index
    %255 = memref.load %arg2[%c45] : memref<63xf32, #tpu.memory_space<smem>>
    %c48 = arith.constant 48 : index
    %256 = memref.load %arg2[%c48] : memref<63xf32, #tpu.memory_space<smem>>
    %257 = vector.broadcast %29 : vector<1x1x18x18xf32> to vector<2x1x18x18xf32>
    %258 = arith.mulf %232, %257 : vector<2x1x18x18xf32>
    %259 = vector.shape_cast %258 : vector<2x1x18x18xf32> to vector<1x2x1x18x18xf32>
    %cst_34 = arith.constant dense<0.000000e+00> : vector<1xf32>
    %260 = vector.multi_reduction <add>, %259, %cst_34 [1, 2, 3, 4] : vector<1x2x1x18x18xf32> to vector<1xf32>
    %261 = vector.shape_cast %260 : vector<1xf32> to vector<1x1x1x1x1xf32>
    %262 = vector.extract %261[0, 0, 0, 0, 0] : f32 from vector<1x1x1x1x1xf32>
    %cst_35 = arith.constant 5.120000e+02 : f32
    %263 = arith.divf %262, %cst_35 : f32
    %264 = vector.broadcast %263 : f32 to vector<2x1x18x18xf32>
    %265 = arith.subf %258, %264 : vector<2x1x18x18xf32>
    %266 = vector.broadcast %29 : vector<1x1x18x18xf32> to vector<2x1x18x18xf32>
    %267 = arith.mulf %265, %266 : vector<2x1x18x18xf32>
    %268 = arith.mulf %267, %267 : vector<2x1x18x18xf32>
    %269 = vector.shape_cast %268 : vector<2x1x18x18xf32> to vector<1x2x1x18x18xf32>
    %cst_36 = arith.constant dense<0.000000e+00> : vector<1xf32>
    %270 = vector.multi_reduction <add>, %269, %cst_36 [1, 2, 3, 4] : vector<1x2x1x18x18xf32> to vector<1xf32>
    %271 = vector.shape_cast %270 : vector<1xf32> to vector<1x1x1x1x1xf32>
    %272 = vector.extract %271[0, 0, 0, 0, 0] : f32 from vector<1x1x1x1x1xf32>
    %cst_37 = arith.constant 5.120000e+02 : f32
    %273 = arith.divf %272, %cst_37 : f32
    %cst_38 = arith.constant 9.99999974E-6 : f32
    %274 = arith.addf %273, %cst_38 : f32
    %275 = math.rsqrt %274 : f32
    %276 = arith.mulf %255, %275 : f32
    %277 = vector.broadcast %276 : f32 to vector<2x1x18x18xf32>
    %278 = arith.mulf %267, %277 : vector<2x1x18x18xf32>
    %279 = vector.broadcast %256 : f32 to vector<2x1x18x18xf32>
    %280 = arith.addf %278, %279 : vector<2x1x18x18xf32>
    %cst_39 = arith.constant 0.000000e+00 : f32
    %281 = vector.broadcast %cst_39 : f32 to vector<2x1x18x18xf32>
    %282 = arith.maximumf %280, %281 : vector<2x1x18x18xf32>
    %283 = vector.broadcast %29 : vector<1x1x18x18xf32> to vector<2x1x18x18xf32>
    %284 = arith.mulf %282, %283 : vector<2x1x18x18xf32>
    %c51 = arith.constant 51 : index
    %285 = memref.load %arg2[%c51] : memref<63xf32, #tpu.memory_space<smem>>
    %c54 = arith.constant 54 : index
    %286 = memref.load %arg2[%c54] : memref<63xf32, #tpu.memory_space<smem>>
    %287 = vector.broadcast %29 : vector<1x1x18x18xf32> to vector<2x1x18x18xf32>
    %288 = arith.mulf %243, %287 : vector<2x1x18x18xf32>
    %289 = vector.shape_cast %288 : vector<2x1x18x18xf32> to vector<1x2x1x18x18xf32>
    %cst_40 = arith.constant dense<0.000000e+00> : vector<1xf32>
    %290 = vector.multi_reduction <add>, %289, %cst_40 [1, 2, 3, 4] : vector<1x2x1x18x18xf32> to vector<1xf32>
    %291 = vector.shape_cast %290 : vector<1xf32> to vector<1x1x1x1x1xf32>
    %292 = vector.extract %291[0, 0, 0, 0, 0] : f32 from vector<1x1x1x1x1xf32>
    %cst_41 = arith.constant 5.120000e+02 : f32
    %293 = arith.divf %292, %cst_41 : f32
    %294 = vector.broadcast %293 : f32 to vector<2x1x18x18xf32>
    %295 = arith.subf %288, %294 : vector<2x1x18x18xf32>
    %296 = vector.broadcast %29 : vector<1x1x18x18xf32> to vector<2x1x18x18xf32>
    %297 = arith.mulf %295, %296 : vector<2x1x18x18xf32>
    %298 = arith.mulf %297, %297 : vector<2x1x18x18xf32>
    %299 = vector.shape_cast %298 : vector<2x1x18x18xf32> to vector<1x2x1x18x18xf32>
    %cst_42 = arith.constant dense<0.000000e+00> : vector<1xf32>
    %300 = vector.multi_reduction <add>, %299, %cst_42 [1, 2, 3, 4] : vector<1x2x1x18x18xf32> to vector<1xf32>
    %301 = vector.shape_cast %300 : vector<1xf32> to vector<1x1x1x1x1xf32>
    %302 = vector.extract %301[0, 0, 0, 0, 0] : f32 from vector<1x1x1x1x1xf32>
    %cst_43 = arith.constant 5.120000e+02 : f32
    %303 = arith.divf %302, %cst_43 : f32
    %cst_44 = arith.constant 9.99999974E-6 : f32
    %304 = arith.addf %303, %cst_44 : f32
    %305 = math.rsqrt %304 : f32
    %306 = arith.mulf %285, %305 : f32
    %307 = vector.broadcast %306 : f32 to vector<2x1x18x18xf32>
    %308 = arith.mulf %297, %307 : vector<2x1x18x18xf32>
    %309 = vector.broadcast %286 : f32 to vector<2x1x18x18xf32>
    %310 = arith.addf %308, %309 : vector<2x1x18x18xf32>
    %cst_45 = arith.constant 0.000000e+00 : f32
    %311 = vector.broadcast %cst_45 : f32 to vector<2x1x18x18xf32>
    %312 = arith.maximumf %310, %311 : vector<2x1x18x18xf32>
    %313 = vector.broadcast %29 : vector<1x1x18x18xf32> to vector<2x1x18x18xf32>
    %314 = arith.mulf %312, %313 : vector<2x1x18x18xf32>
    %315 = arith.addf %284, %314 : vector<2x1x18x18xf32>
    %c57 = arith.constant 57 : index
    %316 = memref.load %arg2[%c57] : memref<63xf32, #tpu.memory_space<smem>>
    %c60 = arith.constant 60 : index
    %317 = memref.load %arg2[%c60] : memref<63xf32, #tpu.memory_space<smem>>
    %318 = vector.broadcast %29 : vector<1x1x18x18xf32> to vector<2x1x18x18xf32>
    %319 = arith.mulf %254, %318 : vector<2x1x18x18xf32>
    %320 = vector.shape_cast %319 : vector<2x1x18x18xf32> to vector<1x2x1x18x18xf32>
    %cst_46 = arith.constant dense<0.000000e+00> : vector<1xf32>
    %321 = vector.multi_reduction <add>, %320, %cst_46 [1, 2, 3, 4] : vector<1x2x1x18x18xf32> to vector<1xf32>
    %322 = vector.shape_cast %321 : vector<1xf32> to vector<1x1x1x1x1xf32>
    %323 = vector.extract %322[0, 0, 0, 0, 0] : f32 from vector<1x1x1x1x1xf32>
    %cst_47 = arith.constant 5.120000e+02 : f32
    %324 = arith.divf %323, %cst_47 : f32
    %325 = vector.broadcast %324 : f32 to vector<2x1x18x18xf32>
    %326 = arith.subf %319, %325 : vector<2x1x18x18xf32>
    %327 = vector.broadcast %29 : vector<1x1x18x18xf32> to vector<2x1x18x18xf32>
    %328 = arith.mulf %326, %327 : vector<2x1x18x18xf32>
    %329 = arith.mulf %328, %328 : vector<2x1x18x18xf32>
    %330 = vector.shape_cast %329 : vector<2x1x18x18xf32> to vector<1x2x1x18x18xf32>
    %cst_48 = arith.constant dense<0.000000e+00> : vector<1xf32>
    %331 = vector.multi_reduction <add>, %330, %cst_48 [1, 2, 3, 4] : vector<1x2x1x18x18xf32> to vector<1xf32>
    %332 = vector.shape_cast %331 : vector<1xf32> to vector<1x1x1x1x1xf32>
    %333 = vector.extract %332[0, 0, 0, 0, 0] : f32 from vector<1x1x1x1x1xf32>
    %cst_49 = arith.constant 5.120000e+02 : f32
    %334 = arith.divf %333, %cst_49 : f32
    %cst_50 = arith.constant 9.99999974E-6 : f32
    %335 = arith.addf %334, %cst_50 : f32
    %336 = math.rsqrt %335 : f32
    %337 = arith.mulf %316, %336 : f32
    %338 = vector.broadcast %337 : f32 to vector<2x1x18x18xf32>
    %339 = arith.mulf %328, %338 : vector<2x1x18x18xf32>
    %340 = vector.broadcast %317 : f32 to vector<2x1x18x18xf32>
    %341 = arith.addf %339, %340 : vector<2x1x18x18xf32>
    %cst_51 = arith.constant 0.000000e+00 : f32
    %342 = vector.broadcast %cst_51 : f32 to vector<2x1x18x18xf32>
    %343 = arith.maximumf %341, %342 : vector<2x1x18x18xf32>
    %344 = vector.broadcast %29 : vector<1x1x18x18xf32> to vector<2x1x18x18xf32>
    %345 = arith.mulf %343, %344 : vector<2x1x18x18xf32>
    %346 = arith.addf %315, %345 : vector<2x1x18x18xf32>
    %c9_52 = arith.constant 9 : index
    %347 = memref.load %arg2[%c9_52] : memref<63xf32, #tpu.memory_space<smem>>
    %348 = vector.broadcast %347 : f32 to vector<2x1x18x18xf32>
    %349 = arith.mulf %189, %348 : vector<2x1x18x18xf32>
    %c10_53 = arith.constant 10 : index
    %350 = memref.load %arg2[%c10_53] : memref<63xf32, #tpu.memory_space<smem>>
    %351 = vector.broadcast %350 : f32 to vector<2x1x18x18xf32>
    %352 = arith.mulf %190, %351 : vector<2x1x18x18xf32>
    %353 = arith.addf %349, %352 : vector<2x1x18x18xf32>
    %c11_54 = arith.constant 11 : index
    %354 = memref.load %arg2[%c11_54] : memref<63xf32, #tpu.memory_space<smem>>
    %355 = vector.broadcast %354 : f32 to vector<2x1x18x18xf32>
    %356 = arith.mulf %191, %355 : vector<2x1x18x18xf32>
    %357 = arith.addf %353, %356 : vector<2x1x18x18xf32>
    %c12_55 = arith.constant 12 : index
    %358 = memref.load %arg2[%c12_55] : memref<63xf32, #tpu.memory_space<smem>>
    %359 = vector.broadcast %358 : f32 to vector<2x1x18x18xf32>
    %360 = arith.mulf %192, %359 : vector<2x1x18x18xf32>
    %361 = arith.addf %357, %360 : vector<2x1x18x18xf32>
    %c13_56 = arith.constant 13 : index
    %362 = memref.load %arg2[%c13_56] : memref<63xf32, #tpu.memory_space<smem>>
    %363 = vector.broadcast %362 : f32 to vector<2x1x18x18xf32>
    %364 = arith.mulf %193, %363 : vector<2x1x18x18xf32>
    %365 = arith.addf %361, %364 : vector<2x1x18x18xf32>
    %c14_57 = arith.constant 14 : index
    %366 = memref.load %arg2[%c14_57] : memref<63xf32, #tpu.memory_space<smem>>
    %367 = vector.broadcast %366 : f32 to vector<2x1x18x18xf32>
    %368 = arith.mulf %194, %367 : vector<2x1x18x18xf32>
    %369 = arith.addf %365, %368 : vector<2x1x18x18xf32>
    %c15_58 = arith.constant 15 : index
    %370 = memref.load %arg2[%c15_58] : memref<63xf32, #tpu.memory_space<smem>>
    %371 = vector.broadcast %370 : f32 to vector<2x1x18x18xf32>
    %372 = arith.mulf %195, %371 : vector<2x1x18x18xf32>
    %373 = arith.addf %369, %372 : vector<2x1x18x18xf32>
    %c16_59 = arith.constant 16 : index
    %374 = memref.load %arg2[%c16_59] : memref<63xf32, #tpu.memory_space<smem>>
    %375 = vector.broadcast %374 : f32 to vector<2x1x18x18xf32>
    %376 = arith.mulf %196, %375 : vector<2x1x18x18xf32>
    %377 = arith.addf %373, %376 : vector<2x1x18x18xf32>
    %c17_60 = arith.constant 17 : index
    %378 = memref.load %arg2[%c17_60] : memref<63xf32, #tpu.memory_space<smem>>
    %379 = vector.broadcast %378 : f32 to vector<2x1x18x18xf32>
    %380 = arith.mulf %197, %379 : vector<2x1x18x18xf32>
    %381 = arith.addf %377, %380 : vector<2x1x18x18xf32>
    %c30 = arith.constant 30 : index
    %382 = memref.load %arg2[%c30] : memref<63xf32, #tpu.memory_space<smem>>
    %383 = vector.broadcast %382 : f32 to vector<2x1x18x18xf32>
    %384 = arith.mulf %192, %383 : vector<2x1x18x18xf32>
    %c31 = arith.constant 31 : index
    %385 = memref.load %arg2[%c31] : memref<63xf32, #tpu.memory_space<smem>>
    %386 = vector.broadcast %385 : f32 to vector<2x1x18x18xf32>
    %387 = arith.mulf %193, %386 : vector<2x1x18x18xf32>
    %388 = arith.addf %384, %387 : vector<2x1x18x18xf32>
    %c32 = arith.constant 32 : index
    %389 = memref.load %arg2[%c32] : memref<63xf32, #tpu.memory_space<smem>>
    %390 = vector.broadcast %389 : f32 to vector<2x1x18x18xf32>
    %391 = arith.mulf %194, %390 : vector<2x1x18x18xf32>
    %392 = arith.addf %388, %391 : vector<2x1x18x18xf32>
    %c39 = arith.constant 39 : index
    %393 = memref.load %arg2[%c39] : memref<63xf32, #tpu.memory_space<smem>>
    %394 = vector.broadcast %393 : f32 to vector<2x1x18x18xf32>
    %395 = arith.mulf %190, %394 : vector<2x1x18x18xf32>
    %c40 = arith.constant 40 : index
    %396 = memref.load %arg2[%c40] : memref<63xf32, #tpu.memory_space<smem>>
    %397 = vector.broadcast %396 : f32 to vector<2x1x18x18xf32>
    %398 = arith.mulf %193, %397 : vector<2x1x18x18xf32>
    %399 = arith.addf %395, %398 : vector<2x1x18x18xf32>
    %c41 = arith.constant 41 : index
    %400 = memref.load %arg2[%c41] : memref<63xf32, #tpu.memory_space<smem>>
    %401 = vector.broadcast %400 : f32 to vector<2x1x18x18xf32>
    %402 = arith.mulf %196, %401 : vector<2x1x18x18xf32>
    %403 = arith.addf %399, %402 : vector<2x1x18x18xf32>
    %c46 = arith.constant 46 : index
    %404 = memref.load %arg2[%c46] : memref<63xf32, #tpu.memory_space<smem>>
    %c49 = arith.constant 49 : index
    %405 = memref.load %arg2[%c49] : memref<63xf32, #tpu.memory_space<smem>>
    %406 = vector.broadcast %29 : vector<1x1x18x18xf32> to vector<2x1x18x18xf32>
    %407 = arith.mulf %381, %406 : vector<2x1x18x18xf32>
    %408 = vector.shape_cast %407 : vector<2x1x18x18xf32> to vector<1x2x1x18x18xf32>
    %cst_61 = arith.constant dense<0.000000e+00> : vector<1xf32>
    %409 = vector.multi_reduction <add>, %408, %cst_61 [1, 2, 3, 4] : vector<1x2x1x18x18xf32> to vector<1xf32>
    %410 = vector.shape_cast %409 : vector<1xf32> to vector<1x1x1x1x1xf32>
    %411 = vector.extract %410[0, 0, 0, 0, 0] : f32 from vector<1x1x1x1x1xf32>
    %cst_62 = arith.constant 5.120000e+02 : f32
    %412 = arith.divf %411, %cst_62 : f32
    %413 = vector.broadcast %412 : f32 to vector<2x1x18x18xf32>
    %414 = arith.subf %407, %413 : vector<2x1x18x18xf32>
    %415 = vector.broadcast %29 : vector<1x1x18x18xf32> to vector<2x1x18x18xf32>
    %416 = arith.mulf %414, %415 : vector<2x1x18x18xf32>
    %417 = arith.mulf %416, %416 : vector<2x1x18x18xf32>
    %418 = vector.shape_cast %417 : vector<2x1x18x18xf32> to vector<1x2x1x18x18xf32>
    %cst_63 = arith.constant dense<0.000000e+00> : vector<1xf32>
    %419 = vector.multi_reduction <add>, %418, %cst_63 [1, 2, 3, 4] : vector<1x2x1x18x18xf32> to vector<1xf32>
    %420 = vector.shape_cast %419 : vector<1xf32> to vector<1x1x1x1x1xf32>
    %421 = vector.extract %420[0, 0, 0, 0, 0] : f32 from vector<1x1x1x1x1xf32>
    %cst_64 = arith.constant 5.120000e+02 : f32
    %422 = arith.divf %421, %cst_64 : f32
    %cst_65 = arith.constant 9.99999974E-6 : f32
    %423 = arith.addf %422, %cst_65 : f32
    %424 = math.rsqrt %423 : f32
    %425 = arith.mulf %404, %424 : f32
    %426 = vector.broadcast %425 : f32 to vector<2x1x18x18xf32>
    %427 = arith.mulf %416, %426 : vector<2x1x18x18xf32>
    %428 = vector.broadcast %405 : f32 to vector<2x1x18x18xf32>
    %429 = arith.addf %427, %428 : vector<2x1x18x18xf32>
    %cst_66 = arith.constant 0.000000e+00 : f32
    %430 = vector.broadcast %cst_66 : f32 to vector<2x1x18x18xf32>
    %431 = arith.maximumf %429, %430 : vector<2x1x18x18xf32>
    %432 = vector.broadcast %29 : vector<1x1x18x18xf32> to vector<2x1x18x18xf32>
    %433 = arith.mulf %431, %432 : vector<2x1x18x18xf32>
    %c52 = arith.constant 52 : index
    %434 = memref.load %arg2[%c52] : memref<63xf32, #tpu.memory_space<smem>>
    %c55 = arith.constant 55 : index
    %435 = memref.load %arg2[%c55] : memref<63xf32, #tpu.memory_space<smem>>
    %436 = vector.broadcast %29 : vector<1x1x18x18xf32> to vector<2x1x18x18xf32>
    %437 = arith.mulf %392, %436 : vector<2x1x18x18xf32>
    %438 = vector.shape_cast %437 : vector<2x1x18x18xf32> to vector<1x2x1x18x18xf32>
    %cst_67 = arith.constant dense<0.000000e+00> : vector<1xf32>
    %439 = vector.multi_reduction <add>, %438, %cst_67 [1, 2, 3, 4] : vector<1x2x1x18x18xf32> to vector<1xf32>
    %440 = vector.shape_cast %439 : vector<1xf32> to vector<1x1x1x1x1xf32>
    %441 = vector.extract %440[0, 0, 0, 0, 0] : f32 from vector<1x1x1x1x1xf32>
    %cst_68 = arith.constant 5.120000e+02 : f32
    %442 = arith.divf %441, %cst_68 : f32
    %443 = vector.broadcast %442 : f32 to vector<2x1x18x18xf32>
    %444 = arith.subf %437, %443 : vector<2x1x18x18xf32>
    %445 = vector.broadcast %29 : vector<1x1x18x18xf32> to vector<2x1x18x18xf32>
    %446 = arith.mulf %444, %445 : vector<2x1x18x18xf32>
    %447 = arith.mulf %446, %446 : vector<2x1x18x18xf32>
    %448 = vector.shape_cast %447 : vector<2x1x18x18xf32> to vector<1x2x1x18x18xf32>
    %cst_69 = arith.constant dense<0.000000e+00> : vector<1xf32>
    %449 = vector.multi_reduction <add>, %448, %cst_69 [1, 2, 3, 4] : vector<1x2x1x18x18xf32> to vector<1xf32>
    %450 = vector.shape_cast %449 : vector<1xf32> to vector<1x1x1x1x1xf32>
    %451 = vector.extract %450[0, 0, 0, 0, 0] : f32 from vector<1x1x1x1x1xf32>
    %cst_70 = arith.constant 5.120000e+02 : f32
    %452 = arith.divf %451, %cst_70 : f32
    %cst_71 = arith.constant 9.99999974E-6 : f32
    %453 = arith.addf %452, %cst_71 : f32
    %454 = math.rsqrt %453 : f32
    %455 = arith.mulf %434, %454 : f32
    %456 = vector.broadcast %455 : f32 to vector<2x1x18x18xf32>
    %457 = arith.mulf %446, %456 : vector<2x1x18x18xf32>
    %458 = vector.broadcast %435 : f32 to vector<2x1x18x18xf32>
    %459 = arith.addf %457, %458 : vector<2x1x18x18xf32>
    %cst_72 = arith.constant 0.000000e+00 : f32
    %460 = vector.broadcast %cst_72 : f32 to vector<2x1x18x18xf32>
    %461 = arith.maximumf %459, %460 : vector<2x1x18x18xf32>
    %462 = vector.broadcast %29 : vector<1x1x18x18xf32> to vector<2x1x18x18xf32>
    %463 = arith.mulf %461, %462 : vector<2x1x18x18xf32>
    %464 = arith.addf %433, %463 : vector<2x1x18x18xf32>
    %c58 = arith.constant 58 : index
    %465 = memref.load %arg2[%c58] : memref<63xf32, #tpu.memory_space<smem>>
    %c61 = arith.constant 61 : index
    %466 = memref.load %arg2[%c61] : memref<63xf32, #tpu.memory_space<smem>>
    %467 = vector.broadcast %29 : vector<1x1x18x18xf32> to vector<2x1x18x18xf32>
    %468 = arith.mulf %403, %467 : vector<2x1x18x18xf32>
    %469 = vector.shape_cast %468 : vector<2x1x18x18xf32> to vector<1x2x1x18x18xf32>
    %cst_73 = arith.constant dense<0.000000e+00> : vector<1xf32>
    %470 = vector.multi_reduction <add>, %469, %cst_73 [1, 2, 3, 4] : vector<1x2x1x18x18xf32> to vector<1xf32>
    %471 = vector.shape_cast %470 : vector<1xf32> to vector<1x1x1x1x1xf32>
    %472 = vector.extract %471[0, 0, 0, 0, 0] : f32 from vector<1x1x1x1x1xf32>
    %cst_74 = arith.constant 5.120000e+02 : f32
    %473 = arith.divf %472, %cst_74 : f32
    %474 = vector.broadcast %473 : f32 to vector<2x1x18x18xf32>
    %475 = arith.subf %468, %474 : vector<2x1x18x18xf32>
    %476 = vector.broadcast %29 : vector<1x1x18x18xf32> to vector<2x1x18x18xf32>
    %477 = arith.mulf %475, %476 : vector<2x1x18x18xf32>
    %478 = arith.mulf %477, %477 : vector<2x1x18x18xf32>
    %479 = vector.shape_cast %478 : vector<2x1x18x18xf32> to vector<1x2x1x18x18xf32>
    %cst_75 = arith.constant dense<0.000000e+00> : vector<1xf32>
    %480 = vector.multi_reduction <add>, %479, %cst_75 [1, 2, 3, 4] : vector<1x2x1x18x18xf32> to vector<1xf32>
    %481 = vector.shape_cast %480 : vector<1xf32> to vector<1x1x1x1x1xf32>
    %482 = vector.extract %481[0, 0, 0, 0, 0] : f32 from vector<1x1x1x1x1xf32>
    %cst_76 = arith.constant 5.120000e+02 : f32
    %483 = arith.divf %482, %cst_76 : f32
    %cst_77 = arith.constant 9.99999974E-6 : f32
    %484 = arith.addf %483, %cst_77 : f32
    %485 = math.rsqrt %484 : f32
    %486 = arith.mulf %465, %485 : f32
    %487 = vector.broadcast %486 : f32 to vector<2x1x18x18xf32>
    %488 = arith.mulf %477, %487 : vector<2x1x18x18xf32>
    %489 = vector.broadcast %466 : f32 to vector<2x1x18x18xf32>
    %490 = arith.addf %488, %489 : vector<2x1x18x18xf32>
    %cst_78 = arith.constant 0.000000e+00 : f32
    %491 = vector.broadcast %cst_78 : f32 to vector<2x1x18x18xf32>
    %492 = arith.maximumf %490, %491 : vector<2x1x18x18xf32>
    %493 = vector.broadcast %29 : vector<1x1x18x18xf32> to vector<2x1x18x18xf32>
    %494 = arith.mulf %492, %493 : vector<2x1x18x18xf32>
    %495 = arith.addf %464, %494 : vector<2x1x18x18xf32>
    %c18_79 = arith.constant 18 : index
    %496 = memref.load %arg2[%c18_79] : memref<63xf32, #tpu.memory_space<smem>>
    %497 = vector.broadcast %496 : f32 to vector<2x1x18x18xf32>
    %498 = arith.mulf %189, %497 : vector<2x1x18x18xf32>
    %c19_80 = arith.constant 19 : index
    %499 = memref.load %arg2[%c19_80] : memref<63xf32, #tpu.memory_space<smem>>
    %500 = vector.broadcast %499 : f32 to vector<2x1x18x18xf32>
    %501 = arith.mulf %190, %500 : vector<2x1x18x18xf32>
    %502 = arith.addf %498, %501 : vector<2x1x18x18xf32>
    %c20_81 = arith.constant 20 : index
    %503 = memref.load %arg2[%c20_81] : memref<63xf32, #tpu.memory_space<smem>>
    %504 = vector.broadcast %503 : f32 to vector<2x1x18x18xf32>
    %505 = arith.mulf %191, %504 : vector<2x1x18x18xf32>
    %506 = arith.addf %502, %505 : vector<2x1x18x18xf32>
    %c21 = arith.constant 21 : index
    %507 = memref.load %arg2[%c21] : memref<63xf32, #tpu.memory_space<smem>>
    %508 = vector.broadcast %507 : f32 to vector<2x1x18x18xf32>
    %509 = arith.mulf %192, %508 : vector<2x1x18x18xf32>
    %510 = arith.addf %506, %509 : vector<2x1x18x18xf32>
    %c22 = arith.constant 22 : index
    %511 = memref.load %arg2[%c22] : memref<63xf32, #tpu.memory_space<smem>>
    %512 = vector.broadcast %511 : f32 to vector<2x1x18x18xf32>
    %513 = arith.mulf %193, %512 : vector<2x1x18x18xf32>
    %514 = arith.addf %510, %513 : vector<2x1x18x18xf32>
    %c23 = arith.constant 23 : index
    %515 = memref.load %arg2[%c23] : memref<63xf32, #tpu.memory_space<smem>>
    %516 = vector.broadcast %515 : f32 to vector<2x1x18x18xf32>
    %517 = arith.mulf %194, %516 : vector<2x1x18x18xf32>
    %518 = arith.addf %514, %517 : vector<2x1x18x18xf32>
    %c24 = arith.constant 24 : index
    %519 = memref.load %arg2[%c24] : memref<63xf32, #tpu.memory_space<smem>>
    %520 = vector.broadcast %519 : f32 to vector<2x1x18x18xf32>
    %521 = arith.mulf %195, %520 : vector<2x1x18x18xf32>
    %522 = arith.addf %518, %521 : vector<2x1x18x18xf32>
    %c25 = arith.constant 25 : index
    %523 = memref.load %arg2[%c25] : memref<63xf32, #tpu.memory_space<smem>>
    %524 = vector.broadcast %523 : f32 to vector<2x1x18x18xf32>
    %525 = arith.mulf %196, %524 : vector<2x1x18x18xf32>
    %526 = arith.addf %522, %525 : vector<2x1x18x18xf32>
    %c26 = arith.constant 26 : index
    %527 = memref.load %arg2[%c26] : memref<63xf32, #tpu.memory_space<smem>>
    %528 = vector.broadcast %527 : f32 to vector<2x1x18x18xf32>
    %529 = arith.mulf %197, %528 : vector<2x1x18x18xf32>
    %530 = arith.addf %526, %529 : vector<2x1x18x18xf32>
    %c33 = arith.constant 33 : index
    %531 = memref.load %arg2[%c33] : memref<63xf32, #tpu.memory_space<smem>>
    %532 = vector.broadcast %531 : f32 to vector<2x1x18x18xf32>
    %533 = arith.mulf %192, %532 : vector<2x1x18x18xf32>
    %c34 = arith.constant 34 : index
    %534 = memref.load %arg2[%c34] : memref<63xf32, #tpu.memory_space<smem>>
    %535 = vector.broadcast %534 : f32 to vector<2x1x18x18xf32>
    %536 = arith.mulf %193, %535 : vector<2x1x18x18xf32>
    %537 = arith.addf %533, %536 : vector<2x1x18x18xf32>
    %c35 = arith.constant 35 : index
    %538 = memref.load %arg2[%c35] : memref<63xf32, #tpu.memory_space<smem>>
    %539 = vector.broadcast %538 : f32 to vector<2x1x18x18xf32>
    %540 = arith.mulf %194, %539 : vector<2x1x18x18xf32>
    %541 = arith.addf %537, %540 : vector<2x1x18x18xf32>
    %c42 = arith.constant 42 : index
    %542 = memref.load %arg2[%c42] : memref<63xf32, #tpu.memory_space<smem>>
    %543 = vector.broadcast %542 : f32 to vector<2x1x18x18xf32>
    %544 = arith.mulf %190, %543 : vector<2x1x18x18xf32>
    %c43 = arith.constant 43 : index
    %545 = memref.load %arg2[%c43] : memref<63xf32, #tpu.memory_space<smem>>
    %546 = vector.broadcast %545 : f32 to vector<2x1x18x18xf32>
    %547 = arith.mulf %193, %546 : vector<2x1x18x18xf32>
    %548 = arith.addf %544, %547 : vector<2x1x18x18xf32>
    %c44 = arith.constant 44 : index
    %549 = memref.load %arg2[%c44] : memref<63xf32, #tpu.memory_space<smem>>
    %550 = vector.broadcast %549 : f32 to vector<2x1x18x18xf32>
    %551 = arith.mulf %196, %550 : vector<2x1x18x18xf32>
    %552 = arith.addf %548, %551 : vector<2x1x18x18xf32>
    %c47 = arith.constant 47 : index
    %553 = memref.load %arg2[%c47] : memref<63xf32, #tpu.memory_space<smem>>
    %c50 = arith.constant 50 : index
    %554 = memref.load %arg2[%c50] : memref<63xf32, #tpu.memory_space<smem>>
    %555 = vector.broadcast %29 : vector<1x1x18x18xf32> to vector<2x1x18x18xf32>
    %556 = arith.mulf %530, %555 : vector<2x1x18x18xf32>
    %557 = vector.shape_cast %556 : vector<2x1x18x18xf32> to vector<1x2x1x18x18xf32>
    %cst_82 = arith.constant dense<0.000000e+00> : vector<1xf32>
    %558 = vector.multi_reduction <add>, %557, %cst_82 [1, 2, 3, 4] : vector<1x2x1x18x18xf32> to vector<1xf32>
    %559 = vector.shape_cast %558 : vector<1xf32> to vector<1x1x1x1x1xf32>
    %560 = vector.extract %559[0, 0, 0, 0, 0] : f32 from vector<1x1x1x1x1xf32>
    %cst_83 = arith.constant 5.120000e+02 : f32
    %561 = arith.divf %560, %cst_83 : f32
    %562 = vector.broadcast %561 : f32 to vector<2x1x18x18xf32>
    %563 = arith.subf %556, %562 : vector<2x1x18x18xf32>
    %564 = vector.broadcast %29 : vector<1x1x18x18xf32> to vector<2x1x18x18xf32>
    %565 = arith.mulf %563, %564 : vector<2x1x18x18xf32>
    %566 = arith.mulf %565, %565 : vector<2x1x18x18xf32>
    %567 = vector.shape_cast %566 : vector<2x1x18x18xf32> to vector<1x2x1x18x18xf32>
    %cst_84 = arith.constant dense<0.000000e+00> : vector<1xf32>
    %568 = vector.multi_reduction <add>, %567, %cst_84 [1, 2, 3, 4] : vector<1x2x1x18x18xf32> to vector<1xf32>
    %569 = vector.shape_cast %568 : vector<1xf32> to vector<1x1x1x1x1xf32>
    %570 = vector.extract %569[0, 0, 0, 0, 0] : f32 from vector<1x1x1x1x1xf32>
    %cst_85 = arith.constant 5.120000e+02 : f32
    %571 = arith.divf %570, %cst_85 : f32
    %cst_86 = arith.constant 9.99999974E-6 : f32
    %572 = arith.addf %571, %cst_86 : f32
    %573 = math.rsqrt %572 : f32
    %574 = arith.mulf %553, %573 : f32
    %575 = vector.broadcast %574 : f32 to vector<2x1x18x18xf32>
    %576 = arith.mulf %565, %575 : vector<2x1x18x18xf32>
    %577 = vector.broadcast %554 : f32 to vector<2x1x18x18xf32>
    %578 = arith.addf %576, %577 : vector<2x1x18x18xf32>
    %cst_87 = arith.constant 0.000000e+00 : f32
    %579 = vector.broadcast %cst_87 : f32 to vector<2x1x18x18xf32>
    %580 = arith.maximumf %578, %579 : vector<2x1x18x18xf32>
    %581 = vector.broadcast %29 : vector<1x1x18x18xf32> to vector<2x1x18x18xf32>
    %582 = arith.mulf %580, %581 : vector<2x1x18x18xf32>
    %c53 = arith.constant 53 : index
    %583 = memref.load %arg2[%c53] : memref<63xf32, #tpu.memory_space<smem>>
    %c56 = arith.constant 56 : index
    %584 = memref.load %arg2[%c56] : memref<63xf32, #tpu.memory_space<smem>>
    %585 = vector.broadcast %29 : vector<1x1x18x18xf32> to vector<2x1x18x18xf32>
    %586 = arith.mulf %541, %585 : vector<2x1x18x18xf32>
    %587 = vector.shape_cast %586 : vector<2x1x18x18xf32> to vector<1x2x1x18x18xf32>
    %cst_88 = arith.constant dense<0.000000e+00> : vector<1xf32>
    %588 = vector.multi_reduction <add>, %587, %cst_88 [1, 2, 3, 4] : vector<1x2x1x18x18xf32> to vector<1xf32>
    %589 = vector.shape_cast %588 : vector<1xf32> to vector<1x1x1x1x1xf32>
    %590 = vector.extract %589[0, 0, 0, 0, 0] : f32 from vector<1x1x1x1x1xf32>
    %cst_89 = arith.constant 5.120000e+02 : f32
    %591 = arith.divf %590, %cst_89 : f32
    %592 = vector.broadcast %591 : f32 to vector<2x1x18x18xf32>
    %593 = arith.subf %586, %592 : vector<2x1x18x18xf32>
    %594 = vector.broadcast %29 : vector<1x1x18x18xf32> to vector<2x1x18x18xf32>
    %595 = arith.mulf %593, %594 : vector<2x1x18x18xf32>
    %596 = arith.mulf %595, %595 : vector<2x1x18x18xf32>
    %597 = vector.shape_cast %596 : vector<2x1x18x18xf32> to vector<1x2x1x18x18xf32>
    %cst_90 = arith.constant dense<0.000000e+00> : vector<1xf32>
    %598 = vector.multi_reduction <add>, %597, %cst_90 [1, 2, 3, 4] : vector<1x2x1x18x18xf32> to vector<1xf32>
    %599 = vector.shape_cast %598 : vector<1xf32> to vector<1x1x1x1x1xf32>
    %600 = vector.extract %599[0, 0, 0, 0, 0] : f32 from vector<1x1x1x1x1xf32>
    %cst_91 = arith.constant 5.120000e+02 : f32
    %601 = arith.divf %600, %cst_91 : f32
    %cst_92 = arith.constant 9.99999974E-6 : f32
    %602 = arith.addf %601, %cst_92 : f32
    %603 = math.rsqrt %602 : f32
    %604 = arith.mulf %583, %603 : f32
    %605 = vector.broadcast %604 : f32 to vector<2x1x18x18xf32>
    %606 = arith.mulf %595, %605 : vector<2x1x18x18xf32>
    %607 = vector.broadcast %584 : f32 to vector<2x1x18x18xf32>
    %608 = arith.addf %606, %607 : vector<2x1x18x18xf32>
    %cst_93 = arith.constant 0.000000e+00 : f32
    %609 = vector.broadcast %cst_93 : f32 to vector<2x1x18x18xf32>
    %610 = arith.maximumf %608, %609 : vector<2x1x18x18xf32>
    %611 = vector.broadcast %29 : vector<1x1x18x18xf32> to vector<2x1x18x18xf32>
    %612 = arith.mulf %610, %611 : vector<2x1x18x18xf32>
    %613 = arith.addf %582, %612 : vector<2x1x18x18xf32>
    %c59 = arith.constant 59 : index
    %614 = memref.load %arg2[%c59] : memref<63xf32, #tpu.memory_space<smem>>
    %c62 = arith.constant 62 : index
    %615 = memref.load %arg2[%c62] : memref<63xf32, #tpu.memory_space<smem>>
    %616 = vector.broadcast %29 : vector<1x1x18x18xf32> to vector<2x1x18x18xf32>
    %617 = arith.mulf %552, %616 : vector<2x1x18x18xf32>
    %618 = vector.shape_cast %617 : vector<2x1x18x18xf32> to vector<1x2x1x18x18xf32>
    %cst_94 = arith.constant dense<0.000000e+00> : vector<1xf32>
    %619 = vector.multi_reduction <add>, %618, %cst_94 [1, 2, 3, 4] : vector<1x2x1x18x18xf32> to vector<1xf32>
    %620 = vector.shape_cast %619 : vector<1xf32> to vector<1x1x1x1x1xf32>
    %621 = vector.extract %620[0, 0, 0, 0, 0] : f32 from vector<1x1x1x1x1xf32>
    %cst_95 = arith.constant 5.120000e+02 : f32
    %622 = arith.divf %621, %cst_95 : f32
    %623 = vector.broadcast %622 : f32 to vector<2x1x18x18xf32>
    %624 = arith.subf %617, %623 : vector<2x1x18x18xf32>
    %625 = vector.broadcast %29 : vector<1x1x18x18xf32> to vector<2x1x18x18xf32>
    %626 = arith.mulf %624, %625 : vector<2x1x18x18xf32>
    %627 = arith.mulf %626, %626 : vector<2x1x18x18xf32>
    %628 = vector.shape_cast %627 : vector<2x1x18x18xf32> to vector<1x2x1x18x18xf32>
    %cst_96 = arith.constant dense<0.000000e+00> : vector<1xf32>
    %629 = vector.multi_reduction <add>, %628, %cst_96 [1, 2, 3, 4] : vector<1x2x1x18x18xf32> to vector<1xf32>
    %630 = vector.shape_cast %629 : vector<1xf32> to vector<1x1x1x1x1xf32>
    %631 = vector.extract %630[0, 0, 0, 0, 0] : f32 from vector<1x1x1x1x1xf32>
    %cst_97 = arith.constant 5.120000e+02 : f32
    %632 = arith.divf %631, %cst_97 : f32
    %cst_98 = arith.constant 9.99999974E-6 : f32
    %633 = arith.addf %632, %cst_98 : f32
    %634 = math.rsqrt %633 : f32
    %635 = arith.mulf %614, %634 : f32
    %636 = vector.broadcast %635 : f32 to vector<2x1x18x18xf32>
    %637 = arith.mulf %626, %636 : vector<2x1x18x18xf32>
    %638 = vector.broadcast %615 : f32 to vector<2x1x18x18xf32>
    %639 = arith.addf %637, %638 : vector<2x1x18x18xf32>
    %cst_99 = arith.constant 0.000000e+00 : f32
    %640 = vector.broadcast %cst_99 : f32 to vector<2x1x18x18xf32>
    %641 = arith.maximumf %639, %640 : vector<2x1x18x18xf32>
    %642 = vector.broadcast %29 : vector<1x1x18x18xf32> to vector<2x1x18x18xf32>
    %643 = arith.mulf %641, %642 : vector<2x1x18x18xf32>
    %644 = arith.addf %613, %643 : vector<2x1x18x18xf32>
    %645 = vector.broadcast %29 : vector<1x1x18x18xf32> to vector<2x1x18x18xf32>
    %646 = arith.mulf %346, %645 : vector<2x1x18x18xf32>
    %647 = vector.shape_cast %646 : vector<2x1x18x18xf32> to vector<1x2x1x18x18xf32>
    %cst_100 = arith.constant dense<0.000000e+00> : vector<1xf32>
    %648 = vector.multi_reduction <add>, %647, %cst_100 [1, 2, 3, 4] : vector<1x2x1x18x18xf32> to vector<1xf32>
    %649 = vector.shape_cast %648 : vector<1xf32> to vector<1x1x1x1x1xf32>
    %650 = vector.extract %649[0, 0, 0, 0, 0] : f32 from vector<1x1x1x1x1xf32>
    %cst_101 = arith.constant 5.120000e+02 : f32
    %651 = arith.divf %650, %cst_101 : f32
    %652 = vector.broadcast %651 : f32 to vector<2x1x18x18xf32>
    %653 = arith.subf %646, %652 : vector<2x1x18x18xf32>
    %654 = vector.broadcast %29 : vector<1x1x18x18xf32> to vector<2x1x18x18xf32>
    %655 = arith.mulf %653, %654 : vector<2x1x18x18xf32>
    %656 = arith.mulf %655, %655 : vector<2x1x18x18xf32>
    %657 = vector.shape_cast %656 : vector<2x1x18x18xf32> to vector<1x2x1x18x18xf32>
    %cst_102 = arith.constant dense<0.000000e+00> : vector<1xf32>
    %658 = vector.multi_reduction <add>, %657, %cst_102 [1, 2, 3, 4] : vector<1x2x1x18x18xf32> to vector<1xf32>
    %659 = vector.shape_cast %658 : vector<1xf32> to vector<1x1x1x1x1xf32>
    %660 = vector.extract %659[0, 0, 0, 0, 0] : f32 from vector<1x1x1x1x1xf32>
    %cst_103 = arith.constant 5.120000e+02 : f32
    %661 = arith.divf %660, %cst_103 : f32
    %cst_104 = arith.constant 9.99999974E-6 : f32
    %662 = arith.addf %661, %cst_104 : f32
    %663 = math.rsqrt %662 : f32
    %cst_105 = arith.constant 1.000000e+00 : f32
    %664 = arith.mulf %cst_105, %663 : f32
    %665 = vector.broadcast %664 : f32 to vector<2x1x18x18xf32>
    %666 = arith.mulf %655, %665 : vector<2x1x18x18xf32>
    %cst_106 = arith.constant 0.000000e+00 : f32
    %667 = vector.broadcast %cst_106 : f32 to vector<2x1x18x18xf32>
    %668 = arith.addf %666, %667 : vector<2x1x18x18xf32>
    %cst_107 = arith.constant 0.000000e+00 : f32
    %669 = vector.broadcast %cst_107 : f32 to vector<2x1x18x18xf32>
    %670 = arith.maximumf %668, %669 : vector<2x1x18x18xf32>
    %671 = vector.broadcast %29 : vector<1x1x18x18xf32> to vector<2x1x18x18xf32>
    %672 = arith.mulf %670, %671 : vector<2x1x18x18xf32>
    %673 = vector.extract_strided_slice %672 {offsets = [0, 0, 1, 1], sizes = [2, 1, 16, 16], strides = [1, 1, 1, 1]} : vector<2x1x18x18xf32> to vector<2x1x16x16xf32>
    %674 = vector.broadcast %29 : vector<1x1x18x18xf32> to vector<2x1x18x18xf32>
    %675 = arith.mulf %644, %674 : vector<2x1x18x18xf32>
    %676 = vector.shape_cast %675 : vector<2x1x18x18xf32> to vector<1x2x1x18x18xf32>
    %cst_108 = arith.constant dense<0.000000e+00> : vector<1xf32>
    %677 = vector.multi_reduction <add>, %676, %cst_108 [1, 2, 3, 4] : vector<1x2x1x18x18xf32> to vector<1xf32>
    %678 = vector.shape_cast %677 : vector<1xf32> to vector<1x1x1x1x1xf32>
    %679 = vector.extract %678[0, 0, 0, 0, 0] : f32 from vector<1x1x1x1x1xf32>
    %cst_109 = arith.constant 5.120000e+02 : f32
    %680 = arith.divf %679, %cst_109 : f32
    %681 = vector.broadcast %680 : f32 to vector<2x1x18x18xf32>
    %682 = arith.subf %675, %681 : vector<2x1x18x18xf32>
    %683 = vector.broadcast %29 : vector<1x1x18x18xf32> to vector<2x1x18x18xf32>
    %684 = arith.mulf %682, %683 : vector<2x1x18x18xf32>
    %685 = arith.mulf %684, %684 : vector<2x1x18x18xf32>
    %686 = vector.shape_cast %685 : vector<2x1x18x18xf32> to vector<1x2x1x18x18xf32>
    %cst_110 = arith.constant dense<0.000000e+00> : vector<1xf32>
    %687 = vector.multi_reduction <add>, %686, %cst_110 [1, 2, 3, 4] : vector<1x2x1x18x18xf32> to vector<1xf32>
    %688 = vector.shape_cast %687 : vector<1xf32> to vector<1x1x1x1x1xf32>
    %689 = vector.extract %688[0, 0, 0, 0, 0] : f32 from vector<1x1x1x1x1xf32>
    %cst_111 = arith.constant 5.120000e+02 : f32
    %690 = arith.divf %689, %cst_111 : f32
    %cst_112 = arith.constant 9.99999974E-6 : f32
    %691 = arith.addf %690, %cst_112 : f32
    %692 = math.rsqrt %691 : f32
    %cst_113 = arith.constant 1.000000e+00 : f32
    %693 = arith.mulf %cst_113, %692 : f32
    %694 = vector.broadcast %693 : f32 to vector<2x1x18x18xf32>
    %695 = arith.mulf %684, %694 : vector<2x1x18x18xf32>
    %cst_114 = arith.constant 0.000000e+00 : f32
    %696 = vector.broadcast %cst_114 : f32 to vector<2x1x18x18xf32>
    %697 = arith.addf %695, %696 : vector<2x1x18x18xf32>
    %cst_115 = arith.constant 0.000000e+00 : f32
    %698 = vector.broadcast %cst_115 : f32 to vector<2x1x18x18xf32>
    %699 = arith.maximumf %697, %698 : vector<2x1x18x18xf32>
    %700 = vector.broadcast %29 : vector<1x1x18x18xf32> to vector<2x1x18x18xf32>
    %701 = arith.mulf %699, %700 : vector<2x1x18x18xf32>
    %702 = vector.extract_strided_slice %701 {offsets = [0, 0, 1, 1], sizes = [2, 1, 16, 16], strides = [1, 1, 1, 1]} : vector<2x1x18x18xf32> to vector<2x1x16x16xf32>
    %703 = vector.extract_strided_slice %495 {offsets = [0, 0, 0, 0], sizes = [2, 1, 16, 16], strides = [1, 1, 1, 1]} : vector<2x1x18x18xf32> to vector<2x1x16x16xf32>
    %704 = vector.extract_strided_slice %495 {offsets = [0, 0, 0, 1], sizes = [2, 1, 16, 16], strides = [1, 1, 1, 1]} : vector<2x1x18x18xf32> to vector<2x1x16x16xf32>
    %705 = vector.extract_strided_slice %495 {offsets = [0, 0, 0, 2], sizes = [2, 1, 16, 16], strides = [1, 1, 1, 1]} : vector<2x1x18x18xf32> to vector<2x1x16x16xf32>
    %706 = vector.extract_strided_slice %495 {offsets = [0, 0, 1, 0], sizes = [2, 1, 16, 16], strides = [1, 1, 1, 1]} : vector<2x1x18x18xf32> to vector<2x1x16x16xf32>
    %707 = vector.extract_strided_slice %495 {offsets = [0, 0, 1, 1], sizes = [2, 1, 16, 16], strides = [1, 1, 1, 1]} : vector<2x1x18x18xf32> to vector<2x1x16x16xf32>
    %708 = vector.extract_strided_slice %495 {offsets = [0, 0, 1, 2], sizes = [2, 1, 16, 16], strides = [1, 1, 1, 1]} : vector<2x1x18x18xf32> to vector<2x1x16x16xf32>
    %709 = vector.extract_strided_slice %495 {offsets = [0, 0, 2, 0], sizes = [2, 1, 16, 16], strides = [1, 1, 1, 1]} : vector<2x1x18x18xf32> to vector<2x1x16x16xf32>
    %710 = vector.extract_strided_slice %495 {offsets = [0, 0, 2, 1], sizes = [2, 1, 16, 16], strides = [1, 1, 1, 1]} : vector<2x1x18x18xf32> to vector<2x1x16x16xf32>
    %711 = vector.extract_strided_slice %495 {offsets = [0, 0, 2, 2], sizes = [2, 1, 16, 16], strides = [1, 1, 1, 1]} : vector<2x1x18x18xf32> to vector<2x1x16x16xf32>
    %c0_116 = arith.constant 0 : index
    %712 = memref.load %arg2[%c0_116] : memref<63xf32, #tpu.memory_space<smem>>
    %713 = vector.broadcast %712 : f32 to vector<2x1x16x16xf32>
    %714 = arith.mulf %703, %713 : vector<2x1x16x16xf32>
    %c1_117 = arith.constant 1 : index
    %715 = memref.load %arg2[%c1_117] : memref<63xf32, #tpu.memory_space<smem>>
    %716 = vector.broadcast %715 : f32 to vector<2x1x16x16xf32>
    %717 = arith.mulf %704, %716 : vector<2x1x16x16xf32>
    %718 = arith.addf %714, %717 : vector<2x1x16x16xf32>
    %c2_118 = arith.constant 2 : index
    %719 = memref.load %arg2[%c2_118] : memref<63xf32, #tpu.memory_space<smem>>
    %720 = vector.broadcast %719 : f32 to vector<2x1x16x16xf32>
    %721 = arith.mulf %705, %720 : vector<2x1x16x16xf32>
    %722 = arith.addf %718, %721 : vector<2x1x16x16xf32>
    %c3_119 = arith.constant 3 : index
    %723 = memref.load %arg2[%c3_119] : memref<63xf32, #tpu.memory_space<smem>>
    %724 = vector.broadcast %723 : f32 to vector<2x1x16x16xf32>
    %725 = arith.mulf %706, %724 : vector<2x1x16x16xf32>
    %726 = arith.addf %722, %725 : vector<2x1x16x16xf32>
    %c4_120 = arith.constant 4 : index
    %727 = memref.load %arg2[%c4_120] : memref<63xf32, #tpu.memory_space<smem>>
    %728 = vector.broadcast %727 : f32 to vector<2x1x16x16xf32>
    %729 = arith.mulf %707, %728 : vector<2x1x16x16xf32>
    %730 = arith.addf %726, %729 : vector<2x1x16x16xf32>
    %c5_121 = arith.constant 5 : index
    %731 = memref.load %arg2[%c5_121] : memref<63xf32, #tpu.memory_space<smem>>
    %732 = vector.broadcast %731 : f32 to vector<2x1x16x16xf32>
    %733 = arith.mulf %708, %732 : vector<2x1x16x16xf32>
    %734 = arith.addf %730, %733 : vector<2x1x16x16xf32>
    %c6_122 = arith.constant 6 : index
    %735 = memref.load %arg2[%c6_122] : memref<63xf32, #tpu.memory_space<smem>>
    %736 = vector.broadcast %735 : f32 to vector<2x1x16x16xf32>
    %737 = arith.mulf %709, %736 : vector<2x1x16x16xf32>
    %738 = arith.addf %734, %737 : vector<2x1x16x16xf32>
    %c7_123 = arith.constant 7 : index
    %739 = memref.load %arg2[%c7_123] : memref<63xf32, #tpu.memory_space<smem>>
    %740 = vector.broadcast %739 : f32 to vector<2x1x16x16xf32>
    %741 = arith.mulf %710, %740 : vector<2x1x16x16xf32>
    %742 = arith.addf %738, %741 : vector<2x1x16x16xf32>
    %c8_124 = arith.constant 8 : index
    %743 = memref.load %arg2[%c8_124] : memref<63xf32, #tpu.memory_space<smem>>
    %744 = vector.broadcast %743 : f32 to vector<2x1x16x16xf32>
    %745 = arith.mulf %711, %744 : vector<2x1x16x16xf32>
    %746 = arith.addf %742, %745 : vector<2x1x16x16xf32>
    %c27_125 = arith.constant 27 : index
    %747 = memref.load %arg2[%c27_125] : memref<63xf32, #tpu.memory_space<smem>>
    %748 = vector.broadcast %747 : f32 to vector<2x1x16x16xf32>
    %749 = arith.mulf %706, %748 : vector<2x1x16x16xf32>
    %c28_126 = arith.constant 28 : index
    %750 = memref.load %arg2[%c28_126] : memref<63xf32, #tpu.memory_space<smem>>
    %751 = vector.broadcast %750 : f32 to vector<2x1x16x16xf32>
    %752 = arith.mulf %707, %751 : vector<2x1x16x16xf32>
    %753 = arith.addf %749, %752 : vector<2x1x16x16xf32>
    %c29_127 = arith.constant 29 : index
    %754 = memref.load %arg2[%c29_127] : memref<63xf32, #tpu.memory_space<smem>>
    %755 = vector.broadcast %754 : f32 to vector<2x1x16x16xf32>
    %756 = arith.mulf %708, %755 : vector<2x1x16x16xf32>
    %757 = arith.addf %753, %756 : vector<2x1x16x16xf32>
    %c36_128 = arith.constant 36 : index
    %758 = memref.load %arg2[%c36_128] : memref<63xf32, #tpu.memory_space<smem>>
    %759 = vector.broadcast %758 : f32 to vector<2x1x16x16xf32>
    %760 = arith.mulf %704, %759 : vector<2x1x16x16xf32>
    %c37_129 = arith.constant 37 : index
    %761 = memref.load %arg2[%c37_129] : memref<63xf32, #tpu.memory_space<smem>>
    %762 = vector.broadcast %761 : f32 to vector<2x1x16x16xf32>
    %763 = arith.mulf %707, %762 : vector<2x1x16x16xf32>
    %764 = arith.addf %760, %763 : vector<2x1x16x16xf32>
    %c38_130 = arith.constant 38 : index
    %765 = memref.load %arg2[%c38_130] : memref<63xf32, #tpu.memory_space<smem>>
    %766 = vector.broadcast %765 : f32 to vector<2x1x16x16xf32>
    %767 = arith.mulf %710, %766 : vector<2x1x16x16xf32>
    %768 = arith.addf %764, %767 : vector<2x1x16x16xf32>
    %c45_131 = arith.constant 45 : index
    %769 = memref.load %arg2[%c45_131] : memref<63xf32, #tpu.memory_space<smem>>
    %c48_132 = arith.constant 48 : index
    %770 = memref.load %arg2[%c48_132] : memref<63xf32, #tpu.memory_space<smem>>
    %cst_133 = arith.constant 1.000000e+00 : f32
    %771 = vector.broadcast %cst_133 : f32 to vector<2x1x16x16xf32>
    %772 = arith.mulf %746, %771 : vector<2x1x16x16xf32>
    %773 = vector.shape_cast %772 : vector<2x1x16x16xf32> to vector<1x2x1x16x16xf32>
    %cst_134 = arith.constant dense<0.000000e+00> : vector<1xf32>
    %774 = vector.multi_reduction <add>, %773, %cst_134 [1, 2, 3, 4] : vector<1x2x1x16x16xf32> to vector<1xf32>
    %775 = vector.shape_cast %774 : vector<1xf32> to vector<1x1x1x1x1xf32>
    %776 = vector.extract %775[0, 0, 0, 0, 0] : f32 from vector<1x1x1x1x1xf32>
    %cst_135 = arith.constant 5.120000e+02 : f32
    %777 = arith.divf %776, %cst_135 : f32
    %778 = vector.broadcast %777 : f32 to vector<2x1x16x16xf32>
    %779 = arith.subf %772, %778 : vector<2x1x16x16xf32>
    %cst_136 = arith.constant 1.000000e+00 : f32
    %780 = vector.broadcast %cst_136 : f32 to vector<2x1x16x16xf32>
    %781 = arith.mulf %779, %780 : vector<2x1x16x16xf32>
    %782 = arith.mulf %781, %781 : vector<2x1x16x16xf32>
    %783 = vector.shape_cast %782 : vector<2x1x16x16xf32> to vector<1x2x1x16x16xf32>
    %cst_137 = arith.constant dense<0.000000e+00> : vector<1xf32>
    %784 = vector.multi_reduction <add>, %783, %cst_137 [1, 2, 3, 4] : vector<1x2x1x16x16xf32> to vector<1xf32>
    %785 = vector.shape_cast %784 : vector<1xf32> to vector<1x1x1x1x1xf32>
    %786 = vector.extract %785[0, 0, 0, 0, 0] : f32 from vector<1x1x1x1x1xf32>
    %cst_138 = arith.constant 5.120000e+02 : f32
    %787 = arith.divf %786, %cst_138 : f32
    %cst_139 = arith.constant 9.99999974E-6 : f32
    %788 = arith.addf %787, %cst_139 : f32
    %789 = math.rsqrt %788 : f32
    %790 = arith.mulf %769, %789 : f32
    %791 = vector.broadcast %790 : f32 to vector<2x1x16x16xf32>
    %792 = arith.mulf %781, %791 : vector<2x1x16x16xf32>
    %793 = vector.broadcast %770 : f32 to vector<2x1x16x16xf32>
    %794 = arith.addf %792, %793 : vector<2x1x16x16xf32>
    %cst_140 = arith.constant 0.000000e+00 : f32
    %795 = vector.broadcast %cst_140 : f32 to vector<2x1x16x16xf32>
    %796 = arith.maximumf %794, %795 : vector<2x1x16x16xf32>
    %cst_141 = arith.constant 1.000000e+00 : f32
    %797 = vector.broadcast %cst_141 : f32 to vector<2x1x16x16xf32>
    %798 = arith.mulf %796, %797 : vector<2x1x16x16xf32>
    %c51_142 = arith.constant 51 : index
    %799 = memref.load %arg2[%c51_142] : memref<63xf32, #tpu.memory_space<smem>>
    %c54_143 = arith.constant 54 : index
    %800 = memref.load %arg2[%c54_143] : memref<63xf32, #tpu.memory_space<smem>>
    %cst_144 = arith.constant 1.000000e+00 : f32
    %801 = vector.broadcast %cst_144 : f32 to vector<2x1x16x16xf32>
    %802 = arith.mulf %757, %801 : vector<2x1x16x16xf32>
    %803 = vector.shape_cast %802 : vector<2x1x16x16xf32> to vector<1x2x1x16x16xf32>
    %cst_145 = arith.constant dense<0.000000e+00> : vector<1xf32>
    %804 = vector.multi_reduction <add>, %803, %cst_145 [1, 2, 3, 4] : vector<1x2x1x16x16xf32> to vector<1xf32>
    %805 = vector.shape_cast %804 : vector<1xf32> to vector<1x1x1x1x1xf32>
    %806 = vector.extract %805[0, 0, 0, 0, 0] : f32 from vector<1x1x1x1x1xf32>
    %cst_146 = arith.constant 5.120000e+02 : f32
    %807 = arith.divf %806, %cst_146 : f32
    %808 = vector.broadcast %807 : f32 to vector<2x1x16x16xf32>
    %809 = arith.subf %802, %808 : vector<2x1x16x16xf32>
    %cst_147 = arith.constant 1.000000e+00 : f32
    %810 = vector.broadcast %cst_147 : f32 to vector<2x1x16x16xf32>
    %811 = arith.mulf %809, %810 : vector<2x1x16x16xf32>
    %812 = arith.mulf %811, %811 : vector<2x1x16x16xf32>
    %813 = vector.shape_cast %812 : vector<2x1x16x16xf32> to vector<1x2x1x16x16xf32>
    %cst_148 = arith.constant dense<0.000000e+00> : vector<1xf32>
    %814 = vector.multi_reduction <add>, %813, %cst_148 [1, 2, 3, 4] : vector<1x2x1x16x16xf32> to vector<1xf32>
    %815 = vector.shape_cast %814 : vector<1xf32> to vector<1x1x1x1x1xf32>
    %816 = vector.extract %815[0, 0, 0, 0, 0] : f32 from vector<1x1x1x1x1xf32>
    %cst_149 = arith.constant 5.120000e+02 : f32
    %817 = arith.divf %816, %cst_149 : f32
    %cst_150 = arith.constant 9.99999974E-6 : f32
    %818 = arith.addf %817, %cst_150 : f32
    %819 = math.rsqrt %818 : f32
    %820 = arith.mulf %799, %819 : f32
    %821 = vector.broadcast %820 : f32 to vector<2x1x16x16xf32>
    %822 = arith.mulf %811, %821 : vector<2x1x16x16xf32>
    %823 = vector.broadcast %800 : f32 to vector<2x1x16x16xf32>
    %824 = arith.addf %822, %823 : vector<2x1x16x16xf32>
    %cst_151 = arith.constant 0.000000e+00 : f32
    %825 = vector.broadcast %cst_151 : f32 to vector<2x1x16x16xf32>
    %826 = arith.maximumf %824, %825 : vector<2x1x16x16xf32>
    %cst_152 = arith.constant 1.000000e+00 : f32
    %827 = vector.broadcast %cst_152 : f32 to vector<2x1x16x16xf32>
    %828 = arith.mulf %826, %827 : vector<2x1x16x16xf32>
    %829 = arith.addf %798, %828 : vector<2x1x16x16xf32>
    %c57_153 = arith.constant 57 : index
    %830 = memref.load %arg2[%c57_153] : memref<63xf32, #tpu.memory_space<smem>>
    %c60_154 = arith.constant 60 : index
    %831 = memref.load %arg2[%c60_154] : memref<63xf32, #tpu.memory_space<smem>>
    %cst_155 = arith.constant 1.000000e+00 : f32
    %832 = vector.broadcast %cst_155 : f32 to vector<2x1x16x16xf32>
    %833 = arith.mulf %768, %832 : vector<2x1x16x16xf32>
    %834 = vector.shape_cast %833 : vector<2x1x16x16xf32> to vector<1x2x1x16x16xf32>
    %cst_156 = arith.constant dense<0.000000e+00> : vector<1xf32>
    %835 = vector.multi_reduction <add>, %834, %cst_156 [1, 2, 3, 4] : vector<1x2x1x16x16xf32> to vector<1xf32>
    %836 = vector.shape_cast %835 : vector<1xf32> to vector<1x1x1x1x1xf32>
    %837 = vector.extract %836[0, 0, 0, 0, 0] : f32 from vector<1x1x1x1x1xf32>
    %cst_157 = arith.constant 5.120000e+02 : f32
    %838 = arith.divf %837, %cst_157 : f32
    %839 = vector.broadcast %838 : f32 to vector<2x1x16x16xf32>
    %840 = arith.subf %833, %839 : vector<2x1x16x16xf32>
    %cst_158 = arith.constant 1.000000e+00 : f32
    %841 = vector.broadcast %cst_158 : f32 to vector<2x1x16x16xf32>
    %842 = arith.mulf %840, %841 : vector<2x1x16x16xf32>
    %843 = arith.mulf %842, %842 : vector<2x1x16x16xf32>
    %844 = vector.shape_cast %843 : vector<2x1x16x16xf32> to vector<1x2x1x16x16xf32>
    %cst_159 = arith.constant dense<0.000000e+00> : vector<1xf32>
    %845 = vector.multi_reduction <add>, %844, %cst_159 [1, 2, 3, 4] : vector<1x2x1x16x16xf32> to vector<1xf32>
    %846 = vector.shape_cast %845 : vector<1xf32> to vector<1x1x1x1x1xf32>
    %847 = vector.extract %846[0, 0, 0, 0, 0] : f32 from vector<1x1x1x1x1xf32>
    %cst_160 = arith.constant 5.120000e+02 : f32
    %848 = arith.divf %847, %cst_160 : f32
    %cst_161 = arith.constant 9.99999974E-6 : f32
    %849 = arith.addf %848, %cst_161 : f32
    %850 = math.rsqrt %849 : f32
    %851 = arith.mulf %830, %850 : f32
    %852 = vector.broadcast %851 : f32 to vector<2x1x16x16xf32>
    %853 = arith.mulf %842, %852 : vector<2x1x16x16xf32>
    %854 = vector.broadcast %831 : f32 to vector<2x1x16x16xf32>
    %855 = arith.addf %853, %854 : vector<2x1x16x16xf32>
    %cst_162 = arith.constant 0.000000e+00 : f32
    %856 = vector.broadcast %cst_162 : f32 to vector<2x1x16x16xf32>
    %857 = arith.maximumf %855, %856 : vector<2x1x16x16xf32>
    %cst_163 = arith.constant 1.000000e+00 : f32
    %858 = vector.broadcast %cst_163 : f32 to vector<2x1x16x16xf32>
    %859 = arith.mulf %857, %858 : vector<2x1x16x16xf32>
    %860 = arith.addf %829, %859 : vector<2x1x16x16xf32>
    %c9_164 = arith.constant 9 : index
    %861 = memref.load %arg2[%c9_164] : memref<63xf32, #tpu.memory_space<smem>>
    %862 = vector.broadcast %861 : f32 to vector<2x1x16x16xf32>
    %863 = arith.mulf %703, %862 : vector<2x1x16x16xf32>
    %c10_165 = arith.constant 10 : index
    %864 = memref.load %arg2[%c10_165] : memref<63xf32, #tpu.memory_space<smem>>
    %865 = vector.broadcast %864 : f32 to vector<2x1x16x16xf32>
    %866 = arith.mulf %704, %865 : vector<2x1x16x16xf32>
    %867 = arith.addf %863, %866 : vector<2x1x16x16xf32>
    %c11_166 = arith.constant 11 : index
    %868 = memref.load %arg2[%c11_166] : memref<63xf32, #tpu.memory_space<smem>>
    %869 = vector.broadcast %868 : f32 to vector<2x1x16x16xf32>
    %870 = arith.mulf %705, %869 : vector<2x1x16x16xf32>
    %871 = arith.addf %867, %870 : vector<2x1x16x16xf32>
    %c12_167 = arith.constant 12 : index
    %872 = memref.load %arg2[%c12_167] : memref<63xf32, #tpu.memory_space<smem>>
    %873 = vector.broadcast %872 : f32 to vector<2x1x16x16xf32>
    %874 = arith.mulf %706, %873 : vector<2x1x16x16xf32>
    %875 = arith.addf %871, %874 : vector<2x1x16x16xf32>
    %c13_168 = arith.constant 13 : index
    %876 = memref.load %arg2[%c13_168] : memref<63xf32, #tpu.memory_space<smem>>
    %877 = vector.broadcast %876 : f32 to vector<2x1x16x16xf32>
    %878 = arith.mulf %707, %877 : vector<2x1x16x16xf32>
    %879 = arith.addf %875, %878 : vector<2x1x16x16xf32>
    %c14_169 = arith.constant 14 : index
    %880 = memref.load %arg2[%c14_169] : memref<63xf32, #tpu.memory_space<smem>>
    %881 = vector.broadcast %880 : f32 to vector<2x1x16x16xf32>
    %882 = arith.mulf %708, %881 : vector<2x1x16x16xf32>
    %883 = arith.addf %879, %882 : vector<2x1x16x16xf32>
    %c15_170 = arith.constant 15 : index
    %884 = memref.load %arg2[%c15_170] : memref<63xf32, #tpu.memory_space<smem>>
    %885 = vector.broadcast %884 : f32 to vector<2x1x16x16xf32>
    %886 = arith.mulf %709, %885 : vector<2x1x16x16xf32>
    %887 = arith.addf %883, %886 : vector<2x1x16x16xf32>
    %c16_171 = arith.constant 16 : index
    %888 = memref.load %arg2[%c16_171] : memref<63xf32, #tpu.memory_space<smem>>
    %889 = vector.broadcast %888 : f32 to vector<2x1x16x16xf32>
    %890 = arith.mulf %710, %889 : vector<2x1x16x16xf32>
    %891 = arith.addf %887, %890 : vector<2x1x16x16xf32>
    %c17_172 = arith.constant 17 : index
    %892 = memref.load %arg2[%c17_172] : memref<63xf32, #tpu.memory_space<smem>>
    %893 = vector.broadcast %892 : f32 to vector<2x1x16x16xf32>
    %894 = arith.mulf %711, %893 : vector<2x1x16x16xf32>
    %895 = arith.addf %891, %894 : vector<2x1x16x16xf32>
    %c30_173 = arith.constant 30 : index
    %896 = memref.load %arg2[%c30_173] : memref<63xf32, #tpu.memory_space<smem>>
    %897 = vector.broadcast %896 : f32 to vector<2x1x16x16xf32>
    %898 = arith.mulf %706, %897 : vector<2x1x16x16xf32>
    %c31_174 = arith.constant 31 : index
    %899 = memref.load %arg2[%c31_174] : memref<63xf32, #tpu.memory_space<smem>>
    %900 = vector.broadcast %899 : f32 to vector<2x1x16x16xf32>
    %901 = arith.mulf %707, %900 : vector<2x1x16x16xf32>
    %902 = arith.addf %898, %901 : vector<2x1x16x16xf32>
    %c32_175 = arith.constant 32 : index
    %903 = memref.load %arg2[%c32_175] : memref<63xf32, #tpu.memory_space<smem>>
    %904 = vector.broadcast %903 : f32 to vector<2x1x16x16xf32>
    %905 = arith.mulf %708, %904 : vector<2x1x16x16xf32>
    %906 = arith.addf %902, %905 : vector<2x1x16x16xf32>
    %c39_176 = arith.constant 39 : index
    %907 = memref.load %arg2[%c39_176] : memref<63xf32, #tpu.memory_space<smem>>
    %908 = vector.broadcast %907 : f32 to vector<2x1x16x16xf32>
    %909 = arith.mulf %704, %908 : vector<2x1x16x16xf32>
    %c40_177 = arith.constant 40 : index
    %910 = memref.load %arg2[%c40_177] : memref<63xf32, #tpu.memory_space<smem>>
    %911 = vector.broadcast %910 : f32 to vector<2x1x16x16xf32>
    %912 = arith.mulf %707, %911 : vector<2x1x16x16xf32>
    %913 = arith.addf %909, %912 : vector<2x1x16x16xf32>
    %c41_178 = arith.constant 41 : index
    %914 = memref.load %arg2[%c41_178] : memref<63xf32, #tpu.memory_space<smem>>
    %915 = vector.broadcast %914 : f32 to vector<2x1x16x16xf32>
    %916 = arith.mulf %710, %915 : vector<2x1x16x16xf32>
    %917 = arith.addf %913, %916 : vector<2x1x16x16xf32>
    %c46_179 = arith.constant 46 : index
    %918 = memref.load %arg2[%c46_179] : memref<63xf32, #tpu.memory_space<smem>>
    %c49_180 = arith.constant 49 : index
    %919 = memref.load %arg2[%c49_180] : memref<63xf32, #tpu.memory_space<smem>>
    %cst_181 = arith.constant 1.000000e+00 : f32
    %920 = vector.broadcast %cst_181 : f32 to vector<2x1x16x16xf32>
    %921 = arith.mulf %895, %920 : vector<2x1x16x16xf32>
    %922 = vector.shape_cast %921 : vector<2x1x16x16xf32> to vector<1x2x1x16x16xf32>
    %cst_182 = arith.constant dense<0.000000e+00> : vector<1xf32>
    %923 = vector.multi_reduction <add>, %922, %cst_182 [1, 2, 3, 4] : vector<1x2x1x16x16xf32> to vector<1xf32>
    %924 = vector.shape_cast %923 : vector<1xf32> to vector<1x1x1x1x1xf32>
    %925 = vector.extract %924[0, 0, 0, 0, 0] : f32 from vector<1x1x1x1x1xf32>
    %cst_183 = arith.constant 5.120000e+02 : f32
    %926 = arith.divf %925, %cst_183 : f32
    %927 = vector.broadcast %926 : f32 to vector<2x1x16x16xf32>
    %928 = arith.subf %921, %927 : vector<2x1x16x16xf32>
    %cst_184 = arith.constant 1.000000e+00 : f32
    %929 = vector.broadcast %cst_184 : f32 to vector<2x1x16x16xf32>
    %930 = arith.mulf %928, %929 : vector<2x1x16x16xf32>
    %931 = arith.mulf %930, %930 : vector<2x1x16x16xf32>
    %932 = vector.shape_cast %931 : vector<2x1x16x16xf32> to vector<1x2x1x16x16xf32>
    %cst_185 = arith.constant dense<0.000000e+00> : vector<1xf32>
    %933 = vector.multi_reduction <add>, %932, %cst_185 [1, 2, 3, 4] : vector<1x2x1x16x16xf32> to vector<1xf32>
    %934 = vector.shape_cast %933 : vector<1xf32> to vector<1x1x1x1x1xf32>
    %935 = vector.extract %934[0, 0, 0, 0, 0] : f32 from vector<1x1x1x1x1xf32>
    %cst_186 = arith.constant 5.120000e+02 : f32
    %936 = arith.divf %935, %cst_186 : f32
    %cst_187 = arith.constant 9.99999974E-6 : f32
    %937 = arith.addf %936, %cst_187 : f32
    %938 = math.rsqrt %937 : f32
    %939 = arith.mulf %918, %938 : f32
    %940 = vector.broadcast %939 : f32 to vector<2x1x16x16xf32>
    %941 = arith.mulf %930, %940 : vector<2x1x16x16xf32>
    %942 = vector.broadcast %919 : f32 to vector<2x1x16x16xf32>
    %943 = arith.addf %941, %942 : vector<2x1x16x16xf32>
    %cst_188 = arith.constant 0.000000e+00 : f32
    %944 = vector.broadcast %cst_188 : f32 to vector<2x1x16x16xf32>
    %945 = arith.maximumf %943, %944 : vector<2x1x16x16xf32>
    %cst_189 = arith.constant 1.000000e+00 : f32
    %946 = vector.broadcast %cst_189 : f32 to vector<2x1x16x16xf32>
    %947 = arith.mulf %945, %946 : vector<2x1x16x16xf32>
    %c52_190 = arith.constant 52 : index
    %948 = memref.load %arg2[%c52_190] : memref<63xf32, #tpu.memory_space<smem>>
    %c55_191 = arith.constant 55 : index
    %949 = memref.load %arg2[%c55_191] : memref<63xf32, #tpu.memory_space<smem>>
    %cst_192 = arith.constant 1.000000e+00 : f32
    %950 = vector.broadcast %cst_192 : f32 to vector<2x1x16x16xf32>
    %951 = arith.mulf %906, %950 : vector<2x1x16x16xf32>
    %952 = vector.shape_cast %951 : vector<2x1x16x16xf32> to vector<1x2x1x16x16xf32>
    %cst_193 = arith.constant dense<0.000000e+00> : vector<1xf32>
    %953 = vector.multi_reduction <add>, %952, %cst_193 [1, 2, 3, 4] : vector<1x2x1x16x16xf32> to vector<1xf32>
    %954 = vector.shape_cast %953 : vector<1xf32> to vector<1x1x1x1x1xf32>
    %955 = vector.extract %954[0, 0, 0, 0, 0] : f32 from vector<1x1x1x1x1xf32>
    %cst_194 = arith.constant 5.120000e+02 : f32
    %956 = arith.divf %955, %cst_194 : f32
    %957 = vector.broadcast %956 : f32 to vector<2x1x16x16xf32>
    %958 = arith.subf %951, %957 : vector<2x1x16x16xf32>
    %cst_195 = arith.constant 1.000000e+00 : f32
    %959 = vector.broadcast %cst_195 : f32 to vector<2x1x16x16xf32>
    %960 = arith.mulf %958, %959 : vector<2x1x16x16xf32>
    %961 = arith.mulf %960, %960 : vector<2x1x16x16xf32>
    %962 = vector.shape_cast %961 : vector<2x1x16x16xf32> to vector<1x2x1x16x16xf32>
    %cst_196 = arith.constant dense<0.000000e+00> : vector<1xf32>
    %963 = vector.multi_reduction <add>, %962, %cst_196 [1, 2, 3, 4] : vector<1x2x1x16x16xf32> to vector<1xf32>
    %964 = vector.shape_cast %963 : vector<1xf32> to vector<1x1x1x1x1xf32>
    %965 = vector.extract %964[0, 0, 0, 0, 0] : f32 from vector<1x1x1x1x1xf32>
    %cst_197 = arith.constant 5.120000e+02 : f32
    %966 = arith.divf %965, %cst_197 : f32
    %cst_198 = arith.constant 9.99999974E-6 : f32
    %967 = arith.addf %966, %cst_198 : f32
    %968 = math.rsqrt %967 : f32
    %969 = arith.mulf %948, %968 : f32
    %970 = vector.broadcast %969 : f32 to vector<2x1x16x16xf32>
    %971 = arith.mulf %960, %970 : vector<2x1x16x16xf32>
    %972 = vector.broadcast %949 : f32 to vector<2x1x16x16xf32>
    %973 = arith.addf %971, %972 : vector<2x1x16x16xf32>
    %cst_199 = arith.constant 0.000000e+00 : f32
    %974 = vector.broadcast %cst_199 : f32 to vector<2x1x16x16xf32>
    %975 = arith.maximumf %973, %974 : vector<2x1x16x16xf32>
    %cst_200 = arith.constant 1.000000e+00 : f32
    %976 = vector.broadcast %cst_200 : f32 to vector<2x1x16x16xf32>
    %977 = arith.mulf %975, %976 : vector<2x1x16x16xf32>
    %978 = arith.addf %947, %977 : vector<2x1x16x16xf32>
    %c58_201 = arith.constant 58 : index
    %979 = memref.load %arg2[%c58_201] : memref<63xf32, #tpu.memory_space<smem>>
    %c61_202 = arith.constant 61 : index
    %980 = memref.load %arg2[%c61_202] : memref<63xf32, #tpu.memory_space<smem>>
    %cst_203 = arith.constant 1.000000e+00 : f32
    %981 = vector.broadcast %cst_203 : f32 to vector<2x1x16x16xf32>
    %982 = arith.mulf %917, %981 : vector<2x1x16x16xf32>
    %983 = vector.shape_cast %982 : vector<2x1x16x16xf32> to vector<1x2x1x16x16xf32>
    %cst_204 = arith.constant dense<0.000000e+00> : vector<1xf32>
    %984 = vector.multi_reduction <add>, %983, %cst_204 [1, 2, 3, 4] : vector<1x2x1x16x16xf32> to vector<1xf32>
    %985 = vector.shape_cast %984 : vector<1xf32> to vector<1x1x1x1x1xf32>
    %986 = vector.extract %985[0, 0, 0, 0, 0] : f32 from vector<1x1x1x1x1xf32>
    %cst_205 = arith.constant 5.120000e+02 : f32
    %987 = arith.divf %986, %cst_205 : f32
    %988 = vector.broadcast %987 : f32 to vector<2x1x16x16xf32>
    %989 = arith.subf %982, %988 : vector<2x1x16x16xf32>
    %cst_206 = arith.constant 1.000000e+00 : f32
    %990 = vector.broadcast %cst_206 : f32 to vector<2x1x16x16xf32>
    %991 = arith.mulf %989, %990 : vector<2x1x16x16xf32>
    %992 = arith.mulf %991, %991 : vector<2x1x16x16xf32>
    %993 = vector.shape_cast %992 : vector<2x1x16x16xf32> to vector<1x2x1x16x16xf32>
    %cst_207 = arith.constant dense<0.000000e+00> : vector<1xf32>
    %994 = vector.multi_reduction <add>, %993, %cst_207 [1, 2, 3, 4] : vector<1x2x1x16x16xf32> to vector<1xf32>
    %995 = vector.shape_cast %994 : vector<1xf32> to vector<1x1x1x1x1xf32>
    %996 = vector.extract %995[0, 0, 0, 0, 0] : f32 from vector<1x1x1x1x1xf32>
    %cst_208 = arith.constant 5.120000e+02 : f32
    %997 = arith.divf %996, %cst_208 : f32
    %cst_209 = arith.constant 9.99999974E-6 : f32
    %998 = arith.addf %997, %cst_209 : f32
    %999 = math.rsqrt %998 : f32
    %1000 = arith.mulf %979, %999 : f32
    %1001 = vector.broadcast %1000 : f32 to vector<2x1x16x16xf32>
    %1002 = arith.mulf %991, %1001 : vector<2x1x16x16xf32>
    %1003 = vector.broadcast %980 : f32 to vector<2x1x16x16xf32>
    %1004 = arith.addf %1002, %1003 : vector<2x1x16x16xf32>
    %cst_210 = arith.constant 0.000000e+00 : f32
    %1005 = vector.broadcast %cst_210 : f32 to vector<2x1x16x16xf32>
    %1006 = arith.maximumf %1004, %1005 : vector<2x1x16x16xf32>
    %cst_211 = arith.constant 1.000000e+00 : f32
    %1007 = vector.broadcast %cst_211 : f32 to vector<2x1x16x16xf32>
    %1008 = arith.mulf %1006, %1007 : vector<2x1x16x16xf32>
    %1009 = arith.addf %978, %1008 : vector<2x1x16x16xf32>
    %c18_212 = arith.constant 18 : index
    %1010 = memref.load %arg2[%c18_212] : memref<63xf32, #tpu.memory_space<smem>>
    %1011 = vector.broadcast %1010 : f32 to vector<2x1x16x16xf32>
    %1012 = arith.mulf %703, %1011 : vector<2x1x16x16xf32>
    %c19_213 = arith.constant 19 : index
    %1013 = memref.load %arg2[%c19_213] : memref<63xf32, #tpu.memory_space<smem>>
    %1014 = vector.broadcast %1013 : f32 to vector<2x1x16x16xf32>
    %1015 = arith.mulf %704, %1014 : vector<2x1x16x16xf32>
    %1016 = arith.addf %1012, %1015 : vector<2x1x16x16xf32>
    %c20_214 = arith.constant 20 : index
    %1017 = memref.load %arg2[%c20_214] : memref<63xf32, #tpu.memory_space<smem>>
    %1018 = vector.broadcast %1017 : f32 to vector<2x1x16x16xf32>
    %1019 = arith.mulf %705, %1018 : vector<2x1x16x16xf32>
    %1020 = arith.addf %1016, %1019 : vector<2x1x16x16xf32>
    %c21_215 = arith.constant 21 : index
    %1021 = memref.load %arg2[%c21_215] : memref<63xf32, #tpu.memory_space<smem>>
    %1022 = vector.broadcast %1021 : f32 to vector<2x1x16x16xf32>
    %1023 = arith.mulf %706, %1022 : vector<2x1x16x16xf32>
    %1024 = arith.addf %1020, %1023 : vector<2x1x16x16xf32>
    %c22_216 = arith.constant 22 : index
    %1025 = memref.load %arg2[%c22_216] : memref<63xf32, #tpu.memory_space<smem>>
    %1026 = vector.broadcast %1025 : f32 to vector<2x1x16x16xf32>
    %1027 = arith.mulf %707, %1026 : vector<2x1x16x16xf32>
    %1028 = arith.addf %1024, %1027 : vector<2x1x16x16xf32>
    %c23_217 = arith.constant 23 : index
    %1029 = memref.load %arg2[%c23_217] : memref<63xf32, #tpu.memory_space<smem>>
    %1030 = vector.broadcast %1029 : f32 to vector<2x1x16x16xf32>
    %1031 = arith.mulf %708, %1030 : vector<2x1x16x16xf32>
    %1032 = arith.addf %1028, %1031 : vector<2x1x16x16xf32>
    %c24_218 = arith.constant 24 : index
    %1033 = memref.load %arg2[%c24_218] : memref<63xf32, #tpu.memory_space<smem>>
    %1034 = vector.broadcast %1033 : f32 to vector<2x1x16x16xf32>
    %1035 = arith.mulf %709, %1034 : vector<2x1x16x16xf32>
    %1036 = arith.addf %1032, %1035 : vector<2x1x16x16xf32>
    %c25_219 = arith.constant 25 : index
    %1037 = memref.load %arg2[%c25_219] : memref<63xf32, #tpu.memory_space<smem>>
    %1038 = vector.broadcast %1037 : f32 to vector<2x1x16x16xf32>
    %1039 = arith.mulf %710, %1038 : vector<2x1x16x16xf32>
    %1040 = arith.addf %1036, %1039 : vector<2x1x16x16xf32>
    %c26_220 = arith.constant 26 : index
    %1041 = memref.load %arg2[%c26_220] : memref<63xf32, #tpu.memory_space<smem>>
    %1042 = vector.broadcast %1041 : f32 to vector<2x1x16x16xf32>
    %1043 = arith.mulf %711, %1042 : vector<2x1x16x16xf32>
    %1044 = arith.addf %1040, %1043 : vector<2x1x16x16xf32>
    %c33_221 = arith.constant 33 : index
    %1045 = memref.load %arg2[%c33_221] : memref<63xf32, #tpu.memory_space<smem>>
    %1046 = vector.broadcast %1045 : f32 to vector<2x1x16x16xf32>
    %1047 = arith.mulf %706, %1046 : vector<2x1x16x16xf32>
    %c34_222 = arith.constant 34 : index
    %1048 = memref.load %arg2[%c34_222] : memref<63xf32, #tpu.memory_space<smem>>
    %1049 = vector.broadcast %1048 : f32 to vector<2x1x16x16xf32>
    %1050 = arith.mulf %707, %1049 : vector<2x1x16x16xf32>
    %1051 = arith.addf %1047, %1050 : vector<2x1x16x16xf32>
    %c35_223 = arith.constant 35 : index
    %1052 = memref.load %arg2[%c35_223] : memref<63xf32, #tpu.memory_space<smem>>
    %1053 = vector.broadcast %1052 : f32 to vector<2x1x16x16xf32>
    %1054 = arith.mulf %708, %1053 : vector<2x1x16x16xf32>
    %1055 = arith.addf %1051, %1054 : vector<2x1x16x16xf32>
    %c42_224 = arith.constant 42 : index
    %1056 = memref.load %arg2[%c42_224] : memref<63xf32, #tpu.memory_space<smem>>
    %1057 = vector.broadcast %1056 : f32 to vector<2x1x16x16xf32>
    %1058 = arith.mulf %704, %1057 : vector<2x1x16x16xf32>
    %c43_225 = arith.constant 43 : index
    %1059 = memref.load %arg2[%c43_225] : memref<63xf32, #tpu.memory_space<smem>>
    %1060 = vector.broadcast %1059 : f32 to vector<2x1x16x16xf32>
    %1061 = arith.mulf %707, %1060 : vector<2x1x16x16xf32>
    %1062 = arith.addf %1058, %1061 : vector<2x1x16x16xf32>
    %c44_226 = arith.constant 44 : index
    %1063 = memref.load %arg2[%c44_226] : memref<63xf32, #tpu.memory_space<smem>>
    %1064 = vector.broadcast %1063 : f32 to vector<2x1x16x16xf32>
    %1065 = arith.mulf %710, %1064 : vector<2x1x16x16xf32>
    %1066 = arith.addf %1062, %1065 : vector<2x1x16x16xf32>
    %c47_227 = arith.constant 47 : index
    %1067 = memref.load %arg2[%c47_227] : memref<63xf32, #tpu.memory_space<smem>>
    %c50_228 = arith.constant 50 : index
    %1068 = memref.load %arg2[%c50_228] : memref<63xf32, #tpu.memory_space<smem>>
    %cst_229 = arith.constant 1.000000e+00 : f32
    %1069 = vector.broadcast %cst_229 : f32 to vector<2x1x16x16xf32>
    %1070 = arith.mulf %1044, %1069 : vector<2x1x16x16xf32>
    %1071 = vector.shape_cast %1070 : vector<2x1x16x16xf32> to vector<1x2x1x16x16xf32>
    %cst_230 = arith.constant dense<0.000000e+00> : vector<1xf32>
    %1072 = vector.multi_reduction <add>, %1071, %cst_230 [1, 2, 3, 4] : vector<1x2x1x16x16xf32> to vector<1xf32>
    %1073 = vector.shape_cast %1072 : vector<1xf32> to vector<1x1x1x1x1xf32>
    %1074 = vector.extract %1073[0, 0, 0, 0, 0] : f32 from vector<1x1x1x1x1xf32>
    %cst_231 = arith.constant 5.120000e+02 : f32
    %1075 = arith.divf %1074, %cst_231 : f32
    %1076 = vector.broadcast %1075 : f32 to vector<2x1x16x16xf32>
    %1077 = arith.subf %1070, %1076 : vector<2x1x16x16xf32>
    %cst_232 = arith.constant 1.000000e+00 : f32
    %1078 = vector.broadcast %cst_232 : f32 to vector<2x1x16x16xf32>
    %1079 = arith.mulf %1077, %1078 : vector<2x1x16x16xf32>
    %1080 = arith.mulf %1079, %1079 : vector<2x1x16x16xf32>
    %1081 = vector.shape_cast %1080 : vector<2x1x16x16xf32> to vector<1x2x1x16x16xf32>
    %cst_233 = arith.constant dense<0.000000e+00> : vector<1xf32>
    %1082 = vector.multi_reduction <add>, %1081, %cst_233 [1, 2, 3, 4] : vector<1x2x1x16x16xf32> to vector<1xf32>
    %1083 = vector.shape_cast %1082 : vector<1xf32> to vector<1x1x1x1x1xf32>
    %1084 = vector.extract %1083[0, 0, 0, 0, 0] : f32 from vector<1x1x1x1x1xf32>
    %cst_234 = arith.constant 5.120000e+02 : f32
    %1085 = arith.divf %1084, %cst_234 : f32
    %cst_235 = arith.constant 9.99999974E-6 : f32
    %1086 = arith.addf %1085, %cst_235 : f32
    %1087 = math.rsqrt %1086 : f32
    %1088 = arith.mulf %1067, %1087 : f32
    %1089 = vector.broadcast %1088 : f32 to vector<2x1x16x16xf32>
    %1090 = arith.mulf %1079, %1089 : vector<2x1x16x16xf32>
    %1091 = vector.broadcast %1068 : f32 to vector<2x1x16x16xf32>
    %1092 = arith.addf %1090, %1091 : vector<2x1x16x16xf32>
    %cst_236 = arith.constant 0.000000e+00 : f32
    %1093 = vector.broadcast %cst_236 : f32 to vector<2x1x16x16xf32>
    %1094 = arith.maximumf %1092, %1093 : vector<2x1x16x16xf32>
    %cst_237 = arith.constant 1.000000e+00 : f32
    %1095 = vector.broadcast %cst_237 : f32 to vector<2x1x16x16xf32>
    %1096 = arith.mulf %1094, %1095 : vector<2x1x16x16xf32>
    %c53_238 = arith.constant 53 : index
    %1097 = memref.load %arg2[%c53_238] : memref<63xf32, #tpu.memory_space<smem>>
    %c56_239 = arith.constant 56 : index
    %1098 = memref.load %arg2[%c56_239] : memref<63xf32, #tpu.memory_space<smem>>
    %cst_240 = arith.constant 1.000000e+00 : f32
    %1099 = vector.broadcast %cst_240 : f32 to vector<2x1x16x16xf32>
    %1100 = arith.mulf %1055, %1099 : vector<2x1x16x16xf32>
    %1101 = vector.shape_cast %1100 : vector<2x1x16x16xf32> to vector<1x2x1x16x16xf32>
    %cst_241 = arith.constant dense<0.000000e+00> : vector<1xf32>
    %1102 = vector.multi_reduction <add>, %1101, %cst_241 [1, 2, 3, 4] : vector<1x2x1x16x16xf32> to vector<1xf32>
    %1103 = vector.shape_cast %1102 : vector<1xf32> to vector<1x1x1x1x1xf32>
    %1104 = vector.extract %1103[0, 0, 0, 0, 0] : f32 from vector<1x1x1x1x1xf32>
    %cst_242 = arith.constant 5.120000e+02 : f32
    %1105 = arith.divf %1104, %cst_242 : f32
    %1106 = vector.broadcast %1105 : f32 to vector<2x1x16x16xf32>
    %1107 = arith.subf %1100, %1106 : vector<2x1x16x16xf32>
    %cst_243 = arith.constant 1.000000e+00 : f32
    %1108 = vector.broadcast %cst_243 : f32 to vector<2x1x16x16xf32>
    %1109 = arith.mulf %1107, %1108 : vector<2x1x16x16xf32>
    %1110 = arith.mulf %1109, %1109 : vector<2x1x16x16xf32>
    %1111 = vector.shape_cast %1110 : vector<2x1x16x16xf32> to vector<1x2x1x16x16xf32>
    %cst_244 = arith.constant dense<0.000000e+00> : vector<1xf32>
    %1112 = vector.multi_reduction <add>, %1111, %cst_244 [1, 2, 3, 4] : vector<1x2x1x16x16xf32> to vector<1xf32>
    %1113 = vector.shape_cast %1112 : vector<1xf32> to vector<1x1x1x1x1xf32>
    %1114 = vector.extract %1113[0, 0, 0, 0, 0] : f32 from vector<1x1x1x1x1xf32>
    %cst_245 = arith.constant 5.120000e+02 : f32
    %1115 = arith.divf %1114, %cst_245 : f32
    %cst_246 = arith.constant 9.99999974E-6 : f32
    %1116 = arith.addf %1115, %cst_246 : f32
    %1117 = math.rsqrt %1116 : f32
    %1118 = arith.mulf %1097, %1117 : f32
    %1119 = vector.broadcast %1118 : f32 to vector<2x1x16x16xf32>
    %1120 = arith.mulf %1109, %1119 : vector<2x1x16x16xf32>
    %1121 = vector.broadcast %1098 : f32 to vector<2x1x16x16xf32>
    %1122 = arith.addf %1120, %1121 : vector<2x1x16x16xf32>
    %cst_247 = arith.constant 0.000000e+00 : f32
    %1123 = vector.broadcast %cst_247 : f32 to vector<2x1x16x16xf32>
    %1124 = arith.maximumf %1122, %1123 : vector<2x1x16x16xf32>
    %cst_248 = arith.constant 1.000000e+00 : f32
    %1125 = vector.broadcast %cst_248 : f32 to vector<2x1x16x16xf32>
    %1126 = arith.mulf %1124, %1125 : vector<2x1x16x16xf32>
    %1127 = arith.addf %1096, %1126 : vector<2x1x16x16xf32>
    %c59_249 = arith.constant 59 : index
    %1128 = memref.load %arg2[%c59_249] : memref<63xf32, #tpu.memory_space<smem>>
    %c62_250 = arith.constant 62 : index
    %1129 = memref.load %arg2[%c62_250] : memref<63xf32, #tpu.memory_space<smem>>
    %cst_251 = arith.constant 1.000000e+00 : f32
    %1130 = vector.broadcast %cst_251 : f32 to vector<2x1x16x16xf32>
    %1131 = arith.mulf %1066, %1130 : vector<2x1x16x16xf32>
    %1132 = vector.shape_cast %1131 : vector<2x1x16x16xf32> to vector<1x2x1x16x16xf32>
    %cst_252 = arith.constant dense<0.000000e+00> : vector<1xf32>
    %1133 = vector.multi_reduction <add>, %1132, %cst_252 [1, 2, 3, 4] : vector<1x2x1x16x16xf32> to vector<1xf32>
    %1134 = vector.shape_cast %1133 : vector<1xf32> to vector<1x1x1x1x1xf32>
    %1135 = vector.extract %1134[0, 0, 0, 0, 0] : f32 from vector<1x1x1x1x1xf32>
    %cst_253 = arith.constant 5.120000e+02 : f32
    %1136 = arith.divf %1135, %cst_253 : f32
    %1137 = vector.broadcast %1136 : f32 to vector<2x1x16x16xf32>
    %1138 = arith.subf %1131, %1137 : vector<2x1x16x16xf32>
    %cst_254 = arith.constant 1.000000e+00 : f32
    %1139 = vector.broadcast %cst_254 : f32 to vector<2x1x16x16xf32>
    %1140 = arith.mulf %1138, %1139 : vector<2x1x16x16xf32>
    %1141 = arith.mulf %1140, %1140 : vector<2x1x16x16xf32>
    %1142 = vector.shape_cast %1141 : vector<2x1x16x16xf32> to vector<1x2x1x16x16xf32>
    %cst_255 = arith.constant dense<0.000000e+00> : vector<1xf32>
    %1143 = vector.multi_reduction <add>, %1142, %cst_255 [1, 2, 3, 4] : vector<1x2x1x16x16xf32> to vector<1xf32>
    %1144 = vector.shape_cast %1143 : vector<1xf32> to vector<1x1x1x1x1xf32>
    %1145 = vector.extract %1144[0, 0, 0, 0, 0] : f32 from vector<1x1x1x1x1xf32>
    %cst_256 = arith.constant 5.120000e+02 : f32
    %1146 = arith.divf %1145, %cst_256 : f32
    %cst_257 = arith.constant 9.99999974E-6 : f32
    %1147 = arith.addf %1146, %cst_257 : f32
    %1148 = math.rsqrt %1147 : f32
    %1149 = arith.mulf %1128, %1148 : f32
    %1150 = vector.broadcast %1149 : f32 to vector<2x1x16x16xf32>
    %1151 = arith.mulf %1140, %1150 : vector<2x1x16x16xf32>
    %1152 = vector.broadcast %1129 : f32 to vector<2x1x16x16xf32>
    %1153 = arith.addf %1151, %1152 : vector<2x1x16x16xf32>
    %cst_258 = arith.constant 0.000000e+00 : f32
    %1154 = vector.broadcast %cst_258 : f32 to vector<2x1x16x16xf32>
    %1155 = arith.maximumf %1153, %1154 : vector<2x1x16x16xf32>
    %cst_259 = arith.constant 1.000000e+00 : f32
    %1156 = vector.broadcast %cst_259 : f32 to vector<2x1x16x16xf32>
    %1157 = arith.mulf %1155, %1156 : vector<2x1x16x16xf32>
    %1158 = arith.addf %1127, %1157 : vector<2x1x16x16xf32>
    %1159 = vector.shape_cast %673 : vector<2x1x16x16xf32> to vector<2x1x16x16xf32>
    %1160 = vector.broadcast %1159 : vector<2x1x16x16xf32> to vector<2x3x16x16xf32>
    %c0_260 = arith.constant 0 : index
    %c0_261 = arith.constant 0 : index
    %c0_262 = arith.constant 0 : index
    %c0_263 = arith.constant 0 : index
    %1161 = vector.load %arg3[%c0_260, %c0_261, %c0_262, %c0_263] : memref<2x3x16x48xf32, #tpu.memory_space<vmem>>, vector<2x3x16x16xf32>
    tpu.vector_store %arg3[%c0_260, %c0_261, %c0_262, %c0_263], %1160 {strides = array<i32>} : memref<2x3x16x48xf32, #tpu.memory_space<vmem>>, vector<2x3x16x16xf32>,
    %c0_264 = arith.constant 0 : index
    %c0_265 = arith.constant 0 : index
    %c0_266 = arith.constant 0 : index
    %c16_267 = arith.constant 16 : index
    %1162 = vector.load %arg3[%c0_264, %c0_265, %c0_266, %c16_267] : memref<2x3x16x48xf32, #tpu.memory_space<vmem>>, vector<2x1x16x16xf32>
    tpu.vector_store %arg3[%c0_264, %c0_265, %c0_266, %c16_267], %860 {strides = array<i32>} : memref<2x3x16x48xf32, #tpu.memory_space<vmem>>, vector<2x1x16x16xf32>,
    %c0_268 = arith.constant 0 : index
    %c1_269 = arith.constant 1 : index
    %c0_270 = arith.constant 0 : index
    %c16_271 = arith.constant 16 : index
    %1163 = vector.load %arg3[%c0_268, %c1_269, %c0_270, %c16_271] : memref<2x3x16x48xf32, #tpu.memory_space<vmem>>, vector<2x1x16x16xf32>
    tpu.vector_store %arg3[%c0_268, %c1_269, %c0_270, %c16_271], %1009 {strides = array<i32>} : memref<2x3x16x48xf32, #tpu.memory_space<vmem>>, vector<2x1x16x16xf32>,
    %c0_272 = arith.constant 0 : index
    %c2_273 = arith.constant 2 : index
    %c0_274 = arith.constant 0 : index
    %c16_275 = arith.constant 16 : index
    %1164 = vector.load %arg3[%c0_272, %c2_273, %c0_274, %c16_275] : memref<2x3x16x48xf32, #tpu.memory_space<vmem>>, vector<2x1x16x16xf32>
    tpu.vector_store %arg3[%c0_272, %c2_273, %c0_274, %c16_275], %1158 {strides = array<i32>} : memref<2x3x16x48xf32, #tpu.memory_space<vmem>>, vector<2x1x16x16xf32>,
    %1165 = vector.shape_cast %702 : vector<2x1x16x16xf32> to vector<2x1x16x16xf32>
    %1166 = vector.broadcast %1165 : vector<2x1x16x16xf32> to vector<2x3x16x16xf32>
    %c0_276 = arith.constant 0 : index
    %c0_277 = arith.constant 0 : index
    %c0_278 = arith.constant 0 : index
    %c32_279 = arith.constant 32 : index
    %1167 = vector.load %arg3[%c0_276, %c0_277, %c0_278, %c32_279] : memref<2x3x16x48xf32, #tpu.memory_space<vmem>>, vector<2x3x16x16xf32>
    tpu.vector_store %arg3[%c0_276, %c0_277, %c0_278, %c32_279], %1166 {strides = array<i32>} : memref<2x3x16x48xf32, #tpu.memory_space<vmem>>, vector<2x3x16x16xf32>,
    return
  }
}

</mosaic_0001>

<llo_original>
// kernel: model_forward.1
$region0: #{model_forward.1}
  #allocation0 [shape = 'u32[]', space=smem, size = 0x4, offset = 0x4, fixed_abs, tag = 'smem constant byte address 0x4 - core index']
  #allocation1 [shape = 'u32[144,128]{1,0:T(1,128)}', space=vmem, size = 0x12000, scoped, tag = 'internal scratch']
  %s0 = inlined_call_operand.vmem [shape: f32[2,1,22,22], index: 0, kind: input, shape index: {}]
  %s1 = inlined_call_operand.vmem [shape: f32[21], index: 1, kind: input, shape index: {}]
  %s2 = inlined_call_operand.vmem [shape: f32[63], index: 2, kind: input, shape index: {}]
  %s3 = inlined_call_operand.hbm [shape: f32[2,3,16,48], index: 3, kind: output, shape index: {}]
  %s4 = sld [smem:[#allocation0]]
  $region30: #{model_forward.1} parent=0
    _
  %s6 = ssub.s32 1, %s4
  %s7 = scalar_select 0, %s6, %s4
  $region1: #{model_forward.1} parent=0
    #allocation2 [shape = 'u8[512]{0}', space=smem, size = 0x200, scoped, tag = 'input window, operand 1, single buffered']
    #allocation3 [shape = 's32[1]{0}', space=sflag, size = 0x4, scoped, tag = 'scoped memory for model_forward.1']
    #allocation4 [shape = 's32[1]{0}', space=sflag, size = 0x4, scoped, tag = 'scoped memory for model_forward.1']
    #allocation5 [shape = 'u8[512]{0}', space=smem, size = 0x200, scoped, tag = 'input window, operand 2, single buffered']
    #allocation6 [shape = 's32[1]{0}', space=sflag, size = 0x4, scoped, tag = 'scoped memory for model_forward.1']
    #allocation7 [shape = 'u8[49152]{0}', space=vmem, size = 0xc000, scoped, tag = 'output window, operand 0, single buffered']
    %8 = vsyncpa [#allocation4], 0
    %9 = vsyncpa [#allocation6], 0
    %10 = vsyncpa [#allocation3], 0
    // Predicated region
    $region2: #{model_forward.1} parent=1 // pred_check
      _
    $region3: #{model_forward.1} parent=1 // pred_check_branch
      %12 = sbr.rel (0) target = $region5
    $region4: #{model_forward.1} parent=1 // pred_region
      _
    $region5: #{model_forward.1} parent=1 // pred_fallthru
      _
    // Predicated region
    $region6: #{model_forward.1} parent=1 // pred_check
      _
    $region7: #{model_forward.1} parent=1 // pred_check_branch
      %14 = sbr.rel (0) target = $region9
    $region8: #{model_forward.1} parent=1 // pred_region
      %s16 = ssub.s32 16, 16
      %17 = vsyncadd [#allocation4], %s16
      %s19 = sshll.u32 %s1, 4
      %s20 = int_to_ptr.vmem [resolvable:$true] %s19
      %22 = dma.vmem_to_smem %s20, 16, [#allocation2], [#allocation4]
    $region9: #{model_forward.1} parent=1 // pred_fallthru
      _
    // Predicated region
    $region10: #{model_forward.1} parent=1 // pred_check
      _
    $region11: #{model_forward.1} parent=1 // pred_check_branch
      %24 = sbr.rel (0) target = $region13
    $region12: #{model_forward.1} parent=1 // pred_region
      %s26 = ssub.s32 16, 16
      %27 = vsyncadd [#allocation6], %s26
      %s29 = sshll.u32 %s2, 4
      %s30 = int_to_ptr.vmem [resolvable:$true] %s29
      %32 = dma.vmem_to_smem %s30, 16, [#allocation5], [#allocation6]
    $region13: #{model_forward.1} parent=1 // pred_fallthru
      _
    // Predicated region
    $region14: #{model_forward.1} parent=1 // pred_check
      _
    $region15: #{model_forward.1} parent=1 // pred_check_branch
      %34 = sbr.rel (0) target = $region17
    $region16: #{model_forward.1} parent=1 // pred_region
      %35 = dma.done [#allocation4], 16
    $region17: #{model_forward.1} parent=1 // pred_fallthru
      _
    // Predicated region
    $region18: #{model_forward.1} parent=1 // pred_check
      _
    $region19: #{model_forward.1} parent=1 // pred_check_branch
      %37 = sbr.rel (0) target = $region21
    $region20: #{model_forward.1} parent=1 // pred_region
      %38 = dma.done [#allocation6], 16
    $region21: #{model_forward.1} parent=1 // pred_fallthru
      _
    %39 = sfence
    %v40 = vlaneseq
    %v41 = vshrl.u32 %v40, 7
    %v42 = vadd.s32 %v41, 8
    %v43 = vadd.s32 %v41, 16
    %v44 = vlaneseq
    %v45 = vand.u32 %v44, 127
    %vm46 = vcmp.ge.s32.totalorder %v41, 2
    %vm47 = vcmp.ge.s32.totalorder %v42, 2
    %vm48 = vcmp.ge.s32.totalorder %v43, 2
    %vm49 = vcmp.lt.s32.totalorder %v41, 18
    %vm50 = vcmp.lt.s32.totalorder %v42, 18
    %vm51 = vcmp.lt.s32.totalorder %v43, 18
    %vm52 = vmand %vm46, %vm49
    %vm53 = vmand %vm47, %vm50
    %vm54 = vmand %vm48, %vm51
    %vm55 = vcmp.ge.s32.totalorder %v45, 2
    %vm56 = vmand %vm52, %vm55
    %vm57 = vmand %vm53, %vm55
    %vm58 = vmand %vm54, %vm55
    %vm59 = vcmp.lt.s32.totalorder %v45, 18
    %vm60 = vmand %vm56, %vm59
    %vm61 = vmand %vm57, %vm59
    %vm62 = vmand %vm58, %vm59
    %v63 = vsel %vm60, 1, 0
    %v64 = vsel %vm61, 1, 0
    %v65 = vsel %vm62, 1, 0
    %v66 = vcvt.s32.f32 %v63
    %v67 = vcvt.s32.f32 %v64
    %v68 = vcvt.s32.f32 %v65
    %vm69 = vcmp.ge.s32.totalorder %v41, 1
    %vm70 = vcmp.ge.s32.totalorder %v42, 1
    %vm71 = vcmp.ge.s32.totalorder %v43, 1
    %vm72 = vcmp.lt.s32.totalorder %v41, 17
    %vm73 = vcmp.lt.s32.totalorder %v42, 17
    %vm74 = vcmp.lt.s32.totalorder %v43, 17
    %vm75 = vmand %vm69, %vm72
    %vm76 = vmand %vm70, %vm73
    %vm77 = vmand %vm71, %vm74
    %vm78 = vcmp.ge.s32.totalorder %v45, 1
    %vm79 = vmand %vm75, %vm78
    %vm80 = vmand %vm76, %vm78
    %vm81 = vmand %vm77, %vm78
    %vm82 = vcmp.lt.s32.totalorder %v45, 17
    %vm83 = vmand %vm79, %vm82
    %vm84 = vmand %vm80, %vm82
    %vm85 = vmand %vm81, %vm82
    %v86 = vsel %vm83, 1, 0
    %v87 = vsel %vm84, 1, 0
    %v88 = vsel %vm85, 1, 0
    %v89 = vcvt.s32.f32 %v86
    %v90 = vcvt.s32.f32 %v87
    %v91 = vcvt.s32.f32 %v88
    %v92 = vld [vmem:[%s0] sm:$0xff]
    %v93 = vld [vmem:[%s0 + $0x8] sm:$0xff]
    %v94 = vld [vmem:[%s0 + $0x10] sm:$0x3f]
    %v95 = vld [vmem:[%s0 + $0x18] sm:$0xff]
    %v96 = vld [vmem:[%s0 + $0x20] sm:$0xff]
    %v97 = vld [vmem:[%s0 + $0x28] sm:$0x3f]
    %s98 = sld [smem:[#allocation2]]
    %v99 = vstv %s98
    %v100 = vmul.f32 %v92, %v99
    %v101 = vmul.f32 %v93, %v99
    %v102 = vmul.f32 %v94, %v99
    %v103 = vmul.f32 %v95, %v99
    %v104 = vmul.f32 %v96, %v99
    %v105 = vmul.f32 %v97, %v99
    %s106 = sld [smem:[#allocation2 + $0x1]]
    %v107 = vstv %s106
    %v108 = vmul.f32 %v92, %v107
    %v109 = vmul.f32 %v93, %v107
    %v110 = vmul.f32 %v94, %v107
    %v111 = vmul.f32 %v95, %v107
    %v112 = vmul.f32 %v96, %v107
    %v113 = vmul.f32 %v97, %v107
    %120 = vrot.lane.b32.xlu0 %v108, 127
    %v121 = vpop.permute.xlu0 %120
    %122 = vrot.lane.b32.xlu0 %v109, 127
    %v123 = vpop.permute.xlu0 %122
    %124 = vrot.lane.b32.xlu0 %v110, 127
    %v125 = vpop.permute.xlu0 %124
    %126 = vrot.lane.b32.xlu0 %v111, 127
    %v127 = vpop.permute.xlu0 %126
    %128 = vrot.lane.b32.xlu0 %v112, 127
    %v129 = vpop.permute.xlu0 %128
    %130 = vrot.lane.b32.xlu0 %v113, 127
    %v131 = vpop.permute.xlu0 %130
    %v138 = vadd.f32 %v100, %v121
    %v139 = vadd.f32 %v101, %v123
    %v140 = vadd.f32 %v102, %v125
    %v141 = vadd.f32 %v103, %v127
    %v142 = vadd.f32 %v104, %v129
    %v143 = vadd.f32 %v105, %v131
    %s144 = sld [smem:[#allocation2 + $0x2]]
    %v145 = vstv %s144
    %v146 = vmul.f32 %v92, %v145
    %v147 = vmul.f32 %v93, %v145
    %v148 = vmul.f32 %v94, %v145
    %v149 = vmul.f32 %v95, %v145
    %v150 = vmul.f32 %v96, %v145
    %v151 = vmul.f32 %v97, %v145
    %158 = vrot.lane.b32.xlu0 %v146, 126
    %v159 = vpop.permute.xlu0 %158
    %160 = vrot.lane.b32.xlu0 %v147, 126
    %v161 = vpop.permute.xlu0 %160
    %162 = vrot.lane.b32.xlu0 %v148, 126
    %v163 = vpop.permute.xlu0 %162
    %164 = vrot.lane.b32.xlu0 %v149, 126
    %v165 = vpop.permute.xlu0 %164
    %166 = vrot.lane.b32.xlu0 %v150, 126
    %v167 = vpop.permute.xlu0 %166
    %168 = vrot.lane.b32.xlu0 %v151, 126
    %v169 = vpop.permute.xlu0 %168
    %v176 = vadd.f32 %v138, %v159
    %v177 = vadd.f32 %v139, %v161
    %v178 = vadd.f32 %v140, %v163
    %v179 = vadd.f32 %v141, %v165
    %v180 = vadd.f32 %v142, %v167
    %v181 = vadd.f32 %v143, %v169
    %s182 = sld [smem:[#allocation2 + $0x3]]
    %v183 = vstv %s182
    %v184 = vmul.f32 %v92, %v183
    %v185 = vmul.f32 %v93, %v183
    %v186 = vmul.f32 %v94, %v183
    %v187 = vmul.f32 %v95, %v183
    %v188 = vmul.f32 %v96, %v183
    %v189 = vmul.f32 %v97, %v183
    %vm196 = vcmask 1046528
    %v197 = vrot.slane %v184, 1
    %v198 = vrot.slane %v185, 1
    %v199 = vsel %vm196, %v197, %v198
    %v200 = vrot.slane %v186, 1
    %v201 = vsel %vm196, %v198, %v200
    %v202 = vrot.slane %v187, 1
    %v203 = vrot.slane %v188, 1
    %v204 = vsel %vm196, %v202, %v203
    %v205 = vrot.slane %v189, 1
    %v206 = vsel %vm196, %v203, %v205
    %v213 = vadd.f32 %v176, %v199
    %v214 = vadd.f32 %v177, %v201
    %v215 = vadd.f32 %v178, %v200
    %v216 = vadd.f32 %v179, %v204
    %v217 = vadd.f32 %v180, %v206
    %v218 = vadd.f32 %v181, %v205
    %s219 = sld [smem:[#allocation2 + $0x4]]
    %v220 = vstv %s219
    %v221 = vmul.f32 %v92, %v220
    %v222 = vmul.f32 %v93, %v220
    %v223 = vmul.f32 %v94, %v220
    %v224 = vmul.f32 %v95, %v220
    %v225 = vmul.f32 %v96, %v220
    %v226 = vmul.f32 %v97, %v220
    %v233 = vrot.slane %v221, 1
    %v234 = vrot.slane %v222, 1
    %v235 = vsel %vm196, %v233, %v234
    %v236 = vrot.slane %v223, 1
    %v237 = vsel %vm196, %v234, %v236
    %v238 = vrot.slane %v224, 1
    %v239 = vrot.slane %v225, 1
    %v240 = vsel %vm196, %v238, %v239
    %v241 = vrot.slane %v226, 1
    %v242 = vsel %vm196, %v239, %v241
    %243 = vrot.lane.b32.xlu0 %v235, 127
    %v244 = vpop.permute.xlu0 %243
    %245 = vrot.lane.b32.xlu0 %v237, 127
    %v246 = vpop.permute.xlu0 %245
    %247 = vrot.lane.b32.xlu0 %v236, 127
    %v248 = vpop.permute.xlu0 %247
    %249 = vrot.lane.b32.xlu0 %v240, 127
    %v250 = vpop.permute.xlu0 %249
    %251 = vrot.lane.b32.xlu0 %v242, 127
    %v252 = vpop.permute.xlu0 %251
    %253 = vrot.lane.b32.xlu0 %v241, 127
    %v254 = vpop.permute.xlu0 %253
    %v261 = vadd.f32 %v213, %v244
    %v262 = vadd.f32 %v214, %v246
    %v263 = vadd.f32 %v215, %v248
    %v264 = vadd.f32 %v216, %v250
    %v265 = vadd.f32 %v217, %v252
    %v266 = vadd.f32 %v218, %v254
    %s267 = sld [smem:[#allocation2 + $0x5]]
    %v268 = vstv %s267
    %v269 = vmul.f32 %v92, %v268
    %v270 = vmul.f32 %v93, %v268
    %v271 = vmul.f32 %v94, %v268
    %v272 = vmul.f32 %v95, %v268
    %v273 = vmul.f32 %v96, %v268
    %v274 = vmul.f32 %v97, %v268
    %v281 = vrot.slane %v269, 1
    %v282 = vrot.slane %v270, 1
    %v283 = vsel %vm196, %v281, %v282
    %v284 = vrot.slane %v271, 1
    %v285 = vsel %vm196, %v282, %v284
    %v286 = vrot.slane %v272, 1
    %v287 = vrot.slane %v273, 1
    %v288 = vsel %vm196, %v286, %v287
    %v289 = vrot.slane %v274, 1
    %v290 = vsel %vm196, %v287, %v289
    %291 = vrot.lane.b32.xlu0 %v283, 126
    %v292 = vpop.permute.xlu0 %291
    %293 = vrot.lane.b32.xlu0 %v285, 126
    %v294 = vpop.permute.xlu0 %293
    %295 = vrot.lane.b32.xlu0 %v284, 126
    %v296 = vpop.permute.xlu0 %295
    %297 = vrot.lane.b32.xlu0 %v288, 126
    %v298 = vpop.permute.xlu0 %297
    %299 = vrot.lane.b32.xlu0 %v290, 126
    %v300 = vpop.permute.xlu0 %299
    %301 = vrot.lane.b32.xlu0 %v289, 126
    %v302 = vpop.permute.xlu0 %301
    %v309 = vadd.f32 %v261, %v292
    %v310 = vadd.f32 %v262, %v294
    %v311 = vadd.f32 %v263, %v296
    %v312 = vadd.f32 %v264, %v298
    %v313 = vadd.f32 %v265, %v300
    %v314 = vadd.f32 %v266, %v302
    %s315 = sld [smem:[#allocation2 + $0x6]]
    %v316 = vstv %s315
    %v317 = vmul.f32 %v92, %v316
    %v318 = vmul.f32 %v93, %v316
    %v319 = vmul.f32 %v94, %v316
    %v320 = vmul.f32 %v95, %v316
    %v321 = vmul.f32 %v96, %v316
    %v322 = vmul.f32 %v97, %v316
    %vm329 = vcmask 1045504
    %v330 = vrot.slane %v317, 2
    %v331 = vrot.slane %v318, 2
    %v332 = vsel %vm329, %v330, %v331
    %v333 = vrot.slane %v319, 2
    %v334 = vsel %vm329, %v331, %v333
    %v335 = vrot.slane %v320, 2
    %v336 = vrot.slane %v321, 2
    %v337 = vsel %vm329, %v335, %v336
    %v338 = vrot.slane %v322, 2
    %v339 = vsel %vm329, %v336, %v338
    %v346 = vadd.f32 %v309, %v332
    %v347 = vadd.f32 %v310, %v334
    %v348 = vadd.f32 %v311, %v333
    %v349 = vadd.f32 %v312, %v337
    %v350 = vadd.f32 %v313, %v339
    %v351 = vadd.f32 %v314, %v338
    %s352 = sld [smem:[#allocation2 + $0x7]]
    %v353 = vstv %s352
    %v354 = vmul.f32 %v92, %v353
    %v355 = vmul.f32 %v93, %v353
    %v356 = vmul.f32 %v94, %v353
    %v357 = vmul.f32 %v95, %v353
    %v358 = vmul.f32 %v96, %v353
    %v359 = vmul.f32 %v97, %v353
    %v366 = vrot.slane %v354, 2
    %v367 = vrot.slane %v355, 2
    %v368 = vsel %vm329, %v366, %v367
    %v369 = vrot.slane %v356, 2
    %v370 = vsel %vm329, %v367, %v369
    %v371 = vrot.slane %v357, 2
    %v372 = vrot.slane %v358, 2
    %v373 = vsel %vm329, %v371, %v372
    %v374 = vrot.slane %v359, 2
    %v375 = vsel %vm329, %v372, %v374
    %376 = vrot.lane.b32.xlu0 %v368, 127
    %v377 = vpop.permute.xlu0 %376
    %378 = vrot.lane.b32.xlu0 %v370, 127
    %v379 = vpop.permute.xlu0 %378
    %380 = vrot.lane.b32.xlu0 %v369, 127
    %v381 = vpop.permute.xlu0 %380
    %382 = vrot.lane.b32.xlu0 %v373, 127
    %v383 = vpop.permute.xlu0 %382
    %384 = vrot.lane.b32.xlu0 %v375, 127
    %v385 = vpop.permute.xlu0 %384
    %386 = vrot.lane.b32.xlu0 %v374, 127
    %v387 = vpop.permute.xlu0 %386
    %v394 = vadd.f32 %v346, %v377
    %v395 = vadd.f32 %v347, %v379
    %v396 = vadd.f32 %v348, %v381
    %v397 = vadd.f32 %v349, %v383
    %v398 = vadd.f32 %v350, %v385
    %v399 = vadd.f32 %v351, %v387
    %s400 = sld [smem:[#allocation2 + $0x8]]
    %v401 = vstv %s400
    %v402 = vmul.f32 %v92, %v401
    %v403 = vmul.f32 %v93, %v401
    %v404 = vmul.f32 %v94, %v401
    %v405 = vmul.f32 %v95, %v401
    %v406 = vmul.f32 %v96, %v401
    %v407 = vmul.f32 %v97, %v401
    %v414 = vrot.slane %v402, 2
    %v415 = vrot.slane %v403, 2
    %v416 = vsel %vm329, %v414, %v415
    %v417 = vrot.slane %v404, 2
    %v418 = vsel %vm329, %v415, %v417
    %v419 = vrot.slane %v405, 2
    %v420 = vrot.slane %v406, 2
    %v421 = vsel %vm329, %v419, %v420
    %v422 = vrot.slane %v407, 2
    %v423 = vsel %vm329, %v420, %v422
    %424 = vrot.lane.b32.xlu0 %v416, 126
    %v425 = vpop.permute.xlu0 %424
    %426 = vrot.lane.b32.xlu0 %v418, 126
    %v427 = vpop.permute.xlu0 %426
    %428 = vrot.lane.b32.xlu0 %v417, 126
    %v429 = vpop.permute.xlu0 %428
    %430 = vrot.lane.b32.xlu0 %v421, 126
    %v431 = vpop.permute.xlu0 %430
    %432 = vrot.lane.b32.xlu0 %v423, 126
    %v433 = vpop.permute.xlu0 %432
    %434 = vrot.lane.b32.xlu0 %v422, 126
    %v435 = vpop.permute.xlu0 %434
    %v442 = vadd.f32 %v394, %v425
    %v443 = vadd.f32 %v395, %v427
    %v444 = vadd.f32 %v396, %v429
    %v445 = vadd.f32 %v397, %v431
    %v446 = vadd.f32 %v398, %v433
    %v447 = vadd.f32 %v399, %v435
    %s448 = sld [smem:[#allocation2 + $0x9]]
    %v449 = vstv %s448
    %v450 = vmul.f32 %v92, %v449
    %v451 = vmul.f32 %v93, %v449
    %v452 = vmul.f32 %v94, %v449
    %v453 = vmul.f32 %v95, %v449
    %v454 = vmul.f32 %v96, %v449
    %v455 = vmul.f32 %v97, %v449
    %s456 = sld [smem:[#allocation2 + $0xa]]
    %v457 = vstv %s456
    %v458 = vmul.f32 %v92, %v457
    %v459 = vmul.f32 %v93, %v457
    %v460 = vmul.f32 %v94, %v457
    %v461 = vmul.f32 %v95, %v457
    %v462 = vmul.f32 %v96, %v457
    %v463 = vmul.f32 %v97, %v457
    %470 = vrot.lane.b32.xlu0 %v458, 127
    %v471 = vpop.permute.xlu0 %470
    %472 = vrot.lane.b32.xlu0 %v459, 127
    %v473 = vpop.permute.xlu0 %472
    %474 = vrot.lane.b32.xlu0 %v460, 127
    %v475 = vpop.permute.xlu0 %474
    %476 = vrot.lane.b32.xlu0 %v461, 127
    %v477 = vpop.permute.xlu0 %476
    %478 = vrot.lane.b32.xlu0 %v462, 127
    %v479 = vpop.permute.xlu0 %478
    %480 = vrot.lane.b32.xlu0 %v463, 127
    %v481 = vpop.permute.xlu0 %480
    %v488 = vadd.f32 %v450, %v471
    %v489 = vadd.f32 %v451, %v473
    %v490 = vadd.f32 %v452, %v475
    %v491 = vadd.f32 %v453, %v477
    %v492 = vadd.f32 %v454, %v479
    %v493 = vadd.f32 %v455, %v481
    %s494 = sld [smem:[#allocation2 + $0xb]]
    %v495 = vstv %s494
    %v496 = vmul.f32 %v92, %v495
    %v497 = vmul.f32 %v93, %v495
    %v498 = vmul.f32 %v94, %v495
    %v499 = vmul.f32 %v95, %v495
    %v500 = vmul.f32 %v96, %v495
    %v501 = vmul.f32 %v97, %v495
    %508 = vrot.lane.b32.xlu0 %v496, 126
    %v509 = vpop.permute.xlu0 %508
    %510 = vrot.lane.b32.xlu0 %v497, 126
    %v511 = vpop.permute.xlu0 %510
    %512 = vrot.lane.b32.xlu0 %v498, 126
    %v513 = vpop.permute.xlu0 %512
    %514 = vrot.lane.b32.xlu0 %v499, 126
    %v515 = vpop.permute.xlu0 %514
    %516 = vrot.lane.b32.xlu0 %v500, 126
    %v517 = vpop.permute.xlu0 %516
    %518 = vrot.lane.b32.xlu0 %v501, 126
    %v519 = vpop.permute.xlu0 %518
    %v526 = vadd.f32 %v488, %v509
    %v527 = vadd.f32 %v489, %v511
    %v528 = vadd.f32 %v490, %v513
    %v529 = vadd.f32 %v491, %v515
    %v530 = vadd.f32 %v492, %v517
    %v531 = vadd.f32 %v493, %v519
    %s532 = sld [smem:[#allocation2 + $0xc]]
    %v533 = vstv %s532
    %v534 = vmul.f32 %v92, %v533
    %v535 = vmul.f32 %v93, %v533
    %v536 = vmul.f32 %v94, %v533
    %v537 = vmul.f32 %v95, %v533
    %v538 = vmul.f32 %v96, %v533
    %v539 = vmul.f32 %v97, %v533
    %s540 = sld [smem:[#allocation2 + $0xd]]
    %v541 = vstv %s540
    %v542 = vmul.f32 %v92, %v541
    %v543 = vmul.f32 %v93, %v541
    %v544 = vmul.f32 %v94, %v541
    %v545 = vmul.f32 %v95, %v541
    %v546 = vmul.f32 %v96, %v541
    %v547 = vmul.f32 %v97, %v541
    %v554 = vrot.slane %v542, 1
    %v555 = vrot.slane %v543, 1
    %v556 = vsel %vm196, %v554, %v555
    %v557 = vrot.slane %v544, 1
    %v558 = vsel %vm196, %v555, %v557
    %v559 = vrot.slane %v545, 1
    %v560 = vrot.slane %v546, 1
    %v561 = vsel %vm196, %v559, %v560
    %v562 = vrot.slane %v547, 1
    %v563 = vsel %vm196, %v560, %v562
    %v570 = vadd.f32 %v534, %v556
    %v571 = vadd.f32 %v535, %v558
    %v572 = vadd.f32 %v536, %v557
    %v573 = vadd.f32 %v537, %v561
    %v574 = vadd.f32 %v538, %v563
    %v575 = vadd.f32 %v539, %v562
    %s576 = sld [smem:[#allocation2 + $0xe]]
    %v577 = vstv %s576
    %v578 = vmul.f32 %v92, %v577
    %v579 = vmul.f32 %v93, %v577
    %v580 = vmul.f32 %v94, %v577
    %v581 = vmul.f32 %v95, %v577
    %v582 = vmul.f32 %v96, %v577
    %v583 = vmul.f32 %v97, %v577
    %v590 = vrot.slane %v578, 2
    %v591 = vrot.slane %v579, 2
    %v592 = vsel %vm329, %v590, %v591
    %v593 = vrot.slane %v580, 2
    %v594 = vsel %vm329, %v591, %v593
    %v595 = vrot.slane %v581, 2
    %v596 = vrot.slane %v582, 2
    %v597 = vsel %vm329, %v595, %v596
    %v598 = vrot.slane %v583, 2
    %v599 = vsel %vm329, %v596, %v598
    %v606 = vadd.f32 %v570, %v592
    %v607 = vadd.f32 %v571, %v594
    %v608 = vadd.f32 %v572, %v593
    %v609 = vadd.f32 %v573, %v597
    %v610 = vadd.f32 %v574, %v599
    %v611 = vadd.f32 %v575, %v598
    %s612 = sld [smem:[#allocation2 + $0xf]]
    %s613 = sld [smem:[#allocation2 + $0x10]]
    %v614 = vmul.f32 %v442, %v66
    %v615 = vmul.f32 %v443, %v67
    %v616 = vmul.f32 %v444, %v68
    %v617 = vmul.f32 %v445, %v66
    %v618 = vmul.f32 %v446, %v67
    %v619 = vmul.f32 %v447, %v68
    %vm620 = vcmask 162816
    %v621 = vsel %vm620, %v614, 0.0
    %v622 = vsel %vm620, %v615, 0.0
    %v623 = vadd.f32 %v621, %v622
    %vm624 = vcmask 158720
    %v625 = vsel %vm624, %v616, 0.0
    %v626 = vadd.f32 %v623, %v625
    %v627 = vsel %vm620, %v617, 0.0
    %v628 = vadd.f32 %v626, %v627
    %v629 = vsel %vm620, %v618, 0.0
    %v630 = vadd.f32 %v628, %v629
    %v631 = vsel %vm624, %v619, 0.0
    %v632 = vadd.f32 %v630, %v631
    %633 = vadd.xlane.f32.xlu0 %v632
    %v634 = vpop.xlane.xlu0 %633
    %v635 = vrot.slane %v634, 4
    %v636 = vadd.f32 %v634, %v635
    %v637 = vrot.slane %v636, 2
    %v638 = vadd.f32 %v636, %v637
    %v639 = vrot.slane %v638, 1
    %v640 = vadd.f32 %v638, %v639
    %s641 = vtos %v640
    %v642 = vrcp.pop 512.0
    %s643 = vtos %v642
    %s644 = smul.f32 %s641, %s643
    %v645 = vstv %s644
    %v646 = vsub.f32 %v614, %v645
    %v647 = vsub.f32 %v615, %v645
    %v648 = vsub.f32 %v616, %v645
    %v649 = vsub.f32 %v617, %v645
    %v650 = vsub.f32 %v618, %v645
    %v651 = vsub.f32 %v619, %v645
    %v652 = vmul.f32 %v646, %v66
    %v653 = vmul.f32 %v647, %v67
    %v654 = vmul.f32 %v648, %v68
    %v655 = vmul.f32 %v649, %v66
    %v656 = vmul.f32 %v650, %v67
    %v657 = vmul.f32 %v651, %v68
    %v658 = vmul.f32 %v652, %v652
    %v659 = vmul.f32 %v653, %v653
    %v660 = vmul.f32 %v654, %v654
    %v661 = vmul.f32 %v655, %v655
    %v662 = vmul.f32 %v656, %v656
    %v663 = vmul.f32 %v657, %v657
    %v664 = vsel %vm620, %v658, 0.0
    %v665 = vsel %vm620, %v659, 0.0
    %v666 = vadd.f32 %v664, %v665
    %v667 = vsel %vm624, %v660, 0.0
    %v668 = vadd.f32 %v666, %v667
    %v669 = vsel %vm620, %v661, 0.0
    %v670 = vadd.f32 %v668, %v669
    %v671 = vsel %vm620, %v662, 0.0
    %v672 = vadd.f32 %v670, %v671
    %v673 = vsel %vm624, %v663, 0.0
    %v674 = vadd.f32 %v672, %v673
    %675 = vadd.xlane.f32.xlu0 %v674
    %v676 = vpop.xlane.xlu0 %675
    %v677 = vrot.slane %v676, 4
    %v678 = vadd.f32 %v676, %v677
    %v679 = vrot.slane %v678, 2
    %v680 = vadd.f32 %v678, %v679
    %v681 = vrot.slane %v680, 1
    %v682 = vadd.f32 %v680, %v681
    %s683 = vtos %v682
    %v684 = vrcp.pop 512.0
    %s685 = vtos %v684
    %s686 = smul.f32 %s683, %s685
    %s687 = sadd.f32 %s686, 1e-05
    %v688 = vstv %s687
    %v689 = vrsqrt.pop %v688
    %s690 = vtos %v689
    %s691 = smul.f32 %s612, %s690
    %v692 = vstv %s691
    %v693 = vmul.f32 %v652, %v692
    %v694 = vmul.f32 %v653, %v692
    %v695 = vmul.f32 %v654, %v692
    %v696 = vmul.f32 %v655, %v692
    %v697 = vmul.f32 %v656, %v692
    %v698 = vmul.f32 %v657, %v692
    %v699 = vstv %s613
    %v700 = vadd.f32 %v693, %v699
    %v701 = vadd.f32 %v694, %v699
    %v702 = vadd.f32 %v695, %v699
    %v703 = vadd.f32 %v696, %v699
    %v704 = vadd.f32 %v697, %v699
    %v705 = vadd.f32 %v698, %v699
    %v706 = vmax.f32 %v700, 0.0
    %v707 = vmax.f32 %v701, 0.0
    %v708 = vmax.f32 %v702, 0.0
    %v709 = vmax.f32 %v703, 0.0
    %v710 = vmax.f32 %v704, 0.0
    %v711 = vmax.f32 %v705, 0.0
    %v712 = vmul.f32 %v706, %v66
    %v713 = vmul.f32 %v707, %v67
    %v714 = vmul.f32 %v708, %v68
    %v715 = vmul.f32 %v709, %v66
    %v716 = vmul.f32 %v710, %v67
    %v717 = vmul.f32 %v711, %v68
    %s718 = sld [smem:[#allocation2 + $0x11]]
    %s719 = sld [smem:[#allocation2 + $0x12]]
    %vm723 = vcmask 1040384
    %v724 = vrot.slane %v66, 7
    %v725 = vrot.slane %v67, 7
    %v726 = vsel %vm723, %v724, %v725
    %v727 = vrot.slane %v68, 7
    %v728 = vsel %vm723, %v725, %v727
    %v732 = vmul.f32 %v526, %v724
    %v733 = vmul.f32 %v527, %v726
    %v734 = vmul.f32 %v528, %v728
    %v735 = vmul.f32 %v529, %v724
    %v736 = vmul.f32 %v530, %v726
    %v737 = vmul.f32 %v531, %v728
    %v744 = vrot.slane %v732, 1
    %v745 = vrot.slane %v733, 1
    %v746 = vsel %vm196, %v744, %v745
    %v747 = vrot.slane %v734, 1
    %v748 = vsel %vm196, %v745, %v747
    %v749 = vrot.slane %v735, 1
    %v750 = vrot.slane %v736, 1
    %v751 = vsel %vm196, %v749, %v750
    %v752 = vrot.slane %v737, 1
    %v753 = vsel %vm196, %v750, %v752
    %v760 = vsel %vm620, %v746, 0.0
    %v761 = vsel %vm620, %v748, 0.0
    %v762 = vadd.f32 %v760, %v761
    %v763 = vsel %vm624, %v747, 0.0
    %v764 = vadd.f32 %v762, %v763
    %v765 = vsel %vm620, %v751, 0.0
    %v766 = vadd.f32 %v764, %v765
    %v767 = vsel %vm620, %v753, 0.0
    %v768 = vadd.f32 %v766, %v767
    %v769 = vsel %vm624, %v752, 0.0
    %v770 = vadd.f32 %v768, %v769
    %771 = vadd.xlane.f32.xlu0 %v770
    %v772 = vpop.xlane.xlu0 %771
    %v773 = vrot.slane %v772, 4
    %v774 = vadd.f32 %v772, %v773
    %v775 = vrot.slane %v774, 2
    %v776 = vadd.f32 %v774, %v775
    %v777 = vrot.slane %v776, 1
    %v778 = vadd.f32 %v776, %v777
    %s779 = vtos %v778
    %v780 = vrcp.pop 512.0
    %s781 = vtos %v780
    %s782 = smul.f32 %s779, %s781
    %v783 = vstv %s782
    %v784 = vsub.f32 %v732, %v783
    %v785 = vsub.f32 %v733, %v783
    %v786 = vsub.f32 %v734, %v783
    %v787 = vsub.f32 %v735, %v783
    %v788 = vsub.f32 %v736, %v783
    %v789 = vsub.f32 %v737, %v783
    %v790 = vmul.f32 %v784, %v724
    %v791 = vmul.f32 %v785, %v726
    %v792 = vmul.f32 %v786, %v728
    %v793 = vmul.f32 %v787, %v724
    %v794 = vmul.f32 %v788, %v726
    %v795 = vmul.f32 %v789, %v728
    %v796 = vmul.f32 %v790, %v790
    %v797 = vmul.f32 %v791, %v791
    %v798 = vmul.f32 %v792, %v792
    %v799 = vmul.f32 %v793, %v793
    %v800 = vmul.f32 %v794, %v794
    %v801 = vmul.f32 %v795, %v795
    %v808 = vrot.slane %v796, 1
    %v809 = vrot.slane %v797, 1
    %v810 = vsel %vm196, %v808, %v809
    %v811 = vrot.slane %v798, 1
    %v812 = vsel %vm196, %v809, %v811
    %v813 = vrot.slane %v799, 1
    %v814 = vrot.slane %v800, 1
    %v815 = vsel %vm196, %v813, %v814
    %v816 = vrot.slane %v801, 1
    %v817 = vsel %vm196, %v814, %v816
    %v824 = vsel %vm620, %v810, 0.0
    %v825 = vsel %vm620, %v812, 0.0
    %v826 = vadd.f32 %v824, %v825
    %v827 = vsel %vm624, %v811, 0.0
    %v828 = vadd.f32 %v826, %v827
    %v829 = vsel %vm620, %v815, 0.0
    %v830 = vadd.f32 %v828, %v829
    %v831 = vsel %vm620, %v817, 0.0
    %v832 = vadd.f32 %v830, %v831
    %v833 = vsel %vm624, %v816, 0.0
    %v834 = vadd.f32 %v832, %v833
    %835 = vadd.xlane.f32.xlu0 %v834
    %v836 = vpop.xlane.xlu0 %835
    %v837 = vrot.slane %v836, 4
    %v838 = vadd.f32 %v836, %v837
    %v839 = vrot.slane %v838, 2
    %v840 = vadd.f32 %v838, %v839
    %v841 = vrot.slane %v840, 1
    %v842 = vadd.f32 %v840, %v841
    %s843 = vtos %v842
    %v844 = vrcp.pop 512.0
    %s845 = vtos %v844
    %s846 = smul.f32 %s843, %s845
    %s847 = sadd.f32 %s846, 1e-05
    %v848 = vstv %s847
    %v849 = vrsqrt.pop %v848
    %s850 = vtos %v849
    %s851 = smul.f32 %s718, %s850
    %v852 = vstv %s851
    %v853 = vmul.f32 %v790, %v852
    %v854 = vmul.f32 %v791, %v852
    %v855 = vmul.f32 %v792, %v852
    %v856 = vmul.f32 %v793, %v852
    %v857 = vmul.f32 %v794, %v852
    %v858 = vmul.f32 %v795, %v852
    %v859 = vstv %s719
    %v860 = vadd.f32 %v853, %v859
    %v861 = vadd.f32 %v854, %v859
    %v862 = vadd.f32 %v855, %v859
    %v863 = vadd.f32 %v856, %v859
    %v864 = vadd.f32 %v857, %v859
    %v865 = vadd.f32 %v858, %v859
    %v866 = vmax.f32 %v860, 0.0
    %v867 = vmax.f32 %v861, 0.0
    %v868 = vmax.f32 %v862, 0.0
    %v869 = vmax.f32 %v863, 0.0
    %v870 = vmax.f32 %v864, 0.0
    %v871 = vmax.f32 %v865, 0.0
    %v872 = vmul.f32 %v866, %v724
    %v873 = vmul.f32 %v867, %v726
    %v874 = vmul.f32 %v868, %v728
    %v875 = vmul.f32 %v869, %v724
    %v876 = vmul.f32 %v870, %v726
    %v877 = vmul.f32 %v871, %v728
    %v884 = vrot.slane %v872, 1
    %v885 = vrot.slane %v873, 1
    %v886 = vsel %vm196, %v884, %v885
    %v887 = vrot.slane %v874, 1
    %v888 = vsel %vm196, %v885, %v887
    %v889 = vrot.slane %v875, 1
    %v890 = vrot.slane %v876, 1
    %v891 = vsel %vm196, %v889, %v890
    %v892 = vrot.slane %v877, 1
    %v893 = vsel %vm196, %v890, %v892
    %v900 = vadd.f32 %v712, %v886
    %v901 = vadd.f32 %v713, %v888
    %v902 = vadd.f32 %v714, %v887
    %v903 = vadd.f32 %v715, %v891
    %v904 = vadd.f32 %v716, %v893
    %v905 = vadd.f32 %v717, %v892
    %s906 = sld [smem:[#allocation2 + $0x13]]
    %s907 = sld [smem:[#allocation2 + $0x14]]
    %908 = vrot.lane.b32.xlu0 %v66, 1
    %v909 = vpop.permute.xlu0 %908
    %910 = vrot.lane.b32.xlu0 %v67, 1
    %v911 = vpop.permute.xlu0 %910
    %912 = vrot.lane.b32.xlu0 %v68, 1
    %v913 = vpop.permute.xlu0 %912
    %v917 = vmul.f32 %v606, %v909
    %v918 = vmul.f32 %v607, %v911
    %v919 = vmul.f32 %v608, %v913
    %v920 = vmul.f32 %v609, %v909
    %v921 = vmul.f32 %v610, %v911
    %v922 = vmul.f32 %v611, %v913
    %929 = vrot.lane.b32.xlu0 %v917, 127
    %v930 = vpop.permute.xlu0 %929
    %931 = vrot.lane.b32.xlu0 %v918, 127
    %v932 = vpop.permute.xlu0 %931
    %933 = vrot.lane.b32.xlu0 %v919, 127
    %v934 = vpop.permute.xlu0 %933
    %935 = vrot.lane.b32.xlu0 %v920, 127
    %v936 = vpop.permute.xlu0 %935
    %937 = vrot.lane.b32.xlu0 %v921, 127
    %v938 = vpop.permute.xlu0 %937
    %939 = vrot.lane.b32.xlu0 %v922, 127
    %v940 = vpop.permute.xlu0 %939
    %v947 = vsel %vm620, %v930, 0.0
    %v948 = vsel %vm620, %v932, 0.0
    %v949 = vadd.f32 %v947, %v948
    %v950 = vsel %vm624, %v934, 0.0
    %v951 = vadd.f32 %v949, %v950
    %v952 = vsel %vm620, %v936, 0.0
    %v953 = vadd.f32 %v951, %v952
    %v954 = vsel %vm620, %v938, 0.0
    %v955 = vadd.f32 %v953, %v954
    %v956 = vsel %vm624, %v940, 0.0
    %v957 = vadd.f32 %v955, %v956
    %958 = vadd.xlane.f32.xlu0 %v957
    %v959 = vpop.xlane.xlu0 %958
    %v960 = vrot.slane %v959, 4
    %v961 = vadd.f32 %v959, %v960
    %v962 = vrot.slane %v961, 2
    %v963 = vadd.f32 %v961, %v962
    %v964 = vrot.slane %v963, 1
    %v965 = vadd.f32 %v963, %v964
    %s966 = vtos %v965
    %v967 = vrcp.pop 512.0
    %s968 = vtos %v967
    %s969 = smul.f32 %s966, %s968
    %v970 = vstv %s969
    %v971 = vsub.f32 %v917, %v970
    %v972 = vsub.f32 %v918, %v970
    %v973 = vsub.f32 %v919, %v970
    %v974 = vsub.f32 %v920, %v970
    %v975 = vsub.f32 %v921, %v970
    %v976 = vsub.f32 %v922, %v970
    %v977 = vmul.f32 %v971, %v909
    %v978 = vmul.f32 %v972, %v911
    %v979 = vmul.f32 %v973, %v913
    %v980 = vmul.f32 %v974, %v909
    %v981 = vmul.f32 %v975, %v911
    %v982 = vmul.f32 %v976, %v913
    %v983 = vmul.f32 %v977, %v977
    %v984 = vmul.f32 %v978, %v978
    %v985 = vmul.f32 %v979, %v979
    %v986 = vmul.f32 %v980, %v980
    %v987 = vmul.f32 %v981, %v981
    %v988 = vmul.f32 %v982, %v982
    %995 = vrot.lane.b32.xlu0 %v983, 127
    %v996 = vpop.permute.xlu0 %995
    %997 = vrot.lane.b32.xlu0 %v984, 127
    %v998 = vpop.permute.xlu0 %997
    %999 = vrot.lane.b32.xlu0 %v985, 127
    %v1000 = vpop.permute.xlu0 %999
    %1001 = vrot.lane.b32.xlu0 %v986, 127
    %v1002 = vpop.permute.xlu0 %1001
    %1003 = vrot.lane.b32.xlu0 %v987, 127
    %v1004 = vpop.permute.xlu0 %1003
    %1005 = vrot.lane.b32.xlu0 %v988, 127
    %v1006 = vpop.permute.xlu0 %1005
    %v1013 = vsel %vm620, %v996, 0.0
    %v1014 = vsel %vm620, %v998, 0.0
    %v1015 = vadd.f32 %v1013, %v1014
    %v1016 = vsel %vm624, %v1000, 0.0
    %v1017 = vadd.f32 %v1015, %v1016
    %v1018 = vsel %vm620, %v1002, 0.0
    %v1019 = vadd.f32 %v1017, %v1018
    %v1020 = vsel %vm620, %v1004, 0.0
    %v1021 = vadd.f32 %v1019, %v1020
    %v1022 = vsel %vm624, %v1006, 0.0
    %v1023 = vadd.f32 %v1021, %v1022
    %1024 = vadd.xlane.f32.xlu0 %v1023
    %v1025 = vpop.xlane.xlu0 %1024
    %v1026 = vrot.slane %v1025, 4
    %v1027 = vadd.f32 %v1025, %v1026
    %v1028 = vrot.slane %v1027, 2
    %v1029 = vadd.f32 %v1027, %v1028
    %v1030 = vrot.slane %v1029, 1
    %v1031 = vadd.f32 %v1029, %v1030
    %s1032 = vtos %v1031
    %v1033 = vrcp.pop 512.0
    %s1034 = vtos %v1033
    %s1035 = smul.f32 %s1032, %s1034
    %s1036 = sadd.f32 %s1035, 1e-05
    %v1037 = vstv %s1036
    %v1038 = vrsqrt.pop %v1037
    %s1039 = vtos %v1038
    %s1040 = smul.f32 %s906, %s1039
    %v1041 = vstv %s1040
    %v1042 = vmul.f32 %v977, %v1041
    %v1043 = vmul.f32 %v978, %v1041
    %v1044 = vmul.f32 %v979, %v1041
    %v1045 = vmul.f32 %v980, %v1041
    %v1046 = vmul.f32 %v981, %v1041
    %v1047 = vmul.f32 %v982, %v1041
    %v1048 = vstv %s907
    %v1049 = vadd.f32 %v1042, %v1048
    %v1050 = vadd.f32 %v1043, %v1048
    %v1051 = vadd.f32 %v1044, %v1048
    %v1052 = vadd.f32 %v1045, %v1048
    %v1053 = vadd.f32 %v1046, %v1048
    %v1054 = vadd.f32 %v1047, %v1048
    %v1055 = vmax.f32 %v1049, 0.0
    %v1056 = vmax.f32 %v1050, 0.0
    %v1057 = vmax.f32 %v1051, 0.0
    %v1058 = vmax.f32 %v1052, 0.0
    %v1059 = vmax.f32 %v1053, 0.0
    %v1060 = vmax.f32 %v1054, 0.0
    %v1061 = vmul.f32 %v1055, %v909
    %v1062 = vmul.f32 %v1056, %v911
    %v1063 = vmul.f32 %v1057, %v913
    %v1064 = vmul.f32 %v1058, %v909
    %v1065 = vmul.f32 %v1059, %v911
    %v1066 = vmul.f32 %v1060, %v913
    %1073 = vrot.lane.b32.xlu0 %v1061, 127
    %v1074 = vpop.permute.xlu0 %1073
    %1075 = vrot.lane.b32.xlu0 %v1062, 127
    %v1076 = vpop.permute.xlu0 %1075
    %1077 = vrot.lane.b32.xlu0 %v1063, 127
    %v1078 = vpop.permute.xlu0 %1077
    %1079 = vrot.lane.b32.xlu0 %v1064, 127
    %v1080 = vpop.permute.xlu0 %1079
    %1081 = vrot.lane.b32.xlu0 %v1065, 127
    %v1082 = vpop.permute.xlu0 %1081
    %1083 = vrot.lane.b32.xlu0 %v1066, 127
    %v1084 = vpop.permute.xlu0 %1083
    %v1091 = vadd.f32 %v900, %v1074
    %v1092 = vadd.f32 %v901, %v1076
    %v1093 = vadd.f32 %v902, %v1078
    %v1094 = vadd.f32 %v903, %v1080
    %v1095 = vadd.f32 %v904, %v1082
    %v1096 = vadd.f32 %v905, %v1084
    %s1097 = sld [smem:[#allocation5]]
    %v1098 = vstv %s1097
    %v1099 = vmul.f32 %v1091, %v1098
    %v1100 = vmul.f32 %v1092, %v1098
    %v1101 = vmul.f32 %v1093, %v1098
    %v1102 = vmul.f32 %v1094, %v1098
    %v1103 = vmul.f32 %v1095, %v1098
    %v1104 = vmul.f32 %v1096, %v1098
    %s1105 = sld [smem:[#allocation5 + $0x1]]
    %v1106 = vstv %s1105
    %v1107 = vmul.f32 %v1091, %v1106
    %v1108 = vmul.f32 %v1092, %v1106
    %v1109 = vmul.f32 %v1093, %v1106
    %v1110 = vmul.f32 %v1094, %v1106
    %v1111 = vmul.f32 %v1095, %v1106
    %v1112 = vmul.f32 %v1096, %v1106
    %1119 = vrot.lane.b32.xlu0 %v1107, 127
    %v1120 = vpop.permute.xlu0 %1119
    %1121 = vrot.lane.b32.xlu0 %v1108, 127
    %v1122 = vpop.permute.xlu0 %1121
    %1123 = vrot.lane.b32.xlu0 %v1109, 127
    %v1124 = vpop.permute.xlu0 %1123
    %1125 = vrot.lane.b32.xlu0 %v1110, 127
    %v1126 = vpop.permute.xlu0 %1125
    %1127 = vrot.lane.b32.xlu0 %v1111, 127
    %v1128 = vpop.permute.xlu0 %1127
    %1129 = vrot.lane.b32.xlu0 %v1112, 127
    %v1130 = vpop.permute.xlu0 %1129
    %v1137 = vadd.f32 %v1099, %v1120
    %v1138 = vadd.f32 %v1100, %v1122
    %v1139 = vadd.f32 %v1101, %v1124
    %v1140 = vadd.f32 %v1102, %v1126
    %v1141 = vadd.f32 %v1103, %v1128
    %v1142 = vadd.f32 %v1104, %v1130
    %s1143 = sld [smem:[#allocation5 + $0x2]]
    %v1144 = vstv %s1143
    %v1145 = vmul.f32 %v1091, %v1144
    %v1146 = vmul.f32 %v1092, %v1144
    %v1147 = vmul.f32 %v1093, %v1144
    %v1148 = vmul.f32 %v1094, %v1144
    %v1149 = vmul.f32 %v1095, %v1144
    %v1150 = vmul.f32 %v1096, %v1144
    %1157 = vrot.lane.b32.xlu0 %v1145, 126
    %v1158 = vpop.permute.xlu0 %1157
    %1159 = vrot.lane.b32.xlu0 %v1146, 126
    %v1160 = vpop.permute.xlu0 %1159
    %1161 = vrot.lane.b32.xlu0 %v1147, 126
    %v1162 = vpop.permute.xlu0 %1161
    %1163 = vrot.lane.b32.xlu0 %v1148, 126
    %v1164 = vpop.permute.xlu0 %1163
    %1165 = vrot.lane.b32.xlu0 %v1149, 126
    %v1166 = vpop.permute.xlu0 %1165
    %1167 = vrot.lane.b32.xlu0 %v1150, 126
    %v1168 = vpop.permute.xlu0 %1167
    %v1175 = vadd.f32 %v1137, %v1158
    %v1176 = vadd.f32 %v1138, %v1160
    %v1177 = vadd.f32 %v1139, %v1162
    %v1178 = vadd.f32 %v1140, %v1164
    %v1179 = vadd.f32 %v1141, %v1166
    %v1180 = vadd.f32 %v1142, %v1168
    %s1181 = sld [smem:[#allocation5 + $0x3]]
    %v1182 = vstv %s1181
    %v1183 = vmul.f32 %v1091, %v1182
    %v1184 = vmul.f32 %v1092, %v1182
    %v1185 = vmul.f32 %v1093, %v1182
    %v1186 = vmul.f32 %v1094, %v1182
    %v1187 = vmul.f32 %v1095, %v1182
    %v1188 = vmul.f32 %v1096, %v1182
    %v1195 = vrot.slane %v1183, 1
    %v1196 = vrot.slane %v1184, 1
    %v1197 = vsel %vm196, %v1195, %v1196
    %v1198 = vrot.slane %v1185, 1
    %v1199 = vsel %vm196, %v1196, %v1198
    %v1200 = vrot.slane %v1186, 1
    %v1201 = vrot.slane %v1187, 1
    %v1202 = vsel %vm196, %v1200, %v1201
    %v1203 = vrot.slane %v1188, 1
    %v1204 = vsel %vm196, %v1201, %v1203
    %v1211 = vadd.f32 %v1175, %v1197
    %v1212 = vadd.f32 %v1176, %v1199
    %v1213 = vadd.f32 %v1177, %v1198
    %v1214 = vadd.f32 %v1178, %v1202
    %v1215 = vadd.f32 %v1179, %v1204
    %v1216 = vadd.f32 %v1180, %v1203
    %s1217 = sld [smem:[#allocation5 + $0x4]]
    %v1218 = vstv %s1217
    %v1219 = vmul.f32 %v1091, %v1218
    %v1220 = vmul.f32 %v1092, %v1218
    %v1221 = vmul.f32 %v1093, %v1218
    %v1222 = vmul.f32 %v1094, %v1218
    %v1223 = vmul.f32 %v1095, %v1218
    %v1224 = vmul.f32 %v1096, %v1218
    %v1231 = vrot.slane %v1219, 1
    %v1232 = vrot.slane %v1220, 1
    %v1233 = vsel %vm196, %v1231, %v1232
    %v1234 = vrot.slane %v1221, 1
    %v1235 = vsel %vm196, %v1232, %v1234
    %v1236 = vrot.slane %v1222, 1
    %v1237 = vrot.slane %v1223, 1
    %v1238 = vsel %vm196, %v1236, %v1237
    %v1239 = vrot.slane %v1224, 1
    %v1240 = vsel %vm196, %v1237, %v1239
    %1241 = vrot.lane.b32.xlu0 %v1233, 127
    %v1242 = vpop.permute.xlu0 %1241
    %1243 = vrot.lane.b32.xlu0 %v1235, 127
    %v1244 = vpop.permute.xlu0 %1243
    %1245 = vrot.lane.b32.xlu0 %v1234, 127
    %v1246 = vpop.permute.xlu0 %1245
    %1247 = vrot.lane.b32.xlu0 %v1238, 127
    %v1248 = vpop.permute.xlu0 %1247
    %1249 = vrot.lane.b32.xlu0 %v1240, 127
    %v1250 = vpop.permute.xlu0 %1249
    %1251 = vrot.lane.b32.xlu0 %v1239, 127
    %v1252 = vpop.permute.xlu0 %1251
    %v1259 = vadd.f32 %v1211, %v1242
    %v1260 = vadd.f32 %v1212, %v1244
    %v1261 = vadd.f32 %v1213, %v1246
    %v1262 = vadd.f32 %v1214, %v1248
    %v1263 = vadd.f32 %v1215, %v1250
    %v1264 = vadd.f32 %v1216, %v1252
    %s1265 = sld [smem:[#allocation5 + $0x5]]
    %v1266 = vstv %s1265
    %v1267 = vmul.f32 %v1091, %v1266
    %v1268 = vmul.f32 %v1092, %v1266
    %v1269 = vmul.f32 %v1093, %v1266
    %v1270 = vmul.f32 %v1094, %v1266
    %v1271 = vmul.f32 %v1095, %v1266
    %v1272 = vmul.f32 %v1096, %v1266
    %v1279 = vrot.slane %v1267, 1
    %v1280 = vrot.slane %v1268, 1
    %v1281 = vsel %vm196, %v1279, %v1280
    %v1282 = vrot.slane %v1269, 1
    %v1283 = vsel %vm196, %v1280, %v1282
    %v1284 = vrot.slane %v1270, 1
    %v1285 = vrot.slane %v1271, 1
    %v1286 = vsel %vm196, %v1284, %v1285
    %v1287 = vrot.slane %v1272, 1
    %v1288 = vsel %vm196, %v1285, %v1287
    %1289 = vrot.lane.b32.xlu0 %v1281, 126
    %v1290 = vpop.permute.xlu0 %1289
    %1291 = vrot.lane.b32.xlu0 %v1283, 126
    %v1292 = vpop.permute.xlu0 %1291
    %1293 = vrot.lane.b32.xlu0 %v1282, 126
    %v1294 = vpop.permute.xlu0 %1293
    %1295 = vrot.lane.b32.xlu0 %v1286, 126
    %v1296 = vpop.permute.xlu0 %1295
    %1297 = vrot.lane.b32.xlu0 %v1288, 126
    %v1298 = vpop.permute.xlu0 %1297
    %1299 = vrot.lane.b32.xlu0 %v1287, 126
    %v1300 = vpop.permute.xlu0 %1299
    %v1307 = vadd.f32 %v1259, %v1290
    %v1308 = vadd.f32 %v1260, %v1292
    %v1309 = vadd.f32 %v1261, %v1294
    %v1310 = vadd.f32 %v1262, %v1296
    %v1311 = vadd.f32 %v1263, %v1298
    %v1312 = vadd.f32 %v1264, %v1300
    %s1313 = sld [smem:[#allocation5 + $0x6]]
    %v1314 = vstv %s1313
    %v1315 = vmul.f32 %v1091, %v1314
    %v1316 = vmul.f32 %v1092, %v1314
    %v1317 = vmul.f32 %v1093, %v1314
    %v1318 = vmul.f32 %v1094, %v1314
    %v1319 = vmul.f32 %v1095, %v1314
    %v1320 = vmul.f32 %v1096, %v1314
    %v1327 = vrot.slane %v1315, 2
    %v1328 = vrot.slane %v1316, 2
    %v1329 = vsel %vm329, %v1327, %v1328
    %v1330 = vrot.slane %v1317, 2
    %v1331 = vsel %vm329, %v1328, %v1330
    %v1332 = vrot.slane %v1318, 2
    %v1333 = vrot.slane %v1319, 2
    %v1334 = vsel %vm329, %v1332, %v1333
    %v1335 = vrot.slane %v1320, 2
    %v1336 = vsel %vm329, %v1333, %v1335
    %v1343 = vadd.f32 %v1307, %v1329
    %v1344 = vadd.f32 %v1308, %v1331
    %v1345 = vadd.f32 %v1309, %v1330
    %v1346 = vadd.f32 %v1310, %v1334
    %v1347 = vadd.f32 %v1311, %v1336
    %v1348 = vadd.f32 %v1312, %v1335
    %s1349 = sld [smem:[#allocation5 + $0x7]]
    %v1350 = vstv %s1349
    %v1351 = vmul.f32 %v1091, %v1350
    %v1352 = vmul.f32 %v1092, %v1350
    %v1353 = vmul.f32 %v1093, %v1350
    %v1354 = vmul.f32 %v1094, %v1350
    %v1355 = vmul.f32 %v1095, %v1350
    %v1356 = vmul.f32 %v1096, %v1350
    %v1363 = vrot.slane %v1351, 2
    %v1364 = vrot.slane %v1352, 2
    %v1365 = vsel %vm329, %v1363, %v1364
    %v1366 = vrot.slane %v1353, 2
    %v1367 = vsel %vm329, %v1364, %v1366
    %v1368 = vrot.slane %v1354, 2
    %v1369 = vrot.slane %v1355, 2
    %v1370 = vsel %vm329, %v1368, %v1369
    %v1371 = vrot.slane %v1356, 2
    %v1372 = vsel %vm329, %v1369, %v1371
    %1373 = vrot.lane.b32.xlu0 %v1365, 127
    %v1374 = vpop.permute.xlu0 %1373
    %1375 = vrot.lane.b32.xlu0 %v1367, 127
    %v1376 = vpop.permute.xlu0 %1375
    %1377 = vrot.lane.b32.xlu0 %v1366, 127
    %v1378 = vpop.permute.xlu0 %1377
    %1379 = vrot.lane.b32.xlu0 %v1370, 127
    %v1380 = vpop.permute.xlu0 %1379
    %1381 = vrot.lane.b32.xlu0 %v1372, 127
    %v1382 = vpop.permute.xlu0 %1381
    %1383 = vrot.lane.b32.xlu0 %v1371, 127
    %v1384 = vpop.permute.xlu0 %1383
    %v1391 = vadd.f32 %v1343, %v1374
    %v1392 = vadd.f32 %v1344, %v1376
    %v1393 = vadd.f32 %v1345, %v1378
    %v1394 = vadd.f32 %v1346, %v1380
    %v1395 = vadd.f32 %v1347, %v1382
    %v1396 = vadd.f32 %v1348, %v1384
    %s1397 = sld [smem:[#allocation5 + $0x8]]
    %v1398 = vstv %s1397
    %v1399 = vmul.f32 %v1091, %v1398
    %v1400 = vmul.f32 %v1092, %v1398
    %v1401 = vmul.f32 %v1093, %v1398
    %v1402 = vmul.f32 %v1094, %v1398
    %v1403 = vmul.f32 %v1095, %v1398
    %v1404 = vmul.f32 %v1096, %v1398
    %v1411 = vrot.slane %v1399, 2
    %v1412 = vrot.slane %v1400, 2
    %v1413 = vsel %vm329, %v1411, %v1412
    %v1414 = vrot.slane %v1401, 2
    %v1415 = vsel %vm329, %v1412, %v1414
    %v1416 = vrot.slane %v1402, 2
    %v1417 = vrot.slane %v1403, 2
    %v1418 = vsel %vm329, %v1416, %v1417
    %v1419 = vrot.slane %v1404, 2
    %v1420 = vsel %vm329, %v1417, %v1419
    %1421 = vrot.lane.b32.xlu0 %v1413, 126
    %v1422 = vpop.permute.xlu0 %1421
    %1423 = vrot.lane.b32.xlu0 %v1415, 126
    %v1424 = vpop.permute.xlu0 %1423
    %1425 = vrot.lane.b32.xlu0 %v1414, 126
    %v1426 = vpop.permute.xlu0 %1425
    %1427 = vrot.lane.b32.xlu0 %v1418, 126
    %v1428 = vpop.permute.xlu0 %1427
    %1429 = vrot.lane.b32.xlu0 %v1420, 126
    %v1430 = vpop.permute.xlu0 %1429
    %1431 = vrot.lane.b32.xlu0 %v1419, 126
    %v1432 = vpop.permute.xlu0 %1431
    %v1439 = vadd.f32 %v1391, %v1422
    %v1440 = vadd.f32 %v1392, %v1424
    %v1441 = vadd.f32 %v1393, %v1426
    %v1442 = vadd.f32 %v1394, %v1428
    %v1443 = vadd.f32 %v1395, %v1430
    %v1444 = vadd.f32 %v1396, %v1432
    %s1445 = sld [smem:[#allocation5 + $0x1b]]
    %v1446 = vstv %s1445
    %v1447 = vmul.f32 %v1091, %v1446
    %v1448 = vmul.f32 %v1092, %v1446
    %v1449 = vmul.f32 %v1093, %v1446
    %v1450 = vmul.f32 %v1094, %v1446
    %v1451 = vmul.f32 %v1095, %v1446
    %v1452 = vmul.f32 %v1096, %v1446
    %s1453 = sld [smem:[#allocation5 + $0x1c]]
    %v1454 = vstv %s1453
    %v1455 = vmul.f32 %v1091, %v1454
    %v1456 = vmul.f32 %v1092, %v1454
    %v1457 = vmul.f32 %v1093, %v1454
    %v1458 = vmul.f32 %v1094, %v1454
    %v1459 = vmul.f32 %v1095, %v1454
    %v1460 = vmul.f32 %v1096, %v1454
    %1467 = vrot.lane.b32.xlu0 %v1455, 127
    %v1468 = vpop.permute.xlu0 %1467
    %1469 = vrot.lane.b32.xlu0 %v1456, 127
    %v1470 = vpop.permute.xlu0 %1469
    %1471 = vrot.lane.b32.xlu0 %v1457, 127
    %v1472 = vpop.permute.xlu0 %1471
    %1473 = vrot.lane.b32.xlu0 %v1458, 127
    %v1474 = vpop.permute.xlu0 %1473
    %1475 = vrot.lane.b32.xlu0 %v1459, 127
    %v1476 = vpop.permute.xlu0 %1475
    %1477 = vrot.lane.b32.xlu0 %v1460, 127
    %v1478 = vpop.permute.xlu0 %1477
    %v1485 = vadd.f32 %v1447, %v1468
    %v1486 = vadd.f32 %v1448, %v1470
    %v1487 = vadd.f32 %v1449, %v1472
    %v1488 = vadd.f32 %v1450, %v1474
    %v1489 = vadd.f32 %v1451, %v1476
    %v1490 = vadd.f32 %v1452, %v1478
    %s1491 = sld [smem:[#allocation5 + $0x1d]]
    %v1492 = vstv %s1491
    %v1493 = vmul.f32 %v1091, %v1492
    %v1494 = vmul.f32 %v1092, %v1492
    %v1495 = vmul.f32 %v1093, %v1492
    %v1496 = vmul.f32 %v1094, %v1492
    %v1497 = vmul.f32 %v1095, %v1492
    %v1498 = vmul.f32 %v1096, %v1492
    %1505 = vrot.lane.b32.xlu0 %v1493, 126
    %v1506 = vpop.permute.xlu0 %1505
    %1507 = vrot.lane.b32.xlu0 %v1494, 126
    %v1508 = vpop.permute.xlu0 %1507
    %1509 = vrot.lane.b32.xlu0 %v1495, 126
    %v1510 = vpop.permute.xlu0 %1509
    %1511 = vrot.lane.b32.xlu0 %v1496, 126
    %v1512 = vpop.permute.xlu0 %1511
    %1513 = vrot.lane.b32.xlu0 %v1497, 126
    %v1514 = vpop.permute.xlu0 %1513
    %1515 = vrot.lane.b32.xlu0 %v1498, 126
    %v1516 = vpop.permute.xlu0 %1515
    %v1523 = vadd.f32 %v1485, %v1506
    %v1524 = vadd.f32 %v1486, %v1508
    %v1525 = vadd.f32 %v1487, %v1510
    %v1526 = vadd.f32 %v1488, %v1512
    %v1527 = vadd.f32 %v1489, %v1514
    %v1528 = vadd.f32 %v1490, %v1516
    %s1529 = sld [smem:[#allocation5 + $0x24]]
    %v1530 = vstv %s1529
    %v1531 = vmul.f32 %v1091, %v1530
    %v1532 = vmul.f32 %v1092, %v1530
    %v1533 = vmul.f32 %v1093, %v1530
    %v1534 = vmul.f32 %v1094, %v1530
    %v1535 = vmul.f32 %v1095, %v1530
    %v1536 = vmul.f32 %v1096, %v1530
    %s1537 = sld [smem:[#allocation5 + $0x25]]
    %v1538 = vstv %s1537
    %v1539 = vmul.f32 %v1091, %v1538
    %v1540 = vmul.f32 %v1092, %v1538
    %v1541 = vmul.f32 %v1093, %v1538
    %v1542 = vmul.f32 %v1094, %v1538
    %v1543 = vmul.f32 %v1095, %v1538
    %v1544 = vmul.f32 %v1096, %v1538
    %v1551 = vrot.slane %v1539, 1
    %v1552 = vrot.slane %v1540, 1
    %v1553 = vsel %vm196, %v1551, %v1552
    %v1554 = vrot.slane %v1541, 1
    %v1555 = vsel %vm196, %v1552, %v1554
    %v1556 = vrot.slane %v1542, 1
    %v1557 = vrot.slane %v1543, 1
    %v1558 = vsel %vm196, %v1556, %v1557
    %v1559 = vrot.slane %v1544, 1
    %v1560 = vsel %vm196, %v1557, %v1559
    %v1567 = vadd.f32 %v1531, %v1553
    %v1568 = vadd.f32 %v1532, %v1555
    %v1569 = vadd.f32 %v1533, %v1554
    %v1570 = vadd.f32 %v1534, %v1558
    %v1571 = vadd.f32 %v1535, %v1560
    %v1572 = vadd.f32 %v1536, %v1559
    %s1573 = sld [smem:[#allocation5 + $0x26]]
    %v1574 = vstv %s1573
    %v1575 = vmul.f32 %v1091, %v1574
    %v1576 = vmul.f32 %v1092, %v1574
    %v1577 = vmul.f32 %v1093, %v1574
    %v1578 = vmul.f32 %v1094, %v1574
    %v1579 = vmul.f32 %v1095, %v1574
    %v1580 = vmul.f32 %v1096, %v1574
    %v1587 = vrot.slane %v1575, 2
    %v1588 = vrot.slane %v1576, 2
    %v1589 = vsel %vm329, %v1587, %v1588
    %v1590 = vrot.slane %v1577, 2
    %v1591 = vsel %vm329, %v1588, %v1590
    %v1592 = vrot.slane %v1578, 2
    %v1593 = vrot.slane %v1579, 2
    %v1594 = vsel %vm329, %v1592, %v1593
    %v1595 = vrot.slane %v1580, 2
    %v1596 = vsel %vm329, %v1593, %v1595
    %v1603 = vadd.f32 %v1567, %v1589
    %v1604 = vadd.f32 %v1568, %v1591
    %v1605 = vadd.f32 %v1569, %v1590
    %v1606 = vadd.f32 %v1570, %v1594
    %v1607 = vadd.f32 %v1571, %v1596
    %v1608 = vadd.f32 %v1572, %v1595
    %s1609 = sld [smem:[#allocation5 + $0x2d]]
    %s1610 = sld [smem:[#allocation5 + $0x30]]
    %v1611 = vmul.f32 %v1439, %v89
    %v1612 = vmul.f32 %v1440, %v90
    %v1613 = vmul.f32 %v1441, %v91
    %v1614 = vmul.f32 %v1442, %v89
    %v1615 = vmul.f32 %v1443, %v90
    %v1616 = vmul.f32 %v1444, %v91
    %vm1617 = vcmask 146432
    %v1618 = vsel %vm1617, %v1611, 0.0
    %v1619 = vsel %vm1617, %v1612, 0.0
    %v1620 = vadd.f32 %v1618, %v1619
    %vm1621 = vcmask 140288
    %v1622 = vsel %vm1621, %v1613, 0.0
    %v1623 = vadd.f32 %v1620, %v1622
    %v1624 = vsel %vm1617, %v1614, 0.0
    %v1625 = vadd.f32 %v1623, %v1624
    %v1626 = vsel %vm1617, %v1615, 0.0
    %v1627 = vadd.f32 %v1625, %v1626
    %v1628 = vsel %vm1621, %v1616, 0.0
    %v1629 = vadd.f32 %v1627, %v1628
    %1630 = vadd.xlane.f32.xlu0 %v1629
    %v1631 = vpop.xlane.xlu0 %1630
    %v1632 = vrot.slane %v1631, 4
    %v1633 = vadd.f32 %v1631, %v1632
    %v1634 = vrot.slane %v1633, 2
    %v1635 = vadd.f32 %v1633, %v1634
    %v1636 = vrot.slane %v1635, 1
    %v1637 = vadd.f32 %v1635, %v1636
    %s1638 = vtos %v1637
    %v1639 = vrcp.pop 512.0
    %s1640 = vtos %v1639
    %s1641 = smul.f32 %s1638, %s1640
    %v1642 = vstv %s1641
    %v1643 = vsub.f32 %v1611, %v1642
    %v1644 = vsub.f32 %v1612, %v1642
    %v1645 = vsub.f32 %v1613, %v1642
    %v1646 = vsub.f32 %v1614, %v1642
    %v1647 = vsub.f32 %v1615, %v1642
    %v1648 = vsub.f32 %v1616, %v1642
    %v1649 = vmul.f32 %v1643, %v89
    %v1650 = vmul.f32 %v1644, %v90
    %v1651 = vmul.f32 %v1645, %v91
    %v1652 = vmul.f32 %v1646, %v89
    %v1653 = vmul.f32 %v1647, %v90
    %v1654 = vmul.f32 %v1648, %v91
    %v1655 = vmul.f32 %v1649, %v1649
    %v1656 = vmul.f32 %v1650, %v1650
    %v1657 = vmul.f32 %v1651, %v1651
    %v1658 = vmul.f32 %v1652, %v1652
    %v1659 = vmul.f32 %v1653, %v1653
    %v1660 = vmul.f32 %v1654, %v1654
    %v1661 = vsel %vm1617, %v1655, 0.0
    %v1662 = vsel %vm1617, %v1656, 0.0
    %v1663 = vadd.f32 %v1661, %v1662
    %v1664 = vsel %vm1621, %v1657, 0.0
    %v1665 = vadd.f32 %v1663, %v1664
    %v1666 = vsel %vm1617, %v1658, 0.0
    %v1667 = vadd.f32 %v1665, %v1666
    %v1668 = vsel %vm1617, %v1659, 0.0
    %v1669 = vadd.f32 %v1667, %v1668
    %v1670 = vsel %vm1621, %v1660, 0.0
    %v1671 = vadd.f32 %v1669, %v1670
    %1672 = vadd.xlane.f32.xlu0 %v1671
    %v1673 = vpop.xlane.xlu0 %1672
    %v1674 = vrot.slane %v1673, 4
    %v1675 = vadd.f32 %v1673, %v1674
    %v1676 = vrot.slane %v1675, 2
    %v1677 = vadd.f32 %v1675, %v1676
    %v1678 = vrot.slane %v1677, 1
    %v1679 = vadd.f32 %v1677, %v1678
    %s1680 = vtos %v1679
    %v1681 = vrcp.pop 512.0
    %s1682 = vtos %v1681
    %s1683 = smul.f32 %s1680, %s1682
    %s1684 = sadd.f32 %s1683, 1e-05
    %v1685 = vstv %s1684
    %v1686 = vrsqrt.pop %v1685
    %s1687 = vtos %v1686
    %s1688 = smul.f32 %s1609, %s1687
    %v1689 = vstv %s1688
    %v1690 = vmul.f32 %v1649, %v1689
    %v1691 = vmul.f32 %v1650, %v1689
    %v1692 = vmul.f32 %v1651, %v1689
    %v1693 = vmul.f32 %v1652, %v1689
    %v1694 = vmul.f32 %v1653, %v1689
    %v1695 = vmul.f32 %v1654, %v1689
    %v1696 = vstv %s1610
    %v1697 = vadd.f32 %v1690, %v1696
    %v1698 = vadd.f32 %v1691, %v1696
    %v1699 = vadd.f32 %v1692, %v1696
    %v1700 = vadd.f32 %v1693, %v1696
    %v1701 = vadd.f32 %v1694, %v1696
    %v1702 = vadd.f32 %v1695, %v1696
    %v1703 = vmax.f32 %v1697, 0.0
    %v1704 = vmax.f32 %v1698, 0.0
    %v1705 = vmax.f32 %v1699, 0.0
    %v1706 = vmax.f32 %v1700, 0.0
    %v1707 = vmax.f32 %v1701, 0.0
    %v1708 = vmax.f32 %v1702, 0.0
    %v1709 = vmul.f32 %v1703, %v89
    %v1710 = vmul.f32 %v1704, %v90
    %v1711 = vmul.f32 %v1705, %v91
    %v1712 = vmul.f32 %v1706, %v89
    %v1713 = vmul.f32 %v1707, %v90
    %v1714 = vmul.f32 %v1708, %v91
    %s1715 = sld [smem:[#allocation5 + $0x33]]
    %s1716 = sld [smem:[#allocation5 + $0x36]]
    %v1720 = vrot.slane %v89, 7
    %v1721 = vrot.slane %v90, 7
    %v1722 = vsel %vm723, %v1720, %v1721
    %v1723 = vrot.slane %v91, 7
    %v1724 = vsel %vm723, %v1721, %v1723
    %v1728 = vmul.f32 %v1523, %v1720
    %v1729 = vmul.f32 %v1524, %v1722
    %v1730 = vmul.f32 %v1525, %v1724
    %v1731 = vmul.f32 %v1526, %v1720
    %v1732 = vmul.f32 %v1527, %v1722
    %v1733 = vmul.f32 %v1528, %v1724
    %v1740 = vrot.slane %v1728, 1
    %v1741 = vrot.slane %v1729, 1
    %v1742 = vsel %vm196, %v1740, %v1741
    %v1743 = vrot.slane %v1730, 1
    %v1744 = vsel %vm196, %v1741, %v1743
    %v1745 = vrot.slane %v1731, 1
    %v1746 = vrot.slane %v1732, 1
    %v1747 = vsel %vm196, %v1745, %v1746
    %v1748 = vrot.slane %v1733, 1
    %v1749 = vsel %vm196, %v1746, %v1748
    %v1756 = vsel %vm1617, %v1742, 0.0
    %v1757 = vsel %vm1617, %v1744, 0.0
    %v1758 = vadd.f32 %v1756, %v1757
    %v1759 = vsel %vm1621, %v1743, 0.0
    %v1760 = vadd.f32 %v1758, %v1759
    %v1761 = vsel %vm1617, %v1747, 0.0
    %v1762 = vadd.f32 %v1760, %v1761
    %v1763 = vsel %vm1617, %v1749, 0.0
    %v1764 = vadd.f32 %v1762, %v1763
    %v1765 = vsel %vm1621, %v1748, 0.0
    %v1766 = vadd.f32 %v1764, %v1765
    %1767 = vadd.xlane.f32.xlu0 %v1766
    %v1768 = vpop.xlane.xlu0 %1767
    %v1769 = vrot.slane %v1768, 4
    %v1770 = vadd.f32 %v1768, %v1769
    %v1771 = vrot.slane %v1770, 2
    %v1772 = vadd.f32 %v1770, %v1771
    %v1773 = vrot.slane %v1772, 1
    %v1774 = vadd.f32 %v1772, %v1773
    %s1775 = vtos %v1774
    %v1776 = vrcp.pop 512.0
    %s1777 = vtos %v1776
    %s1778 = smul.f32 %s1775, %s1777
    %v1779 = vstv %s1778
    %v1780 = vsub.f32 %v1728, %v1779
    %v1781 = vsub.f32 %v1729, %v1779
    %v1782 = vsub.f32 %v1730, %v1779
    %v1783 = vsub.f32 %v1731, %v1779
    %v1784 = vsub.f32 %v1732, %v1779
    %v1785 = vsub.f32 %v1733, %v1779
    %v1786 = vmul.f32 %v1780, %v1720
    %v1787 = vmul.f32 %v1781, %v1722
    %v1788 = vmul.f32 %v1782, %v1724
    %v1789 = vmul.f32 %v1783, %v1720
    %v1790 = vmul.f32 %v1784, %v1722
    %v1791 = vmul.f32 %v1785, %v1724
    %v1792 = vmul.f32 %v1786, %v1786
    %v1793 = vmul.f32 %v1787, %v1787
    %v1794 = vmul.f32 %v1788, %v1788
    %v1795 = vmul.f32 %v1789, %v1789
    %v1796 = vmul.f32 %v1790, %v1790
    %v1797 = vmul.f32 %v1791, %v1791
    %v1804 = vrot.slane %v1792, 1
    %v1805 = vrot.slane %v1793, 1
    %v1806 = vsel %vm196, %v1804, %v1805
    %v1807 = vrot.slane %v1794, 1
    %v1808 = vsel %vm196, %v1805, %v1807
    %v1809 = vrot.slane %v1795, 1
    %v1810 = vrot.slane %v1796, 1
    %v1811 = vsel %vm196, %v1809, %v1810
    %v1812 = vrot.slane %v1797, 1
    %v1813 = vsel %vm196, %v1810, %v1812
    %v1820 = vsel %vm1617, %v1806, 0.0
    %v1821 = vsel %vm1617, %v1808, 0.0
    %v1822 = vadd.f32 %v1820, %v1821
    %v1823 = vsel %vm1621, %v1807, 0.0
    %v1824 = vadd.f32 %v1822, %v1823
    %v1825 = vsel %vm1617, %v1811, 0.0
    %v1826 = vadd.f32 %v1824, %v1825
    %v1827 = vsel %vm1617, %v1813, 0.0
    %v1828 = vadd.f32 %v1826, %v1827
    %v1829 = vsel %vm1621, %v1812, 0.0
    %v1830 = vadd.f32 %v1828, %v1829
    %1831 = vadd.xlane.f32.xlu0 %v1830
    %v1832 = vpop.xlane.xlu0 %1831
    %v1833 = vrot.slane %v1832, 4
    %v1834 = vadd.f32 %v1832, %v1833
    %v1835 = vrot.slane %v1834, 2
    %v1836 = vadd.f32 %v1834, %v1835
    %v1837 = vrot.slane %v1836, 1
    %v1838 = vadd.f32 %v1836, %v1837
    %s1839 = vtos %v1838
    %v1840 = vrcp.pop 512.0
    %s1841 = vtos %v1840
    %s1842 = smul.f32 %s1839, %s1841
    %s1843 = sadd.f32 %s1842, 1e-05
    %v1844 = vstv %s1843
    %v1845 = vrsqrt.pop %v1844
    %s1846 = vtos %v1845
    %s1847 = smul.f32 %s1715, %s1846
    %v1848 = vstv %s1847
    %v1849 = vmul.f32 %v1786, %v1848
    %v1850 = vmul.f32 %v1787, %v1848
    %v1851 = vmul.f32 %v1788, %v1848
    %v1852 = vmul.f32 %v1789, %v1848
    %v1853 = vmul.f32 %v1790, %v1848
    %v1854 = vmul.f32 %v1791, %v1848
    %v1855 = vstv %s1716
    %v1856 = vadd.f32 %v1849, %v1855
    %v1857 = vadd.f32 %v1850, %v1855
    %v1858 = vadd.f32 %v1851, %v1855
    %v1859 = vadd.f32 %v1852, %v1855
    %v1860 = vadd.f32 %v1853, %v1855
    %v1861 = vadd.f32 %v1854, %v1855
    %v1862 = vmax.f32 %v1856, 0.0
    %v1863 = vmax.f32 %v1857, 0.0
    %v1864 = vmax.f32 %v1858, 0.0
    %v1865 = vmax.f32 %v1859, 0.0
    %v1866 = vmax.f32 %v1860, 0.0
    %v1867 = vmax.f32 %v1861, 0.0
    %v1868 = vmul.f32 %v1862, %v1720
    %v1869 = vmul.f32 %v1863, %v1722
    %v1870 = vmul.f32 %v1864, %v1724
    %v1871 = vmul.f32 %v1865, %v1720
    %v1872 = vmul.f32 %v1866, %v1722
    %v1873 = vmul.f32 %v1867, %v1724
    %v1880 = vrot.slane %v1868, 1
    %v1881 = vrot.slane %v1869, 1
    %v1882 = vsel %vm196, %v1880, %v1881
    %v1883 = vrot.slane %v1870, 1
    %v1884 = vsel %vm196, %v1881, %v1883
    %v1885 = vrot.slane %v1871, 1
    %v1886 = vrot.slane %v1872, 1
    %v1887 = vsel %vm196, %v1885, %v1886
    %v1888 = vrot.slane %v1873, 1
    %v1889 = vsel %vm196, %v1886, %v1888
    %v1896 = vadd.f32 %v1709, %v1882
    %v1897 = vadd.f32 %v1710, %v1884
    %v1898 = vadd.f32 %v1711, %v1883
    %v1899 = vadd.f32 %v1712, %v1887
    %v1900 = vadd.f32 %v1713, %v1889
    %v1901 = vadd.f32 %v1714, %v1888
    %s1902 = sld [smem:[#allocation5 + $0x39]]
    %s1903 = sld [smem:[#allocation5 + $0x3c]]
    %1904 = vrot.lane.b32.xlu0 %v89, 1
    %v1905 = vpop.permute.xlu0 %1904
    %1906 = vrot.lane.b32.xlu0 %v90, 1
    %v1907 = vpop.permute.xlu0 %1906
    %1908 = vrot.lane.b32.xlu0 %v91, 1
    %v1909 = vpop.permute.xlu0 %1908
    %v1913 = vmul.f32 %v1603, %v1905
    %v1914 = vmul.f32 %v1604, %v1907
    %v1915 = vmul.f32 %v1605, %v1909
    %v1916 = vmul.f32 %v1606, %v1905
    %v1917 = vmul.f32 %v1607, %v1907
    %v1918 = vmul.f32 %v1608, %v1909
    %1925 = vrot.lane.b32.xlu0 %v1913, 127
    %v1926 = vpop.permute.xlu0 %1925
    %1927 = vrot.lane.b32.xlu0 %v1914, 127
    %v1928 = vpop.permute.xlu0 %1927
    %1929 = vrot.lane.b32.xlu0 %v1915, 127
    %v1930 = vpop.permute.xlu0 %1929
    %1931 = vrot.lane.b32.xlu0 %v1916, 127
    %v1932 = vpop.permute.xlu0 %1931
    %1933 = vrot.lane.b32.xlu0 %v1917, 127
    %v1934 = vpop.permute.xlu0 %1933
    %1935 = vrot.lane.b32.xlu0 %v1918, 127
    %v1936 = vpop.permute.xlu0 %1935
    %v1943 = vsel %vm1617, %v1926, 0.0
    %v1944 = vsel %vm1617, %v1928, 0.0
    %v1945 = vadd.f32 %v1943, %v1944
    %v1946 = vsel %vm1621, %v1930, 0.0
    %v1947 = vadd.f32 %v1945, %v1946
    %v1948 = vsel %vm1617, %v1932, 0.0
    %v1949 = vadd.f32 %v1947, %v1948
    %v1950 = vsel %vm1617, %v1934, 0.0
    %v1951 = vadd.f32 %v1949, %v1950
    %v1952 = vsel %vm1621, %v1936, 0.0
    %v1953 = vadd.f32 %v1951, %v1952
    %1954 = vadd.xlane.f32.xlu0 %v1953
    %v1955 = vpop.xlane.xlu0 %1954
    %v1956 = vrot.slane %v1955, 4
    %v1957 = vadd.f32 %v1955, %v1956
    %v1958 = vrot.slane %v1957, 2
    %v1959 = vadd.f32 %v1957, %v1958
    %v1960 = vrot.slane %v1959, 1
    %v1961 = vadd.f32 %v1959, %v1960
    %s1962 = vtos %v1961
    %v1963 = vrcp.pop 512.0
    %s1964 = vtos %v1963
    %s1965 = smul.f32 %s1962, %s1964
    %v1966 = vstv %s1965
    %v1967 = vsub.f32 %v1913, %v1966
    %v1968 = vsub.f32 %v1914, %v1966
    %v1969 = vsub.f32 %v1915, %v1966
    %v1970 = vsub.f32 %v1916, %v1966
    %v1971 = vsub.f32 %v1917, %v1966
    %v1972 = vsub.f32 %v1918, %v1966
    %v1973 = vmul.f32 %v1967, %v1905
    %v1974 = vmul.f32 %v1968, %v1907
    %v1975 = vmul.f32 %v1969, %v1909
    %v1976 = vmul.f32 %v1970, %v1905
    %v1977 = vmul.f32 %v1971, %v1907
    %v1978 = vmul.f32 %v1972, %v1909
    %v1979 = vmul.f32 %v1973, %v1973
    %v1980 = vmul.f32 %v1974, %v1974
    %v1981 = vmul.f32 %v1975, %v1975
    %v1982 = vmul.f32 %v1976, %v1976
    %v1983 = vmul.f32 %v1977, %v1977
    %v1984 = vmul.f32 %v1978, %v1978
    %1991 = vrot.lane.b32.xlu0 %v1979, 127
    %v1992 = vpop.permute.xlu0 %1991
    %1993 = vrot.lane.b32.xlu0 %v1980, 127
    %v1994 = vpop.permute.xlu0 %1993
    %1995 = vrot.lane.b32.xlu0 %v1981, 127
    %v1996 = vpop.permute.xlu0 %1995
    %1997 = vrot.lane.b32.xlu0 %v1982, 127
    %v1998 = vpop.permute.xlu0 %1997
    %1999 = vrot.lane.b32.xlu0 %v1983, 127
    %v2000 = vpop.permute.xlu0 %1999
    %2001 = vrot.lane.b32.xlu0 %v1984, 127
    %v2002 = vpop.permute.xlu0 %2001
    %v2009 = vsel %vm1617, %v1992, 0.0
    %v2010 = vsel %vm1617, %v1994, 0.0
    %v2011 = vadd.f32 %v2009, %v2010
    %v2012 = vsel %vm1621, %v1996, 0.0
    %v2013 = vadd.f32 %v2011, %v2012
    %v2014 = vsel %vm1617, %v1998, 0.0
    %v2015 = vadd.f32 %v2013, %v2014
    %v2016 = vsel %vm1617, %v2000, 0.0
    %v2017 = vadd.f32 %v2015, %v2016
    %v2018 = vsel %vm1621, %v2002, 0.0
    %v2019 = vadd.f32 %v2017, %v2018
    %2020 = vadd.xlane.f32.xlu0 %v2019
    %v2021 = vpop.xlane.xlu0 %2020
    %v2022 = vrot.slane %v2021, 4
    %v2023 = vadd.f32 %v2021, %v2022
    %v2024 = vrot.slane %v2023, 2
    %v2025 = vadd.f32 %v2023, %v2024
    %v2026 = vrot.slane %v2025, 1
    %v2027 = vadd.f32 %v2025, %v2026
    %s2028 = vtos %v2027
    %v2029 = vrcp.pop 512.0
    %s2030 = vtos %v2029
    %s2031 = smul.f32 %s2028, %s2030
    %s2032 = sadd.f32 %s2031, 1e-05
    %v2033 = vstv %s2032
    %v2034 = vrsqrt.pop %v2033
    %s2035 = vtos %v2034
    %s2036 = smul.f32 %s1902, %s2035
    %v2037 = vstv %s2036
    %v2038 = vmul.f32 %v1973, %v2037
    %v2039 = vmul.f32 %v1974, %v2037
    %v2040 = vmul.f32 %v1975, %v2037
    %v2041 = vmul.f32 %v1976, %v2037
    %v2042 = vmul.f32 %v1977, %v2037
    %v2043 = vmul.f32 %v1978, %v2037
    %v2044 = vstv %s1903
    %v2045 = vadd.f32 %v2038, %v2044
    %v2046 = vadd.f32 %v2039, %v2044
    %v2047 = vadd.f32 %v2040, %v2044
    %v2048 = vadd.f32 %v2041, %v2044
    %v2049 = vadd.f32 %v2042, %v2044
    %v2050 = vadd.f32 %v2043, %v2044
    %v2051 = vmax.f32 %v2045, 0.0
    %v2052 = vmax.f32 %v2046, 0.0
    %v2053 = vmax.f32 %v2047, 0.0
    %v2054 = vmax.f32 %v2048, 0.0
    %v2055 = vmax.f32 %v2049, 0.0
    %v2056 = vmax.f32 %v2050, 0.0
    %v2057 = vmul.f32 %v2051, %v1905
    %v2058 = vmul.f32 %v2052, %v1907
    %v2059 = vmul.f32 %v2053, %v1909
    %v2060 = vmul.f32 %v2054, %v1905
    %v2061 = vmul.f32 %v2055, %v1907
    %v2062 = vmul.f32 %v2056, %v1909
    %2069 = vrot.lane.b32.xlu0 %v2057, 127
    %v2070 = vpop.permute.xlu0 %2069
    %2071 = vrot.lane.b32.xlu0 %v2058, 127
    %v2072 = vpop.permute.xlu0 %2071
    %2073 = vrot.lane.b32.xlu0 %v2059, 127
    %v2074 = vpop.permute.xlu0 %2073
    %2075 = vrot.lane.b32.xlu0 %v2060, 127
    %v2076 = vpop.permute.xlu0 %2075
    %2077 = vrot.lane.b32.xlu0 %v2061, 127
    %v2078 = vpop.permute.xlu0 %2077
    %2079 = vrot.lane.b32.xlu0 %v2062, 127
    %v2080 = vpop.permute.xlu0 %2079
    %v2087 = vadd.f32 %v1896, %v2070
    %v2088 = vadd.f32 %v1897, %v2072
    %v2089 = vadd.f32 %v1898, %v2074
    %v2090 = vadd.f32 %v1899, %v2076
    %v2091 = vadd.f32 %v1900, %v2078
    %v2092 = vadd.f32 %v1901, %v2080
    %s2093 = sld [smem:[#allocation5 + $0x9]]
    %v2094 = vstv %s2093
    %v2095 = vmul.f32 %v1091, %v2094
    %v2096 = vmul.f32 %v1092, %v2094
    %v2097 = vmul.f32 %v1093, %v2094
    %v2098 = vmul.f32 %v1094, %v2094
    %v2099 = vmul.f32 %v1095, %v2094
    %v2100 = vmul.f32 %v1096, %v2094
    %s2101 = sld [smem:[#allocation5 + $0xa]]
    %v2102 = vstv %s2101
    %v2103 = vmul.f32 %v1091, %v2102
    %v2104 = vmul.f32 %v1092, %v2102
    %v2105 = vmul.f32 %v1093, %v2102
    %v2106 = vmul.f32 %v1094, %v2102
    %v2107 = vmul.f32 %v1095, %v2102
    %v2108 = vmul.f32 %v1096, %v2102
    %2115 = vrot.lane.b32.xlu0 %v2103, 127
    %v2116 = vpop.permute.xlu0 %2115
    %2117 = vrot.lane.b32.xlu0 %v2104, 127
    %v2118 = vpop.permute.xlu0 %2117
    %2119 = vrot.lane.b32.xlu0 %v2105, 127
    %v2120 = vpop.permute.xlu0 %2119
    %2121 = vrot.lane.b32.xlu0 %v2106, 127
    %v2122 = vpop.permute.xlu0 %2121
    %2123 = vrot.lane.b32.xlu0 %v2107, 127
    %v2124 = vpop.permute.xlu0 %2123
    %2125 = vrot.lane.b32.xlu0 %v2108, 127
    %v2126 = vpop.permute.xlu0 %2125
    %v2133 = vadd.f32 %v2095, %v2116
    %v2134 = vadd.f32 %v2096, %v2118
    %v2135 = vadd.f32 %v2097, %v2120
    %v2136 = vadd.f32 %v2098, %v2122
    %v2137 = vadd.f32 %v2099, %v2124
    %v2138 = vadd.f32 %v2100, %v2126
    %s2139 = sld [smem:[#allocation5 + $0xb]]
    %v2140 = vstv %s2139
    %v2141 = vmul.f32 %v1091, %v2140
    %v2142 = vmul.f32 %v1092, %v2140
    %v2143 = vmul.f32 %v1093, %v2140
    %v2144 = vmul.f32 %v1094, %v2140
    %v2145 = vmul.f32 %v1095, %v2140
    %v2146 = vmul.f32 %v1096, %v2140
    %2153 = vrot.lane.b32.xlu0 %v2141, 126
    %v2154 = vpop.permute.xlu0 %2153
    %2155 = vrot.lane.b32.xlu0 %v2142, 126
    %v2156 = vpop.permute.xlu0 %2155
    %2157 = vrot.lane.b32.xlu0 %v2143, 126
    %v2158 = vpop.permute.xlu0 %2157
    %2159 = vrot.lane.b32.xlu0 %v2144, 126
    %v2160 = vpop.permute.xlu0 %2159
    %2161 = vrot.lane.b32.xlu0 %v2145, 126
    %v2162 = vpop.permute.xlu0 %2161
    %2163 = vrot.lane.b32.xlu0 %v2146, 126
    %v2164 = vpop.permute.xlu0 %2163
    %v2171 = vadd.f32 %v2133, %v2154
    %v2172 = vadd.f32 %v2134, %v2156
    %v2173 = vadd.f32 %v2135, %v2158
    %v2174 = vadd.f32 %v2136, %v2160
    %v2175 = vadd.f32 %v2137, %v2162
    %v2176 = vadd.f32 %v2138, %v2164
    %s2177 = sld [smem:[#allocation5 + $0xc]]
    %v2178 = vstv %s2177
    %v2179 = vmul.f32 %v1091, %v2178
    %v2180 = vmul.f32 %v1092, %v2178
    %v2181 = vmul.f32 %v1093, %v2178
    %v2182 = vmul.f32 %v1094, %v2178
    %v2183 = vmul.f32 %v1095, %v2178
    %v2184 = vmul.f32 %v1096, %v2178
    %v2191 = vrot.slane %v2179, 1
    %v2192 = vrot.slane %v2180, 1
    %v2193 = vsel %vm196, %v2191, %v2192
    %v2194 = vrot.slane %v2181, 1
    %v2195 = vsel %vm196, %v2192, %v2194
    %v2196 = vrot.slane %v2182, 1
    %v2197 = vrot.slane %v2183, 1
    %v2198 = vsel %vm196, %v2196, %v2197
    %v2199 = vrot.slane %v2184, 1
    %v2200 = vsel %vm196, %v2197, %v2199
    %v2207 = vadd.f32 %v2171, %v2193
    %v2208 = vadd.f32 %v2172, %v2195
    %v2209 = vadd.f32 %v2173, %v2194
    %v2210 = vadd.f32 %v2174, %v2198
    %v2211 = vadd.f32 %v2175, %v2200
    %v2212 = vadd.f32 %v2176, %v2199
    %s2213 = sld [smem:[#allocation5 + $0xd]]
    %v2214 = vstv %s2213
    %v2215 = vmul.f32 %v1091, %v2214
    %v2216 = vmul.f32 %v1092, %v2214
    %v2217 = vmul.f32 %v1093, %v2214
    %v2218 = vmul.f32 %v1094, %v2214
    %v2219 = vmul.f32 %v1095, %v2214
    %v2220 = vmul.f32 %v1096, %v2214
    %v2227 = vrot.slane %v2215, 1
    %v2228 = vrot.slane %v2216, 1
    %v2229 = vsel %vm196, %v2227, %v2228
    %v2230 = vrot.slane %v2217, 1
    %v2231 = vsel %vm196, %v2228, %v2230
    %v2232 = vrot.slane %v2218, 1
    %v2233 = vrot.slane %v2219, 1
    %v2234 = vsel %vm196, %v2232, %v2233
    %v2235 = vrot.slane %v2220, 1
    %v2236 = vsel %vm196, %v2233, %v2235
    %2237 = vrot.lane.b32.xlu0 %v2229, 127
    %v2238 = vpop.permute.xlu0 %2237
    %2239 = vrot.lane.b32.xlu0 %v2231, 127
    %v2240 = vpop.permute.xlu0 %2239
    %2241 = vrot.lane.b32.xlu0 %v2230, 127
    %v2242 = vpop.permute.xlu0 %2241
    %2243 = vrot.lane.b32.xlu0 %v2234, 127
    %v2244 = vpop.permute.xlu0 %2243
    %2245 = vrot.lane.b32.xlu0 %v2236, 127
    %v2246 = vpop.permute.xlu0 %2245
    %2247 = vrot.lane.b32.xlu0 %v2235, 127
    %v2248 = vpop.permute.xlu0 %2247
    %v2255 = vadd.f32 %v2207, %v2238
    %v2256 = vadd.f32 %v2208, %v2240
    %v2257 = vadd.f32 %v2209, %v2242
    %v2258 = vadd.f32 %v2210, %v2244
    %v2259 = vadd.f32 %v2211, %v2246
    %v2260 = vadd.f32 %v2212, %v2248
    %s2261 = sld [smem:[#allocation5 + $0xe]]
    %v2262 = vstv %s2261
    %v2263 = vmul.f32 %v1091, %v2262
    %v2264 = vmul.f32 %v1092, %v2262
    %v2265 = vmul.f32 %v1093, %v2262
    %v2266 = vmul.f32 %v1094, %v2262
    %v2267 = vmul.f32 %v1095, %v2262
    %v2268 = vmul.f32 %v1096, %v2262
    %v2275 = vrot.slane %v2263, 1
    %v2276 = vrot.slane %v2264, 1
    %v2277 = vsel %vm196, %v2275, %v2276
    %v2278 = vrot.slane %v2265, 1
    %v2279 = vsel %vm196, %v2276, %v2278
    %v2280 = vrot.slane %v2266, 1
    %v2281 = vrot.slane %v2267, 1
    %v2282 = vsel %vm196, %v2280, %v2281
    %v2283 = vrot.slane %v2268, 1
    %v2284 = vsel %vm196, %v2281, %v2283
    %2285 = vrot.lane.b32.xlu0 %v2277, 126
    %v2286 = vpop.permute.xlu0 %2285
    %2287 = vrot.lane.b32.xlu0 %v2279, 126
    %v2288 = vpop.permute.xlu0 %2287
    %2289 = vrot.lane.b32.xlu0 %v2278, 126
    %v2290 = vpop.permute.xlu0 %2289
    %2291 = vrot.lane.b32.xlu0 %v2282, 126
    %v2292 = vpop.permute.xlu0 %2291
    %2293 = vrot.lane.b32.xlu0 %v2284, 126
    %v2294 = vpop.permute.xlu0 %2293
    %2295 = vrot.lane.b32.xlu0 %v2283, 126
    %v2296 = vpop.permute.xlu0 %2295
    %v2303 = vadd.f32 %v2255, %v2286
    %v2304 = vadd.f32 %v2256, %v2288
    %v2305 = vadd.f32 %v2257, %v2290
    %v2306 = vadd.f32 %v2258, %v2292
    %v2307 = vadd.f32 %v2259, %v2294
    %v2308 = vadd.f32 %v2260, %v2296
    %s2309 = sld [smem:[#allocation5 + $0xf]]
    %v2310 = vstv %s2309
    %v2311 = vmul.f32 %v1091, %v2310
    %v2312 = vmul.f32 %v1092, %v2310
    %v2313 = vmul.f32 %v1093, %v2310
    %v2314 = vmul.f32 %v1094, %v2310
    %v2315 = vmul.f32 %v1095, %v2310
    %v2316 = vmul.f32 %v1096, %v2310
    %v2323 = vrot.slane %v2311, 2
    %v2324 = vrot.slane %v2312, 2
    %v2325 = vsel %vm329, %v2323, %v2324
    %v2326 = vrot.slane %v2313, 2
    %v2327 = vsel %vm329, %v2324, %v2326
    %v2328 = vrot.slane %v2314, 2
    %v2329 = vrot.slane %v2315, 2
    %v2330 = vsel %vm329, %v2328, %v2329
    %v2331 = vrot.slane %v2316, 2
    %v2332 = vsel %vm329, %v2329, %v2331
    %v2339 = vadd.f32 %v2303, %v2325
    %v2340 = vadd.f32 %v2304, %v2327
    %v2341 = vadd.f32 %v2305, %v2326
    %v2342 = vadd.f32 %v2306, %v2330
    %v2343 = vadd.f32 %v2307, %v2332
    %v2344 = vadd.f32 %v2308, %v2331
    %s2345 = sld [smem:[#allocation5 + $0x10]]
    %v2346 = vstv %s2345
    %v2347 = vmul.f32 %v1091, %v2346
    %v2348 = vmul.f32 %v1092, %v2346
    %v2349 = vmul.f32 %v1093, %v2346
    %v2350 = vmul.f32 %v1094, %v2346
    %v2351 = vmul.f32 %v1095, %v2346
    %v2352 = vmul.f32 %v1096, %v2346
    %v2359 = vrot.slane %v2347, 2
    %v2360 = vrot.slane %v2348, 2
    %v2361 = vsel %vm329, %v2359, %v2360
    %v2362 = vrot.slane %v2349, 2
    %v2363 = vsel %vm329, %v2360, %v2362
    %v2364 = vrot.slane %v2350, 2
    %v2365 = vrot.slane %v2351, 2
    %v2366 = vsel %vm329, %v2364, %v2365
    %v2367 = vrot.slane %v2352, 2
    %v2368 = vsel %vm329, %v2365, %v2367
    %2369 = vrot.lane.b32.xlu0 %v2361, 127
    %v2370 = vpop.permute.xlu0 %2369
    %2371 = vrot.lane.b32.xlu0 %v2363, 127
    %v2372 = vpop.permute.xlu0 %2371
    %2373 = vrot.lane.b32.xlu0 %v2362, 127
    %v2374 = vpop.permute.xlu0 %2373
    %2375 = vrot.lane.b32.xlu0 %v2366, 127
    %v2376 = vpop.permute.xlu0 %2375
    %2377 = vrot.lane.b32.xlu0 %v2368, 127
    %v2378 = vpop.permute.xlu0 %2377
    %2379 = vrot.lane.b32.xlu0 %v2367, 127
    %v2380 = vpop.permute.xlu0 %2379
    %v2387 = vadd.f32 %v2339, %v2370
    %v2388 = vadd.f32 %v2340, %v2372
    %v2389 = vadd.f32 %v2341, %v2374
    %v2390 = vadd.f32 %v2342, %v2376
    %v2391 = vadd.f32 %v2343, %v2378
    %v2392 = vadd.f32 %v2344, %v2380
    %s2393 = sld [smem:[#allocation5 + $0x11]]
    %v2394 = vstv %s2393
    %v2395 = vmul.f32 %v1091, %v2394
    %v2396 = vmul.f32 %v1092, %v2394
    %v2397 = vmul.f32 %v1093, %v2394
    %v2398 = vmul.f32 %v1094, %v2394
    %v2399 = vmul.f32 %v1095, %v2394
    %v2400 = vmul.f32 %v1096, %v2394
    %v2407 = vrot.slane %v2395, 2
    %v2408 = vrot.slane %v2396, 2
    %v2409 = vsel %vm329, %v2407, %v2408
    %v2410 = vrot.slane %v2397, 2
    %v2411 = vsel %vm329, %v2408, %v2410
    %v2412 = vrot.slane %v2398, 2
    %v2413 = vrot.slane %v2399, 2
    %v2414 = vsel %vm329, %v2412, %v2413
    %v2415 = vrot.slane %v2400, 2
    %v2416 = vsel %vm329, %v2413, %v2415
    %2417 = vrot.lane.b32.xlu0 %v2409, 126
    %v2418 = vpop.permute.xlu0 %2417
    %2419 = vrot.lane.b32.xlu0 %v2411, 126
    %v2420 = vpop.permute.xlu0 %2419
    %2421 = vrot.lane.b32.xlu0 %v2410, 126
    %v2422 = vpop.permute.xlu0 %2421
    %2423 = vrot.lane.b32.xlu0 %v2414, 126
    %v2424 = vpop.permute.xlu0 %2423
    %2425 = vrot.lane.b32.xlu0 %v2416, 126
    %v2426 = vpop.permute.xlu0 %2425
    %2427 = vrot.lane.b32.xlu0 %v2415, 126
    %v2428 = vpop.permute.xlu0 %2427
    %v2435 = vadd.f32 %v2387, %v2418
    %v2436 = vadd.f32 %v2388, %v2420
    %v2437 = vadd.f32 %v2389, %v2422
    %v2438 = vadd.f32 %v2390, %v2424
    %v2439 = vadd.f32 %v2391, %v2426
    %v2440 = vadd.f32 %v2392, %v2428
    %s2441 = sld [smem:[#allocation5 + $0x1e]]
    %v2442 = vstv %s2441
    %v2443 = vmul.f32 %v1091, %v2442
    %v2444 = vmul.f32 %v1092, %v2442
    %v2445 = vmul.f32 %v1093, %v2442
    %v2446 = vmul.f32 %v1094, %v2442
    %v2447 = vmul.f32 %v1095, %v2442
    %v2448 = vmul.f32 %v1096, %v2442
    %s2449 = sld [smem:[#allocation5 + $0x1f]]
    %v2450 = vstv %s2449
    %v2451 = vmul.f32 %v1091, %v2450
    %v2452 = vmul.f32 %v1092, %v2450
    %v2453 = vmul.f32 %v1093, %v2450
    %v2454 = vmul.f32 %v1094, %v2450
    %v2455 = vmul.f32 %v1095, %v2450
    %v2456 = vmul.f32 %v1096, %v2450
    %2463 = vrot.lane.b32.xlu0 %v2451, 127
    %v2464 = vpop.permute.xlu0 %2463
    %2465 = vrot.lane.b32.xlu0 %v2452, 127
    %v2466 = vpop.permute.xlu0 %2465
    %2467 = vrot.lane.b32.xlu0 %v2453, 127
    %v2468 = vpop.permute.xlu0 %2467
    %2469 = vrot.lane.b32.xlu0 %v2454, 127
    %v2470 = vpop.permute.xlu0 %2469
    %2471 = vrot.lane.b32.xlu0 %v2455, 127
    %v2472 = vpop.permute.xlu0 %2471
    %2473 = vrot.lane.b32.xlu0 %v2456, 127
    %v2474 = vpop.permute.xlu0 %2473
    %v2481 = vadd.f32 %v2443, %v2464
    %v2482 = vadd.f32 %v2444, %v2466
    %v2483 = vadd.f32 %v2445, %v2468
    %v2484 = vadd.f32 %v2446, %v2470
    %v2485 = vadd.f32 %v2447, %v2472
    %v2486 = vadd.f32 %v2448, %v2474
    %s2487 = sld [smem:[#allocation5 + $0x20]]
    %v2488 = vstv %s2487
    %v2489 = vmul.f32 %v1091, %v2488
    %v2490 = vmul.f32 %v1092, %v2488
    %v2491 = vmul.f32 %v1093, %v2488
    %v2492 = vmul.f32 %v1094, %v2488
    %v2493 = vmul.f32 %v1095, %v2488
    %v2494 = vmul.f32 %v1096, %v2488
    %2501 = vrot.lane.b32.xlu0 %v2489, 126
    %v2502 = vpop.permute.xlu0 %2501
    %2503 = vrot.lane.b32.xlu0 %v2490, 126
    %v2504 = vpop.permute.xlu0 %2503
    %2505 = vrot.lane.b32.xlu0 %v2491, 126
    %v2506 = vpop.permute.xlu0 %2505
    %2507 = vrot.lane.b32.xlu0 %v2492, 126
    %v2508 = vpop.permute.xlu0 %2507
    %2509 = vrot.lane.b32.xlu0 %v2493, 126
    %v2510 = vpop.permute.xlu0 %2509
    %2511 = vrot.lane.b32.xlu0 %v2494, 126
    %v2512 = vpop.permute.xlu0 %2511
    %v2519 = vadd.f32 %v2481, %v2502
    %v2520 = vadd.f32 %v2482, %v2504
    %v2521 = vadd.f32 %v2483, %v2506
    %v2522 = vadd.f32 %v2484, %v2508
    %v2523 = vadd.f32 %v2485, %v2510
    %v2524 = vadd.f32 %v2486, %v2512
    %s2525 = sld [smem:[#allocation5 + $0x27]]
    %v2526 = vstv %s2525
    %v2527 = vmul.f32 %v1091, %v2526
    %v2528 = vmul.f32 %v1092, %v2526
    %v2529 = vmul.f32 %v1093, %v2526
    %v2530 = vmul.f32 %v1094, %v2526
    %v2531 = vmul.f32 %v1095, %v2526
    %v2532 = vmul.f32 %v1096, %v2526
    %s2533 = sld [smem:[#allocation5 + $0x28]]
    %v2534 = vstv %s2533
    %v2535 = vmul.f32 %v1091, %v2534
    %v2536 = vmul.f32 %v1092, %v2534
    %v2537 = vmul.f32 %v1093, %v2534
    %v2538 = vmul.f32 %v1094, %v2534
    %v2539 = vmul.f32 %v1095, %v2534
    %v2540 = vmul.f32 %v1096, %v2534
    %v2547 = vrot.slane %v2535, 1
    %v2548 = vrot.slane %v2536, 1
    %v2549 = vsel %vm196, %v2547, %v2548
    %v2550 = vrot.slane %v2537, 1
    %v2551 = vsel %vm196, %v2548, %v2550
    %v2552 = vrot.slane %v2538, 1
    %v2553 = vrot.slane %v2539, 1
    %v2554 = vsel %vm196, %v2552, %v2553
    %v2555 = vrot.slane %v2540, 1
    %v2556 = vsel %vm196, %v2553, %v2555
    %v2563 = vadd.f32 %v2527, %v2549
    %v2564 = vadd.f32 %v2528, %v2551
    %v2565 = vadd.f32 %v2529, %v2550
    %v2566 = vadd.f32 %v2530, %v2554
    %v2567 = vadd.f32 %v2531, %v2556
    %v2568 = vadd.f32 %v2532, %v2555
    %s2569 = sld [smem:[#allocation5 + $0x29]]
    %v2570 = vstv %s2569
    %v2571 = vmul.f32 %v1091, %v2570
    %v2572 = vmul.f32 %v1092, %v2570
    %v2573 = vmul.f32 %v1093, %v2570
    %v2574 = vmul.f32 %v1094, %v2570
    %v2575 = vmul.f32 %v1095, %v2570
    %v2576 = vmul.f32 %v1096, %v2570
    %v2583 = vrot.slane %v2571, 2
    %v2584 = vrot.slane %v2572, 2
    %v2585 = vsel %vm329, %v2583, %v2584
    %v2586 = vrot.slane %v2573, 2
    %v2587 = vsel %vm329, %v2584, %v2586
    %v2588 = vrot.slane %v2574, 2
    %v2589 = vrot.slane %v2575, 2
    %v2590 = vsel %vm329, %v2588, %v2589
    %v2591 = vrot.slane %v2576, 2
    %v2592 = vsel %vm329, %v2589, %v2591
    %v2599 = vadd.f32 %v2563, %v2585
    %v2600 = vadd.f32 %v2564, %v2587
    %v2601 = vadd.f32 %v2565, %v2586
    %v2602 = vadd.f32 %v2566, %v2590
    %v2603 = vadd.f32 %v2567, %v2592
    %v2604 = vadd.f32 %v2568, %v2591
    %s2605 = sld [smem:[#allocation5 + $0x2e]]
    %s2606 = sld [smem:[#allocation5 + $0x31]]
    %v2607 = vmul.f32 %v2435, %v89
    %v2608 = vmul.f32 %v2436, %v90
    %v2609 = vmul.f32 %v2437, %v91
    %v2610 = vmul.f32 %v2438, %v89
    %v2611 = vmul.f32 %v2439, %v90
    %v2612 = vmul.f32 %v2440, %v91
    %v2613 = vsel %vm1617, %v2607, 0.0
    %v2614 = vsel %vm1617, %v2608, 0.0
    %v2615 = vadd.f32 %v2613, %v2614
    %v2616 = vsel %vm1621, %v2609, 0.0
    %v2617 = vadd.f32 %v2615, %v2616
    %v2618 = vsel %vm1617, %v2610, 0.0
    %v2619 = vadd.f32 %v2617, %v2618
    %v2620 = vsel %vm1617, %v2611, 0.0
    %v2621 = vadd.f32 %v2619, %v2620
    %v2622 = vsel %vm1621, %v2612, 0.0
    %v2623 = vadd.f32 %v2621, %v2622
    %2624 = vadd.xlane.f32.xlu0 %v2623
    %v2625 = vpop.xlane.xlu0 %2624
    %v2626 = vrot.slane %v2625, 4
    %v2627 = vadd.f32 %v2625, %v2626
    %v2628 = vrot.slane %v2627, 2
    %v2629 = vadd.f32 %v2627, %v2628
    %v2630 = vrot.slane %v2629, 1
    %v2631 = vadd.f32 %v2629, %v2630
    %s2632 = vtos %v2631
    %v2633 = vrcp.pop 512.0
    %s2634 = vtos %v2633
    %s2635 = smul.f32 %s2632, %s2634
    %v2636 = vstv %s2635
    %v2637 = vsub.f32 %v2607, %v2636
    %v2638 = vsub.f32 %v2608, %v2636
    %v2639 = vsub.f32 %v2609, %v2636
    %v2640 = vsub.f32 %v2610, %v2636
    %v2641 = vsub.f32 %v2611, %v2636
    %v2642 = vsub.f32 %v2612, %v2636
    %v2643 = vmul.f32 %v2637, %v89
    %v2644 = vmul.f32 %v2638, %v90
    %v2645 = vmul.f32 %v2639, %v91
    %v2646 = vmul.f32 %v2640, %v89
    %v2647 = vmul.f32 %v2641, %v90
    %v2648 = vmul.f32 %v2642, %v91
    %v2649 = vmul.f32 %v2643, %v2643
    %v2650 = vmul.f32 %v2644, %v2644
    %v2651 = vmul.f32 %v2645, %v2645
    %v2652 = vmul.f32 %v2646, %v2646
    %v2653 = vmul.f32 %v2647, %v2647
    %v2654 = vmul.f32 %v2648, %v2648
    %v2655 = vsel %vm1617, %v2649, 0.0
    %v2656 = vsel %vm1617, %v2650, 0.0
    %v2657 = vadd.f32 %v2655, %v2656
    %v2658 = vsel %vm1621, %v2651, 0.0
    %v2659 = vadd.f32 %v2657, %v2658
    %v2660 = vsel %vm1617, %v2652, 0.0
    %v2661 = vadd.f32 %v2659, %v2660
    %v2662 = vsel %vm1617, %v2653, 0.0
    %v2663 = vadd.f32 %v2661, %v2662
    %v2664 = vsel %vm1621, %v2654, 0.0
    %v2665 = vadd.f32 %v2663, %v2664
    %2666 = vadd.xlane.f32.xlu0 %v2665
    %v2667 = vpop.xlane.xlu0 %2666
    %v2668 = vrot.slane %v2667, 4
    %v2669 = vadd.f32 %v2667, %v2668
    %v2670 = vrot.slane %v2669, 2
    %v2671 = vadd.f32 %v2669, %v2670
    %v2672 = vrot.slane %v2671, 1
    %v2673 = vadd.f32 %v2671, %v2672
    %s2674 = vtos %v2673
    %v2675 = vrcp.pop 512.0
    %s2676 = vtos %v2675
    %s2677 = smul.f32 %s2674, %s2676
    %s2678 = sadd.f32 %s2677, 1e-05
    %v2679 = vstv %s2678
    %v2680 = vrsqrt.pop %v2679
    %s2681 = vtos %v2680
    %s2682 = smul.f32 %s2605, %s2681
    %v2683 = vstv %s2682
    %v2684 = vmul.f32 %v2643, %v2683
    %v2685 = vmul.f32 %v2644, %v2683
    %v2686 = vmul.f32 %v2645, %v2683
    %v2687 = vmul.f32 %v2646, %v2683
    %v2688 = vmul.f32 %v2647, %v2683
    %v2689 = vmul.f32 %v2648, %v2683
    %v2690 = vstv %s2606
    %v2691 = vadd.f32 %v2684, %v2690
    %v2692 = vadd.f32 %v2685, %v2690
    %v2693 = vadd.f32 %v2686, %v2690
    %v2694 = vadd.f32 %v2687, %v2690
    %v2695 = vadd.f32 %v2688, %v2690
    %v2696 = vadd.f32 %v2689, %v2690
    %v2697 = vmax.f32 %v2691, 0.0
    %v2698 = vmax.f32 %v2692, 0.0
    %v2699 = vmax.f32 %v2693, 0.0
    %v2700 = vmax.f32 %v2694, 0.0
    %v2701 = vmax.f32 %v2695, 0.0
    %v2702 = vmax.f32 %v2696, 0.0
    %v2703 = vmul.f32 %v2697, %v89
    %v2704 = vmul.f32 %v2698, %v90
    %v2705 = vmul.f32 %v2699, %v91
    %v2706 = vmul.f32 %v2700, %v89
    %v2707 = vmul.f32 %v2701, %v90
    %v2708 = vmul.f32 %v2702, %v91
    %s2709 = sld [smem:[#allocation5 + $0x34]]
    %s2710 = sld [smem:[#allocation5 + $0x37]]
    %v2711 = vmul.f32 %v2519, %v1720
    %v2712 = vmul.f32 %v2520, %v1722
    %v2713 = vmul.f32 %v2521, %v1724
    %v2714 = vmul.f32 %v2522, %v1720
    %v2715 = vmul.f32 %v2523, %v1722
    %v2716 = vmul.f32 %v2524, %v1724
    %v2723 = vrot.slane %v2711, 1
    %v2724 = vrot.slane %v2712, 1
    %v2725 = vsel %vm196, %v2723, %v2724
    %v2726 = vrot.slane %v2713, 1
    %v2727 = vsel %vm196, %v2724, %v2726
    %v2728 = vrot.slane %v2714, 1
    %v2729 = vrot.slane %v2715, 1
    %v2730 = vsel %vm196, %v2728, %v2729
    %v2731 = vrot.slane %v2716, 1
    %v2732 = vsel %vm196, %v2729, %v2731
    %v2739 = vsel %vm1617, %v2725, 0.0
    %v2740 = vsel %vm1617, %v2727, 0.0
    %v2741 = vadd.f32 %v2739, %v2740
    %v2742 = vsel %vm1621, %v2726, 0.0
    %v2743 = vadd.f32 %v2741, %v2742
    %v2744 = vsel %vm1617, %v2730, 0.0
    %v2745 = vadd.f32 %v2743, %v2744
    %v2746 = vsel %vm1617, %v2732, 0.0
    %v2747 = vadd.f32 %v2745, %v2746
    %v2748 = vsel %vm1621, %v2731, 0.0
    %v2749 = vadd.f32 %v2747, %v2748
    %2750 = vadd.xlane.f32.xlu0 %v2749
    %v2751 = vpop.xlane.xlu0 %2750
    %v2752 = vrot.slane %v2751, 4
    %v2753 = vadd.f32 %v2751, %v2752
    %v2754 = vrot.slane %v2753, 2
    %v2755 = vadd.f32 %v2753, %v2754
    %v2756 = vrot.slane %v2755, 1
    %v2757 = vadd.f32 %v2755, %v2756
    %s2758 = vtos %v2757
    %v2759 = vrcp.pop 512.0
    %s2760 = vtos %v2759
    %s2761 = smul.f32 %s2758, %s2760
    %v2762 = vstv %s2761
    %v2763 = vsub.f32 %v2711, %v2762
    %v2764 = vsub.f32 %v2712, %v2762
    %v2765 = vsub.f32 %v2713, %v2762
    %v2766 = vsub.f32 %v2714, %v2762
    %v2767 = vsub.f32 %v2715, %v2762
    %v2768 = vsub.f32 %v2716, %v2762
    %v2769 = vmul.f32 %v2763, %v1720
    %v2770 = vmul.f32 %v2764, %v1722
    %v2771 = vmul.f32 %v2765, %v1724
    %v2772 = vmul.f32 %v2766, %v1720
    %v2773 = vmul.f32 %v2767, %v1722
    %v2774 = vmul.f32 %v2768, %v1724
    %v2775 = vmul.f32 %v2769, %v2769
    %v2776 = vmul.f32 %v2770, %v2770
    %v2777 = vmul.f32 %v2771, %v2771
    %v2778 = vmul.f32 %v2772, %v2772
    %v2779 = vmul.f32 %v2773, %v2773
    %v2780 = vmul.f32 %v2774, %v2774
    %v2787 = vrot.slane %v2775, 1
    %v2788 = vrot.slane %v2776, 1
    %v2789 = vsel %vm196, %v2787, %v2788
    %v2790 = vrot.slane %v2777, 1
    %v2791 = vsel %vm196, %v2788, %v2790
    %v2792 = vrot.slane %v2778, 1
    %v2793 = vrot.slane %v2779, 1
    %v2794 = vsel %vm196, %v2792, %v2793
    %v2795 = vrot.slane %v2780, 1
    %v2796 = vsel %vm196, %v2793, %v2795
    %v2803 = vsel %vm1617, %v2789, 0.0
    %v2804 = vsel %vm1617, %v2791, 0.0
    %v2805 = vadd.f32 %v2803, %v2804
    %v2806 = vsel %vm1621, %v2790, 0.0
    %v2807 = vadd.f32 %v2805, %v2806
    %v2808 = vsel %vm1617, %v2794, 0.0
    %v2809 = vadd.f32 %v2807, %v2808
    %v2810 = vsel %vm1617, %v2796, 0.0
    %v2811 = vadd.f32 %v2809, %v2810
    %v2812 = vsel %vm1621, %v2795, 0.0
    %v2813 = vadd.f32 %v2811, %v2812
    %2814 = vadd.xlane.f32.xlu0 %v2813
    %v2815 = vpop.xlane.xlu0 %2814
    %v2816 = vrot.slane %v2815, 4
    %v2817 = vadd.f32 %v2815, %v2816
    %v2818 = vrot.slane %v2817, 2
    %v2819 = vadd.f32 %v2817, %v2818
    %v2820 = vrot.slane %v2819, 1
    %v2821 = vadd.f32 %v2819, %v2820
    %s2822 = vtos %v2821
    %v2823 = vrcp.pop 512.0
    %s2824 = vtos %v2823
    %s2825 = smul.f32 %s2822, %s2824
    %s2826 = sadd.f32 %s2825, 1e-05
    %v2827 = vstv %s2826
    %v2828 = vrsqrt.pop %v2827
    %s2829 = vtos %v2828
    %s2830 = smul.f32 %s2709, %s2829
    %v2831 = vstv %s2830
    %v2832 = vmul.f32 %v2769, %v2831
    %v2833 = vmul.f32 %v2770, %v2831
    %v2834 = vmul.f32 %v2771, %v2831
    %v2835 = vmul.f32 %v2772, %v2831
    %v2836 = vmul.f32 %v2773, %v2831
    %v2837 = vmul.f32 %v2774, %v2831
    %v2838 = vstv %s2710
    %v2839 = vadd.f32 %v2832, %v2838
    %v2840 = vadd.f32 %v2833, %v2838
    %v2841 = vadd.f32 %v2834, %v2838
    %v2842 = vadd.f32 %v2835, %v2838
    %v2843 = vadd.f32 %v2836, %v2838
    %v2844 = vadd.f32 %v2837, %v2838
    %v2845 = vmax.f32 %v2839, 0.0
    %v2846 = vmax.f32 %v2840, 0.0
    %v2847 = vmax.f32 %v2841, 0.0
    %v2848 = vmax.f32 %v2842, 0.0
    %v2849 = vmax.f32 %v2843, 0.0
    %v2850 = vmax.f32 %v2844, 0.0
    %v2851 = vmul.f32 %v2845, %v1720
    %v2852 = vmul.f32 %v2846, %v1722
    %v2853 = vmul.f32 %v2847, %v1724
    %v2854 = vmul.f32 %v2848, %v1720
    %v2855 = vmul.f32 %v2849, %v1722
    %v2856 = vmul.f32 %v2850, %v1724
    %v2863 = vrot.slane %v2851, 1
    %v2864 = vrot.slane %v2852, 1
    %v2865 = vsel %vm196, %v2863, %v2864
    %v2866 = vrot.slane %v2853, 1
    %v2867 = vsel %vm196, %v2864, %v2866
    %v2868 = vrot.slane %v2854, 1
    %v2869 = vrot.slane %v2855, 1
    %v2870 = vsel %vm196, %v2868, %v2869
    %v2871 = vrot.slane %v2856, 1
    %v2872 = vsel %vm196, %v2869, %v2871
    %v2879 = vadd.f32 %v2703, %v2865
    %v2880 = vadd.f32 %v2704, %v2867
    %v2881 = vadd.f32 %v2705, %v2866
    %v2882 = vadd.f32 %v2706, %v2870
    %v2883 = vadd.f32 %v2707, %v2872
    %v2884 = vadd.f32 %v2708, %v2871
    %s2885 = sld [smem:[#allocation5 + $0x3a]]
    %s2886 = sld [smem:[#allocation5 + $0x3d]]
    %v2887 = vmul.f32 %v2599, %v1905
    %v2888 = vmul.f32 %v2600, %v1907
    %v2889 = vmul.f32 %v2601, %v1909
    %v2890 = vmul.f32 %v2602, %v1905
    %v2891 = vmul.f32 %v2603, %v1907
    %v2892 = vmul.f32 %v2604, %v1909
    %2899 = vrot.lane.b32.xlu0 %v2887, 127
    %v2900 = vpop.permute.xlu0 %2899
    %2901 = vrot.lane.b32.xlu0 %v2888, 127
    %v2902 = vpop.permute.xlu0 %2901
    %2903 = vrot.lane.b32.xlu0 %v2889, 127
    %v2904 = vpop.permute.xlu0 %2903
    %2905 = vrot.lane.b32.xlu0 %v2890, 127
    %v2906 = vpop.permute.xlu0 %2905
    %2907 = vrot.lane.b32.xlu0 %v2891, 127
    %v2908 = vpop.permute.xlu0 %2907
    %2909 = vrot.lane.b32.xlu0 %v2892, 127
    %v2910 = vpop.permute.xlu0 %2909
    %v2917 = vsel %vm1617, %v2900, 0.0
    %v2918 = vsel %vm1617, %v2902, 0.0
    %v2919 = vadd.f32 %v2917, %v2918
    %v2920 = vsel %vm1621, %v2904, 0.0
    %v2921 = vadd.f32 %v2919, %v2920
    %v2922 = vsel %vm1617, %v2906, 0.0
    %v2923 = vadd.f32 %v2921, %v2922
    %v2924 = vsel %vm1617, %v2908, 0.0
    %v2925 = vadd.f32 %v2923, %v2924
    %v2926 = vsel %vm1621, %v2910, 0.0
    %v2927 = vadd.f32 %v2925, %v2926
    %2928 = vadd.xlane.f32.xlu0 %v2927
    %v2929 = vpop.xlane.xlu0 %2928
    %v2930 = vrot.slane %v2929, 4
    %v2931 = vadd.f32 %v2929, %v2930
    %v2932 = vrot.slane %v2931, 2
    %v2933 = vadd.f32 %v2931, %v2932
    %v2934 = vrot.slane %v2933, 1
    %v2935 = vadd.f32 %v2933, %v2934
    %s2936 = vtos %v2935
    %v2937 = vrcp.pop 512.0
    %s2938 = vtos %v2937
    %s2939 = smul.f32 %s2936, %s2938
    %v2940 = vstv %s2939
    %v2941 = vsub.f32 %v2887, %v2940
    %v2942 = vsub.f32 %v2888, %v2940
    %v2943 = vsub.f32 %v2889, %v2940
    %v2944 = vsub.f32 %v2890, %v2940
    %v2945 = vsub.f32 %v2891, %v2940
    %v2946 = vsub.f32 %v2892, %v2940
    %v2947 = vmul.f32 %v2941, %v1905
    %v2948 = vmul.f32 %v2942, %v1907
    %v2949 = vmul.f32 %v2943, %v1909
    %v2950 = vmul.f32 %v2944, %v1905
    %v2951 = vmul.f32 %v2945, %v1907
    %v2952 = vmul.f32 %v2946, %v1909
    %v2953 = vmul.f32 %v2947, %v2947
    %v2954 = vmul.f32 %v2948, %v2948
    %v2955 = vmul.f32 %v2949, %v2949
    %v2956 = vmul.f32 %v2950, %v2950
    %v2957 = vmul.f32 %v2951, %v2951
    %v2958 = vmul.f32 %v2952, %v2952
    %2965 = vrot.lane.b32.xlu0 %v2953, 127
    %v2966 = vpop.permute.xlu0 %2965
    %2967 = vrot.lane.b32.xlu0 %v2954, 127
    %v2968 = vpop.permute.xlu0 %2967
    %2969 = vrot.lane.b32.xlu0 %v2955, 127
    %v2970 = vpop.permute.xlu0 %2969
    %2971 = vrot.lane.b32.xlu0 %v2956, 127
    %v2972 = vpop.permute.xlu0 %2971
    %2973 = vrot.lane.b32.xlu0 %v2957, 127
    %v2974 = vpop.permute.xlu0 %2973
    %2975 = vrot.lane.b32.xlu0 %v2958, 127
    %v2976 = vpop.permute.xlu0 %2975
    %v2983 = vsel %vm1617, %v2966, 0.0
    %v2984 = vsel %vm1617, %v2968, 0.0
    %v2985 = vadd.f32 %v2983, %v2984
    %v2986 = vsel %vm1621, %v2970, 0.0
    %v2987 = vadd.f32 %v2985, %v2986
    %v2988 = vsel %vm1617, %v2972, 0.0
    %v2989 = vadd.f32 %v2987, %v2988
    %v2990 = vsel %vm1617, %v2974, 0.0
    %v2991 = vadd.f32 %v2989, %v2990
    %v2992 = vsel %vm1621, %v2976, 0.0
    %v2993 = vadd.f32 %v2991, %v2992
    %2994 = vadd.xlane.f32.xlu0 %v2993
    %v2995 = vpop.xlane.xlu0 %2994
    %v2996 = vrot.slane %v2995, 4
    %v2997 = vadd.f32 %v2995, %v2996
    %v2998 = vrot.slane %v2997, 2
    %v2999 = vadd.f32 %v2997, %v2998
    %v3000 = vrot.slane %v2999, 1
    %v3001 = vadd.f32 %v2999, %v3000
    %s3002 = vtos %v3001
    %v3003 = vrcp.pop 512.0
    %s3004 = vtos %v3003
    %s3005 = smul.f32 %s3002, %s3004
    %s3006 = sadd.f32 %s3005, 1e-05
    %v3007 = vstv %s3006
    %v3008 = vrsqrt.pop %v3007
    %s3009 = vtos %v3008
    %s3010 = smul.f32 %s2885, %s3009
    %v3011 = vstv %s3010
    %v3012 = vmul.f32 %v2947, %v3011
    %v3013 = vmul.f32 %v2948, %v3011
    %v3014 = vmul.f32 %v2949, %v3011
    %v3015 = vmul.f32 %v2950, %v3011
    %v3016 = vmul.f32 %v2951, %v3011
    %v3017 = vmul.f32 %v2952, %v3011
    %v3018 = vstv %s2886
    %v3019 = vadd.f32 %v3012, %v3018
    %v3020 = vadd.f32 %v3013, %v3018
    %v3021 = vadd.f32 %v3014, %v3018
    %v3022 = vadd.f32 %v3015, %v3018
    %v3023 = vadd.f32 %v3016, %v3018
    %v3024 = vadd.f32 %v3017, %v3018
    %v3025 = vmax.f32 %v3019, 0.0
    %v3026 = vmax.f32 %v3020, 0.0
    %v3027 = vmax.f32 %v3021, 0.0
    %v3028 = vmax.f32 %v3022, 0.0
    %v3029 = vmax.f32 %v3023, 0.0
    %v3030 = vmax.f32 %v3024, 0.0
    %v3031 = vmul.f32 %v3025, %v1905
    %v3032 = vmul.f32 %v3026, %v1907
    %v3033 = vmul.f32 %v3027, %v1909
    %v3034 = vmul.f32 %v3028, %v1905
    %v3035 = vmul.f32 %v3029, %v1907
    %v3036 = vmul.f32 %v3030, %v1909
    %3043 = vrot.lane.b32.xlu0 %v3031, 127
    %v3044 = vpop.permute.xlu0 %3043
    %3045 = vrot.lane.b32.xlu0 %v3032, 127
    %v3046 = vpop.permute.xlu0 %3045
    %3047 = vrot.lane.b32.xlu0 %v3033, 127
    %v3048 = vpop.permute.xlu0 %3047
    %3049 = vrot.lane.b32.xlu0 %v3034, 127
    %v3050 = vpop.permute.xlu0 %3049
    %3051 = vrot.lane.b32.xlu0 %v3035, 127
    %v3052 = vpop.permute.xlu0 %3051
    %3053 = vrot.lane.b32.xlu0 %v3036, 127
    %v3054 = vpop.permute.xlu0 %3053
    %v3061 = vadd.f32 %v2879, %v3044
    %v3062 = vadd.f32 %v2880, %v3046
    %v3063 = vadd.f32 %v2881, %v3048
    %v3064 = vadd.f32 %v2882, %v3050
    %v3065 = vadd.f32 %v2883, %v3052
    %v3066 = vadd.f32 %v2884, %v3054
    %s3067 = sld [smem:[#allocation5 + $0x12]]
    %v3068 = vstv %s3067
    %v3069 = vmul.f32 %v1091, %v3068
    %v3070 = vmul.f32 %v1092, %v3068
    %v3071 = vmul.f32 %v1093, %v3068
    %v3072 = vmul.f32 %v1094, %v3068
    %v3073 = vmul.f32 %v1095, %v3068
    %v3074 = vmul.f32 %v1096, %v3068
    %s3075 = sld [smem:[#allocation5 + $0x13]]
    %v3076 = vstv %s3075
    %v3077 = vmul.f32 %v1091, %v3076
    %v3078 = vmul.f32 %v1092, %v3076
    %v3079 = vmul.f32 %v1093, %v3076
    %v3080 = vmul.f32 %v1094, %v3076
    %v3081 = vmul.f32 %v1095, %v3076
    %v3082 = vmul.f32 %v1096, %v3076
    %3089 = vrot.lane.b32.xlu0 %v3077, 127
    %v3090 = vpop.permute.xlu0 %3089
    %3091 = vrot.lane.b32.xlu0 %v3078, 127
    %v3092 = vpop.permute.xlu0 %3091
    %3093 = vrot.lane.b32.xlu0 %v3079, 127
    %v3094 = vpop.permute.xlu0 %3093
    %3095 = vrot.lane.b32.xlu0 %v3080, 127
    %v3096 = vpop.permute.xlu0 %3095
    %3097 = vrot.lane.b32.xlu0 %v3081, 127
    %v3098 = vpop.permute.xlu0 %3097
    %3099 = vrot.lane.b32.xlu0 %v3082, 127
    %v3100 = vpop.permute.xlu0 %3099
    %v3107 = vadd.f32 %v3069, %v3090
    %v3108 = vadd.f32 %v3070, %v3092
    %v3109 = vadd.f32 %v3071, %v3094
    %v3110 = vadd.f32 %v3072, %v3096
    %v3111 = vadd.f32 %v3073, %v3098
    %v3112 = vadd.f32 %v3074, %v3100
    %s3113 = sld [smem:[#allocation5 + $0x14]]
    %v3114 = vstv %s3113
    %v3115 = vmul.f32 %v1091, %v3114
    %v3116 = vmul.f32 %v1092, %v3114
    %v3117 = vmul.f32 %v1093, %v3114
    %v3118 = vmul.f32 %v1094, %v3114
    %v3119 = vmul.f32 %v1095, %v3114
    %v3120 = vmul.f32 %v1096, %v3114
    %3127 = vrot.lane.b32.xlu0 %v3115, 126
    %v3128 = vpop.permute.xlu0 %3127
    %3129 = vrot.lane.b32.xlu0 %v3116, 126
    %v3130 = vpop.permute.xlu0 %3129
    %3131 = vrot.lane.b32.xlu0 %v3117, 126
    %v3132 = vpop.permute.xlu0 %3131
    %3133 = vrot.lane.b32.xlu0 %v3118, 126
    %v3134 = vpop.permute.xlu0 %3133
    %3135 = vrot.lane.b32.xlu0 %v3119, 126
    %v3136 = vpop.permute.xlu0 %3135
    %3137 = vrot.lane.b32.xlu0 %v3120, 126
    %v3138 = vpop.permute.xlu0 %3137
    %v3145 = vadd.f32 %v3107, %v3128
    %v3146 = vadd.f32 %v3108, %v3130
    %v3147 = vadd.f32 %v3109, %v3132
    %v3148 = vadd.f32 %v3110, %v3134
    %v3149 = vadd.f32 %v3111, %v3136
    %v3150 = vadd.f32 %v3112, %v3138
    %s3151 = sld [smem:[#allocation5 + $0x15]]
    %v3152 = vstv %s3151
    %v3153 = vmul.f32 %v1091, %v3152
    %v3154 = vmul.f32 %v1092, %v3152
    %v3155 = vmul.f32 %v1093, %v3152
    %v3156 = vmul.f32 %v1094, %v3152
    %v3157 = vmul.f32 %v1095, %v3152
    %v3158 = vmul.f32 %v1096, %v3152
    %v3165 = vrot.slane %v3153, 1
    %v3166 = vrot.slane %v3154, 1
    %v3167 = vsel %vm196, %v3165, %v3166
    %v3168 = vrot.slane %v3155, 1
    %v3169 = vsel %vm196, %v3166, %v3168
    %v3170 = vrot.slane %v3156, 1
    %v3171 = vrot.slane %v3157, 1
    %v3172 = vsel %vm196, %v3170, %v3171
    %v3173 = vrot.slane %v3158, 1
    %v3174 = vsel %vm196, %v3171, %v3173
    %v3181 = vadd.f32 %v3145, %v3167
    %v3182 = vadd.f32 %v3146, %v3169
    %v3183 = vadd.f32 %v3147, %v3168
    %v3184 = vadd.f32 %v3148, %v3172
    %v3185 = vadd.f32 %v3149, %v3174
    %v3186 = vadd.f32 %v3150, %v3173
    %s3187 = sld [smem:[#allocation5 + $0x16]]
    %v3188 = vstv %s3187
    %v3189 = vmul.f32 %v1091, %v3188
    %v3190 = vmul.f32 %v1092, %v3188
    %v3191 = vmul.f32 %v1093, %v3188
    %v3192 = vmul.f32 %v1094, %v3188
    %v3193 = vmul.f32 %v1095, %v3188
    %v3194 = vmul.f32 %v1096, %v3188
    %v3201 = vrot.slane %v3189, 1
    %v3202 = vrot.slane %v3190, 1
    %v3203 = vsel %vm196, %v3201, %v3202
    %v3204 = vrot.slane %v3191, 1
    %v3205 = vsel %vm196, %v3202, %v3204
    %v3206 = vrot.slane %v3192, 1
    %v3207 = vrot.slane %v3193, 1
    %v3208 = vsel %vm196, %v3206, %v3207
    %v3209 = vrot.slane %v3194, 1
    %v3210 = vsel %vm196, %v3207, %v3209
    %3211 = vrot.lane.b32.xlu0 %v3203, 127
    %v3212 = vpop.permute.xlu0 %3211
    %3213 = vrot.lane.b32.xlu0 %v3205, 127
    %v3214 = vpop.permute.xlu0 %3213
    %3215 = vrot.lane.b32.xlu0 %v3204, 127
    %v3216 = vpop.permute.xlu0 %3215
    %3217 = vrot.lane.b32.xlu0 %v3208, 127
    %v3218 = vpop.permute.xlu0 %3217
    %3219 = vrot.lane.b32.xlu0 %v3210, 127
    %v3220 = vpop.permute.xlu0 %3219
    %3221 = vrot.lane.b32.xlu0 %v3209, 127
    %v3222 = vpop.permute.xlu0 %3221
    %v3229 = vadd.f32 %v3181, %v3212
    %v3230 = vadd.f32 %v3182, %v3214
    %v3231 = vadd.f32 %v3183, %v3216
    %v3232 = vadd.f32 %v3184, %v3218
    %v3233 = vadd.f32 %v3185, %v3220
    %v3234 = vadd.f32 %v3186, %v3222
    %s3235 = sld [smem:[#allocation5 + $0x17]]
    %v3236 = vstv %s3235
    %v3237 = vmul.f32 %v1091, %v3236
    %v3238 = vmul.f32 %v1092, %v3236
    %v3239 = vmul.f32 %v1093, %v3236
    %v3240 = vmul.f32 %v1094, %v3236
    %v3241 = vmul.f32 %v1095, %v3236
    %v3242 = vmul.f32 %v1096, %v3236
    %v3249 = vrot.slane %v3237, 1
    %v3250 = vrot.slane %v3238, 1
    %v3251 = vsel %vm196, %v3249, %v3250
    %v3252 = vrot.slane %v3239, 1
    %v3253 = vsel %vm196, %v3250, %v3252
    %v3254 = vrot.slane %v3240, 1
    %v3255 = vrot.slane %v3241, 1
    %v3256 = vsel %vm196, %v3254, %v3255
    %v3257 = vrot.slane %v3242, 1
    %v3258 = vsel %vm196, %v3255, %v3257
    %3259 = vrot.lane.b32.xlu0 %v3251, 126
    %v3260 = vpop.permute.xlu0 %3259
    %3261 = vrot.lane.b32.xlu0 %v3253, 126
    %v3262 = vpop.permute.xlu0 %3261
    %3263 = vrot.lane.b32.xlu0 %v3252, 126
    %v3264 = vpop.permute.xlu0 %3263
    %3265 = vrot.lane.b32.xlu0 %v3256, 126
    %v3266 = vpop.permute.xlu0 %3265
    %3267 = vrot.lane.b32.xlu0 %v3258, 126
    %v3268 = vpop.permute.xlu0 %3267
    %3269 = vrot.lane.b32.xlu0 %v3257, 126
    %v3270 = vpop.permute.xlu0 %3269
    %v3277 = vadd.f32 %v3229, %v3260
    %v3278 = vadd.f32 %v3230, %v3262
    %v3279 = vadd.f32 %v3231, %v3264
    %v3280 = vadd.f32 %v3232, %v3266
    %v3281 = vadd.f32 %v3233, %v3268
    %v3282 = vadd.f32 %v3234, %v3270
    %s3283 = sld [smem:[#allocation5 + $0x18]]
    %v3284 = vstv %s3283
    %v3285 = vmul.f32 %v1091, %v3284
    %v3286 = vmul.f32 %v1092, %v3284
    %v3287 = vmul.f32 %v1093, %v3284
    %v3288 = vmul.f32 %v1094, %v3284
    %v3289 = vmul.f32 %v1095, %v3284
    %v3290 = vmul.f32 %v1096, %v3284
    %v3297 = vrot.slane %v3285, 2
    %v3298 = vrot.slane %v3286, 2
    %v3299 = vsel %vm329, %v3297, %v3298
    %v3300 = vrot.slane %v3287, 2
    %v3301 = vsel %vm329, %v3298, %v3300
    %v3302 = vrot.slane %v3288, 2
    %v3303 = vrot.slane %v3289, 2
    %v3304 = vsel %vm329, %v3302, %v3303
    %v3305 = vrot.slane %v3290, 2
    %v3306 = vsel %vm329, %v3303, %v3305
    %v3313 = vadd.f32 %v3277, %v3299
    %v3314 = vadd.f32 %v3278, %v3301
    %v3315 = vadd.f32 %v3279, %v3300
    %v3316 = vadd.f32 %v3280, %v3304
    %v3317 = vadd.f32 %v3281, %v3306
    %v3318 = vadd.f32 %v3282, %v3305
    %s3319 = sld [smem:[#allocation5 + $0x19]]
    %v3320 = vstv %s3319
    %v3321 = vmul.f32 %v1091, %v3320
    %v3322 = vmul.f32 %v1092, %v3320
    %v3323 = vmul.f32 %v1093, %v3320
    %v3324 = vmul.f32 %v1094, %v3320
    %v3325 = vmul.f32 %v1095, %v3320
    %v3326 = vmul.f32 %v1096, %v3320
    %v3333 = vrot.slane %v3321, 2
    %v3334 = vrot.slane %v3322, 2
    %v3335 = vsel %vm329, %v3333, %v3334
    %v3336 = vrot.slane %v3323, 2
    %v3337 = vsel %vm329, %v3334, %v3336
    %v3338 = vrot.slane %v3324, 2
    %v3339 = vrot.slane %v3325, 2
    %v3340 = vsel %vm329, %v3338, %v3339
    %v3341 = vrot.slane %v3326, 2
    %v3342 = vsel %vm329, %v3339, %v3341
    %3343 = vrot.lane.b32.xlu0 %v3335, 127
    %v3344 = vpop.permute.xlu0 %3343
    %3345 = vrot.lane.b32.xlu0 %v3337, 127
    %v3346 = vpop.permute.xlu0 %3345
    %3347 = vrot.lane.b32.xlu0 %v3336, 127
    %v3348 = vpop.permute.xlu0 %3347
    %3349 = vrot.lane.b32.xlu0 %v3340, 127
    %v3350 = vpop.permute.xlu0 %3349
    %3351 = vrot.lane.b32.xlu0 %v3342, 127
    %v3352 = vpop.permute.xlu0 %3351
    %3353 = vrot.lane.b32.xlu0 %v3341, 127
    %v3354 = vpop.permute.xlu0 %3353
    %v3361 = vadd.f32 %v3313, %v3344
    %v3362 = vadd.f32 %v3314, %v3346
    %v3363 = vadd.f32 %v3315, %v3348
    %v3364 = vadd.f32 %v3316, %v3350
    %v3365 = vadd.f32 %v3317, %v3352
    %v3366 = vadd.f32 %v3318, %v3354
    %s3367 = sld [smem:[#allocation5 + $0x1a]]
    %v3368 = vstv %s3367
    %v3369 = vmul.f32 %v1091, %v3368
    %v3370 = vmul.f32 %v1092, %v3368
    %v3371 = vmul.f32 %v1093, %v3368
    %v3372 = vmul.f32 %v1094, %v3368
    %v3373 = vmul.f32 %v1095, %v3368
    %v3374 = vmul.f32 %v1096, %v3368
    %v3381 = vrot.slane %v3369, 2
    %v3382 = vrot.slane %v3370, 2
    %v3383 = vsel %vm329, %v3381, %v3382
    %v3384 = vrot.slane %v3371, 2
    %v3385 = vsel %vm329, %v3382, %v3384
    %v3386 = vrot.slane %v3372, 2
    %v3387 = vrot.slane %v3373, 2
    %v3388 = vsel %vm329, %v3386, %v3387
    %v3389 = vrot.slane %v3374, 2
    %v3390 = vsel %vm329, %v3387, %v3389
    %3391 = vrot.lane.b32.xlu0 %v3383, 126
    %v3392 = vpop.permute.xlu0 %3391
    %3393 = vrot.lane.b32.xlu0 %v3385, 126
    %v3394 = vpop.permute.xlu0 %3393
    %3395 = vrot.lane.b32.xlu0 %v3384, 126
    %v3396 = vpop.permute.xlu0 %3395
    %3397 = vrot.lane.b32.xlu0 %v3388, 126
    %v3398 = vpop.permute.xlu0 %3397
    %3399 = vrot.lane.b32.xlu0 %v3390, 126
    %v3400 = vpop.permute.xlu0 %3399
    %3401 = vrot.lane.b32.xlu0 %v3389, 126
    %v3402 = vpop.permute.xlu0 %3401
    %v3409 = vadd.f32 %v3361, %v3392
    %v3410 = vadd.f32 %v3362, %v3394
    %v3411 = vadd.f32 %v3363, %v3396
    %v3412 = vadd.f32 %v3364, %v3398
    %v3413 = vadd.f32 %v3365, %v3400
    %v3414 = vadd.f32 %v3366, %v3402
    %s3415 = sld [smem:[#allocation5 + $0x21]]
    %v3416 = vstv %s3415
    %v3417 = vmul.f32 %v1091, %v3416
    %v3418 = vmul.f32 %v1092, %v3416
    %v3419 = vmul.f32 %v1093, %v3416
    %v3420 = vmul.f32 %v1094, %v3416
    %v3421 = vmul.f32 %v1095, %v3416
    %v3422 = vmul.f32 %v1096, %v3416
    %s3423 = sld [smem:[#allocation5 + $0x22]]
    %v3424 = vstv %s3423
    %v3425 = vmul.f32 %v1091, %v3424
    %v3426 = vmul.f32 %v1092, %v3424
    %v3427 = vmul.f32 %v1093, %v3424
    %v3428 = vmul.f32 %v1094, %v3424
    %v3429 = vmul.f32 %v1095, %v3424
    %v3430 = vmul.f32 %v1096, %v3424
    %3437 = vrot.lane.b32.xlu0 %v3425, 127
    %v3438 = vpop.permute.xlu0 %3437
    %3439 = vrot.lane.b32.xlu0 %v3426, 127
    %v3440 = vpop.permute.xlu0 %3439
    %3441 = vrot.lane.b32.xlu0 %v3427, 127
    %v3442 = vpop.permute.xlu0 %3441
    %3443 = vrot.lane.b32.xlu0 %v3428, 127
    %v3444 = vpop.permute.xlu0 %3443
    %3445 = vrot.lane.b32.xlu0 %v3429, 127
    %v3446 = vpop.permute.xlu0 %3445
    %3447 = vrot.lane.b32.xlu0 %v3430, 127
    %v3448 = vpop.permute.xlu0 %3447
    %v3455 = vadd.f32 %v3417, %v3438
    %v3456 = vadd.f32 %v3418, %v3440
    %v3457 = vadd.f32 %v3419, %v3442
    %v3458 = vadd.f32 %v3420, %v3444
    %v3459 = vadd.f32 %v3421, %v3446
    %v3460 = vadd.f32 %v3422, %v3448
    %s3461 = sld [smem:[#allocation5 + $0x23]]
    %v3462 = vstv %s3461
    %v3463 = vmul.f32 %v1091, %v3462
    %v3464 = vmul.f32 %v1092, %v3462
    %v3465 = vmul.f32 %v1093, %v3462
    %v3466 = vmul.f32 %v1094, %v3462
    %v3467 = vmul.f32 %v1095, %v3462
    %v3468 = vmul.f32 %v1096, %v3462
    %3475 = vrot.lane.b32.xlu0 %v3463, 126
    %v3476 = vpop.permute.xlu0 %3475
    %3477 = vrot.lane.b32.xlu0 %v3464, 126
    %v3478 = vpop.permute.xlu0 %3477
    %3479 = vrot.lane.b32.xlu0 %v3465, 126
    %v3480 = vpop.permute.xlu0 %3479
    %3481 = vrot.lane.b32.xlu0 %v3466, 126
    %v3482 = vpop.permute.xlu0 %3481
    %3483 = vrot.lane.b32.xlu0 %v3467, 126
    %v3484 = vpop.permute.xlu0 %3483
    %3485 = vrot.lane.b32.xlu0 %v3468, 126
    %v3486 = vpop.permute.xlu0 %3485
    %v3493 = vadd.f32 %v3455, %v3476
    %v3494 = vadd.f32 %v3456, %v3478
    %v3495 = vadd.f32 %v3457, %v3480
    %v3496 = vadd.f32 %v3458, %v3482
    %v3497 = vadd.f32 %v3459, %v3484
    %v3498 = vadd.f32 %v3460, %v3486
    %s3499 = sld [smem:[#allocation5 + $0x2a]]
    %v3500 = vstv %s3499
    %v3501 = vmul.f32 %v1091, %v3500
    %v3502 = vmul.f32 %v1092, %v3500
    %v3503 = vmul.f32 %v1093, %v3500
    %v3504 = vmul.f32 %v1094, %v3500
    %v3505 = vmul.f32 %v1095, %v3500
    %v3506 = vmul.f32 %v1096, %v3500
    %s3507 = sld [smem:[#allocation5 + $0x2b]]
    %v3508 = vstv %s3507
    %v3509 = vmul.f32 %v1091, %v3508
    %v3510 = vmul.f32 %v1092, %v3508
    %v3511 = vmul.f32 %v1093, %v3508
    %v3512 = vmul.f32 %v1094, %v3508
    %v3513 = vmul.f32 %v1095, %v3508
    %v3514 = vmul.f32 %v1096, %v3508
    %v3521 = vrot.slane %v3509, 1
    %v3522 = vrot.slane %v3510, 1
    %v3523 = vsel %vm196, %v3521, %v3522
    %v3524 = vrot.slane %v3511, 1
    %v3525 = vsel %vm196, %v3522, %v3524
    %v3526 = vrot.slane %v3512, 1
    %v3527 = vrot.slane %v3513, 1
    %v3528 = vsel %vm196, %v3526, %v3527
    %v3529 = vrot.slane %v3514, 1
    %v3530 = vsel %vm196, %v3527, %v3529
    %v3537 = vadd.f32 %v3501, %v3523
    %v3538 = vadd.f32 %v3502, %v3525
    %v3539 = vadd.f32 %v3503, %v3524
    %v3540 = vadd.f32 %v3504, %v3528
    %v3541 = vadd.f32 %v3505, %v3530
    %v3542 = vadd.f32 %v3506, %v3529
    %s3543 = sld [smem:[#allocation5 + $0x2c]]
    %v3544 = vstv %s3543
    %v3545 = vmul.f32 %v1091, %v3544
    %v3546 = vmul.f32 %v1092, %v3544
    %v3547 = vmul.f32 %v1093, %v3544
    %v3548 = vmul.f32 %v1094, %v3544
    %v3549 = vmul.f32 %v1095, %v3544
    %v3550 = vmul.f32 %v1096, %v3544
    %v3557 = vrot.slane %v3545, 2
    %v3558 = vrot.slane %v3546, 2
    %v3559 = vsel %vm329, %v3557, %v3558
    %v3560 = vrot.slane %v3547, 2
    %v3561 = vsel %vm329, %v3558, %v3560
    %v3562 = vrot.slane %v3548, 2
    %v3563 = vrot.slane %v3549, 2
    %v3564 = vsel %vm329, %v3562, %v3563
    %v3565 = vrot.slane %v3550, 2
    %v3566 = vsel %vm329, %v3563, %v3565
    %v3573 = vadd.f32 %v3537, %v3559
    %v3574 = vadd.f32 %v3538, %v3561
    %v3575 = vadd.f32 %v3539, %v3560
    %v3576 = vadd.f32 %v3540, %v3564
    %v3577 = vadd.f32 %v3541, %v3566
    %v3578 = vadd.f32 %v3542, %v3565
    %s3579 = sld [smem:[#allocation5 + $0x2f]]
    %s3580 = sld [smem:[#allocation5 + $0x32]]
    %v3581 = vmul.f32 %v3409, %v89
    %v3582 = vmul.f32 %v3410, %v90
    %v3583 = vmul.f32 %v3411, %v91
    %v3584 = vmul.f32 %v3412, %v89
    %v3585 = vmul.f32 %v3413, %v90
    %v3586 = vmul.f32 %v3414, %v91
    %v3587 = vsel %vm1617, %v3581, 0.0
    %v3588 = vsel %vm1617, %v3582, 0.0
    %v3589 = vadd.f32 %v3587, %v3588
    %v3590 = vsel %vm1621, %v3583, 0.0
    %v3591 = vadd.f32 %v3589, %v3590
    %v3592 = vsel %vm1617, %v3584, 0.0
    %v3593 = vadd.f32 %v3591, %v3592
    %v3594 = vsel %vm1617, %v3585, 0.0
    %v3595 = vadd.f32 %v3593, %v3594
    %v3596 = vsel %vm1621, %v3586, 0.0
    %v3597 = vadd.f32 %v3595, %v3596
    %3598 = vadd.xlane.f32.xlu0 %v3597
    %v3599 = vpop.xlane.xlu0 %3598
    %v3600 = vrot.slane %v3599, 4
    %v3601 = vadd.f32 %v3599, %v3600
    %v3602 = vrot.slane %v3601, 2
    %v3603 = vadd.f32 %v3601, %v3602
    %v3604 = vrot.slane %v3603, 1
    %v3605 = vadd.f32 %v3603, %v3604
    %s3606 = vtos %v3605
    %v3607 = vrcp.pop 512.0
    %s3608 = vtos %v3607
    %s3609 = smul.f32 %s3606, %s3608
    %v3610 = vstv %s3609
    %v3611 = vsub.f32 %v3581, %v3610
    %v3612 = vsub.f32 %v3582, %v3610
    %v3613 = vsub.f32 %v3583, %v3610
    %v3614 = vsub.f32 %v3584, %v3610
    %v3615 = vsub.f32 %v3585, %v3610
    %v3616 = vsub.f32 %v3586, %v3610
    %v3617 = vmul.f32 %v3611, %v89
    %v3618 = vmul.f32 %v3612, %v90
    %v3619 = vmul.f32 %v3613, %v91
    %v3620 = vmul.f32 %v3614, %v89
    %v3621 = vmul.f32 %v3615, %v90
    %v3622 = vmul.f32 %v3616, %v91
    %v3623 = vmul.f32 %v3617, %v3617
    %v3624 = vmul.f32 %v3618, %v3618
    %v3625 = vmul.f32 %v3619, %v3619
    %v3626 = vmul.f32 %v3620, %v3620
    %v3627 = vmul.f32 %v3621, %v3621
    %v3628 = vmul.f32 %v3622, %v3622
    %v3629 = vsel %vm1617, %v3623, 0.0
    %v3630 = vsel %vm1617, %v3624, 0.0
    %v3631 = vadd.f32 %v3629, %v3630
    %v3632 = vsel %vm1621, %v3625, 0.0
    %v3633 = vadd.f32 %v3631, %v3632
    %v3634 = vsel %vm1617, %v3626, 0.0
    %v3635 = vadd.f32 %v3633, %v3634
    %v3636 = vsel %vm1617, %v3627, 0.0
    %v3637 = vadd.f32 %v3635, %v3636
    %v3638 = vsel %vm1621, %v3628, 0.0
    %v3639 = vadd.f32 %v3637, %v3638
    %3640 = vadd.xlane.f32.xlu0 %v3639
    %v3641 = vpop.xlane.xlu0 %3640
    %v3642 = vrot.slane %v3641, 4
    %v3643 = vadd.f32 %v3641, %v3642
    %v3644 = vrot.slane %v3643, 2
    %v3645 = vadd.f32 %v3643, %v3644
    %v3646 = vrot.slane %v3645, 1
    %v3647 = vadd.f32 %v3645, %v3646
    %s3648 = vtos %v3647
    %v3649 = vrcp.pop 512.0
    %s3650 = vtos %v3649
    %s3651 = smul.f32 %s3648, %s3650
    %s3652 = sadd.f32 %s3651, 1e-05
    %v3653 = vstv %s3652
    %v3654 = vrsqrt.pop %v3653
    %s3655 = vtos %v3654
    %s3656 = smul.f32 %s3579, %s3655
    %v3657 = vstv %s3656
    %v3658 = vmul.f32 %v3617, %v3657
    %v3659 = vmul.f32 %v3618, %v3657
    %v3660 = vmul.f32 %v3619, %v3657
    %v3661 = vmul.f32 %v3620, %v3657
    %v3662 = vmul.f32 %v3621, %v3657
    %v3663 = vmul.f32 %v3622, %v3657
    %v3664 = vstv %s3580
    %v3665 = vadd.f32 %v3658, %v3664
    %v3666 = vadd.f32 %v3659, %v3664
    %v3667 = vadd.f32 %v3660, %v3664
    %v3668 = vadd.f32 %v3661, %v3664
    %v3669 = vadd.f32 %v3662, %v3664
    %v3670 = vadd.f32 %v3663, %v3664
    %v3671 = vmax.f32 %v3665, 0.0
    %v3672 = vmax.f32 %v3666, 0.0
    %v3673 = vmax.f32 %v3667, 0.0
    %v3674 = vmax.f32 %v3668, 0.0
    %v3675 = vmax.f32 %v3669, 0.0
    %v3676 = vmax.f32 %v3670, 0.0
    %v3677 = vmul.f32 %v3671, %v89
    %v3678 = vmul.f32 %v3672, %v90
    %v3679 = vmul.f32 %v3673, %v91
    %v3680 = vmul.f32 %v3674, %v89
    %v3681 = vmul.f32 %v3675, %v90
    %v3682 = vmul.f32 %v3676, %v91
    %s3683 = sld [smem:[#allocation5 + $0x35]]
    %s3684 = sld [smem:[#allocation5 + $0x38]]
    %v3685 = vmul.f32 %v3493, %v1720
    %v3686 = vmul.f32 %v3494, %v1722
    %v3687 = vmul.f32 %v3495, %v1724
    %v3688 = vmul.f32 %v3496, %v1720
    %v3689 = vmul.f32 %v3497, %v1722
    %v3690 = vmul.f32 %v3498, %v1724
    %v3697 = vrot.slane %v3685, 1
    %v3698 = vrot.slane %v3686, 1
    %v3699 = vsel %vm196, %v3697, %v3698
    %v3700 = vrot.slane %v3687, 1
    %v3701 = vsel %vm196, %v3698, %v3700
    %v3702 = vrot.slane %v3688, 1
    %v3703 = vrot.slane %v3689, 1
    %v3704 = vsel %vm196, %v3702, %v3703
    %v3705 = vrot.slane %v3690, 1
    %v3706 = vsel %vm196, %v3703, %v3705
    %v3713 = vsel %vm1617, %v3699, 0.0
    %v3714 = vsel %vm1617, %v3701, 0.0
    %v3715 = vadd.f32 %v3713, %v3714
    %v3716 = vsel %vm1621, %v3700, 0.0
    %v3717 = vadd.f32 %v3715, %v3716
    %v3718 = vsel %vm1617, %v3704, 0.0
    %v3719 = vadd.f32 %v3717, %v3718
    %v3720 = vsel %vm1617, %v3706, 0.0
    %v3721 = vadd.f32 %v3719, %v3720
    %v3722 = vsel %vm1621, %v3705, 0.0
    %v3723 = vadd.f32 %v3721, %v3722
    %3724 = vadd.xlane.f32.xlu0 %v3723
    %v3725 = vpop.xlane.xlu0 %3724
    %v3726 = vrot.slane %v3725, 4
    %v3727 = vadd.f32 %v3725, %v3726
    %v3728 = vrot.slane %v3727, 2
    %v3729 = vadd.f32 %v3727, %v3728
    %v3730 = vrot.slane %v3729, 1
    %v3731 = vadd.f32 %v3729, %v3730
    %s3732 = vtos %v3731
    %v3733 = vrcp.pop 512.0
    %s3734 = vtos %v3733
    %s3735 = smul.f32 %s3732, %s3734
    %v3736 = vstv %s3735
    %v3737 = vsub.f32 %v3685, %v3736
    %v3738 = vsub.f32 %v3686, %v3736
    %v3739 = vsub.f32 %v3687, %v3736
    %v3740 = vsub.f32 %v3688, %v3736
    %v3741 = vsub.f32 %v3689, %v3736
    %v3742 = vsub.f32 %v3690, %v3736
    %v3743 = vmul.f32 %v3737, %v1720
    %v3744 = vmul.f32 %v3738, %v1722
    %v3745 = vmul.f32 %v3739, %v1724
    %v3746 = vmul.f32 %v3740, %v1720
    %v3747 = vmul.f32 %v3741, %v1722
    %v3748 = vmul.f32 %v3742, %v1724
    %v3749 = vmul.f32 %v3743, %v3743
    %v3750 = vmul.f32 %v3744, %v3744
    %v3751 = vmul.f32 %v3745, %v3745
    %v3752 = vmul.f32 %v3746, %v3746
    %v3753 = vmul.f32 %v3747, %v3747
    %v3754 = vmul.f32 %v3748, %v3748
    %v3761 = vrot.slane %v3749, 1
    %v3762 = vrot.slane %v3750, 1
    %v3763 = vsel %vm196, %v3761, %v3762
    %v3764 = vrot.slane %v3751, 1
    %v3765 = vsel %vm196, %v3762, %v3764
    %v3766 = vrot.slane %v3752, 1
    %v3767 = vrot.slane %v3753, 1
    %v3768 = vsel %vm196, %v3766, %v3767
    %v3769 = vrot.slane %v3754, 1
    %v3770 = vsel %vm196, %v3767, %v3769
    %v3777 = vsel %vm1617, %v3763, 0.0
    %v3778 = vsel %vm1617, %v3765, 0.0
    %v3779 = vadd.f32 %v3777, %v3778
    %v3780 = vsel %vm1621, %v3764, 0.0
    %v3781 = vadd.f32 %v3779, %v3780
    %v3782 = vsel %vm1617, %v3768, 0.0
    %v3783 = vadd.f32 %v3781, %v3782
    %v3784 = vsel %vm1617, %v3770, 0.0
    %v3785 = vadd.f32 %v3783, %v3784
    %v3786 = vsel %vm1621, %v3769, 0.0
    %v3787 = vadd.f32 %v3785, %v3786
    %3788 = vadd.xlane.f32.xlu0 %v3787
    %v3789 = vpop.xlane.xlu0 %3788
    %v3790 = vrot.slane %v3789, 4
    %v3791 = vadd.f32 %v3789, %v3790
    %v3792 = vrot.slane %v3791, 2
    %v3793 = vadd.f32 %v3791, %v3792
    %v3794 = vrot.slane %v3793, 1
    %v3795 = vadd.f32 %v3793, %v3794
    %s3796 = vtos %v3795
    %v3797 = vrcp.pop 512.0
    %s3798 = vtos %v3797
    %s3799 = smul.f32 %s3796, %s3798
    %s3800 = sadd.f32 %s3799, 1e-05
    %v3801 = vstv %s3800
    %v3802 = vrsqrt.pop %v3801
    %s3803 = vtos %v3802
    %s3804 = smul.f32 %s3683, %s3803
    %v3805 = vstv %s3804
    %v3806 = vmul.f32 %v3743, %v3805
    %v3807 = vmul.f32 %v3744, %v3805
    %v3808 = vmul.f32 %v3745, %v3805
    %v3809 = vmul.f32 %v3746, %v3805
    %v3810 = vmul.f32 %v3747, %v3805
    %v3811 = vmul.f32 %v3748, %v3805
    %v3812 = vstv %s3684
    %v3813 = vadd.f32 %v3806, %v3812
    %v3814 = vadd.f32 %v3807, %v3812
    %v3815 = vadd.f32 %v3808, %v3812
    %v3816 = vadd.f32 %v3809, %v3812
    %v3817 = vadd.f32 %v3810, %v3812
    %v3818 = vadd.f32 %v3811, %v3812
    %v3819 = vmax.f32 %v3813, 0.0
    %v3820 = vmax.f32 %v3814, 0.0
    %v3821 = vmax.f32 %v3815, 0.0
    %v3822 = vmax.f32 %v3816, 0.0
    %v3823 = vmax.f32 %v3817, 0.0
    %v3824 = vmax.f32 %v3818, 0.0
    %v3825 = vmul.f32 %v3819, %v1720
    %v3826 = vmul.f32 %v3820, %v1722
    %v3827 = vmul.f32 %v3821, %v1724
    %v3828 = vmul.f32 %v3822, %v1720
    %v3829 = vmul.f32 %v3823, %v1722
    %v3830 = vmul.f32 %v3824, %v1724
    %v3837 = vrot.slane %v3825, 1
    %v3838 = vrot.slane %v3826, 1
    %v3839 = vsel %vm196, %v3837, %v3838
    %v3840 = vrot.slane %v3827, 1
    %v3841 = vsel %vm196, %v3838, %v3840
    %v3842 = vrot.slane %v3828, 1
    %v3843 = vrot.slane %v3829, 1
    %v3844 = vsel %vm196, %v3842, %v3843
    %v3845 = vrot.slane %v3830, 1
    %v3846 = vsel %vm196, %v3843, %v3845
    %v3853 = vadd.f32 %v3677, %v3839
    %v3854 = vadd.f32 %v3678, %v3841
    %v3855 = vadd.f32 %v3679, %v3840
    %v3856 = vadd.f32 %v3680, %v3844
    %v3857 = vadd.f32 %v3681, %v3846
    %v3858 = vadd.f32 %v3682, %v3845
    %s3859 = sld [smem:[#allocation5 + $0x3b]]
    %s3860 = sld [smem:[#allocation5 + $0x3e]]
    %v3861 = vmul.f32 %v3573, %v1905
    %v3862 = vmul.f32 %v3574, %v1907
    %v3863 = vmul.f32 %v3575, %v1909
    %v3864 = vmul.f32 %v3576, %v1905
    %v3865 = vmul.f32 %v3577, %v1907
    %v3866 = vmul.f32 %v3578, %v1909
    %3873 = vrot.lane.b32.xlu0 %v3861, 127
    %v3874 = vpop.permute.xlu0 %3873
    %3875 = vrot.lane.b32.xlu0 %v3862, 127
    %v3876 = vpop.permute.xlu0 %3875
    %3877 = vrot.lane.b32.xlu0 %v3863, 127
    %v3878 = vpop.permute.xlu0 %3877
    %3879 = vrot.lane.b32.xlu0 %v3864, 127
    %v3880 = vpop.permute.xlu0 %3879
    %3881 = vrot.lane.b32.xlu0 %v3865, 127
    %v3882 = vpop.permute.xlu0 %3881
    %3883 = vrot.lane.b32.xlu0 %v3866, 127
    %v3884 = vpop.permute.xlu0 %3883
    %v3891 = vsel %vm1617, %v3874, 0.0
    %v3892 = vsel %vm1617, %v3876, 0.0
    %v3893 = vadd.f32 %v3891, %v3892
    %v3894 = vsel %vm1621, %v3878, 0.0
    %v3895 = vadd.f32 %v3893, %v3894
    %v3896 = vsel %vm1617, %v3880, 0.0
    %v3897 = vadd.f32 %v3895, %v3896
    %v3898 = vsel %vm1617, %v3882, 0.0
    %v3899 = vadd.f32 %v3897, %v3898
    %v3900 = vsel %vm1621, %v3884, 0.0
    %v3901 = vadd.f32 %v3899, %v3900
    %3902 = vadd.xlane.f32.xlu0 %v3901
    %v3903 = vpop.xlane.xlu0 %3902
    %v3904 = vrot.slane %v3903, 4
    %v3905 = vadd.f32 %v3903, %v3904
    %v3906 = vrot.slane %v3905, 2
    %v3907 = vadd.f32 %v3905, %v3906
    %v3908 = vrot.slane %v3907, 1
    %v3909 = vadd.f32 %v3907, %v3908
    %s3910 = vtos %v3909
    %v3911 = vrcp.pop 512.0
    %s3912 = vtos %v3911
    %s3913 = smul.f32 %s3910, %s3912
    %v3914 = vstv %s3913
    %v3915 = vsub.f32 %v3861, %v3914
    %v3916 = vsub.f32 %v3862, %v3914
    %v3917 = vsub.f32 %v3863, %v3914
    %v3918 = vsub.f32 %v3864, %v3914
    %v3919 = vsub.f32 %v3865, %v3914
    %v3920 = vsub.f32 %v3866, %v3914
    %v3921 = vmul.f32 %v3915, %v1905
    %v3922 = vmul.f32 %v3916, %v1907
    %v3923 = vmul.f32 %v3917, %v1909
    %v3924 = vmul.f32 %v3918, %v1905
    %v3925 = vmul.f32 %v3919, %v1907
    %v3926 = vmul.f32 %v3920, %v1909
    %v3927 = vmul.f32 %v3921, %v3921
    %v3928 = vmul.f32 %v3922, %v3922
    %v3929 = vmul.f32 %v3923, %v3923
    %v3930 = vmul.f32 %v3924, %v3924
    %v3931 = vmul.f32 %v3925, %v3925
    %v3932 = vmul.f32 %v3926, %v3926
    %3939 = vrot.lane.b32.xlu0 %v3927, 127
    %v3940 = vpop.permute.xlu0 %3939
    %3941 = vrot.lane.b32.xlu0 %v3928, 127
    %v3942 = vpop.permute.xlu0 %3941
    %3943 = vrot.lane.b32.xlu0 %v3929, 127
    %v3944 = vpop.permute.xlu0 %3943
    %3945 = vrot.lane.b32.xlu0 %v3930, 127
    %v3946 = vpop.permute.xlu0 %3945
    %3947 = vrot.lane.b32.xlu0 %v3931, 127
    %v3948 = vpop.permute.xlu0 %3947
    %3949 = vrot.lane.b32.xlu0 %v3932, 127
    %v3950 = vpop.permute.xlu0 %3949
    %v3957 = vsel %vm1617, %v3940, 0.0
    %v3958 = vsel %vm1617, %v3942, 0.0
    %v3959 = vadd.f32 %v3957, %v3958
    %v3960 = vsel %vm1621, %v3944, 0.0
    %v3961 = vadd.f32 %v3959, %v3960
    %v3962 = vsel %vm1617, %v3946, 0.0
    %v3963 = vadd.f32 %v3961, %v3962
    %v3964 = vsel %vm1617, %v3948, 0.0
    %v3965 = vadd.f32 %v3963, %v3964
    %v3966 = vsel %vm1621, %v3950, 0.0
    %v3967 = vadd.f32 %v3965, %v3966
    %3968 = vadd.xlane.f32.xlu0 %v3967
    %v3969 = vpop.xlane.xlu0 %3968
    %v3970 = vrot.slane %v3969, 4
    %v3971 = vadd.f32 %v3969, %v3970
    %v3972 = vrot.slane %v3971, 2
    %v3973 = vadd.f32 %v3971, %v3972
    %v3974 = vrot.slane %v3973, 1
    %v3975 = vadd.f32 %v3973, %v3974
    %s3976 = vtos %v3975
    %v3977 = vrcp.pop 512.0
    %s3978 = vtos %v3977
    %s3979 = smul.f32 %s3976, %s3978
    %s3980 = sadd.f32 %s3979, 1e-05
    %v3981 = vstv %s3980
    %v3982 = vrsqrt.pop %v3981
    %s3983 = vtos %v3982
    %s3984 = smul.f32 %s3859, %s3983
    %v3985 = vstv %s3984
    %v3986 = vmul.f32 %v3921, %v3985
    %v3987 = vmul.f32 %v3922, %v3985
    %v3988 = vmul.f32 %v3923, %v3985
    %v3989 = vmul.f32 %v3924, %v3985
    %v3990 = vmul.f32 %v3925, %v3985
    %v3991 = vmul.f32 %v3926, %v3985
    %v3992 = vstv %s3860
    %v3993 = vadd.f32 %v3986, %v3992
    %v3994 = vadd.f32 %v3987, %v3992
    %v3995 = vadd.f32 %v3988, %v3992
    %v3996 = vadd.f32 %v3989, %v3992
    %v3997 = vadd.f32 %v3990, %v3992
    %v3998 = vadd.f32 %v3991, %v3992
    %v3999 = vmax.f32 %v3993, 0.0
    %v4000 = vmax.f32 %v3994, 0.0
    %v4001 = vmax.f32 %v3995, 0.0
    %v4002 = vmax.f32 %v3996, 0.0
    %v4003 = vmax.f32 %v3997, 0.0
    %v4004 = vmax.f32 %v3998, 0.0
    %v4005 = vmul.f32 %v3999, %v1905
    %v4006 = vmul.f32 %v4000, %v1907
    %v4007 = vmul.f32 %v4001, %v1909
    %v4008 = vmul.f32 %v4002, %v1905
    %v4009 = vmul.f32 %v4003, %v1907
    %v4010 = vmul.f32 %v4004, %v1909
    %4017 = vrot.lane.b32.xlu0 %v4005, 127
    %v4018 = vpop.permute.xlu0 %4017
    %4019 = vrot.lane.b32.xlu0 %v4006, 127
    %v4020 = vpop.permute.xlu0 %4019
    %4021 = vrot.lane.b32.xlu0 %v4007, 127
    %v4022 = vpop.permute.xlu0 %4021
    %4023 = vrot.lane.b32.xlu0 %v4008, 127
    %v4024 = vpop.permute.xlu0 %4023
    %4025 = vrot.lane.b32.xlu0 %v4009, 127
    %v4026 = vpop.permute.xlu0 %4025
    %4027 = vrot.lane.b32.xlu0 %v4010, 127
    %v4028 = vpop.permute.xlu0 %4027
    %v4035 = vadd.f32 %v3853, %v4018
    %v4036 = vadd.f32 %v3854, %v4020
    %v4037 = vadd.f32 %v3855, %v4022
    %v4038 = vadd.f32 %v3856, %v4024
    %v4039 = vadd.f32 %v3857, %v4026
    %v4040 = vadd.f32 %v3858, %v4028
    %v4041 = vmul.f32 %v2087, %v89
    %v4042 = vmul.f32 %v2088, %v90
    %v4043 = vmul.f32 %v2089, %v91
    %v4044 = vmul.f32 %v2090, %v89
    %v4045 = vmul.f32 %v2091, %v90
    %v4046 = vmul.f32 %v2092, %v91
    %v4047 = vsel %vm1617, %v4041, 0.0
    %v4048 = vsel %vm1617, %v4042, 0.0
    %v4049 = vadd.f32 %v4047, %v4048
    %v4050 = vsel %vm1621, %v4043, 0.0
    %v4051 = vadd.f32 %v4049, %v4050
    %v4052 = vsel %vm1617, %v4044, 0.0
    %v4053 = vadd.f32 %v4051, %v4052
    %v4054 = vsel %vm1617, %v4045, 0.0
    %v4055 = vadd.f32 %v4053, %v4054
    %v4056 = vsel %vm1621, %v4046, 0.0
    %v4057 = vadd.f32 %v4055, %v4056
    %4058 = vadd.xlane.f32.xlu0 %v4057
    %v4059 = vpop.xlane.xlu0 %4058
    %v4060 = vrot.slane %v4059, 4
    %v4061 = vadd.f32 %v4059, %v4060
    %v4062 = vrot.slane %v4061, 2
    %v4063 = vadd.f32 %v4061, %v4062
    %v4064 = vrot.slane %v4063, 1
    %v4065 = vadd.f32 %v4063, %v4064
    %s4066 = vtos %v4065
    %v4067 = vrcp.pop 512.0
    %s4068 = vtos %v4067
    %s4069 = smul.f32 %s4066, %s4068
    %v4070 = vstv %s4069
    %v4071 = vsub.f32 %v4041, %v4070
    %v4072 = vsub.f32 %v4042, %v4070
    %v4073 = vsub.f32 %v4043, %v4070
    %v4074 = vsub.f32 %v4044, %v4070
    %v4075 = vsub.f32 %v4045, %v4070
    %v4076 = vsub.f32 %v4046, %v4070
    %v4077 = vmul.f32 %v4071, %v89
    %v4078 = vmul.f32 %v4072, %v90
    %v4079 = vmul.f32 %v4073, %v91
    %v4080 = vmul.f32 %v4074, %v89
    %v4081 = vmul.f32 %v4075, %v90
    %v4082 = vmul.f32 %v4076, %v91
    %v4083 = vmul.f32 %v4077, %v4077
    %v4084 = vmul.f32 %v4078, %v4078
    %v4085 = vmul.f32 %v4079, %v4079
    %v4086 = vmul.f32 %v4080, %v4080
    %v4087 = vmul.f32 %v4081, %v4081
    %v4088 = vmul.f32 %v4082, %v4082
    %v4089 = vsel %vm1617, %v4083, 0.0
    %v4090 = vsel %vm1617, %v4084, 0.0
    %v4091 = vadd.f32 %v4089, %v4090
    %v4092 = vsel %vm1621, %v4085, 0.0
    %v4093 = vadd.f32 %v4091, %v4092
    %v4094 = vsel %vm1617, %v4086, 0.0
    %v4095 = vadd.f32 %v4093, %v4094
    %v4096 = vsel %vm1617, %v4087, 0.0
    %v4097 = vadd.f32 %v4095, %v4096
    %v4098 = vsel %vm1621, %v4088, 0.0
    %v4099 = vadd.f32 %v4097, %v4098
    %4100 = vadd.xlane.f32.xlu0 %v4099
    %v4101 = vpop.xlane.xlu0 %4100
    %v4102 = vrot.slane %v4101, 4
    %v4103 = vadd.f32 %v4101, %v4102
    %v4104 = vrot.slane %v4103, 2
    %v4105 = vadd.f32 %v4103, %v4104
    %v4106 = vrot.slane %v4105, 1
    %v4107 = vadd.f32 %v4105, %v4106
    %s4108 = vtos %v4107
    %v4109 = vrcp.pop 512.0
    %s4110 = vtos %v4109
    %s4111 = smul.f32 %s4108, %s4110
    %s4112 = sadd.f32 %s4111, 1e-05
    %v4113 = vstv %s4112
    %v4114 = vrsqrt.pop %v4113
    %s4115 = vtos %v4114
    %v4116 = vstv %s4115
    %v4117 = vmul.f32 %v4077, %v4116
    %v4118 = vmul.f32 %v4078, %v4116
    %v4119 = vmul.f32 %v4079, %v4116
    %v4120 = vmul.f32 %v4080, %v4116
    %v4121 = vmul.f32 %v4081, %v4116
    %v4122 = vmul.f32 %v4082, %v4116
    %v4123 = vadd.f32 %v4117, 0.0
    %v4124 = vadd.f32 %v4118, 0.0
    %v4125 = vadd.f32 %v4119, 0.0
    %v4126 = vadd.f32 %v4120, 0.0
    %v4127 = vadd.f32 %v4121, 0.0
    %v4128 = vadd.f32 %v4122, 0.0
    %v4129 = vmax.f32 %v4123, 0.0
    %v4130 = vmax.f32 %v4124, 0.0
    %v4131 = vmax.f32 %v4125, 0.0
    %v4132 = vmax.f32 %v4126, 0.0
    %v4133 = vmax.f32 %v4127, 0.0
    %v4134 = vmax.f32 %v4128, 0.0
    %v4135 = vmul.f32 %v4129, %v89
    %v4136 = vmul.f32 %v4130, %v90
    %v4137 = vmul.f32 %v4131, %v91
    %v4138 = vmul.f32 %v4132, %v89
    %v4139 = vmul.f32 %v4133, %v90
    %v4140 = vmul.f32 %v4134, %v91
    %v4141 = vmul.f32 %v4035, %v89
    %v4142 = vmul.f32 %v4036, %v90
    %v4143 = vmul.f32 %v4037, %v91
    %v4144 = vmul.f32 %v4038, %v89
    %v4145 = vmul.f32 %v4039, %v90
    %v4146 = vmul.f32 %v4040, %v91
    %v4147 = vsel %vm1617, %v4141, 0.0
    %v4148 = vsel %vm1617, %v4142, 0.0
    %v4149 = vadd.f32 %v4147, %v4148
    %v4150 = vsel %vm1621, %v4143, 0.0
    %v4151 = vadd.f32 %v4149, %v4150
    %v4152 = vsel %vm1617, %v4144, 0.0
    %v4153 = vadd.f32 %v4151, %v4152
    %v4154 = vsel %vm1617, %v4145, 0.0
    %v4155 = vadd.f32 %v4153, %v4154
    %v4156 = vsel %vm1621, %v4146, 0.0
    %v4157 = vadd.f32 %v4155, %v4156
    %4158 = vadd.xlane.f32.xlu0 %v4157
    %v4159 = vpop.xlane.xlu0 %4158
    %v4160 = vrot.slane %v4159, 4
    %v4161 = vadd.f32 %v4159, %v4160
    %v4162 = vrot.slane %v4161, 2
    %v4163 = vadd.f32 %v4161, %v4162
    %v4164 = vrot.slane %v4163, 1
    %v4165 = vadd.f32 %v4163, %v4164
    %s4166 = vtos %v4165
    %v4167 = vrcp.pop 512.0
    %s4168 = vtos %v4167
    %s4169 = smul.f32 %s4166, %s4168
    %v4170 = vstv %s4169
    %v4171 = vsub.f32 %v4141, %v4170
    %v4172 = vsub.f32 %v4142, %v4170
    %v4173 = vsub.f32 %v4143, %v4170
    %v4174 = vsub.f32 %v4144, %v4170
    %v4175 = vsub.f32 %v4145, %v4170
    %v4176 = vsub.f32 %v4146, %v4170
    %v4177 = vmul.f32 %v4171, %v89
    %v4178 = vmul.f32 %v4172, %v90
    %v4179 = vmul.f32 %v4173, %v91
    %v4180 = vmul.f32 %v4174, %v89
    %v4181 = vmul.f32 %v4175, %v90
    %v4182 = vmul.f32 %v4176, %v91
    %v4183 = vmul.f32 %v4177, %v4177
    %v4184 = vmul.f32 %v4178, %v4178
    %v4185 = vmul.f32 %v4179, %v4179
    %v4186 = vmul.f32 %v4180, %v4180
    %v4187 = vmul.f32 %v4181, %v4181
    %v4188 = vmul.f32 %v4182, %v4182
    %v4189 = vsel %vm1617, %v4183, 0.0
    %v4190 = vsel %vm1617, %v4184, 0.0
    %v4191 = vadd.f32 %v4189, %v4190
    %v4192 = vsel %vm1621, %v4185, 0.0
    %v4193 = vadd.f32 %v4191, %v4192
    %v4194 = vsel %vm1617, %v4186, 0.0
    %v4195 = vadd.f32 %v4193, %v4194
    %v4196 = vsel %vm1617, %v4187, 0.0
    %v4197 = vadd.f32 %v4195, %v4196
    %v4198 = vsel %vm1621, %v4188, 0.0
    %v4199 = vadd.f32 %v4197, %v4198
    %4200 = vadd.xlane.f32.xlu0 %v4199
    %v4201 = vpop.xlane.xlu0 %4200
    %v4202 = vrot.slane %v4201, 4
    %v4203 = vadd.f32 %v4201, %v4202
    %v4204 = vrot.slane %v4203, 2
    %v4205 = vadd.f32 %v4203, %v4204
    %v4206 = vrot.slane %v4205, 1
    %v4207 = vadd.f32 %v4205, %v4206
    %s4208 = vtos %v4207
    %v4209 = vrcp.pop 512.0
    %s4210 = vtos %v4209
    %s4211 = smul.f32 %s4208, %s4210
    %s4212 = sadd.f32 %s4211, 1e-05
    %v4213 = vstv %s4212
    %v4214 = vrsqrt.pop %v4213
    %s4215 = vtos %v4214
    %v4216 = vstv %s4215
    %v4217 = vmul.f32 %v4177, %v4216
    %v4218 = vmul.f32 %v4178, %v4216
    %v4219 = vmul.f32 %v4179, %v4216
    %v4220 = vmul.f32 %v4180, %v4216
    %v4221 = vmul.f32 %v4181, %v4216
    %v4222 = vmul.f32 %v4182, %v4216
    %v4223 = vadd.f32 %v4217, 0.0
    %v4224 = vadd.f32 %v4218, 0.0
    %v4225 = vadd.f32 %v4219, 0.0
    %v4226 = vadd.f32 %v4220, 0.0
    %v4227 = vadd.f32 %v4221, 0.0
    %v4228 = vadd.f32 %v4222, 0.0
    %v4229 = vmax.f32 %v4223, 0.0
    %v4230 = vmax.f32 %v4224, 0.0
    %v4231 = vmax.f32 %v4225, 0.0
    %v4232 = vmax.f32 %v4226, 0.0
    %v4233 = vmax.f32 %v4227, 0.0
    %v4234 = vmax.f32 %v4228, 0.0
    %v4235 = vmul.f32 %v4229, %v89
    %v4236 = vmul.f32 %v4230, %v90
    %v4237 = vmul.f32 %v4231, %v91
    %v4238 = vmul.f32 %v4232, %v89
    %v4239 = vmul.f32 %v4233, %v90
    %v4240 = vmul.f32 %v4234, %v91
    %v4241 = vmul.f32 %v3061, %v1098
    %v4242 = vmul.f32 %v3062, %v1098
    %v4243 = vmul.f32 %v3064, %v1098
    %v4244 = vmul.f32 %v3065, %v1098
    %v4245 = vmul.f32 %v3061, %v1106
    %v4246 = vmul.f32 %v3062, %v1106
    %v4247 = vmul.f32 %v3064, %v1106
    %v4248 = vmul.f32 %v3065, %v1106
    %4253 = vrot.lane.b32.xlu0 %v4245, 127
    %v4254 = vpop.permute.xlu0 %4253
    %4255 = vrot.lane.b32.xlu0 %v4246, 127
    %v4256 = vpop.permute.xlu0 %4255
    %4257 = vrot.lane.b32.xlu0 %v4247, 127
    %v4258 = vpop.permute.xlu0 %4257
    %4259 = vrot.lane.b32.xlu0 %v4248, 127
    %v4260 = vpop.permute.xlu0 %4259
    %v4265 = vadd.f32 %v4241, %v4254
    %v4266 = vadd.f32 %v4242, %v4256
    %v4267 = vadd.f32 %v4243, %v4258
    %v4268 = vadd.f32 %v4244, %v4260
    %v4269 = vmul.f32 %v3061, %v1144
    %v4270 = vmul.f32 %v3062, %v1144
    %v4271 = vmul.f32 %v3064, %v1144
    %v4272 = vmul.f32 %v3065, %v1144
    %4277 = vrot.lane.b32.xlu0 %v4269, 126
    %v4278 = vpop.permute.xlu0 %4277
    %4279 = vrot.lane.b32.xlu0 %v4270, 126
    %v4280 = vpop.permute.xlu0 %4279
    %4281 = vrot.lane.b32.xlu0 %v4271, 126
    %v4282 = vpop.permute.xlu0 %4281
    %4283 = vrot.lane.b32.xlu0 %v4272, 126
    %v4284 = vpop.permute.xlu0 %4283
    %v4289 = vadd.f32 %v4265, %v4278
    %v4290 = vadd.f32 %v4266, %v4280
    %v4291 = vadd.f32 %v4267, %v4282
    %v4292 = vadd.f32 %v4268, %v4284
    %v4293 = vmul.f32 %v3061, %v1182
    %v4294 = vmul.f32 %v3062, %v1182
    %v4295 = vmul.f32 %v3063, %v1182
    %v4296 = vmul.f32 %v3064, %v1182
    %v4297 = vmul.f32 %v3065, %v1182
    %v4298 = vmul.f32 %v3066, %v1182
    %v4305 = vrot.slane %v4293, 1
    %v4306 = vrot.slane %v4294, 1
    %v4307 = vsel %vm196, %v4305, %v4306
    %v4308 = vrot.slane %v4295, 1
    %v4309 = vsel %vm196, %v4306, %v4308
    %v4310 = vrot.slane %v4296, 1
    %v4311 = vrot.slane %v4297, 1
    %v4312 = vsel %vm196, %v4310, %v4311
    %v4313 = vrot.slane %v4298, 1
    %v4314 = vsel %vm196, %v4311, %v4313
    %v4319 = vadd.f32 %v4289, %v4307
    %v4320 = vadd.f32 %v4290, %v4309
    %v4321 = vadd.f32 %v4291, %v4312
    %v4322 = vadd.f32 %v4292, %v4314
    %v4323 = vmul.f32 %v3061, %v1218
    %v4324 = vmul.f32 %v3062, %v1218
    %v4325 = vmul.f32 %v3063, %v1218
    %v4326 = vmul.f32 %v3064, %v1218
    %v4327 = vmul.f32 %v3065, %v1218
    %v4328 = vmul.f32 %v3066, %v1218
    %v4335 = vrot.slane %v4323, 1
    %v4336 = vrot.slane %v4324, 1
    %v4337 = vsel %vm196, %v4335, %v4336
    %v4338 = vrot.slane %v4325, 1
    %v4339 = vsel %vm196, %v4336, %v4338
    %v4340 = vrot.slane %v4326, 1
    %v4341 = vrot.slane %v4327, 1
    %v4342 = vsel %vm196, %v4340, %v4341
    %v4343 = vrot.slane %v4328, 1
    %v4344 = vsel %vm196, %v4341, %v4343
    %4345 = vrot.lane.b32.xlu0 %v4337, 127
    %v4346 = vpop.permute.xlu0 %4345
    %4347 = vrot.lane.b32.xlu0 %v4339, 127
    %v4348 = vpop.permute.xlu0 %4347
    %4349 = vrot.lane.b32.xlu0 %v4342, 127
    %v4350 = vpop.permute.xlu0 %4349
    %4351 = vrot.lane.b32.xlu0 %v4344, 127
    %v4352 = vpop.permute.xlu0 %4351
    %v4357 = vadd.f32 %v4319, %v4346
    %v4358 = vadd.f32 %v4320, %v4348
    %v4359 = vadd.f32 %v4321, %v4350
    %v4360 = vadd.f32 %v4322, %v4352
    %v4361 = vmul.f32 %v3061, %v1266
    %v4362 = vmul.f32 %v3062, %v1266
    %v4363 = vmul.f32 %v3063, %v1266
    %v4364 = vmul.f32 %v3064, %v1266
    %v4365 = vmul.f32 %v3065, %v1266
    %v4366 = vmul.f32 %v3066, %v1266
    %v4373 = vrot.slane %v4361, 1
    %v4374 = vrot.slane %v4362, 1
    %v4375 = vsel %vm196, %v4373, %v4374
    %v4376 = vrot.slane %v4363, 1
    %v4377 = vsel %vm196, %v4374, %v4376
    %v4378 = vrot.slane %v4364, 1
    %v4379 = vrot.slane %v4365, 1
    %v4380 = vsel %vm196, %v4378, %v4379
    %v4381 = vrot.slane %v4366, 1
    %v4382 = vsel %vm196, %v4379, %v4381
    %4383 = vrot.lane.b32.xlu0 %v4375, 126
    %v4384 = vpop.permute.xlu0 %4383
    %4385 = vrot.lane.b32.xlu0 %v4377, 126
    %v4386 = vpop.permute.xlu0 %4385
    %4387 = vrot.lane.b32.xlu0 %v4380, 126
    %v4388 = vpop.permute.xlu0 %4387
    %4389 = vrot.lane.b32.xlu0 %v4382, 126
    %v4390 = vpop.permute.xlu0 %4389
    %v4395 = vadd.f32 %v4357, %v4384
    %v4396 = vadd.f32 %v4358, %v4386
    %v4397 = vadd.f32 %v4359, %v4388
    %v4398 = vadd.f32 %v4360, %v4390
    %v4399 = vmul.f32 %v3061, %v1314
    %v4400 = vmul.f32 %v3062, %v1314
    %v4401 = vmul.f32 %v3063, %v1314
    %v4402 = vmul.f32 %v3064, %v1314
    %v4403 = vmul.f32 %v3065, %v1314
    %v4404 = vmul.f32 %v3066, %v1314
    %v4411 = vrot.slane %v4399, 2
    %v4412 = vrot.slane %v4400, 2
    %v4413 = vsel %vm329, %v4411, %v4412
    %v4414 = vrot.slane %v4401, 2
    %v4415 = vsel %vm329, %v4412, %v4414
    %v4416 = vrot.slane %v4402, 2
    %v4417 = vrot.slane %v4403, 2
    %v4418 = vsel %vm329, %v4416, %v4417
    %v4419 = vrot.slane %v4404, 2
    %v4420 = vsel %vm329, %v4417, %v4419
    %v4425 = vadd.f32 %v4395, %v4413
    %v4426 = vadd.f32 %v4396, %v4415
    %v4427 = vadd.f32 %v4397, %v4418
    %v4428 = vadd.f32 %v4398, %v4420
    %v4429 = vmul.f32 %v3061, %v1350
    %v4430 = vmul.f32 %v3062, %v1350
    %v4431 = vmul.f32 %v3063, %v1350
    %v4432 = vmul.f32 %v3064, %v1350
    %v4433 = vmul.f32 %v3065, %v1350
    %v4434 = vmul.f32 %v3066, %v1350
    %v4441 = vrot.slane %v4429, 2
    %v4442 = vrot.slane %v4430, 2
    %v4443 = vsel %vm329, %v4441, %v4442
    %v4444 = vrot.slane %v4431, 2
    %v4445 = vsel %vm329, %v4442, %v4444
    %v4446 = vrot.slane %v4432, 2
    %v4447 = vrot.slane %v4433, 2
    %v4448 = vsel %vm329, %v4446, %v4447
    %v4449 = vrot.slane %v4434, 2
    %v4450 = vsel %vm329, %v4447, %v4449
    %4451 = vrot.lane.b32.xlu0 %v4443, 127
    %v4452 = vpop.permute.xlu0 %4451
    %4453 = vrot.lane.b32.xlu0 %v4445, 127
    %v4454 = vpop.permute.xlu0 %4453
    %4455 = vrot.lane.b32.xlu0 %v4448, 127
    %v4456 = vpop.permute.xlu0 %4455
    %4457 = vrot.lane.b32.xlu0 %v4450, 127
    %v4458 = vpop.permute.xlu0 %4457
    %v4463 = vadd.f32 %v4425, %v4452
    %v4464 = vadd.f32 %v4426, %v4454
    %v4465 = vadd.f32 %v4427, %v4456
    %v4466 = vadd.f32 %v4428, %v4458
    %v4467 = vmul.f32 %v3061, %v1398
    %v4468 = vmul.f32 %v3062, %v1398
    %v4469 = vmul.f32 %v3063, %v1398
    %v4470 = vmul.f32 %v3064, %v1398
    %v4471 = vmul.f32 %v3065, %v1398
    %v4472 = vmul.f32 %v3066, %v1398
    %v4479 = vrot.slane %v4467, 2
    %v4480 = vrot.slane %v4468, 2
    %v4481 = vsel %vm329, %v4479, %v4480
    %v4482 = vrot.slane %v4469, 2
    %v4483 = vsel %vm329, %v4480, %v4482
    %v4484 = vrot.slane %v4470, 2
    %v4485 = vrot.slane %v4471, 2
    %v4486 = vsel %vm329, %v4484, %v4485
    %v4487 = vrot.slane %v4472, 2
    %v4488 = vsel %vm329, %v4485, %v4487
    %4489 = vrot.lane.b32.xlu0 %v4481, 126
    %v4490 = vpop.permute.xlu0 %4489
    %4491 = vrot.lane.b32.xlu0 %v4483, 126
    %v4492 = vpop.permute.xlu0 %4491
    %4493 = vrot.lane.b32.xlu0 %v4486, 126
    %v4494 = vpop.permute.xlu0 %4493
    %4495 = vrot.lane.b32.xlu0 %v4488, 126
    %v4496 = vpop.permute.xlu0 %4495
    %v4501 = vadd.f32 %v4463, %v4490
    %v4502 = vadd.f32 %v4464, %v4492
    %v4503 = vadd.f32 %v4465, %v4494
    %v4504 = vadd.f32 %v4466, %v4496
    %v4505 = vmul.f32 %v3061, %v1446
    %v4506 = vmul.f32 %v3062, %v1446
    %v4507 = vmul.f32 %v3063, %v1446
    %v4508 = vmul.f32 %v3064, %v1446
    %v4509 = vmul.f32 %v3065, %v1446
    %v4510 = vmul.f32 %v3066, %v1446
    %v4511 = vmul.f32 %v3061, %v1454
    %v4512 = vmul.f32 %v3062, %v1454
    %v4513 = vmul.f32 %v3063, %v1454
    %v4514 = vmul.f32 %v3064, %v1454
    %v4515 = vmul.f32 %v3065, %v1454
    %v4516 = vmul.f32 %v3066, %v1454
    %4523 = vrot.lane.b32.xlu0 %v4511, 127
    %v4524 = vpop.permute.xlu0 %4523
    %4525 = vrot.lane.b32.xlu0 %v4512, 127
    %v4526 = vpop.permute.xlu0 %4525
    %4527 = vrot.lane.b32.xlu0 %v4513, 127
    %v4528 = vpop.permute.xlu0 %4527
    %4529 = vrot.lane.b32.xlu0 %v4514, 127
    %v4530 = vpop.permute.xlu0 %4529
    %4531 = vrot.lane.b32.xlu0 %v4515, 127
    %v4532 = vpop.permute.xlu0 %4531
    %4533 = vrot.lane.b32.xlu0 %v4516, 127
    %v4534 = vpop.permute.xlu0 %4533
    %v4541 = vadd.f32 %v4505, %v4524
    %v4542 = vadd.f32 %v4506, %v4526
    %v4543 = vadd.f32 %v4507, %v4528
    %v4544 = vadd.f32 %v4508, %v4530
    %v4545 = vadd.f32 %v4509, %v4532
    %v4546 = vadd.f32 %v4510, %v4534
    %v4547 = vmul.f32 %v3061, %v1492
    %v4548 = vmul.f32 %v3062, %v1492
    %v4549 = vmul.f32 %v3063, %v1492
    %v4550 = vmul.f32 %v3064, %v1492
    %v4551 = vmul.f32 %v3065, %v1492
    %v4552 = vmul.f32 %v3066, %v1492
    %4559 = vrot.lane.b32.xlu0 %v4547, 126
    %v4560 = vpop.permute.xlu0 %4559
    %4561 = vrot.lane.b32.xlu0 %v4548, 126
    %v4562 = vpop.permute.xlu0 %4561
    %4563 = vrot.lane.b32.xlu0 %v4549, 126
    %v4564 = vpop.permute.xlu0 %4563
    %4565 = vrot.lane.b32.xlu0 %v4550, 126
    %v4566 = vpop.permute.xlu0 %4565
    %4567 = vrot.lane.b32.xlu0 %v4551, 126
    %v4568 = vpop.permute.xlu0 %4567
    %4569 = vrot.lane.b32.xlu0 %v4552, 126
    %v4570 = vpop.permute.xlu0 %4569
    %v4577 = vadd.f32 %v4541, %v4560
    %v4578 = vadd.f32 %v4542, %v4562
    %v4579 = vadd.f32 %v4543, %v4564
    %v4580 = vadd.f32 %v4544, %v4566
    %v4581 = vadd.f32 %v4545, %v4568
    %v4582 = vadd.f32 %v4546, %v4570
    %v4583 = vmul.f32 %v3061, %v1530
    %v4584 = vmul.f32 %v3062, %v1530
    %v4585 = vmul.f32 %v3064, %v1530
    %v4586 = vmul.f32 %v3065, %v1530
    %v4587 = vmul.f32 %v3061, %v1538
    %v4588 = vmul.f32 %v3062, %v1538
    %v4589 = vmul.f32 %v3063, %v1538
    %v4590 = vmul.f32 %v3064, %v1538
    %v4591 = vmul.f32 %v3065, %v1538
    %v4592 = vmul.f32 %v3066, %v1538
    %v4599 = vrot.slane %v4587, 1
    %v4600 = vrot.slane %v4588, 1
    %v4601 = vsel %vm196, %v4599, %v4600
    %v4602 = vrot.slane %v4589, 1
    %v4603 = vsel %vm196, %v4600, %v4602
    %v4604 = vrot.slane %v4590, 1
    %v4605 = vrot.slane %v4591, 1
    %v4606 = vsel %vm196, %v4604, %v4605
    %v4607 = vrot.slane %v4592, 1
    %v4608 = vsel %vm196, %v4605, %v4607
    %v4613 = vadd.f32 %v4583, %v4601
    %v4614 = vadd.f32 %v4584, %v4603
    %v4615 = vadd.f32 %v4585, %v4606
    %v4616 = vadd.f32 %v4586, %v4608
    %v4617 = vmul.f32 %v3061, %v1574
    %v4618 = vmul.f32 %v3062, %v1574
    %v4619 = vmul.f32 %v3063, %v1574
    %v4620 = vmul.f32 %v3064, %v1574
    %v4621 = vmul.f32 %v3065, %v1574
    %v4622 = vmul.f32 %v3066, %v1574
    %v4629 = vrot.slane %v4617, 2
    %v4630 = vrot.slane %v4618, 2
    %v4631 = vsel %vm329, %v4629, %v4630
    %v4632 = vrot.slane %v4619, 2
    %v4633 = vsel %vm329, %v4630, %v4632
    %v4634 = vrot.slane %v4620, 2
    %v4635 = vrot.slane %v4621, 2
    %v4636 = vsel %vm329, %v4634, %v4635
    %v4637 = vrot.slane %v4622, 2
    %v4638 = vsel %vm329, %v4635, %v4637
    %v4643 = vadd.f32 %v4613, %v4631
    %v4644 = vadd.f32 %v4614, %v4633
    %v4645 = vadd.f32 %v4615, %v4636
    %v4646 = vadd.f32 %v4616, %v4638
    %vm4647 = vcmask 130048
    %v4648 = vsel %vm4647, %v4501, 0.0
    %v4649 = vsel %vm4647, %v4502, 0.0
    %v4650 = vadd.f32 %v4648, %v4649
    %v4651 = vsel %vm4647, %v4503, 0.0
    %v4652 = vadd.f32 %v4650, %v4651
    %v4653 = vsel %vm4647, %v4504, 0.0
    %v4654 = vadd.f32 %v4652, %v4653
    %4655 = vadd.xlane.f32.xlu0 %v4654
    %v4656 = vpop.xlane.xlu0 %4655
    %v4657 = vrot.slane %v4656, 4
    %v4658 = vadd.f32 %v4656, %v4657
    %v4659 = vrot.slane %v4658, 2
    %v4660 = vadd.f32 %v4658, %v4659
    %v4661 = vrot.slane %v4660, 1
    %v4662 = vadd.f32 %v4660, %v4661
    %s4663 = vtos %v4662
    %v4664 = vrcp.pop 512.0
    %s4665 = vtos %v4664
    %s4666 = smul.f32 %s4663, %s4665
    %v4667 = vstv %s4666
    %v4668 = vsub.f32 %v4501, %v4667
    %v4669 = vsub.f32 %v4502, %v4667
    %v4670 = vsub.f32 %v4503, %v4667
    %v4671 = vsub.f32 %v4504, %v4667
    %v4672 = vmul.f32 %v4668, %v4668
    %v4673 = vmul.f32 %v4669, %v4669
    %v4674 = vmul.f32 %v4670, %v4670
    %v4675 = vmul.f32 %v4671, %v4671
    %v4676 = vsel %vm4647, %v4672, 0.0
    %v4677 = vsel %vm4647, %v4673, 0.0
    %v4678 = vadd.f32 %v4676, %v4677
    %v4679 = vsel %vm4647, %v4674, 0.0
    %v4680 = vadd.f32 %v4678, %v4679
    %v4681 = vsel %vm4647, %v4675, 0.0
    %v4682 = vadd.f32 %v4680, %v4681
    %4683 = vadd.xlane.f32.xlu0 %v4682
    %v4684 = vpop.xlane.xlu0 %4683
    %v4685 = vrot.slane %v4684, 4
    %v4686 = vadd.f32 %v4684, %v4685
    %v4687 = vrot.slane %v4686, 2
    %v4688 = vadd.f32 %v4686, %v4687
    %v4689 = vrot.slane %v4688, 1
    %v4690 = vadd.f32 %v4688, %v4689
    %s4691 = vtos %v4690
    %v4692 = vrcp.pop 512.0
    %s4693 = vtos %v4692
    %s4694 = smul.f32 %s4691, %s4693
    %s4695 = sadd.f32 %s4694, 1e-05
    %v4696 = vstv %s4695
    %v4697 = vrsqrt.pop %v4696
    %s4698 = vtos %v4697
    %s4699 = smul.f32 %s1609, %s4698
    %v4700 = vstv %s4699
    %v4701 = vmul.f32 %v4668, %v4700
    %v4702 = vmul.f32 %v4669, %v4700
    %v4703 = vmul.f32 %v4670, %v4700
    %v4704 = vmul.f32 %v4671, %v4700
    %v4705 = vadd.f32 %v4701, %v1696
    %v4706 = vadd.f32 %v4702, %v1696
    %v4707 = vadd.f32 %v4703, %v1696
    %v4708 = vadd.f32 %v4704, %v1696
    %v4709 = vmax.f32 %v4705, 0.0
    %v4710 = vmax.f32 %v4706, 0.0
    %v4711 = vmax.f32 %v4707, 0.0
    %v4712 = vmax.f32 %v4708, 0.0
    %v4719 = vrot.slane %v4577, 1
    %v4720 = vrot.slane %v4578, 1
    %v4721 = vsel %vm196, %v4719, %v4720
    %v4722 = vrot.slane %v4579, 1
    %v4723 = vsel %vm196, %v4720, %v4722
    %v4724 = vrot.slane %v4580, 1
    %v4725 = vrot.slane %v4581, 1
    %v4726 = vsel %vm196, %v4724, %v4725
    %v4727 = vrot.slane %v4582, 1
    %v4728 = vsel %vm196, %v4725, %v4727
    %v4733 = vsel %vm4647, %v4721, 0.0
    %v4734 = vsel %vm4647, %v4723, 0.0
    %v4735 = vadd.f32 %v4733, %v4734
    %v4736 = vsel %vm4647, %v4726, 0.0
    %v4737 = vadd.f32 %v4735, %v4736
    %v4738 = vsel %vm4647, %v4728, 0.0
    %v4739 = vadd.f32 %v4737, %v4738
    %4740 = vadd.xlane.f32.xlu0 %v4739
    %v4741 = vpop.xlane.xlu0 %4740
    %v4742 = vrot.slane %v4741, 4
    %v4743 = vadd.f32 %v4741, %v4742
    %v4744 = vrot.slane %v4743, 2
    %v4745 = vadd.f32 %v4743, %v4744
    %v4746 = vrot.slane %v4745, 1
    %v4747 = vadd.f32 %v4745, %v4746
    %s4748 = vtos %v4747
    %v4749 = vrcp.pop 512.0
    %s4750 = vtos %v4749
    %s4751 = smul.f32 %s4748, %s4750
    %v4752 = vstv %s4751
    %v4753 = vsub.f32 %v4577, %v4752
    %v4754 = vsub.f32 %v4578, %v4752
    %v4755 = vsub.f32 %v4579, %v4752
    %v4756 = vsub.f32 %v4580, %v4752
    %v4757 = vsub.f32 %v4581, %v4752
    %v4758 = vsub.f32 %v4582, %v4752
    %v4759 = vmul.f32 %v4753, %v4753
    %v4760 = vmul.f32 %v4754, %v4754
    %v4761 = vmul.f32 %v4755, %v4755
    %v4762 = vmul.f32 %v4756, %v4756
    %v4763 = vmul.f32 %v4757, %v4757
    %v4764 = vmul.f32 %v4758, %v4758
    %v4771 = vrot.slane %v4759, 1
    %v4772 = vrot.slane %v4760, 1
    %v4773 = vsel %vm196, %v4771, %v4772
    %v4774 = vrot.slane %v4761, 1
    %v4775 = vsel %vm196, %v4772, %v4774
    %v4776 = vrot.slane %v4762, 1
    %v4777 = vrot.slane %v4763, 1
    %v4778 = vsel %vm196, %v4776, %v4777
    %v4779 = vrot.slane %v4764, 1
    %v4780 = vsel %vm196, %v4777, %v4779
    %v4785 = vsel %vm4647, %v4773, 0.0
    %v4786 = vsel %vm4647, %v4775, 0.0
    %v4787 = vadd.f32 %v4785, %v4786
    %v4788 = vsel %vm4647, %v4778, 0.0
    %v4789 = vadd.f32 %v4787, %v4788
    %v4790 = vsel %vm4647, %v4780, 0.0
    %v4791 = vadd.f32 %v4789, %v4790
    %4792 = vadd.xlane.f32.xlu0 %v4791
    %v4793 = vpop.xlane.xlu0 %4792
    %v4794 = vrot.slane %v4793, 4
    %v4795 = vadd.f32 %v4793, %v4794
    %v4796 = vrot.slane %v4795, 2
    %v4797 = vadd.f32 %v4795, %v4796
    %v4798 = vrot.slane %v4797, 1
    %v4799 = vadd.f32 %v4797, %v4798
    %s4800 = vtos %v4799
    %v4801 = vrcp.pop 512.0
    %s4802 = vtos %v4801
    %s4803 = smul.f32 %s4800, %s4802
    %s4804 = sadd.f32 %s4803, 1e-05
    %v4805 = vstv %s4804
    %v4806 = vrsqrt.pop %v4805
    %s4807 = vtos %v4806
    %s4808 = smul.f32 %s1715, %s4807
    %v4809 = vstv %s4808
    %v4810 = vmul.f32 %v4753, %v4809
    %v4811 = vmul.f32 %v4754, %v4809
    %v4812 = vmul.f32 %v4755, %v4809
    %v4813 = vmul.f32 %v4756, %v4809
    %v4814 = vmul.f32 %v4757, %v4809
    %v4815 = vmul.f32 %v4758, %v4809
    %v4816 = vadd.f32 %v4810, %v1855
    %v4817 = vadd.f32 %v4811, %v1855
    %v4818 = vadd.f32 %v4812, %v1855
    %v4819 = vadd.f32 %v4813, %v1855
    %v4820 = vadd.f32 %v4814, %v1855
    %v4821 = vadd.f32 %v4815, %v1855
    %v4822 = vmax.f32 %v4816, 0.0
    %v4823 = vmax.f32 %v4817, 0.0
    %v4824 = vmax.f32 %v4818, 0.0
    %v4825 = vmax.f32 %v4819, 0.0
    %v4826 = vmax.f32 %v4820, 0.0
    %v4827 = vmax.f32 %v4821, 0.0
    %v4834 = vrot.slane %v4822, 1
    %v4835 = vrot.slane %v4823, 1
    %v4836 = vsel %vm196, %v4834, %v4835
    %v4837 = vrot.slane %v4824, 1
    %v4838 = vsel %vm196, %v4835, %v4837
    %v4839 = vrot.slane %v4825, 1
    %v4840 = vrot.slane %v4826, 1
    %v4841 = vsel %vm196, %v4839, %v4840
    %v4842 = vrot.slane %v4827, 1
    %v4843 = vsel %vm196, %v4840, %v4842
    %v4848 = vadd.f32 %v4709, %v4836
    %v4849 = vadd.f32 %v4710, %v4838
    %v4850 = vadd.f32 %v4711, %v4841
    %v4851 = vadd.f32 %v4712, %v4843
    %4856 = vrot.lane.b32.xlu0 %v4643, 127
    %v4857 = vpop.permute.xlu0 %4856
    %4858 = vrot.lane.b32.xlu0 %v4644, 127
    %v4859 = vpop.permute.xlu0 %4858
    %4860 = vrot.lane.b32.xlu0 %v4645, 127
    %v4861 = vpop.permute.xlu0 %4860
    %4862 = vrot.lane.b32.xlu0 %v4646, 127
    %v4863 = vpop.permute.xlu0 %4862
    %v4868 = vsel %vm4647, %v4857, 0.0
    %v4869 = vsel %vm4647, %v4859, 0.0
    %v4870 = vadd.f32 %v4868, %v4869
    %v4871 = vsel %vm4647, %v4861, 0.0
    %v4872 = vadd.f32 %v4870, %v4871
    %v4873 = vsel %vm4647, %v4863, 0.0
    %v4874 = vadd.f32 %v4872, %v4873
    %4875 = vadd.xlane.f32.xlu0 %v4874
    %v4876 = vpop.xlane.xlu0 %4875
    %v4877 = vrot.slane %v4876, 4
    %v4878 = vadd.f32 %v4876, %v4877
    %v4879 = vrot.slane %v4878, 2
    %v4880 = vadd.f32 %v4878, %v4879
    %v4881 = vrot.slane %v4880, 1
    %v4882 = vadd.f32 %v4880, %v4881
    %s4883 = vtos %v4882
    %v4884 = vrcp.pop 512.0
    %s4885 = vtos %v4884
    %s4886 = smul.f32 %s4883, %s4885
    %v4887 = vstv %s4886
    %v4888 = vsub.f32 %v4643, %v4887
    %v4889 = vsub.f32 %v4644, %v4887
    %v4890 = vsub.f32 %v4645, %v4887
    %v4891 = vsub.f32 %v4646, %v4887
    %v4892 = vmul.f32 %v4888, %v4888
    %v4893 = vmul.f32 %v4889, %v4889
    %v4894 = vmul.f32 %v4890, %v4890
    %v4895 = vmul.f32 %v4891, %v4891
    %4900 = vrot.lane.b32.xlu0 %v4892, 127
    %v4901 = vpop.permute.xlu0 %4900
    %4902 = vrot.lane.b32.xlu0 %v4893, 127
    %v4903 = vpop.permute.xlu0 %4902
    %4904 = vrot.lane.b32.xlu0 %v4894, 127
    %v4905 = vpop.permute.xlu0 %4904
    %4906 = vrot.lane.b32.xlu0 %v4895, 127
    %v4907 = vpop.permute.xlu0 %4906
    %v4912 = vsel %vm4647, %v4901, 0.0
    %v4913 = vsel %vm4647, %v4903, 0.0
    %v4914 = vadd.f32 %v4912, %v4913
    %v4915 = vsel %vm4647, %v4905, 0.0
    %v4916 = vadd.f32 %v4914, %v4915
    %v4917 = vsel %vm4647, %v4907, 0.0
    %v4918 = vadd.f32 %v4916, %v4917
    %4919 = vadd.xlane.f32.xlu0 %v4918
    %v4920 = vpop.xlane.xlu0 %4919
    %v4921 = vrot.slane %v4920, 4
    %v4922 = vadd.f32 %v4920, %v4921
    %v4923 = vrot.slane %v4922, 2
    %v4924 = vadd.f32 %v4922, %v4923
    %v4925 = vrot.slane %v4924, 1
    %v4926 = vadd.f32 %v4924, %v4925
    %s4927 = vtos %v4926
    %v4928 = vrcp.pop 512.0
    %s4929 = vtos %v4928
    %s4930 = smul.f32 %s4927, %s4929
    %s4931 = sadd.f32 %s4930, 1e-05
    %v4932 = vstv %s4931
    %v4933 = vrsqrt.pop %v4932
    %s4934 = vtos %v4933
    %s4935 = smul.f32 %s1902, %s4934
    %v4936 = vstv %s4935
    %v4937 = vmul.f32 %v4888, %v4936
    %v4938 = vmul.f32 %v4889, %v4936
    %v4939 = vmul.f32 %v4890, %v4936
    %v4940 = vmul.f32 %v4891, %v4936
    %v4941 = vadd.f32 %v4937, %v2044
    %v4942 = vadd.f32 %v4938, %v2044
    %v4943 = vadd.f32 %v4939, %v2044
    %v4944 = vadd.f32 %v4940, %v2044
    %v4945 = vmax.f32 %v4941, 0.0
    %v4946 = vmax.f32 %v4942, 0.0
    %v4947 = vmax.f32 %v4943, 0.0
    %v4948 = vmax.f32 %v4944, 0.0
    %4953 = vrot.lane.b32.xlu0 %v4945, 127
    %v4954 = vpop.permute.xlu0 %4953
    %4955 = vrot.lane.b32.xlu0 %v4946, 127
    %v4956 = vpop.permute.xlu0 %4955
    %4957 = vrot.lane.b32.xlu0 %v4947, 127
    %v4958 = vpop.permute.xlu0 %4957
    %4959 = vrot.lane.b32.xlu0 %v4948, 127
    %v4960 = vpop.permute.xlu0 %4959
    %v4965 = vadd.f32 %v4848, %v4954
    %v4966 = vadd.f32 %v4849, %v4956
    %v4967 = vadd.f32 %v4850, %v4958
    %v4968 = vadd.f32 %v4851, %v4960
    %v4969 = vmul.f32 %v3061, %v2094
    %v4970 = vmul.f32 %v3062, %v2094
    %v4971 = vmul.f32 %v3064, %v2094
    %v4972 = vmul.f32 %v3065, %v2094
    %v4973 = vmul.f32 %v3061, %v2102
    %v4974 = vmul.f32 %v3062, %v2102
    %v4975 = vmul.f32 %v3064, %v2102
    %v4976 = vmul.f32 %v3065, %v2102
    %4981 = vrot.lane.b32.xlu0 %v4973, 127
    %v4982 = vpop.permute.xlu0 %4981
    %4983 = vrot.lane.b32.xlu0 %v4974, 127
    %v4984 = vpop.permute.xlu0 %4983
    %4985 = vrot.lane.b32.xlu0 %v4975, 127
    %v4986 = vpop.permute.xlu0 %4985
    %4987 = vrot.lane.b32.xlu0 %v4976, 127
    %v4988 = vpop.permute.xlu0 %4987
    %v4993 = vadd.f32 %v4969, %v4982
    %v4994 = vadd.f32 %v4970, %v4984
    %v4995 = vadd.f32 %v4971, %v4986
    %v4996 = vadd.f32 %v4972, %v4988
    %v4997 = vmul.f32 %v3061, %v2140
    %v4998 = vmul.f32 %v3062, %v2140
    %v4999 = vmul.f32 %v3064, %v2140
    %v5000 = vmul.f32 %v3065, %v2140
    %5005 = vrot.lane.b32.xlu0 %v4997, 126
    %v5006 = vpop.permute.xlu0 %5005
    %5007 = vrot.lane.b32.xlu0 %v4998, 126
    %v5008 = vpop.permute.xlu0 %5007
    %5009 = vrot.lane.b32.xlu0 %v4999, 126
    %v5010 = vpop.permute.xlu0 %5009
    %5011 = vrot.lane.b32.xlu0 %v5000, 126
    %v5012 = vpop.permute.xlu0 %5011
    %v5017 = vadd.f32 %v4993, %v5006
    %v5018 = vadd.f32 %v4994, %v5008
    %v5019 = vadd.f32 %v4995, %v5010
    %v5020 = vadd.f32 %v4996, %v5012
    %v5021 = vmul.f32 %v3061, %v2178
    %v5022 = vmul.f32 %v3062, %v2178
    %v5023 = vmul.f32 %v3063, %v2178
    %v5024 = vmul.f32 %v3064, %v2178
    %v5025 = vmul.f32 %v3065, %v2178
    %v5026 = vmul.f32 %v3066, %v2178
    %v5033 = vrot.slane %v5021, 1
    %v5034 = vrot.slane %v5022, 1
    %v5035 = vsel %vm196, %v5033, %v5034
    %v5036 = vrot.slane %v5023, 1
    %v5037 = vsel %vm196, %v5034, %v5036
    %v5038 = vrot.slane %v5024, 1
    %v5039 = vrot.slane %v5025, 1
    %v5040 = vsel %vm196, %v5038, %v5039
    %v5041 = vrot.slane %v5026, 1
    %v5042 = vsel %vm196, %v5039, %v5041
    %v5047 = vadd.f32 %v5017, %v5035
    %v5048 = vadd.f32 %v5018, %v5037
    %v5049 = vadd.f32 %v5019, %v5040
    %v5050 = vadd.f32 %v5020, %v5042
    %v5051 = vmul.f32 %v3061, %v2214
    %v5052 = vmul.f32 %v3062, %v2214
    %v5053 = vmul.f32 %v3063, %v2214
    %v5054 = vmul.f32 %v3064, %v2214
    %v5055 = vmul.f32 %v3065, %v2214
    %v5056 = vmul.f32 %v3066, %v2214
    %v5063 = vrot.slane %v5051, 1
    %v5064 = vrot.slane %v5052, 1
    %v5065 = vsel %vm196, %v5063, %v5064
    %v5066 = vrot.slane %v5053, 1
    %v5067 = vsel %vm196, %v5064, %v5066
    %v5068 = vrot.slane %v5054, 1
    %v5069 = vrot.slane %v5055, 1
    %v5070 = vsel %vm196, %v5068, %v5069
    %v5071 = vrot.slane %v5056, 1
    %v5072 = vsel %vm196, %v5069, %v5071
    %5073 = vrot.lane.b32.xlu0 %v5065, 127
    %v5074 = vpop.permute.xlu0 %5073
    %5075 = vrot.lane.b32.xlu0 %v5067, 127
    %v5076 = vpop.permute.xlu0 %5075
    %5077 = vrot.lane.b32.xlu0 %v5070, 127
    %v5078 = vpop.permute.xlu0 %5077
    %5079 = vrot.lane.b32.xlu0 %v5072, 127
    %v5080 = vpop.permute.xlu0 %5079
    %v5085 = vadd.f32 %v5047, %v5074
    %v5086 = vadd.f32 %v5048, %v5076
    %v5087 = vadd.f32 %v5049, %v5078
    %v5088 = vadd.f32 %v5050, %v5080
    %v5089 = vmul.f32 %v3061, %v2262
    %v5090 = vmul.f32 %v3062, %v2262
    %v5091 = vmul.f32 %v3063, %v2262
    %v5092 = vmul.f32 %v3064, %v2262
    %v5093 = vmul.f32 %v3065, %v2262
    %v5094 = vmul.f32 %v3066, %v2262
    %v5101 = vrot.slane %v5089, 1
    %v5102 = vrot.slane %v5090, 1
    %v5103 = vsel %vm196, %v5101, %v5102
    %v5104 = vrot.slane %v5091, 1
    %v5105 = vsel %vm196, %v5102, %v5104
    %v5106 = vrot.slane %v5092, 1
    %v5107 = vrot.slane %v5093, 1
    %v5108 = vsel %vm196, %v5106, %v5107
    %v5109 = vrot.slane %v5094, 1
    %v5110 = vsel %vm196, %v5107, %v5109
    %5111 = vrot.lane.b32.xlu0 %v5103, 126
    %v5112 = vpop.permute.xlu0 %5111
    %5113 = vrot.lane.b32.xlu0 %v5105, 126
    %v5114 = vpop.permute.xlu0 %5113
    %5115 = vrot.lane.b32.xlu0 %v5108, 126
    %v5116 = vpop.permute.xlu0 %5115
    %5117 = vrot.lane.b32.xlu0 %v5110, 126
    %v5118 = vpop.permute.xlu0 %5117
    %v5123 = vadd.f32 %v5085, %v5112
    %v5124 = vadd.f32 %v5086, %v5114
    %v5125 = vadd.f32 %v5087, %v5116
    %v5126 = vadd.f32 %v5088, %v5118
    %v5127 = vmul.f32 %v3061, %v2310
    %v5128 = vmul.f32 %v3062, %v2310
    %v5129 = vmul.f32 %v3063, %v2310
    %v5130 = vmul.f32 %v3064, %v2310
    %v5131 = vmul.f32 %v3065, %v2310
    %v5132 = vmul.f32 %v3066, %v2310
    %v5139 = vrot.slane %v5127, 2
    %v5140 = vrot.slane %v5128, 2
    %v5141 = vsel %vm329, %v5139, %v5140
    %v5142 = vrot.slane %v5129, 2
    %v5143 = vsel %vm329, %v5140, %v5142
    %v5144 = vrot.slane %v5130, 2
    %v5145 = vrot.slane %v5131, 2
    %v5146 = vsel %vm329, %v5144, %v5145
    %v5147 = vrot.slane %v5132, 2
    %v5148 = vsel %vm329, %v5145, %v5147
    %v5153 = vadd.f32 %v5123, %v5141
    %v5154 = vadd.f32 %v5124, %v5143
    %v5155 = vadd.f32 %v5125, %v5146
    %v5156 = vadd.f32 %v5126, %v5148
    %v5157 = vmul.f32 %v3061, %v2346
    %v5158 = vmul.f32 %v3062, %v2346
    %v5159 = vmul.f32 %v3063, %v2346
    %v5160 = vmul.f32 %v3064, %v2346
    %v5161 = vmul.f32 %v3065, %v2346
    %v5162 = vmul.f32 %v3066, %v2346
    %v5169 = vrot.slane %v5157, 2
    %v5170 = vrot.slane %v5158, 2
    %v5171 = vsel %vm329, %v5169, %v5170
    %v5172 = vrot.slane %v5159, 2
    %v5173 = vsel %vm329, %v5170, %v5172
    %v5174 = vrot.slane %v5160, 2
    %v5175 = vrot.slane %v5161, 2
    %v5176 = vsel %vm329, %v5174, %v5175
    %v5177 = vrot.slane %v5162, 2
    %v5178 = vsel %vm329, %v5175, %v5177
    %5179 = vrot.lane.b32.xlu0 %v5171, 127
    %v5180 = vpop.permute.xlu0 %5179
    %5181 = vrot.lane.b32.xlu0 %v5173, 127
    %v5182 = vpop.permute.xlu0 %5181
    %5183 = vrot.lane.b32.xlu0 %v5176, 127
    %v5184 = vpop.permute.xlu0 %5183
    %5185 = vrot.lane.b32.xlu0 %v5178, 127
    %v5186 = vpop.permute.xlu0 %5185
    %v5191 = vadd.f32 %v5153, %v5180
    %v5192 = vadd.f32 %v5154, %v5182
    %v5193 = vadd.f32 %v5155, %v5184
    %v5194 = vadd.f32 %v5156, %v5186
    %v5195 = vmul.f32 %v3061, %v2394
    %v5196 = vmul.f32 %v3062, %v2394
    %v5197 = vmul.f32 %v3063, %v2394
    %v5198 = vmul.f32 %v3064, %v2394
    %v5199 = vmul.f32 %v3065, %v2394
    %v5200 = vmul.f32 %v3066, %v2394
    %v5207 = vrot.slane %v5195, 2
    %v5208 = vrot.slane %v5196, 2
    %v5209 = vsel %vm329, %v5207, %v5208
    %v5210 = vrot.slane %v5197, 2
    %v5211 = vsel %vm329, %v5208, %v5210
    %v5212 = vrot.slane %v5198, 2
    %v5213 = vrot.slane %v5199, 2
    %v5214 = vsel %vm329, %v5212, %v5213
    %v5215 = vrot.slane %v5200, 2
    %v5216 = vsel %vm329, %v5213, %v5215
    %5217 = vrot.lane.b32.xlu0 %v5209, 126
    %v5218 = vpop.permute.xlu0 %5217
    %5219 = vrot.lane.b32.xlu0 %v5211, 126
    %v5220 = vpop.permute.xlu0 %5219
    %5221 = vrot.lane.b32.xlu0 %v5214, 126
    %v5222 = vpop.permute.xlu0 %5221
    %5223 = vrot.lane.b32.xlu0 %v5216, 126
    %v5224 = vpop.permute.xlu0 %5223
    %v5229 = vadd.f32 %v5191, %v5218
    %v5230 = vadd.f32 %v5192, %v5220
    %v5231 = vadd.f32 %v5193, %v5222
    %v5232 = vadd.f32 %v5194, %v5224
    %v5233 = vmul.f32 %v3061, %v2442
    %v5234 = vmul.f32 %v3062, %v2442
    %v5235 = vmul.f32 %v3063, %v2442
    %v5236 = vmul.f32 %v3064, %v2442
    %v5237 = vmul.f32 %v3065, %v2442
    %v5238 = vmul.f32 %v3066, %v2442
    %v5239 = vmul.f32 %v3061, %v2450
    %v5240 = vmul.f32 %v3062, %v2450
    %v5241 = vmul.f32 %v3063, %v2450
    %v5242 = vmul.f32 %v3064, %v2450
    %v5243 = vmul.f32 %v3065, %v2450
    %v5244 = vmul.f32 %v3066, %v2450
    %5251 = vrot.lane.b32.xlu0 %v5239, 127
    %v5252 = vpop.permute.xlu0 %5251
    %5253 = vrot.lane.b32.xlu0 %v5240, 127
    %v5254 = vpop.permute.xlu0 %5253
    %5255 = vrot.lane.b32.xlu0 %v5241, 127
    %v5256 = vpop.permute.xlu0 %5255
    %5257 = vrot.lane.b32.xlu0 %v5242, 127
    %v5258 = vpop.permute.xlu0 %5257
    %5259 = vrot.lane.b32.xlu0 %v5243, 127
    %v5260 = vpop.permute.xlu0 %5259
    %5261 = vrot.lane.b32.xlu0 %v5244, 127
    %v5262 = vpop.permute.xlu0 %5261
    %v5269 = vadd.f32 %v5233, %v5252
    %v5270 = vadd.f32 %v5234, %v5254
    %v5271 = vadd.f32 %v5235, %v5256
    %v5272 = vadd.f32 %v5236, %v5258
    %v5273 = vadd.f32 %v5237, %v5260
    %v5274 = vadd.f32 %v5238, %v5262
    %v5275 = vmul.f32 %v3061, %v2488
    %v5276 = vmul.f32 %v3062, %v2488
    %v5277 = vmul.f32 %v3063, %v2488
    %v5278 = vmul.f32 %v3064, %v2488
    %v5279 = vmul.f32 %v3065, %v2488
    %v5280 = vmul.f32 %v3066, %v2488
    %5287 = vrot.lane.b32.xlu0 %v5275, 126
    %v5288 = vpop.permute.xlu0 %5287
    %5289 = vrot.lane.b32.xlu0 %v5276, 126
    %v5290 = vpop.permute.xlu0 %5289
    %5291 = vrot.lane.b32.xlu0 %v5277, 126
    %v5292 = vpop.permute.xlu0 %5291
    %5293 = vrot.lane.b32.xlu0 %v5278, 126
    %v5294 = vpop.permute.xlu0 %5293
    %5295 = vrot.lane.b32.xlu0 %v5279, 126
    %v5296 = vpop.permute.xlu0 %5295
    %5297 = vrot.lane.b32.xlu0 %v5280, 126
    %v5298 = vpop.permute.xlu0 %5297
    %v5305 = vadd.f32 %v5269, %v5288
    %v5306 = vadd.f32 %v5270, %v5290
    %v5307 = vadd.f32 %v5271, %v5292
    %v5308 = vadd.f32 %v5272, %v5294
    %v5309 = vadd.f32 %v5273, %v5296
    %v5310 = vadd.f32 %v5274, %v5298
    %v5311 = vmul.f32 %v3061, %v2526
    %v5312 = vmul.f32 %v3062, %v2526
    %v5313 = vmul.f32 %v3064, %v2526
    %v5314 = vmul.f32 %v3065, %v2526
    %v5315 = vmul.f32 %v3061, %v2534
    %v5316 = vmul.f32 %v3062, %v2534
    %v5317 = vmul.f32 %v3063, %v2534
    %v5318 = vmul.f32 %v3064, %v2534
    %v5319 = vmul.f32 %v3065, %v2534
    %v5320 = vmul.f32 %v3066, %v2534
    %v5327 = vrot.slane %v5315, 1
    %v5328 = vrot.slane %v5316, 1
    %v5329 = vsel %vm196, %v5327, %v5328
    %v5330 = vrot.slane %v5317, 1
    %v5331 = vsel %vm196, %v5328, %v5330
    %v5332 = vrot.slane %v5318, 1
    %v5333 = vrot.slane %v5319, 1
    %v5334 = vsel %vm196, %v5332, %v5333
    %v5335 = vrot.slane %v5320, 1
    %v5336 = vsel %vm196, %v5333, %v5335
    %v5341 = vadd.f32 %v5311, %v5329
    %v5342 = vadd.f32 %v5312, %v5331
    %v5343 = vadd.f32 %v5313, %v5334
    %v5344 = vadd.f32 %v5314, %v5336
    %v5345 = vmul.f32 %v3061, %v2570
    %v5346 = vmul.f32 %v3062, %v2570
    %v5347 = vmul.f32 %v3063, %v2570
    %v5348 = vmul.f32 %v3064, %v2570
    %v5349 = vmul.f32 %v3065, %v2570
    %v5350 = vmul.f32 %v3066, %v2570
    %v5357 = vrot.slane %v5345, 2
    %v5358 = vrot.slane %v5346, 2
    %v5359 = vsel %vm329, %v5357, %v5358
    %v5360 = vrot.slane %v5347, 2
    %v5361 = vsel %vm329, %v5358, %v5360
    %v5362 = vrot.slane %v5348, 2
    %v5363 = vrot.slane %v5349, 2
    %v5364 = vsel %vm329, %v5362, %v5363
    %v5365 = vrot.slane %v5350, 2
    %v5366 = vsel %vm329, %v5363, %v5365
    %v5371 = vadd.f32 %v5341, %v5359
    %v5372 = vadd.f32 %v5342, %v5361
    %v5373 = vadd.f32 %v5343, %v5364
    %v5374 = vadd.f32 %v5344, %v5366
    %v5375 = vsel %vm4647, %v5229, 0.0
    %v5376 = vsel %vm4647, %v5230, 0.0
    %v5377 = vadd.f32 %v5375, %v5376
    %v5378 = vsel %vm4647, %v5231, 0.0
    %v5379 = vadd.f32 %v5377, %v5378
    %v5380 = vsel %vm4647, %v5232, 0.0
    %v5381 = vadd.f32 %v5379, %v5380
    %5382 = vadd.xlane.f32.xlu0 %v5381
    %v5383 = vpop.xlane.xlu0 %5382
    %v5384 = vrot.slane %v5383, 4
    %v5385 = vadd.f32 %v5383, %v5384
    %v5386 = vrot.slane %v5385, 2
    %v5387 = vadd.f32 %v5385, %v5386
    %v5388 = vrot.slane %v5387, 1
    %v5389 = vadd.f32 %v5387, %v5388
    %s5390 = vtos %v5389
    %v5391 = vrcp.pop 512.0
    %s5392 = vtos %v5391
    %s5393 = smul.f32 %s5390, %s5392
    %v5394 = vstv %s5393
    %v5395 = vsub.f32 %v5229, %v5394
    %v5396 = vsub.f32 %v5230, %v5394
    %v5397 = vsub.f32 %v5231, %v5394
    %v5398 = vsub.f32 %v5232, %v5394
    %v5399 = vmul.f32 %v5395, %v5395
    %v5400 = vmul.f32 %v5396, %v5396
    %v5401 = vmul.f32 %v5397, %v5397
    %v5402 = vmul.f32 %v5398, %v5398
    %v5403 = vsel %vm4647, %v5399, 0.0
    %v5404 = vsel %vm4647, %v5400, 0.0
    %v5405 = vadd.f32 %v5403, %v5404
    %v5406 = vsel %vm4647, %v5401, 0.0
    %v5407 = vadd.f32 %v5405, %v5406
    %v5408 = vsel %vm4647, %v5402, 0.0
    %v5409 = vadd.f32 %v5407, %v5408
    %5410 = vadd.xlane.f32.xlu0 %v5409
    %v5411 = vpop.xlane.xlu0 %5410
    %v5412 = vrot.slane %v5411, 4
    %v5413 = vadd.f32 %v5411, %v5412
    %v5414 = vrot.slane %v5413, 2
    %v5415 = vadd.f32 %v5413, %v5414
    %v5416 = vrot.slane %v5415, 1
    %v5417 = vadd.f32 %v5415, %v5416
    %s5418 = vtos %v5417
    %v5419 = vrcp.pop 512.0
    %s5420 = vtos %v5419
    %s5421 = smul.f32 %s5418, %s5420
    %s5422 = sadd.f32 %s5421, 1e-05
    %v5423 = vstv %s5422
    %v5424 = vrsqrt.pop %v5423
    %s5425 = vtos %v5424
    %s5426 = smul.f32 %s2605, %s5425
    %v5427 = vstv %s5426
    %v5428 = vmul.f32 %v5395, %v5427
    %v5429 = vmul.f32 %v5396, %v5427
    %v5430 = vmul.f32 %v5397, %v5427
    %v5431 = vmul.f32 %v5398, %v5427
    %v5432 = vadd.f32 %v5428, %v2690
    %v5433 = vadd.f32 %v5429, %v2690
    %v5434 = vadd.f32 %v5430, %v2690
    %v5435 = vadd.f32 %v5431, %v2690
    %v5436 = vmax.f32 %v5432, 0.0
    %v5437 = vmax.f32 %v5433, 0.0
    %v5438 = vmax.f32 %v5434, 0.0
    %v5439 = vmax.f32 %v5435, 0.0
    %v5446 = vrot.slane %v5305, 1
    %v5447 = vrot.slane %v5306, 1
    %v5448 = vsel %vm196, %v5446, %v5447
    %v5449 = vrot.slane %v5307, 1
    %v5450 = vsel %vm196, %v5447, %v5449
    %v5451 = vrot.slane %v5308, 1
    %v5452 = vrot.slane %v5309, 1
    %v5453 = vsel %vm196, %v5451, %v5452
    %v5454 = vrot.slane %v5310, 1
    %v5455 = vsel %vm196, %v5452, %v5454
    %v5460 = vsel %vm4647, %v5448, 0.0
    %v5461 = vsel %vm4647, %v5450, 0.0
    %v5462 = vadd.f32 %v5460, %v5461
    %v5463 = vsel %vm4647, %v5453, 0.0
    %v5464 = vadd.f32 %v5462, %v5463
    %v5465 = vsel %vm4647, %v5455, 0.0
    %v5466 = vadd.f32 %v5464, %v5465
    %5467 = vadd.xlane.f32.xlu0 %v5466
    %v5468 = vpop.xlane.xlu0 %5467
    %v5469 = vrot.slane %v5468, 4
    %v5470 = vadd.f32 %v5468, %v5469
    %v5471 = vrot.slane %v5470, 2
    %v5472 = vadd.f32 %v5470, %v5471
    %v5473 = vrot.slane %v5472, 1
    %v5474 = vadd.f32 %v5472, %v5473
    %s5475 = vtos %v5474
    %v5476 = vrcp.pop 512.0
    %s5477 = vtos %v5476
    %s5478 = smul.f32 %s5475, %s5477
    %v5479 = vstv %s5478
    %v5480 = vsub.f32 %v5305, %v5479
    %v5481 = vsub.f32 %v5306, %v5479
    %v5482 = vsub.f32 %v5307, %v5479
    %v5483 = vsub.f32 %v5308, %v5479
    %v5484 = vsub.f32 %v5309, %v5479
    %v5485 = vsub.f32 %v5310, %v5479
    %v5486 = vmul.f32 %v5480, %v5480
    %v5487 = vmul.f32 %v5481, %v5481
    %v5488 = vmul.f32 %v5482, %v5482
    %v5489 = vmul.f32 %v5483, %v5483
    %v5490 = vmul.f32 %v5484, %v5484
    %v5491 = vmul.f32 %v5485, %v5485
    %v5498 = vrot.slane %v5486, 1
    %v5499 = vrot.slane %v5487, 1
    %v5500 = vsel %vm196, %v5498, %v5499
    %v5501 = vrot.slane %v5488, 1
    %v5502 = vsel %vm196, %v5499, %v5501
    %v5503 = vrot.slane %v5489, 1
    %v5504 = vrot.slane %v5490, 1
    %v5505 = vsel %vm196, %v5503, %v5504
    %v5506 = vrot.slane %v5491, 1
    %v5507 = vsel %vm196, %v5504, %v5506
    %v5512 = vsel %vm4647, %v5500, 0.0
    %v5513 = vsel %vm4647, %v5502, 0.0
    %v5514 = vadd.f32 %v5512, %v5513
    %v5515 = vsel %vm4647, %v5505, 0.0
    %v5516 = vadd.f32 %v5514, %v5515
    %v5517 = vsel %vm4647, %v5507, 0.0
    %v5518 = vadd.f32 %v5516, %v5517
    %5519 = vadd.xlane.f32.xlu0 %v5518
    %v5520 = vpop.xlane.xlu0 %5519
    %v5521 = vrot.slane %v5520, 4
    %v5522 = vadd.f32 %v5520, %v5521
    %v5523 = vrot.slane %v5522, 2
    %v5524 = vadd.f32 %v5522, %v5523
    %v5525 = vrot.slane %v5524, 1
    %v5526 = vadd.f32 %v5524, %v5525
    %s5527 = vtos %v5526
    %v5528 = vrcp.pop 512.0
    %s5529 = vtos %v5528
    %s5530 = smul.f32 %s5527, %s5529
    %s5531 = sadd.f32 %s5530, 1e-05
    %v5532 = vstv %s5531
    %v5533 = vrsqrt.pop %v5532
    %s5534 = vtos %v5533
    %s5535 = smul.f32 %s2709, %s5534
    %v5536 = vstv %s5535
    %v5537 = vmul.f32 %v5480, %v5536
    %v5538 = vmul.f32 %v5481, %v5536
    %v5539 = vmul.f32 %v5482, %v5536
    %v5540 = vmul.f32 %v5483, %v5536
    %v5541 = vmul.f32 %v5484, %v5536
    %v5542 = vmul.f32 %v5485, %v5536
    %v5543 = vadd.f32 %v5537, %v2838
    %v5544 = vadd.f32 %v5538, %v2838
    %v5545 = vadd.f32 %v5539, %v2838
    %v5546 = vadd.f32 %v5540, %v2838
    %v5547 = vadd.f32 %v5541, %v2838
    %v5548 = vadd.f32 %v5542, %v2838
    %v5549 = vmax.f32 %v5543, 0.0
    %v5550 = vmax.f32 %v5544, 0.0
    %v5551 = vmax.f32 %v5545, 0.0
    %v5552 = vmax.f32 %v5546, 0.0
    %v5553 = vmax.f32 %v5547, 0.0
    %v5554 = vmax.f32 %v5548, 0.0
    %v5561 = vrot.slane %v5549, 1
    %v5562 = vrot.slane %v5550, 1
    %v5563 = vsel %vm196, %v5561, %v5562
    %v5564 = vrot.slane %v5551, 1
    %v5565 = vsel %vm196, %v5562, %v5564
    %v5566 = vrot.slane %v5552, 1
    %v5567 = vrot.slane %v5553, 1
    %v5568 = vsel %vm196, %v5566, %v5567
    %v5569 = vrot.slane %v5554, 1
    %v5570 = vsel %vm196, %v5567, %v5569
    %v5575 = vadd.f32 %v5436, %v5563
    %v5576 = vadd.f32 %v5437, %v5565
    %v5577 = vadd.f32 %v5438, %v5568
    %v5578 = vadd.f32 %v5439, %v5570
    %5583 = vrot.lane.b32.xlu0 %v5371, 127
    %v5584 = vpop.permute.xlu0 %5583
    %5585 = vrot.lane.b32.xlu0 %v5372, 127
    %v5586 = vpop.permute.xlu0 %5585
    %5587 = vrot.lane.b32.xlu0 %v5373, 127
    %v5588 = vpop.permute.xlu0 %5587
    %5589 = vrot.lane.b32.xlu0 %v5374, 127
    %v5590 = vpop.permute.xlu0 %5589
    %v5595 = vsel %vm4647, %v5584, 0.0
    %v5596 = vsel %vm4647, %v5586, 0.0
    %v5597 = vadd.f32 %v5595, %v5596
    %v5598 = vsel %vm4647, %v5588, 0.0
    %v5599 = vadd.f32 %v5597, %v5598
    %v5600 = vsel %vm4647, %v5590, 0.0
    %v5601 = vadd.f32 %v5599, %v5600
    %5602 = vadd.xlane.f32.xlu0 %v5601
    %v5603 = vpop.xlane.xlu0 %5602
    %v5604 = vrot.slane %v5603, 4
    %v5605 = vadd.f32 %v5603, %v5604
    %v5606 = vrot.slane %v5605, 2
    %v5607 = vadd.f32 %v5605, %v5606
    %v5608 = vrot.slane %v5607, 1
    %v5609 = vadd.f32 %v5607, %v5608
    %s5610 = vtos %v5609
    %v5611 = vrcp.pop 512.0
    %s5612 = vtos %v5611
    %s5613 = smul.f32 %s5610, %s5612
    %v5614 = vstv %s5613
    %v5615 = vsub.f32 %v5371, %v5614
    %v5616 = vsub.f32 %v5372, %v5614
    %v5617 = vsub.f32 %v5373, %v5614
    %v5618 = vsub.f32 %v5374, %v5614
    %v5619 = vmul.f32 %v5615, %v5615
    %v5620 = vmul.f32 %v5616, %v5616
    %v5621 = vmul.f32 %v5617, %v5617
    %v5622 = vmul.f32 %v5618, %v5618
    %5627 = vrot.lane.b32.xlu0 %v5619, 127
    %v5628 = vpop.permute.xlu0 %5627
    %5629 = vrot.lane.b32.xlu0 %v5620, 127
    %v5630 = vpop.permute.xlu0 %5629
    %5631 = vrot.lane.b32.xlu0 %v5621, 127
    %v5632 = vpop.permute.xlu0 %5631
    %5633 = vrot.lane.b32.xlu0 %v5622, 127
    %v5634 = vpop.permute.xlu0 %5633
    %v5639 = vsel %vm4647, %v5628, 0.0
    %v5640 = vsel %vm4647, %v5630, 0.0
    %v5641 = vadd.f32 %v5639, %v5640
    %v5642 = vsel %vm4647, %v5632, 0.0
    %v5643 = vadd.f32 %v5641, %v5642
    %v5644 = vsel %vm4647, %v5634, 0.0
    %v5645 = vadd.f32 %v5643, %v5644
    %5646 = vadd.xlane.f32.xlu0 %v5645
    %v5647 = vpop.xlane.xlu0 %5646
    %v5648 = vrot.slane %v5647, 4
    %v5649 = vadd.f32 %v5647, %v5648
    %v5650 = vrot.slane %v5649, 2
    %v5651 = vadd.f32 %v5649, %v5650
    %v5652 = vrot.slane %v5651, 1
    %v5653 = vadd.f32 %v5651, %v5652
    %s5654 = vtos %v5653
    %v5655 = vrcp.pop 512.0
    %s5656 = vtos %v5655
    %s5657 = smul.f32 %s5654, %s5656
    %s5658 = sadd.f32 %s5657, 1e-05
    %v5659 = vstv %s5658
    %v5660 = vrsqrt.pop %v5659
    %s5661 = vtos %v5660
    %s5662 = smul.f32 %s2885, %s5661
    %v5663 = vstv %s5662
    %v5664 = vmul.f32 %v5615, %v5663
    %v5665 = vmul.f32 %v5616, %v5663
    %v5666 = vmul.f32 %v5617, %v5663
    %v5667 = vmul.f32 %v5618, %v5663
    %v5668 = vadd.f32 %v5664, %v3018
    %v5669 = vadd.f32 %v5665, %v3018
    %v5670 = vadd.f32 %v5666, %v3018
    %v5671 = vadd.f32 %v5667, %v3018
    %v5672 = vmax.f32 %v5668, 0.0
    %v5673 = vmax.f32 %v5669, 0.0
    %v5674 = vmax.f32 %v5670, 0.0
    %v5675 = vmax.f32 %v5671, 0.0
    %5680 = vrot.lane.b32.xlu0 %v5672, 127
    %v5681 = vpop.permute.xlu0 %5680
    %5682 = vrot.lane.b32.xlu0 %v5673, 127
    %v5683 = vpop.permute.xlu0 %5682
    %5684 = vrot.lane.b32.xlu0 %v5674, 127
    %v5685 = vpop.permute.xlu0 %5684
    %5686 = vrot.lane.b32.xlu0 %v5675, 127
    %v5687 = vpop.permute.xlu0 %5686
    %v5692 = vadd.f32 %v5575, %v5681
    %v5693 = vadd.f32 %v5576, %v5683
    %v5694 = vadd.f32 %v5577, %v5685
    %v5695 = vadd.f32 %v5578, %v5687
    %v5696 = vmul.f32 %v3061, %v3068
    %v5697 = vmul.f32 %v3062, %v3068
    %v5698 = vmul.f32 %v3064, %v3068
    %v5699 = vmul.f32 %v3065, %v3068
    %v5700 = vmul.f32 %v3061, %v3076
    %v5701 = vmul.f32 %v3062, %v3076
    %v5702 = vmul.f32 %v3064, %v3076
    %v5703 = vmul.f32 %v3065, %v3076
    %5708 = vrot.lane.b32.xlu0 %v5700, 127
    %v5709 = vpop.permute.xlu0 %5708
    %5710 = vrot.lane.b32.xlu0 %v5701, 127
    %v5711 = vpop.permute.xlu0 %5710
    %5712 = vrot.lane.b32.xlu0 %v5702, 127
    %v5713 = vpop.permute.xlu0 %5712
    %5714 = vrot.lane.b32.xlu0 %v5703, 127
    %v5715 = vpop.permute.xlu0 %5714
    %v5720 = vadd.f32 %v5696, %v5709
    %v5721 = vadd.f32 %v5697, %v5711
    %v5722 = vadd.f32 %v5698, %v5713
    %v5723 = vadd.f32 %v5699, %v5715
    %v5724 = vmul.f32 %v3061, %v3114
    %v5725 = vmul.f32 %v3062, %v3114
    %v5726 = vmul.f32 %v3064, %v3114
    %v5727 = vmul.f32 %v3065, %v3114
    %5732 = vrot.lane.b32.xlu0 %v5724, 126
    %v5733 = vpop.permute.xlu0 %5732
    %5734 = vrot.lane.b32.xlu0 %v5725, 126
    %v5735 = vpop.permute.xlu0 %5734
    %5736 = vrot.lane.b32.xlu0 %v5726, 126
    %v5737 = vpop.permute.xlu0 %5736
    %5738 = vrot.lane.b32.xlu0 %v5727, 126
    %v5739 = vpop.permute.xlu0 %5738
    %v5744 = vadd.f32 %v5720, %v5733
    %v5745 = vadd.f32 %v5721, %v5735
    %v5746 = vadd.f32 %v5722, %v5737
    %v5747 = vadd.f32 %v5723, %v5739
    %v5748 = vmul.f32 %v3061, %v3152
    %v5749 = vmul.f32 %v3062, %v3152
    %v5750 = vmul.f32 %v3063, %v3152
    %v5751 = vmul.f32 %v3064, %v3152
    %v5752 = vmul.f32 %v3065, %v3152
    %v5753 = vmul.f32 %v3066, %v3152
    %v5760 = vrot.slane %v5748, 1
    %v5761 = vrot.slane %v5749, 1
    %v5762 = vsel %vm196, %v5760, %v5761
    %v5763 = vrot.slane %v5750, 1
    %v5764 = vsel %vm196, %v5761, %v5763
    %v5765 = vrot.slane %v5751, 1
    %v5766 = vrot.slane %v5752, 1
    %v5767 = vsel %vm196, %v5765, %v5766
    %v5768 = vrot.slane %v5753, 1
    %v5769 = vsel %vm196, %v5766, %v5768
    %v5774 = vadd.f32 %v5744, %v5762
    %v5775 = vadd.f32 %v5745, %v5764
    %v5776 = vadd.f32 %v5746, %v5767
    %v5777 = vadd.f32 %v5747, %v5769
    %v5778 = vmul.f32 %v3061, %v3188
    %v5779 = vmul.f32 %v3062, %v3188
    %v5780 = vmul.f32 %v3063, %v3188
    %v5781 = vmul.f32 %v3064, %v3188
    %v5782 = vmul.f32 %v3065, %v3188
    %v5783 = vmul.f32 %v3066, %v3188
    %v5790 = vrot.slane %v5778, 1
    %v5791 = vrot.slane %v5779, 1
    %v5792 = vsel %vm196, %v5790, %v5791
    %v5793 = vrot.slane %v5780, 1
    %v5794 = vsel %vm196, %v5791, %v5793
    %v5795 = vrot.slane %v5781, 1
    %v5796 = vrot.slane %v5782, 1
    %v5797 = vsel %vm196, %v5795, %v5796
    %v5798 = vrot.slane %v5783, 1
    %v5799 = vsel %vm196, %v5796, %v5798
    %5800 = vrot.lane.b32.xlu0 %v5792, 127
    %v5801 = vpop.permute.xlu0 %5800
    %5802 = vrot.lane.b32.xlu0 %v5794, 127
    %v5803 = vpop.permute.xlu0 %5802
    %5804 = vrot.lane.b32.xlu0 %v5797, 127
    %v5805 = vpop.permute.xlu0 %5804
    %5806 = vrot.lane.b32.xlu0 %v5799, 127
    %v5807 = vpop.permute.xlu0 %5806
    %v5812 = vadd.f32 %v5774, %v5801
    %v5813 = vadd.f32 %v5775, %v5803
    %v5814 = vadd.f32 %v5776, %v5805
    %v5815 = vadd.f32 %v5777, %v5807
    %v5816 = vmul.f32 %v3061, %v3236
    %v5817 = vmul.f32 %v3062, %v3236
    %v5818 = vmul.f32 %v3063, %v3236
    %v5819 = vmul.f32 %v3064, %v3236
    %v5820 = vmul.f32 %v3065, %v3236
    %v5821 = vmul.f32 %v3066, %v3236
    %v5828 = vrot.slane %v5816, 1
    %v5829 = vrot.slane %v5817, 1
    %v5830 = vsel %vm196, %v5828, %v5829
    %v5831 = vrot.slane %v5818, 1
    %v5832 = vsel %vm196, %v5829, %v5831
    %v5833 = vrot.slane %v5819, 1
    %v5834 = vrot.slane %v5820, 1
    %v5835 = vsel %vm196, %v5833, %v5834
    %v5836 = vrot.slane %v5821, 1
    %v5837 = vsel %vm196, %v5834, %v5836
    %5838 = vrot.lane.b32.xlu0 %v5830, 126
    %v5839 = vpop.permute.xlu0 %5838
    %5840 = vrot.lane.b32.xlu0 %v5832, 126
    %v5841 = vpop.permute.xlu0 %5840
    %5842 = vrot.lane.b32.xlu0 %v5835, 126
    %v5843 = vpop.permute.xlu0 %5842
    %5844 = vrot.lane.b32.xlu0 %v5837, 126
    %v5845 = vpop.permute.xlu0 %5844
    %v5850 = vadd.f32 %v5812, %v5839
    %v5851 = vadd.f32 %v5813, %v5841
    %v5852 = vadd.f32 %v5814, %v5843
    %v5853 = vadd.f32 %v5815, %v5845
    %v5854 = vmul.f32 %v3061, %v3284
    %v5855 = vmul.f32 %v3062, %v3284
    %v5856 = vmul.f32 %v3063, %v3284
    %v5857 = vmul.f32 %v3064, %v3284
    %v5858 = vmul.f32 %v3065, %v3284
    %v5859 = vmul.f32 %v3066, %v3284
    %v5866 = vrot.slane %v5854, 2
    %v5867 = vrot.slane %v5855, 2
    %v5868 = vsel %vm329, %v5866, %v5867
    %v5869 = vrot.slane %v5856, 2
    %v5870 = vsel %vm329, %v5867, %v5869
    %v5871 = vrot.slane %v5857, 2
    %v5872 = vrot.slane %v5858, 2
    %v5873 = vsel %vm329, %v5871, %v5872
    %v5874 = vrot.slane %v5859, 2
    %v5875 = vsel %vm329, %v5872, %v5874
    %v5880 = vadd.f32 %v5850, %v5868
    %v5881 = vadd.f32 %v5851, %v5870
    %v5882 = vadd.f32 %v5852, %v5873
    %v5883 = vadd.f32 %v5853, %v5875
    %v5884 = vmul.f32 %v3061, %v3320
    %v5885 = vmul.f32 %v3062, %v3320
    %v5886 = vmul.f32 %v3063, %v3320
    %v5887 = vmul.f32 %v3064, %v3320
    %v5888 = vmul.f32 %v3065, %v3320
    %v5889 = vmul.f32 %v3066, %v3320
    %v5896 = vrot.slane %v5884, 2
    %v5897 = vrot.slane %v5885, 2
    %v5898 = vsel %vm329, %v5896, %v5897
    %v5899 = vrot.slane %v5886, 2
    %v5900 = vsel %vm329, %v5897, %v5899
    %v5901 = vrot.slane %v5887, 2
    %v5902 = vrot.slane %v5888, 2
    %v5903 = vsel %vm329, %v5901, %v5902
    %v5904 = vrot.slane %v5889, 2
    %v5905 = vsel %vm329, %v5902, %v5904
    %5906 = vrot.lane.b32.xlu0 %v5898, 127
    %v5907 = vpop.permute.xlu0 %5906
    %5908 = vrot.lane.b32.xlu0 %v5900, 127
    %v5909 = vpop.permute.xlu0 %5908
    %5910 = vrot.lane.b32.xlu0 %v5903, 127
    %v5911 = vpop.permute.xlu0 %5910
    %5912 = vrot.lane.b32.xlu0 %v5905, 127
    %v5913 = vpop.permute.xlu0 %5912
    %v5918 = vadd.f32 %v5880, %v5907
    %v5919 = vadd.f32 %v5881, %v5909
    %v5920 = vadd.f32 %v5882, %v5911
    %v5921 = vadd.f32 %v5883, %v5913
    %v5922 = vmul.f32 %v3061, %v3368
    %v5923 = vmul.f32 %v3062, %v3368
    %v5924 = vmul.f32 %v3063, %v3368
    %v5925 = vmul.f32 %v3064, %v3368
    %v5926 = vmul.f32 %v3065, %v3368
    %v5927 = vmul.f32 %v3066, %v3368
    %v5934 = vrot.slane %v5922, 2
    %v5935 = vrot.slane %v5923, 2
    %v5936 = vsel %vm329, %v5934, %v5935
    %v5937 = vrot.slane %v5924, 2
    %v5938 = vsel %vm329, %v5935, %v5937
    %v5939 = vrot.slane %v5925, 2
    %v5940 = vrot.slane %v5926, 2
    %v5941 = vsel %vm329, %v5939, %v5940
    %v5942 = vrot.slane %v5927, 2
    %v5943 = vsel %vm329, %v5940, %v5942
    %5944 = vrot.lane.b32.xlu0 %v5936, 126
    %v5945 = vpop.permute.xlu0 %5944
    %5946 = vrot.lane.b32.xlu0 %v5938, 126
    %v5947 = vpop.permute.xlu0 %5946
    %5948 = vrot.lane.b32.xlu0 %v5941, 126
    %v5949 = vpop.permute.xlu0 %5948
    %5950 = vrot.lane.b32.xlu0 %v5943, 126
    %v5951 = vpop.permute.xlu0 %5950
    %v5956 = vadd.f32 %v5918, %v5945
    %v5957 = vadd.f32 %v5919, %v5947
    %v5958 = vadd.f32 %v5920, %v5949
    %v5959 = vadd.f32 %v5921, %v5951
    %v5960 = vmul.f32 %v3061, %v3416
    %v5961 = vmul.f32 %v3062, %v3416
    %v5962 = vmul.f32 %v3063, %v3416
    %v5963 = vmul.f32 %v3064, %v3416
    %v5964 = vmul.f32 %v3065, %v3416
    %v5965 = vmul.f32 %v3066, %v3416
    %v5966 = vmul.f32 %v3061, %v3424
    %v5967 = vmul.f32 %v3062, %v3424
    %v5968 = vmul.f32 %v3063, %v3424
    %v5969 = vmul.f32 %v3064, %v3424
    %v5970 = vmul.f32 %v3065, %v3424
    %v5971 = vmul.f32 %v3066, %v3424
    %5978 = vrot.lane.b32.xlu0 %v5966, 127
    %v5979 = vpop.permute.xlu0 %5978
    %5980 = vrot.lane.b32.xlu0 %v5967, 127
    %v5981 = vpop.permute.xlu0 %5980
    %5982 = vrot.lane.b32.xlu0 %v5968, 127
    %v5983 = vpop.permute.xlu0 %5982
    %5984 = vrot.lane.b32.xlu0 %v5969, 127
    %v5985 = vpop.permute.xlu0 %5984
    %5986 = vrot.lane.b32.xlu0 %v5970, 127
    %v5987 = vpop.permute.xlu0 %5986
    %5988 = vrot.lane.b32.xlu0 %v5971, 127
    %v5989 = vpop.permute.xlu0 %5988
    %v5996 = vadd.f32 %v5960, %v5979
    %v5997 = vadd.f32 %v5961, %v5981
    %v5998 = vadd.f32 %v5962, %v5983
    %v5999 = vadd.f32 %v5963, %v5985
    %v6000 = vadd.f32 %v5964, %v5987
    %v6001 = vadd.f32 %v5965, %v5989
    %v6002 = vmul.f32 %v3061, %v3462
    %v6003 = vmul.f32 %v3062, %v3462
    %v6004 = vmul.f32 %v3063, %v3462
    %v6005 = vmul.f32 %v3064, %v3462
    %v6006 = vmul.f32 %v3065, %v3462
    %v6007 = vmul.f32 %v3066, %v3462
    %6014 = vrot.lane.b32.xlu0 %v6002, 126
    %v6015 = vpop.permute.xlu0 %6014
    %6016 = vrot.lane.b32.xlu0 %v6003, 126
    %v6017 = vpop.permute.xlu0 %6016
    %6018 = vrot.lane.b32.xlu0 %v6004, 126
    %v6019 = vpop.permute.xlu0 %6018
    %6020 = vrot.lane.b32.xlu0 %v6005, 126
    %v6021 = vpop.permute.xlu0 %6020
    %6022 = vrot.lane.b32.xlu0 %v6006, 126
    %v6023 = vpop.permute.xlu0 %6022
    %6024 = vrot.lane.b32.xlu0 %v6007, 126
    %v6025 = vpop.permute.xlu0 %6024
    %v6032 = vadd.f32 %v5996, %v6015
    %v6033 = vadd.f32 %v5997, %v6017
    %v6034 = vadd.f32 %v5998, %v6019
    %v6035 = vadd.f32 %v5999, %v6021
    %v6036 = vadd.f32 %v6000, %v6023
    %v6037 = vadd.f32 %v6001, %v6025
    %v6038 = vmul.f32 %v3061, %v3500
    %v6039 = vmul.f32 %v3062, %v3500
    %v6040 = vmul.f32 %v3064, %v3500
    %v6041 = vmul.f32 %v3065, %v3500
    %v6042 = vmul.f32 %v3061, %v3508
    %v6043 = vmul.f32 %v3062, %v3508
    %v6044 = vmul.f32 %v3063, %v3508
    %v6045 = vmul.f32 %v3064, %v3508
    %v6046 = vmul.f32 %v3065, %v3508
    %v6047 = vmul.f32 %v3066, %v3508
    %v6054 = vrot.slane %v6042, 1
    %v6055 = vrot.slane %v6043, 1
    %v6056 = vsel %vm196, %v6054, %v6055
    %v6057 = vrot.slane %v6044, 1
    %v6058 = vsel %vm196, %v6055, %v6057
    %v6059 = vrot.slane %v6045, 1
    %v6060 = vrot.slane %v6046, 1
    %v6061 = vsel %vm196, %v6059, %v6060
    %v6062 = vrot.slane %v6047, 1
    %v6063 = vsel %vm196, %v6060, %v6062
    %v6068 = vadd.f32 %v6038, %v6056
    %v6069 = vadd.f32 %v6039, %v6058
    %v6070 = vadd.f32 %v6040, %v6061
    %v6071 = vadd.f32 %v6041, %v6063
    %v6072 = vmul.f32 %v3061, %v3544
    %v6073 = vmul.f32 %v3062, %v3544
    %v6074 = vmul.f32 %v3063, %v3544
    %v6075 = vmul.f32 %v3064, %v3544
    %v6076 = vmul.f32 %v3065, %v3544
    %v6077 = vmul.f32 %v3066, %v3544
    %v6084 = vrot.slane %v6072, 2
    %v6085 = vrot.slane %v6073, 2
    %v6086 = vsel %vm329, %v6084, %v6085
    %v6087 = vrot.slane %v6074, 2
    %v6088 = vsel %vm329, %v6085, %v6087
    %v6089 = vrot.slane %v6075, 2
    %v6090 = vrot.slane %v6076, 2
    %v6091 = vsel %vm329, %v6089, %v6090
    %v6092 = vrot.slane %v6077, 2
    %v6093 = vsel %vm329, %v6090, %v6092
    %v6098 = vadd.f32 %v6068, %v6086
    %v6099 = vadd.f32 %v6069, %v6088
    %v6100 = vadd.f32 %v6070, %v6091
    %v6101 = vadd.f32 %v6071, %v6093
    %v6102 = vsel %vm4647, %v5956, 0.0
    %v6103 = vsel %vm4647, %v5957, 0.0
    %v6104 = vadd.f32 %v6102, %v6103
    %v6105 = vsel %vm4647, %v5958, 0.0
    %v6106 = vadd.f32 %v6104, %v6105
    %v6107 = vsel %vm4647, %v5959, 0.0
    %v6108 = vadd.f32 %v6106, %v6107
    %6109 = vadd.xlane.f32.xlu0 %v6108
    %v6110 = vpop.xlane.xlu0 %6109
    %v6111 = vrot.slane %v6110, 4
    %v6112 = vadd.f32 %v6110, %v6111
    %v6113 = vrot.slane %v6112, 2
    %v6114 = vadd.f32 %v6112, %v6113
    %v6115 = vrot.slane %v6114, 1
    %v6116 = vadd.f32 %v6114, %v6115
    %s6117 = vtos %v6116
    %v6118 = vrcp.pop 512.0
    %s6119 = vtos %v6118
    %s6120 = smul.f32 %s6117, %s6119
    %v6121 = vstv %s6120
    %v6122 = vsub.f32 %v5956, %v6121
    %v6123 = vsub.f32 %v5957, %v6121
    %v6124 = vsub.f32 %v5958, %v6121
    %v6125 = vsub.f32 %v5959, %v6121
    %v6126 = vmul.f32 %v6122, %v6122
    %v6127 = vmul.f32 %v6123, %v6123
    %v6128 = vmul.f32 %v6124, %v6124
    %v6129 = vmul.f32 %v6125, %v6125
    %v6130 = vsel %vm4647, %v6126, 0.0
    %v6131 = vsel %vm4647, %v6127, 0.0
    %v6132 = vadd.f32 %v6130, %v6131
    %v6133 = vsel %vm4647, %v6128, 0.0
    %v6134 = vadd.f32 %v6132, %v6133
    %v6135 = vsel %vm4647, %v6129, 0.0
    %v6136 = vadd.f32 %v6134, %v6135
    %6137 = vadd.xlane.f32.xlu0 %v6136
    %v6138 = vpop.xlane.xlu0 %6137
    %v6139 = vrot.slane %v6138, 4
    %v6140 = vadd.f32 %v6138, %v6139
    %v6141 = vrot.slane %v6140, 2
    %v6142 = vadd.f32 %v6140, %v6141
    %v6143 = vrot.slane %v6142, 1
    %v6144 = vadd.f32 %v6142, %v6143
    %s6145 = vtos %v6144
    %v6146 = vrcp.pop 512.0
    %s6147 = vtos %v6146
    %s6148 = smul.f32 %s6145, %s6147
    %s6149 = sadd.f32 %s6148, 1e-05
    %v6150 = vstv %s6149
    %v6151 = vrsqrt.pop %v6150
    %s6152 = vtos %v6151
    %s6153 = smul.f32 %s3579, %s6152
    %v6154 = vstv %s6153
    %v6155 = vmul.f32 %v6122, %v6154
    %v6156 = vmul.f32 %v6123, %v6154
    %v6157 = vmul.f32 %v6124, %v6154
    %v6158 = vmul.f32 %v6125, %v6154
    %v6159 = vadd.f32 %v6155, %v3664
    %v6160 = vadd.f32 %v6156, %v3664
    %v6161 = vadd.f32 %v6157, %v3664
    %v6162 = vadd.f32 %v6158, %v3664
    %v6163 = vmax.f32 %v6159, 0.0
    %v6164 = vmax.f32 %v6160, 0.0
    %v6165 = vmax.f32 %v6161, 0.0
    %v6166 = vmax.f32 %v6162, 0.0
    %v6173 = vrot.slane %v6032, 1
    %v6174 = vrot.slane %v6033, 1
    %v6175 = vsel %vm196, %v6173, %v6174
    %v6176 = vrot.slane %v6034, 1
    %v6177 = vsel %vm196, %v6174, %v6176
    %v6178 = vrot.slane %v6035, 1
    %v6179 = vrot.slane %v6036, 1
    %v6180 = vsel %vm196, %v6178, %v6179
    %v6181 = vrot.slane %v6037, 1
    %v6182 = vsel %vm196, %v6179, %v6181
    %v6187 = vsel %vm4647, %v6175, 0.0
    %v6188 = vsel %vm4647, %v6177, 0.0
    %v6189 = vadd.f32 %v6187, %v6188
    %v6190 = vsel %vm4647, %v6180, 0.0
    %v6191 = vadd.f32 %v6189, %v6190
    %v6192 = vsel %vm4647, %v6182, 0.0
    %v6193 = vadd.f32 %v6191, %v6192
    %6194 = vadd.xlane.f32.xlu0 %v6193
    %v6195 = vpop.xlane.xlu0 %6194
    %v6196 = vrot.slane %v6195, 4
    %v6197 = vadd.f32 %v6195, %v6196
    %v6198 = vrot.slane %v6197, 2
    %v6199 = vadd.f32 %v6197, %v6198
    %v6200 = vrot.slane %v6199, 1
    %v6201 = vadd.f32 %v6199, %v6200
    %s6202 = vtos %v6201
    %v6203 = vrcp.pop 512.0
    %s6204 = vtos %v6203
    %s6205 = smul.f32 %s6202, %s6204
    %v6206 = vstv %s6205
    %v6207 = vsub.f32 %v6032, %v6206
    %v6208 = vsub.f32 %v6033, %v6206
    %v6209 = vsub.f32 %v6034, %v6206
    %v6210 = vsub.f32 %v6035, %v6206
    %v6211 = vsub.f32 %v6036, %v6206
    %v6212 = vsub.f32 %v6037, %v6206
    %v6213 = vmul.f32 %v6207, %v6207
    %v6214 = vmul.f32 %v6208, %v6208
    %v6215 = vmul.f32 %v6209, %v6209
    %v6216 = vmul.f32 %v6210, %v6210
    %v6217 = vmul.f32 %v6211, %v6211
    %v6218 = vmul.f32 %v6212, %v6212
    %v6225 = vrot.slane %v6213, 1
    %v6226 = vrot.slane %v6214, 1
    %v6227 = vsel %vm196, %v6225, %v6226
    %v6228 = vrot.slane %v6215, 1
    %v6229 = vsel %vm196, %v6226, %v6228
    %v6230 = vrot.slane %v6216, 1
    %v6231 = vrot.slane %v6217, 1
    %v6232 = vsel %vm196, %v6230, %v6231
    %v6233 = vrot.slane %v6218, 1
    %v6234 = vsel %vm196, %v6231, %v6233
    %v6239 = vsel %vm4647, %v6227, 0.0
    %v6240 = vsel %vm4647, %v6229, 0.0
    %v6241 = vadd.f32 %v6239, %v6240
    %v6242 = vsel %vm4647, %v6232, 0.0
    %v6243 = vadd.f32 %v6241, %v6242
    %v6244 = vsel %vm4647, %v6234, 0.0
    %v6245 = vadd.f32 %v6243, %v6244
    %6246 = vadd.xlane.f32.xlu0 %v6245
    %v6247 = vpop.xlane.xlu0 %6246
    %v6248 = vrot.slane %v6247, 4
    %v6249 = vadd.f32 %v6247, %v6248
    %v6250 = vrot.slane %v6249, 2
    %v6251 = vadd.f32 %v6249, %v6250
    %v6252 = vrot.slane %v6251, 1
    %v6253 = vadd.f32 %v6251, %v6252
    %s6254 = vtos %v6253
    %v6255 = vrcp.pop 512.0
    %s6256 = vtos %v6255
    %s6257 = smul.f32 %s6254, %s6256
    %s6258 = sadd.f32 %s6257, 1e-05
    %v6259 = vstv %s6258
    %v6260 = vrsqrt.pop %v6259
    %s6261 = vtos %v6260
    %s6262 = smul.f32 %s3683, %s6261
    %v6263 = vstv %s6262
    %v6264 = vmul.f32 %v6207, %v6263
    %v6265 = vmul.f32 %v6208, %v6263
    %v6266 = vmul.f32 %v6209, %v6263
    %v6267 = vmul.f32 %v6210, %v6263
    %v6268 = vmul.f32 %v6211, %v6263
    %v6269 = vmul.f32 %v6212, %v6263
    %v6270 = vadd.f32 %v6264, %v3812
    %v6271 = vadd.f32 %v6265, %v3812
    %v6272 = vadd.f32 %v6266, %v3812
    %v6273 = vadd.f32 %v6267, %v3812
    %v6274 = vadd.f32 %v6268, %v3812
    %v6275 = vadd.f32 %v6269, %v3812
    %v6276 = vmax.f32 %v6270, 0.0
    %v6277 = vmax.f32 %v6271, 0.0
    %v6278 = vmax.f32 %v6272, 0.0
    %v6279 = vmax.f32 %v6273, 0.0
    %v6280 = vmax.f32 %v6274, 0.0
    %v6281 = vmax.f32 %v6275, 0.0
    %v6288 = vrot.slane %v6276, 1
    %v6289 = vrot.slane %v6277, 1
    %v6290 = vsel %vm196, %v6288, %v6289
    %v6291 = vrot.slane %v6278, 1
    %v6292 = vsel %vm196, %v6289, %v6291
    %v6293 = vrot.slane %v6279, 1
    %v6294 = vrot.slane %v6280, 1
    %v6295 = vsel %vm196, %v6293, %v6294
    %v6296 = vrot.slane %v6281, 1
    %v6297 = vsel %vm196, %v6294, %v6296
    %v6302 = vadd.f32 %v6163, %v6290
    %v6303 = vadd.f32 %v6164, %v6292
    %v6304 = vadd.f32 %v6165, %v6295
    %v6305 = vadd.f32 %v6166, %v6297
    %6310 = vrot.lane.b32.xlu0 %v6098, 127
    %v6311 = vpop.permute.xlu0 %6310
    %6312 = vrot.lane.b32.xlu0 %v6099, 127
    %v6313 = vpop.permute.xlu0 %6312
    %6314 = vrot.lane.b32.xlu0 %v6100, 127
    %v6315 = vpop.permute.xlu0 %6314
    %6316 = vrot.lane.b32.xlu0 %v6101, 127
    %v6317 = vpop.permute.xlu0 %6316
    %v6322 = vsel %vm4647, %v6311, 0.0
    %v6323 = vsel %vm4647, %v6313, 0.0
    %v6324 = vadd.f32 %v6322, %v6323
    %v6325 = vsel %vm4647, %v6315, 0.0
    %v6326 = vadd.f32 %v6324, %v6325
    %v6327 = vsel %vm4647, %v6317, 0.0
    %v6328 = vadd.f32 %v6326, %v6327
    %6329 = vadd.xlane.f32.xlu0 %v6328
    %v6330 = vpop.xlane.xlu0 %6329
    %v6331 = vrot.slane %v6330, 4
    %v6332 = vadd.f32 %v6330, %v6331
    %v6333 = vrot.slane %v6332, 2
    %v6334 = vadd.f32 %v6332, %v6333
    %v6335 = vrot.slane %v6334, 1
    %v6336 = vadd.f32 %v6334, %v6335
    %s6337 = vtos %v6336
    %v6338 = vrcp.pop 512.0
    %s6339 = vtos %v6338
    %s6340 = smul.f32 %s6337, %s6339
    %v6341 = vstv %s6340
    %v6342 = vsub.f32 %v6098, %v6341
    %v6343 = vsub.f32 %v6099, %v6341
    %v6344 = vsub.f32 %v6100, %v6341
    %v6345 = vsub.f32 %v6101, %v6341
    %v6346 = vmul.f32 %v6342, %v6342
    %v6347 = vmul.f32 %v6343, %v6343
    %v6348 = vmul.f32 %v6344, %v6344
    %v6349 = vmul.f32 %v6345, %v6345
    %6354 = vrot.lane.b32.xlu0 %v6346, 127
    %v6355 = vpop.permute.xlu0 %6354
    %6356 = vrot.lane.b32.xlu0 %v6347, 127
    %v6357 = vpop.permute.xlu0 %6356
    %6358 = vrot.lane.b32.xlu0 %v6348, 127
    %v6359 = vpop.permute.xlu0 %6358
    %6360 = vrot.lane.b32.xlu0 %v6349, 127
    %v6361 = vpop.permute.xlu0 %6360
    %v6366 = vsel %vm4647, %v6355, 0.0
    %v6367 = vsel %vm4647, %v6357, 0.0
    %v6368 = vadd.f32 %v6366, %v6367
    %v6369 = vsel %vm4647, %v6359, 0.0
    %v6370 = vadd.f32 %v6368, %v6369
    %v6371 = vsel %vm4647, %v6361, 0.0
    %v6372 = vadd.f32 %v6370, %v6371
    %6373 = vadd.xlane.f32.xlu0 %v6372
    %v6374 = vpop.xlane.xlu0 %6373
    %v6375 = vrot.slane %v6374, 4
    %v6376 = vadd.f32 %v6374, %v6375
    %v6377 = vrot.slane %v6376, 2
    %v6378 = vadd.f32 %v6376, %v6377
    %v6379 = vrot.slane %v6378, 1
    %v6380 = vadd.f32 %v6378, %v6379
    %s6381 = vtos %v6380
    %v6382 = vrcp.pop 512.0
    %s6383 = vtos %v6382
    %s6384 = smul.f32 %s6381, %s6383
    %s6385 = sadd.f32 %s6384, 1e-05
    %v6386 = vstv %s6385
    %v6387 = vrsqrt.pop %v6386
    %s6388 = vtos %v6387
    %s6389 = smul.f32 %s3859, %s6388
    %v6390 = vstv %s6389
    %v6391 = vmul.f32 %v6342, %v6390
    %v6392 = vmul.f32 %v6343, %v6390
    %v6393 = vmul.f32 %v6344, %v6390
    %v6394 = vmul.f32 %v6345, %v6390
    %v6395 = vadd.f32 %v6391, %v3992
    %v6396 = vadd.f32 %v6392, %v3992
    %v6397 = vadd.f32 %v6393, %v3992
    %v6398 = vadd.f32 %v6394, %v3992
    %v6399 = vmax.f32 %v6395, 0.0
    %v6400 = vmax.f32 %v6396, 0.0
    %v6401 = vmax.f32 %v6397, 0.0
    %v6402 = vmax.f32 %v6398, 0.0
    %6407 = vrot.lane.b32.xlu0 %v6399, 127
    %v6408 = vpop.permute.xlu0 %6407
    %6409 = vrot.lane.b32.xlu0 %v6400, 127
    %v6410 = vpop.permute.xlu0 %6409
    %6411 = vrot.lane.b32.xlu0 %v6401, 127
    %v6412 = vpop.permute.xlu0 %6411
    %6413 = vrot.lane.b32.xlu0 %v6402, 127
    %v6414 = vpop.permute.xlu0 %6413
    %v6419 = vadd.f32 %v6302, %v6408
    %v6420 = vadd.f32 %v6303, %v6410
    %v6421 = vadd.f32 %v6304, %v6412
    %v6422 = vadd.f32 %v6305, %v6414
    %6429 = vrot.lane.b32.xlu0 %v4135, 127
    %v6430 = vpop.permute.xlu0 %6429
    %6431 = vrot.lane.b32.xlu0 %v4136, 127
    %v6432 = vpop.permute.xlu0 %6431
    %6433 = vrot.lane.b32.xlu0 %v4137, 127
    %v6434 = vpop.permute.xlu0 %6433
    %6435 = vrot.lane.b32.xlu0 %v4138, 127
    %v6436 = vpop.permute.xlu0 %6435
    %6437 = vrot.lane.b32.xlu0 %v4139, 127
    %v6438 = vpop.permute.xlu0 %6437
    %6439 = vrot.lane.b32.xlu0 %v4140, 127
    %v6440 = vpop.permute.xlu0 %6439
    %vm6447 = vcmask 130049
    %6448 = vst.msk [vmem:[#allocation7 - $0x1] sm:$0xfe] %vm6447, %v6430
    %6449 = vst.msk [vmem:[#allocation7 + $0x7] sm:$0xff] %vm4647, %v6432
    %vm6450 = vcmask 122880
    %6451 = vst.msk [vmem:[#allocation7 + $0xf] sm:$0x1] %vm6450, %v6434
    %6452 = vst.msk [vmem:[#allocation7 + $0xf] sm:$0xfe] %vm6447, %v6430
    %6453 = vst.msk [vmem:[#allocation7 + $0x17] sm:$0xff] %vm4647, %v6432
    %6454 = vst.msk [vmem:[#allocation7 + $0x1f] sm:$0x1] %vm6450, %v6434
    %6455 = vst.msk [vmem:[#allocation7 + $0x1f] sm:$0xfe] %vm6447, %v6430
    %6456 = vst.msk [vmem:[#allocation7 + $0x27] sm:$0xff] %vm4647, %v6432
    %6457 = vst.msk [vmem:[#allocation7 + $0x2f] sm:$0x1] %vm6450, %v6434
    %6458 = vst.msk [vmem:[#allocation7 + $0x2f] sm:$0xfe] %vm6447, %v6436
    %6459 = vst.msk [vmem:[#allocation7 + $0x37] sm:$0xff] %vm4647, %v6438
    %6460 = vst.msk [vmem:[#allocation7 + $0x3f] sm:$0x1] %vm6450, %v6440
    %6461 = vst.msk [vmem:[#allocation7 + $0x3f] sm:$0xfe] %vm6447, %v6436
    %6462 = vst.msk [vmem:[#allocation7 + $0x47] sm:$0xff] %vm4647, %v6438
    %6463 = vst.msk [vmem:[#allocation7 + $0x4f] sm:$0x1] %vm6450, %v6440
    %6464 = vst.msk [vmem:[#allocation7 + $0x4f] sm:$0xfe] %vm6447, %v6436
    %6465 = vst.msk [vmem:[#allocation7 + $0x57] sm:$0xff] %vm4647, %v6438
    %6466 = vst.msk [vmem:[#allocation7 + $0x5f] sm:$0x1] %vm6450, %v6440
    %6471 = vrot.lane.b32.xlu0 %v4965, 16
    %v6472 = vpop.permute.xlu0 %6471
    %6473 = vrot.lane.b32.xlu0 %v4966, 16
    %v6474 = vpop.permute.xlu0 %6473
    %6475 = vrot.lane.b32.xlu0 %v4967, 16
    %v6476 = vpop.permute.xlu0 %6475
    %6477 = vrot.lane.b32.xlu0 %v4968, 16
    %v6478 = vpop.permute.xlu0 %6477
    %vm6483 = vcmask 261248
    %6484 = vst.msk [vmem:[#allocation7] sm:$0xff] %vm6483, %v6472
    %6485 = vst.msk [vmem:[#allocation7 + $0x8] sm:$0xff] %vm6483, %v6474
    %6486 = vst.msk [vmem:[#allocation7 + $0x30] sm:$0xff] %vm6483, %v6476
    %6487 = vst.msk [vmem:[#allocation7 + $0x38] sm:$0xff] %vm6483, %v6478
    %6492 = vrot.lane.b32.xlu0 %v5692, 16
    %v6493 = vpop.permute.xlu0 %6492
    %6494 = vrot.lane.b32.xlu0 %v5693, 16
    %v6495 = vpop.permute.xlu0 %6494
    %6496 = vrot.lane.b32.xlu0 %v5694, 16
    %v6497 = vpop.permute.xlu0 %6496
    %6498 = vrot.lane.b32.xlu0 %v5695, 16
    %v6499 = vpop.permute.xlu0 %6498
    %s6504 = scalar_lea.vmem [#allocation7], 16
    %6505 = vst.msk [vmem:[%s6504] sm:$0xff] %vm6483, %v6493
    %6506 = vst.msk [vmem:[%s6504 + $0x8] sm:$0xff] %vm6483, %v6495
    %6507 = vst.msk [vmem:[%s6504 + $0x30] sm:$0xff] %vm6483, %v6497
    %6508 = vst.msk [vmem:[%s6504 + $0x38] sm:$0xff] %vm6483, %v6499
    %6513 = vrot.lane.b32.xlu0 %v6419, 16
    %v6514 = vpop.permute.xlu0 %6513
    %6515 = vrot.lane.b32.xlu0 %v6420, 16
    %v6516 = vpop.permute.xlu0 %6515
    %6517 = vrot.lane.b32.xlu0 %v6421, 16
    %v6518 = vpop.permute.xlu0 %6517
    %6519 = vrot.lane.b32.xlu0 %v6422, 16
    %v6520 = vpop.permute.xlu0 %6519
    %s6525 = scalar_lea.vmem [#allocation7], 32
    %6526 = vst.msk [vmem:[%s6525] sm:$0xff] %vm6483, %v6514
    %6527 = vst.msk [vmem:[%s6525 + $0x8] sm:$0xff] %vm6483, %v6516
    %6528 = vst.msk [vmem:[%s6525 + $0x30] sm:$0xff] %vm6483, %v6518
    %6529 = vst.msk [vmem:[%s6525 + $0x38] sm:$0xff] %vm6483, %v6520
    %6536 = vrot.lane.b32.xlu0 %v4235, 31
    %v6537 = vpop.permute.xlu0 %6536
    %6538 = vrot.lane.b32.xlu0 %v4236, 31
    %v6539 = vpop.permute.xlu0 %6538
    %6540 = vrot.lane.b32.xlu0 %v4237, 31
    %v6541 = vpop.permute.xlu0 %6540
    %6542 = vrot.lane.b32.xlu0 %v4238, 31
    %v6543 = vpop.permute.xlu0 %6542
    %6544 = vrot.lane.b32.xlu0 %v4239, 31
    %v6545 = vpop.permute.xlu0 %6544
    %6546 = vrot.lane.b32.xlu0 %v4240, 31
    %v6547 = vpop.permute.xlu0 %6546
    %vm6554 = vcmask 392449
    %6555 = vst.msk [vmem:[#allocation7 - $0x1] sm:$0xfe] %vm6554, %v6537
    %vm6556 = vcmask 392448
    %6557 = vst.msk [vmem:[#allocation7 + $0x7] sm:$0xff] %vm6556, %v6539
    %vm6558 = vcmask 385280
    %6559 = vst.msk [vmem:[#allocation7 + $0xf] sm:$0x1] %vm6558, %v6541
    %6560 = vst.msk [vmem:[#allocation7 + $0xf] sm:$0xfe] %vm6554, %v6537
    %6561 = vst.msk [vmem:[#allocation7 + $0x17] sm:$0xff] %vm6556, %v6539
    %6562 = vst.msk [vmem:[#allocation7 + $0x1f] sm:$0x1] %vm6558, %v6541
    %6563 = vst.msk [vmem:[#allocation7 + $0x1f] sm:$0xfe] %vm6554, %v6537
    %6564 = vst.msk [vmem:[#allocation7 + $0x27] sm:$0xff] %vm6556, %v6539
    %6565 = vst.msk [vmem:[#allocation7 + $0x2f] sm:$0x1] %vm6558, %v6541
    %6566 = vst.msk [vmem:[#allocation7 + $0x2f] sm:$0xfe] %vm6554, %v6543
    %6567 = vst.msk [vmem:[#allocation7 + $0x37] sm:$0xff] %vm6556, %v6545
    %6568 = vst.msk [vmem:[#allocation7 + $0x3f] sm:$0x1] %vm6558, %v6547
    %6569 = vst.msk [vmem:[#allocation7 + $0x3f] sm:$0xfe] %vm6554, %v6543
    %6570 = vst.msk [vmem:[#allocation7 + $0x47] sm:$0xff] %vm6556, %v6545
    %6571 = vst.msk [vmem:[#allocation7 + $0x4f] sm:$0x1] %vm6558, %v6547
    %6572 = vst.msk [vmem:[#allocation7 + $0x4f] sm:$0xfe] %vm6554, %v6543
    %6573 = vst.msk [vmem:[#allocation7 + $0x57] sm:$0xff] %vm6556, %v6545
    %6574 = vst.msk [vmem:[#allocation7 + $0x5f] sm:$0x1] %vm6558, %v6547
    // Predicated region
    $region22: #{model_forward.1} parent=1 // pred_check
      _
    $region23: #{model_forward.1} parent=1 // pred_check_branch
      %6576 = sbr.rel (0) target = $region25
    $region24: #{model_forward.1} parent=1 // pred_region
      %s6578 = ssub.s32 1536, 1536
      %6579 = vsyncadd [#allocation3], %s6578
      %s6580 = sshll.u32 [#allocation7], 4
      %s6581 = int_to_ptr.vmem [resolvable:$true] %s6580
      %6586 = dma.vmem_to_hbm [thread:$0]  %s6581, 1536, %s3, [#allocation3], 128, 128, 8
    $region25: #{model_forward.1} parent=1 // pred_fallthru
      _
    // Predicated region
    $region26: #{model_forward.1} parent=1 // pred_check
      _
    $region27: #{model_forward.1} parent=1 // pred_check_branch
      %6588 = sbr.rel (0) target = $region29
    $region28: #{model_forward.1} parent=1 // pred_region
      %6589 = dma.done [#allocation3], 1536
    $region29: #{model_forward.1} parent=1 // pred_fallthru
      _
    %6590 = vsyncpa [#allocation3], 1
    %6591 = vsyncpa [#allocation4], 1
    %6592 = vsyncpa [#allocation6], 1

</llo_original>
